<compile_context>
chip_gen: v6e
topology: v6e:2x2x1
jax: 0.10.0
libtpu: 0.0.40
codegen_flags: <defaults>
</compile_context>

<pallas_src>
import functools

import jax
import jax.numpy as jnp
from jax.experimental import pallas as pl
from jax.experimental.pallas import tpu as pltpu

BN_EPS = 1e-5
LANE = 128
VMEM_LIMIT_BYTES = 32 * 1024 * 1024   # explicit & safe on v5e / v6e / v7x


def _round_up(x, m):
    return (x + m - 1) // m * m


def _pick_row_tile(rows, wo, target_m):
    """Largest divisor t of `rows` with t*wo <= target_m and (t*wo) % 8 == 0."""
    best = None
    for t in range(1, rows + 1):
        if rows % t:
            continue
        m = t * wo
        if m > target_m or m % 8:
            continue
        if best is None or t > best:
            best = t
    return best if best is not None else rows


# ---------------------------------------------------------------------------
# Kernel 1: conv (sum of shifted tap/window matmuls) + per-tile BN statistics.
# ---------------------------------------------------------------------------
def _conv_stats_kernel(*refs, windows, wo, cp):
    n_taps = len(windows)
    tap_refs = refs[:n_taps]
    w_ref = refs[n_taps]
    y_ref, mean_ref, m2_ref = refs[n_taps + 1:]

    t_rows = tap_refs[0].shape[0]
    tile_m = t_rows * wo

    acc = jnp.zeros((tile_m, cp), jnp.float32)
    for t in range(n_taps):
        cin = tap_refs[t].shape[-1]
        for col_start, w_idx in windows[t]:
            win = tap_refs[t][:, col_start:col_start + wo, :]   # (t_rows, wo, cin) bf16
            win = win.reshape(tile_m, cin)
            acc = acc + jnp.dot(win, w_ref[w_idx],
                                preferred_element_type=jnp.float32)
    y_ref[...] = acc

    # Per-tile centered statistics (combined across tiles outside the kernel;
    # keeps the grid axis "parallel" and avoids E[y^2]-E[y]^2 cancellation).
    tile_mean = jnp.sum(acc, axis=0, keepdims=True) * (1.0 / tile_m)
    centered = acc - tile_mean
    tile_m2 = jnp.sum(centered * centered, axis=0, keepdims=True)
    mean_ref[...] = jnp.broadcast_to(tile_mean, (8, cp))
    m2_ref[...] = jnp.broadcast_to(tile_m2, (8, cp))


def _conv_bn_stats(taps, windows, w_stack, wo, cp, target_tile_m):
    rows = taps[0].shape[0]
    t_rows = _pick_row_tile(rows, wo, target_tile_m)
    n_tiles = rows // t_rows
    tile_m = t_rows * wo
    m_total = rows * wo

    in_specs = [
        pl.BlockSpec((t_rows,) + tuple(tap.shape[1:]), lambda i: (i, 0, 0))
        for tap in taps
    ]
    in_specs.append(pl.BlockSpec(tuple(w_stack.shape), lambda i: (0, 0, 0)))

    out_shape = (
        jax.ShapeDtypeStruct((m_total, cp), jnp.float32),
        jax.ShapeDtypeStruct((n_tiles * 8, cp), jnp.float32),
        jax.ShapeDtypeStruct((n_tiles * 8, cp), jnp.float32),
    )
    out_specs = (
        pl.BlockSpec((tile_m, cp), lambda i: (i, 0)),
        pl.BlockSpec((8, cp), lambda i: (i, 0)),
        pl.BlockSpec((8, cp), lambda i: (i, 0)),
    )

    cin = int(taps[0].shape[-1])
    n_mm = sum(len(w) for w in windows)
    tap_bytes = sum(int(t.size) * t.dtype.itemsize for t in taps)
    cost = pl.CostEstimate(
        flops=int(2 * m_total * cin * cp * n_mm),
        transcendentals=0,
        bytes_accessed=int(tap_bytes + w_stack.size * w_stack.dtype.itemsize
                           + m_total * cp * 4),
    )

    kernel = functools.partial(_conv_stats_kernel, windows=windows, wo=wo, cp=cp)
    y, means, m2s = pl.pallas_call(
        kernel,
        grid=(n_tiles,),
        in_specs=in_specs,
        out_specs=out_specs,
        out_shape=out_shape,
        compiler_params=pltpu.CompilerParams(
            dimension_semantics=("parallel",),
            vmem_limit_bytes=VMEM_LIMIT_BYTES,
        ),
        cost_estimate=cost,
    )(*taps, w_stack)

    # Combine per-tile stats with the parallel-variance (Chan) formula.
    tile_means = means[0::8]                       # (n_tiles, cp)
    tile_m2s = m2s[0::8]
    mean = jnp.mean(tile_means, axis=0, keepdims=True)
    between = jnp.sum((tile_means - mean) ** 2, axis=0, keepdims=True) * float(tile_m)
    var = (jnp.sum(tile_m2s, axis=0, keepdims=True) + between) / float(m_total)
    return y, mean, var, tile_m


# ---------------------------------------------------------------------------
# Kernel 2: fused BatchNorm apply (+ residual branch) (+ ReLU).
# ---------------------------------------------------------------------------
def _bn_apply_kernel(y_ref, s_ref, b_ref, o_ref, *, relu):
    z = y_ref[...] * s_ref[...] + b_ref[...]
    if relu:
        z = jnp.maximum(z, 0.0)
    o_ref[...] = z.astype(o_ref.dtype)


def _bn_apply_res_kernel(y_ref, s_ref, b_ref, r_ref, rs_ref, rb_ref, o_ref, *, relu):
    z = (y_ref[...] * s_ref[...] + b_ref[...]
         + r_ref[...] * rs_ref[...] + rb_ref[...])
    if relu:
        z = jnp.maximum(z, 0.0)
    o_ref[...] = z.astype(o_ref.dtype)


def _bn_apply(y, scale, shift, tile_m, *, residual=None, res_scale=None,
              res_shift=None, relu=True, out_dtype=jnp.float32):
    m_total, cp = y.shape
    n_tiles = m_total // tile_m

    row_spec = pl.BlockSpec((tile_m, cp), lambda i: (i, 0))
    vec_spec = pl.BlockSpec((1, cp), lambda i: (0, 0))

    if residual is None:
        kernel = functools.partial(_bn_apply_kernel, relu=relu)
        in_specs = [row_spec, vec_spec, vec_spec]
        args = (y, scale, shift)
        in_bytes = int(y.size) * 4
    else:
        kernel = functools.partial(_bn_apply_res_kernel, relu=relu)
        in_specs = [row_spec, vec_spec, vec_spec, row_spec, vec_spec, vec_spec]
        args = (y, scale, shift, residual, res_scale, res_shift)
        in_bytes = (int(y.size) + int(residual.size)) * 4

    out_bytes = m_total * cp * jnp.dtype(out_dtype).itemsize
    return pl.pallas_call(
        kernel,
        grid=(n_tiles,),
        in_specs=in_specs,
        out_specs=row_spec,
        out_shape=jax.ShapeDtypeStruct((m_total, cp), out_dtype),
        compiler_params=pltpu.CompilerParams(
            dimension_semantics=("parallel",),
            vmem_limit_bytes=VMEM_LIMIT_BYTES,
        ),
        cost_estimate=pl.CostEstimate(flops=int(5 * m_total * cp),
                                      transcendentals=0,
                                      bytes_accessed=int(in_bytes + out_bytes)),
    )(*args)


# ---------------------------------------------------------------------------
# JAX glue: taps, weight/parameter padding, stats -> scale/shift.
# ---------------------------------------------------------------------------
def _conv3x3_taps(x_nhwc, stride):
    """Taps for a 3x3 / pad=1 conv.  stride==1 -> 3 row-shifted taps (width
    shifts handled in-kernel); stride>1 -> 9 pre-strided taps."""
    n, h, w, c = x_nhwc.shape
    xp = jnp.pad(x_nhwc.astype(jnp.bfloat16), ((0, 0), (1, 1), (1, 1), (0, 0)))
    ho = (h + 2 - 3) // stride + 1
    wo = (w + 2 - 3) // stride + 1
    taps, windows = [], []
    if stride == 1:
        for dh in range(3):
            tap = xp[:, dh:dh + ho, :, :]                  # (n, ho, w+2, c)
            taps.append(tap.reshape(n * ho, w + 2, c))
            windows.append(tuple((dw, 3 * dh + dw) for dw in range(3)))
    else:
        for dh in range(3):
            for dw in range(3):
                tap = jax.lax.slice(
                    xp, (0, dh, dw, 0),
                    (n, dh + (ho - 1) * stride + 1, dw + (wo - 1) * stride + 1, c),
                    (1, stride, stride, 1))                # (n, ho, wo, c)
                taps.append(tap.reshape(n * ho, wo, c))
                windows.append(((0, 3 * dh + dw),))
    return taps, tuple(windows), (n, ho, wo)


def _conv1x1_taps(x_nhwc, stride):
    n, c = x_nhwc.shape[0], x_nhwc.shape[3]
    xs = x_nhwc[:, ::stride, ::stride, :].astype(jnp.bfloat16)
    ho, wo = xs.shape[1], xs.shape[2]
    return [xs.reshape(n * ho, wo, c)], (((0, 0),),), (n, ho, wo)


def _prep_weight(w_hwio, cin_pad, cout_pad):
    """HWIO conv weight -> bf16 stack (kh*kw, cin_pad, cout_pad)."""
    kh, kw, cin, cout = w_hwio.shape
    wp = jnp.zeros((kh * kw, cin_pad, cout_pad), jnp.float32)
    wp = wp.at[:, :cin, :cout].set(
        w_hwio.reshape(kh * kw, cin, cout).astype(jnp.float32))
    return wp.astype(jnp.bfloat16)


def _bn_scale_shift(gamma, beta, mean, var, cp):
    g = jnp.zeros((1, cp), jnp.float32).at[:, :gamma.size].set(gamma.reshape(1, -1))
    b = jnp.zeros((1, cp), jnp.float32).at[:, :beta.size].set(beta.reshape(1, -1))
    scale = g * jax.lax.rsqrt(var + BN_EPS)
    shift = b - mean * scale
    return scale, shift


def basic_block(x_nchw, w1, w2, wd, g1, b1, g2, b2, gd, bd, stride=1,
                target_tile_m=512):
    """PyTorch BasicBlock forward (training-mode BatchNorm batch statistics).

    Weights are HWIO: w1 (3,3,Cin,P), w2 (3,3,P,P), wd (1,1,Cin,P).
    """
    x = jnp.transpose(x_nchw, (0, 2, 3, 1)).astype(jnp.float32)   # NCHW -> NHWC
    n, h, w, cin = x.shape
    planes = w1.shape[-1]
    cp = _round_up(planes, LANE)

    if cin == planes and stride != 1:
        raise ValueError("identity residual requires stride == 1 "
                         "(PyTorch BasicBlock would fail the add here too)")

    # ---- conv1 (3x3, stride) + bn1 statistics ----
    taps1, win1, (_, ho, wo) = _conv3x3_taps(x, stride)
    w1s = _prep_weight(w1, cin, cp)
    y1, mean1, var1, tile_m1 = _conv_bn_stats(taps1, win1, w1s, wo, cp, target_tile_m)
    s1, t1 = _bn_scale_shift(g1, b1, mean1, var1, cp)

    # ---- bn1 apply + ReLU (bf16 output feeds the conv2 MXU path) ----
    z1 = _bn_apply(y1, s1, t1, tile_m1, relu=True, out_dtype=jnp.bfloat16)
    z1_img = z1.reshape(n, ho, wo, cp)

    # ---- conv2 (3x3, stride 1) + bn2 statistics ----
    taps2, win2, _ = _conv3x3_taps(z1_img, 1)
    w2s = _prep_weight(w2, cp, cp)
    y2, mean2, var2, tile_m2 = _conv_bn_stats(taps2, win2, w2s, wo, cp, target_tile_m)
    s2, t2 = _bn_scale_shift(g2, b2, mean2, var2, cp)

    # ---- residual branch ----
    if cin != planes:
        # downsample = conv1x1(stride) + BN, its BN applied fused in the final kernel
        tapsd, wind, _ = _conv1x1_taps(x, stride)
        wds = _prep_weight(wd, cin, cp)
        yd, meand, vard, _ = _conv_bn_stats(tapsd, wind, wds, wo, cp, target_tile_m)
        rs, rt = _bn_scale_shift(gd, bd, meand, vard, cp)
        residual = yd
    else:
        residual = jnp.zeros((n * h * w, cp), jnp.float32)
        residual = residual.at[:, :cin].set(x.reshape(n * h * w, cin))
        rs = jnp.ones((1, cp), jnp.float32)
        rt = jnp.zeros((1, cp), jnp.float32)

    # ---- bn2 apply + residual + ReLU (fused) ----
    out = _bn_apply(y2, s2, t2, tile_m2, residual=residual, res_scale=rs,
                    res_shift=rt, relu=True, out_dtype=jnp.float32)
    out = out.reshape(n, ho, wo, cp)[:, :, :, :planes]
    return jnp.transpose(out, (0, 3, 1, 2))                       # back to NCHW


def reference_basic_block(x_nchw, w1, w2, wd, g1, b1, g2, b2, gd, bd, stride=1,
                          match_mxu=True):
    """Plain-JAX reference.  With match_mxu=True the conv operands get the same
    bf16 rounding the MXU path uses, so the comparison isolates kernel bugs."""
    x = jnp.transpose(x_nchw, (0, 2, 3, 1)).astype(jnp.float32)
    cin, planes = x.shape[-1], w1.shape[-1]

    def rd(a):
        return a.astype(jnp.bfloat16).astype(jnp.float32) if match_mxu else a

    def conv(z, wgt, s, pad):
        return jax.lax.conv_general_dilated(
            rd(z), rd(wgt), (s, s), pad,
            dimension_numbers=("NHWC", "HWIO", "NHWC"),
            precision=jax.lax.Precision.HIGHEST)

    def bn(y, g, b):
        m = jnp.mean(y, axis=(0, 1, 2), keepdims=True)
        v = jnp.mean((y - m) ** 2, axis=(0, 1, 2), keepdims=True)
        return ((y - m) * jax.lax.rsqrt(v + BN_EPS) * g.reshape(1, 1, 1, -1)
                + b.reshape(1, 1, 1, -1))

    out = jax.nn.relu(bn(conv(x, w1, stride, ((1, 1), (1, 1))), g1, b1))
    out = bn(conv(out, w2, 1, ((1, 1), (1, 1))), g2, b2)
    if cin != planes:
        res = bn(conv(x, wd, stride, ((0, 0), (0, 0))), gd, bd)
    else:
        res = x
    out = jax.nn.relu(out + res)
    return jnp.transpose(out, (0, 3, 1, 2))


if __name__ == "__main__":
    root = jax.random.PRNGKey(0)

    def make_inputs(key, n, cin, hw, planes):
        ks = jax.random.split(key, 4)
        x = jax.random.normal(ks[0], (n, cin, hw, hw), jnp.float32)       # NCHW
        w1 = 0.1 * jax.random.normal(ks[1], (3, 3, cin, planes), jnp.float32)
        w2 = 0.1 * jax.random.normal(ks[2], (3, 3, planes, planes), jnp.float32)
        wd = 0.1 * jax.random.normal(ks[3], (1, 1, cin, planes), jnp.float32)
        ones = jnp.ones((1, planes), jnp.float32)      # BatchNorm2d default init
        zeros = jnp.zeros((1, planes), jnp.float32)
        return (x, w1, w2, wd, ones, zeros, ones, zeros, ones, zeros)

    configs = [
        # (n, cin, hw, planes, stride, target_tile_m)
        (2, 4, 16, 8, 1, 512),   # downsample (conv1x1) residual path
        (2, 8, 16, 8, 1, 128),   # identity residual + multi-tile grid / stat combine
        (2, 4, 16, 8, 2, 512),   # stride-2 downsample path (9-tap conv lowering)
    ]
    keys = jax.random.split(root, len(configs))
    for cfg_key, (n, cin, hw, planes, stride, tgt) in zip(keys, configs):
        args = make_inputs(cfg_key, n, cin, hw, planes)
        out = jax.block_until_ready(
            basic_block(*args, stride=stride, target_tile_m=tgt))
        ref = reference_basic_block(*args, stride=stride)
        ho = (hw + 2 - 3) // stride + 1
        assert out.shape == (n, planes, ho, ho), out.shape
        err = float(jnp.max(jnp.abs(out - ref)))
        assert jnp.allclose(out, ref, atol=5e-3, rtol=5e-3), err

    print("KERNEL_OK")
</pallas_src>

<mosaic_0001>
module attributes {stable_mosaic.version = 11 : i64} {
  func.func @_conv_stats_kernel(%arg0: i32, %arg1: memref<32x18x4xbf16, #tpu.memory_space<vmem>>, %arg2: memref<32x18x4xbf16, #tpu.memory_space<vmem>>, %arg3: memref<32x18x4xbf16, #tpu.memory_space<vmem>>, %arg4: memref<9x4x128xbf16, #tpu.memory_space<vmem>>, %arg5: memref<512x128xf32, #tpu.memory_space<vmem>>, %arg6: memref<8x128xf32, #tpu.memory_space<vmem>>, %arg7: memref<8x128xf32, #tpu.memory_space<vmem>>) attributes {dimension_semantics = [#tpu.dimension_semantics<parallel>], iteration_bounds = array<i64: 1>, scalar_prefetch = 0 : i64, scratch_operands = 0 : i64, tpu.core_type = #tpu.core_type<tc>, window_params = [{transform_indices = @transform_0, window_bounds = array<i64: 32, 18, 4>}, {transform_indices = @transform_1, window_bounds = array<i64: 32, 18, 4>}, {transform_indices = @transform_2, window_bounds = array<i64: 32, 18, 4>}, {pipeline_mode = #tpu.pipeline_mode<synchronous>, transform_indices = @transform_3, window_bounds = array<i64: 9, 4, 128>}, {transform_indices = @transform_4, window_bounds = array<i64: 512, 128>}, {transform_indices = @transform_5, window_bounds = array<i64: 8, 128>}, {transform_indices = @transform_6, window_bounds = array<i64: 8, 128>}]} {
    %cst = arith.constant 0.000000e+00 : f32
    %0 = vector.broadcast %cst : f32 to vector<512x128xf32>
    %c0 = arith.constant 0 : index
    %c0_0 = arith.constant 0 : index
    %c0_1 = arith.constant 0 : index
    %1 = vector.load %arg1[%c0, %c0_0, %c0_1] : memref<32x18x4xbf16, #tpu.memory_space<vmem>>, vector<32x16x4xbf16>
    %2 = vector.shape_cast %1 : vector<32x16x4xbf16> to vector<512x4xbf16>
    %c0_2 = arith.constant 0 : index
    %c0_3 = arith.constant 0 : index
    %c0_4 = arith.constant 0 : index
    %3 = vector.load %arg4[%c0_2, %c0_3, %c0_4] : memref<9x4x128xbf16, #tpu.memory_space<vmem>>, vector<1x4x128xbf16>
    %4 = vector.shape_cast %3 : vector<1x4x128xbf16> to vector<4x128xbf16>
    %cst_5 = arith.constant dense<0.000000e+00> : vector<512x128xf32>
    %5 = tpu.matmul %2, %4, %cst_5 {dimension_numbers = #tpu.dot_dimension_numbers<[1], [0], [0], [1], [0, 0, 1, 1], [], []>} : vector<512x4xbf16>, vector<4x128xbf16>, vector<512x128xf32> -> vector<512x128xf32>
    %6 = arith.addf %0, %5 : vector<512x128xf32>
    %c0_6 = arith.constant 0 : index
    %c1 = arith.constant 1 : index
    %c0_7 = arith.constant 0 : index
    %7 = vector.load %arg1[%c0_6, %c1, %c0_7] : memref<32x18x4xbf16, #tpu.memory_space<vmem>>, vector<32x16x4xbf16>
    %8 = vector.shape_cast %7 : vector<32x16x4xbf16> to vector<512x4xbf16>
    %c1_8 = arith.constant 1 : index
    %c0_9 = arith.constant 0 : index
    %c0_10 = arith.constant 0 : index
    %9 = vector.load %arg4[%c1_8, %c0_9, %c0_10] : memref<9x4x128xbf16, #tpu.memory_space<vmem>>, vector<1x4x128xbf16>
    %10 = vector.shape_cast %9 : vector<1x4x128xbf16> to vector<4x128xbf16>
    %cst_11 = arith.constant dense<0.000000e+00> : vector<512x128xf32>
    %11 = tpu.matmul %8, %10, %cst_11 {dimension_numbers = #tpu.dot_dimension_numbers<[1], [0], [0], [1], [0, 0, 1, 1], [], []>} : vector<512x4xbf16>, vector<4x128xbf16>, vector<512x128xf32> -> vector<512x128xf32>
    %12 = arith.addf %6, %11 : vector<512x128xf32>
    %c0_12 = arith.constant 0 : index
    %c2 = arith.constant 2 : index
    %c0_13 = arith.constant 0 : index
    %13 = vector.load %arg1[%c0_12, %c2, %c0_13] : memref<32x18x4xbf16, #tpu.memory_space<vmem>>, vector<32x16x4xbf16>
    %14 = vector.shape_cast %13 : vector<32x16x4xbf16> to vector<512x4xbf16>
    %c2_14 = arith.constant 2 : index
    %c0_15 = arith.constant 0 : index
    %c0_16 = arith.constant 0 : index
    %15 = vector.load %arg4[%c2_14, %c0_15, %c0_16] : memref<9x4x128xbf16, #tpu.memory_space<vmem>>, vector<1x4x128xbf16>
    %16 = vector.shape_cast %15 : vector<1x4x128xbf16> to vector<4x128xbf16>
    %cst_17 = arith.constant dense<0.000000e+00> : vector<512x128xf32>
    %17 = tpu.matmul %14, %16, %cst_17 {dimension_numbers = #tpu.dot_dimension_numbers<[1], [0], [0], [1], [0, 0, 1, 1], [], []>} : vector<512x4xbf16>, vector<4x128xbf16>, vector<512x128xf32> -> vector<512x128xf32>
    %18 = arith.addf %12, %17 : vector<512x128xf32>
    %c0_18 = arith.constant 0 : index
    %c0_19 = arith.constant 0 : index
    %c0_20 = arith.constant 0 : index
    %19 = vector.load %arg2[%c0_18, %c0_19, %c0_20] : memref<32x18x4xbf16, #tpu.memory_space<vmem>>, vector<32x16x4xbf16>
    %20 = vector.shape_cast %19 : vector<32x16x4xbf16> to vector<512x4xbf16>
    %c3 = arith.constant 3 : index
    %c0_21 = arith.constant 0 : index
    %c0_22 = arith.constant 0 : index
    %21 = vector.load %arg4[%c3, %c0_21, %c0_22] : memref<9x4x128xbf16, #tpu.memory_space<vmem>>, vector<1x4x128xbf16>
    %22 = vector.shape_cast %21 : vector<1x4x128xbf16> to vector<4x128xbf16>
    %cst_23 = arith.constant dense<0.000000e+00> : vector<512x128xf32>
    %23 = tpu.matmul %20, %22, %cst_23 {dimension_numbers = #tpu.dot_dimension_numbers<[1], [0], [0], [1], [0, 0, 1, 1], [], []>} : vector<512x4xbf16>, vector<4x128xbf16>, vector<512x128xf32> -> vector<512x128xf32>
    %24 = arith.addf %18, %23 : vector<512x128xf32>
    %c0_24 = arith.constant 0 : index
    %c1_25 = arith.constant 1 : index
    %c0_26 = arith.constant 0 : index
    %25 = vector.load %arg2[%c0_24, %c1_25, %c0_26] : memref<32x18x4xbf16, #tpu.memory_space<vmem>>, vector<32x16x4xbf16>
    %26 = vector.shape_cast %25 : vector<32x16x4xbf16> to vector<512x4xbf16>
    %c4 = arith.constant 4 : index
    %c0_27 = arith.constant 0 : index
    %c0_28 = arith.constant 0 : index
    %27 = vector.load %arg4[%c4, %c0_27, %c0_28] : memref<9x4x128xbf16, #tpu.memory_space<vmem>>, vector<1x4x128xbf16>
    %28 = vector.shape_cast %27 : vector<1x4x128xbf16> to vector<4x128xbf16>
    %cst_29 = arith.constant dense<0.000000e+00> : vector<512x128xf32>
    %29 = tpu.matmul %26, %28, %cst_29 {dimension_numbers = #tpu.dot_dimension_numbers<[1], [0], [0], [1], [0, 0, 1, 1], [], []>} : vector<512x4xbf16>, vector<4x128xbf16>, vector<512x128xf32> -> vector<512x128xf32>
    %30 = arith.addf %24, %29 : vector<512x128xf32>
    %c0_30 = arith.constant 0 : index
    %c2_31 = arith.constant 2 : index
    %c0_32 = arith.constant 0 : index
    %31 = vector.load %arg2[%c0_30, %c2_31, %c0_32] : memref<32x18x4xbf16, #tpu.memory_space<vmem>>, vector<32x16x4xbf16>
    %32 = vector.shape_cast %31 : vector<32x16x4xbf16> to vector<512x4xbf16>
    %c5 = arith.constant 5 : index
    %c0_33 = arith.constant 0 : index
    %c0_34 = arith.constant 0 : index
    %33 = vector.load %arg4[%c5, %c0_33, %c0_34] : memref<9x4x128xbf16, #tpu.memory_space<vmem>>, vector<1x4x128xbf16>
    %34 = vector.shape_cast %33 : vector<1x4x128xbf16> to vector<4x128xbf16>
    %cst_35 = arith.constant dense<0.000000e+00> : vector<512x128xf32>
    %35 = tpu.matmul %32, %34, %cst_35 {dimension_numbers = #tpu.dot_dimension_numbers<[1], [0], [0], [1], [0, 0, 1, 1], [], []>} : vector<512x4xbf16>, vector<4x128xbf16>, vector<512x128xf32> -> vector<512x128xf32>
    %36 = arith.addf %30, %35 : vector<512x128xf32>
    %c0_36 = arith.constant 0 : index
    %c0_37 = arith.constant 0 : index
    %c0_38 = arith.constant 0 : index
    %37 = vector.load %arg3[%c0_36, %c0_37, %c0_38] : memref<32x18x4xbf16, #tpu.memory_space<vmem>>, vector<32x16x4xbf16>
    %38 = vector.shape_cast %37 : vector<32x16x4xbf16> to vector<512x4xbf16>
    %c6 = arith.constant 6 : index
    %c0_39 = arith.constant 0 : index
    %c0_40 = arith.constant 0 : index
    %39 = vector.load %arg4[%c6, %c0_39, %c0_40] : memref<9x4x128xbf16, #tpu.memory_space<vmem>>, vector<1x4x128xbf16>
    %40 = vector.shape_cast %39 : vector<1x4x128xbf16> to vector<4x128xbf16>
    %cst_41 = arith.constant dense<0.000000e+00> : vector<512x128xf32>
    %41 = tpu.matmul %38, %40, %cst_41 {dimension_numbers = #tpu.dot_dimension_numbers<[1], [0], [0], [1], [0, 0, 1, 1], [], []>} : vector<512x4xbf16>, vector<4x128xbf16>, vector<512x128xf32> -> vector<512x128xf32>
    %42 = arith.addf %36, %41 : vector<512x128xf32>
    %c0_42 = arith.constant 0 : index
    %c1_43 = arith.constant 1 : index
    %c0_44 = arith.constant 0 : index
    %43 = vector.load %arg3[%c0_42, %c1_43, %c0_44] : memref<32x18x4xbf16, #tpu.memory_space<vmem>>, vector<32x16x4xbf16>
    %44 = vector.shape_cast %43 : vector<32x16x4xbf16> to vector<512x4xbf16>
    %c7 = arith.constant 7 : index
    %c0_45 = arith.constant 0 : index
    %c0_46 = arith.constant 0 : index
    %45 = vector.load %arg4[%c7, %c0_45, %c0_46] : memref<9x4x128xbf16, #tpu.memory_space<vmem>>, vector<1x4x128xbf16>
    %46 = vector.shape_cast %45 : vector<1x4x128xbf16> to vector<4x128xbf16>
    %cst_47 = arith.constant dense<0.000000e+00> : vector<512x128xf32>
    %47 = tpu.matmul %44, %46, %cst_47 {dimension_numbers = #tpu.dot_dimension_numbers<[1], [0], [0], [1], [0, 0, 1, 1], [], []>} : vector<512x4xbf16>, vector<4x128xbf16>, vector<512x128xf32> -> vector<512x128xf32>
    %48 = arith.addf %42, %47 : vector<512x128xf32>
    %c0_48 = arith.constant 0 : index
    %c2_49 = arith.constant 2 : index
    %c0_50 = arith.constant 0 : index
    %49 = vector.load %arg3[%c0_48, %c2_49, %c0_50] : memref<32x18x4xbf16, #tpu.memory_space<vmem>>, vector<32x16x4xbf16>
    %50 = vector.shape_cast %49 : vector<32x16x4xbf16> to vector<512x4xbf16>
    %c8 = arith.constant 8 : index
    %c0_51 = arith.constant 0 : index
    %c0_52 = arith.constant 0 : index
    %51 = vector.load %arg4[%c8, %c0_51, %c0_52] : memref<9x4x128xbf16, #tpu.memory_space<vmem>>, vector<1x4x128xbf16>
    %52 = vector.shape_cast %51 : vector<1x4x128xbf16> to vector<4x128xbf16>
    %cst_53 = arith.constant dense<0.000000e+00> : vector<512x128xf32>
    %53 = tpu.matmul %50, %52, %cst_53 {dimension_numbers = #tpu.dot_dimension_numbers<[1], [0], [0], [1], [0, 0, 1, 1], [], []>} : vector<512x4xbf16>, vector<4x128xbf16>, vector<512x128xf32> -> vector<512x128xf32>
    %54 = arith.addf %48, %53 : vector<512x128xf32>
    %c0_54 = arith.constant 0 : index
    %c0_55 = arith.constant 0 : index
    %55 = vector.load %arg5[%c0_54, %c0_55] : memref<512x128xf32, #tpu.memory_space<vmem>>, vector<512x128xf32>
    tpu.vector_store %arg5[%c0_54, %c0_55], %54 {strides = array<i32>} : memref<512x128xf32, #tpu.memory_space<vmem>>, vector<512x128xf32>,
    %cst_56 = arith.constant dense<0.000000e+00> : vector<128xf32>
    %56 = vector.multi_reduction <add>, %54, %cst_56 [0] : vector<512x128xf32> to vector<128xf32>
    %57 = vector.shape_cast %56 : vector<128xf32> to vector<1x128xf32>
    %cst_57 = arith.constant 0.001953125 : f32
    %58 = vector.broadcast %cst_57 : f32 to vector<1x128xf32>
    %59 = arith.mulf %57, %58 : vector<1x128xf32>
    %60 = vector.broadcast %59 : vector<1x128xf32> to vector<512x128xf32>
    %61 = arith.subf %54, %60 : vector<512x128xf32>
    %62 = arith.mulf %61, %61 : vector<512x128xf32>
    %cst_58 = arith.constant dense<0.000000e+00> : vector<128xf32>
    %63 = vector.multi_reduction <add>, %62, %cst_58 [0] : vector<512x128xf32> to vector<128xf32>
    %64 = vector.shape_cast %63 : vector<128xf32> to vector<1x128xf32>
    %65 = vector.shape_cast %59 : vector<1x128xf32> to vector<1x128xf32>
    %66 = vector.broadcast %65 : vector<1x128xf32> to vector<8x128xf32>
    %c0_59 = arith.constant 0 : index
    %c0_60 = arith.constant 0 : index
    %67 = vector.load %arg6[%c0_59, %c0_60] : memref<8x128xf32, #tpu.memory_space<vmem>>, vector<8x128xf32>
    tpu.vector_store %arg6[%c0_59, %c0_60], %66 {strides = array<i32>} : memref<8x128xf32, #tpu.memory_space<vmem>>, vector<8x128xf32>,
    %68 = vector.shape_cast %64 : vector<1x128xf32> to vector<1x128xf32>
    %69 = vector.broadcast %68 : vector<1x128xf32> to vector<8x128xf32>
    %c0_61 = arith.constant 0 : index
    %c0_62 = arith.constant 0 : index
    %70 = vector.load %arg7[%c0_61, %c0_62] : memref<8x128xf32, #tpu.memory_space<vmem>>, vector<8x128xf32>
    tpu.vector_store %arg7[%c0_61, %c0_62], %69 {strides = array<i32>} : memref<8x128xf32, #tpu.memory_space<vmem>>, vector<8x128xf32>,
    return
  }
  func.func @transform_0(%arg0: i32) -> (i32, i32, i32) {
    %c0_i32 = arith.constant 0 : i32
    %c0_i32_0 = arith.constant 0 : i32
    %c0_i32_1 = arith.constant 0 : i32
    return %arg0, %c0_i32, %c0_i32_0 : i32, i32, i32
  }
  func.func @transform_1(%arg0: i32) -> (i32, i32, i32) {
    %c0_i32 = arith.constant 0 : i32
    %c0_i32_0 = arith.constant 0 : i32
    %c0_i32_1 = arith.constant 0 : i32
    return %arg0, %c0_i32, %c0_i32_0 : i32, i32, i32
  }
  func.func @transform_2(%arg0: i32) -> (i32, i32, i32) {
    %c0_i32 = arith.constant 0 : i32
    %c0_i32_0 = arith.constant 0 : i32
    %c0_i32_1 = arith.constant 0 : i32
    return %arg0, %c0_i32, %c0_i32_0 : i32, i32, i32
  }
  func.func @transform_3(%arg0: i32) -> (i32, i32, i32) {
    %c0_i32 = arith.constant 0 : i32
    %c0_i32_0 = arith.constant 0 : i32
    %c0_i32_1 = arith.constant 0 : i32
    %c0_i32_2 = arith.constant 0 : i32
    return %c0_i32, %c0_i32_0, %c0_i32_1 : i32, i32, i32
  }
  func.func @transform_4(%arg0: i32) -> (i32, i32) {
    %c0_i32 = arith.constant 0 : i32
    %c0_i32_0 = arith.constant 0 : i32
    return %arg0, %c0_i32 : i32, i32
  }
  func.func @transform_5(%arg0: i32) -> (i32, i32) {
    %c0_i32 = arith.constant 0 : i32
    %c0_i32_0 = arith.constant 0 : i32
    return %arg0, %c0_i32 : i32, i32
  }
  func.func @transform_6(%arg0: i32) -> (i32, i32) {
    %c0_i32 = arith.constant 0 : i32
    %c0_i32_0 = arith.constant 0 : i32
    return %arg0, %c0_i32 : i32, i32
  }
}

</mosaic_0001>

<llo_original>
// kernel: tpu_custom_call.1
$region0: #{tpu_custom_call.1}
  #allocation0 [shape = 'u32[]', space=smem, size = 0x4, offset = 0x4, fixed_abs, tag = 'smem constant byte address 0x4 - core index']
  #allocation1 [shape = 'u32[144,128]{1,0:T(1,128)}', space=vmem, size = 0x12000, scoped, tag = 'internal scratch']
  %s0 = inlined_call_operand.vmem [shape: bf16[32,18,4], index: 0, kind: input, shape index: {}]
  %s1 = inlined_call_operand.vmem [shape: bf16[32,18,4], index: 1, kind: input, shape index: {}]
  %s2 = inlined_call_operand.vmem [shape: bf16[32,18,4], index: 2, kind: input, shape index: {}]
  %s3 = inlined_call_operand.vmem [shape: bf16[9,4,128], index: 3, kind: input, shape index: {}]
  %s4 = inlined_call_operand.hbm [shape: f32[512,128], index: 4, kind: output, shape index: {0}]
  %s5 = inlined_call_operand.hbm [shape: f32[8,128], index: 5, kind: output, shape index: {1}]
  %s6 = inlined_call_operand.hbm [shape: f32[8,128], index: 6, kind: output, shape index: {2}]
  %7 = xla_tuple %s4, %s5, %s6
  %s8 = sld [smem:[#allocation0]]
  $region42: #{tpu_custom_call.1} parent=0
    _
  %s10 = ssub.s32 1, %s8
  %s11 = scalar_select 0, %s10, %s8
  $region1: #{tpu_custom_call.1} parent=0
    #allocation2 [shape = 'u8[262144]{0}', space=vmem, size = 0x40000, scoped, tag = 'output window, operand 0, single buffered']
    #allocation3 [shape = 's32[1]{0}', space=sflag, size = 0x4, scoped, tag = 'scoped memory for tpu_custom_call.1']
    #allocation4 [shape = 'u8[4096]{0}', space=vmem, size = 0x1000, scoped, tag = 'output window, operand 1, single buffered']
    #allocation5 [shape = 's32[1]{0}', space=sflag, size = 0x4, scoped, tag = 'scoped memory for tpu_custom_call.1']
    #allocation6 [shape = 'u8[4096]{0}', space=vmem, size = 0x1000, scoped, tag = 'output window, operand 2, single buffered']
    %12 = vsyncpa [#allocation3], 0
    %13 = vsyncpa [#allocation5], 0
    // Predicated region
    $region2: #{tpu_custom_call.1} parent=1 // pred_check
      _
    $region3: #{tpu_custom_call.1} parent=1 // pred_check_branch
      %15 = sbr.rel (0) target = $region5
    $region4: #{tpu_custom_call.1} parent=1 // pred_region
      _
    $region5: #{tpu_custom_call.1} parent=1 // pred_fallthru
      _
    // Predicated region
    $region6: #{tpu_custom_call.1} parent=1 // pred_check
      _
    $region7: #{tpu_custom_call.1} parent=1 // pred_check_branch
      %17 = sbr.rel (0) target = $region9
    $region8: #{tpu_custom_call.1} parent=1 // pred_region
      _
    $region9: #{tpu_custom_call.1} parent=1 // pred_fallthru
      _
    // Predicated region
    $region10: #{tpu_custom_call.1} parent=1 // pred_check
      _
    $region11: #{tpu_custom_call.1} parent=1 // pred_check_branch
      %19 = sbr.rel (0) target = $region13
    $region12: #{tpu_custom_call.1} parent=1 // pred_region
      _
    $region13: #{tpu_custom_call.1} parent=1 // pred_fallthru
      _
    // Predicated region
    $region14: #{tpu_custom_call.1} parent=1 // pred_check
      _
    $region15: #{tpu_custom_call.1} parent=1 // pred_check_branch
      %21 = sbr.rel (0) target = $region17
    $region16: #{tpu_custom_call.1} parent=1 // pred_region
      _
    $region17: #{tpu_custom_call.1} parent=1 // pred_fallthru
      _
    %v23 = vld [vmem:[%s0] sm:$0xf]
    %v24 = vld [vmem:[%s0 + $0x4] sm:$0xf]
    %v25 = vld [vmem:[%s0 + $0xc] sm:$0xf]
    %v26 = vld [vmem:[%s0 + $0x10] sm:$0xf]
    %v27 = vld [vmem:[%s0 + $0x18] sm:$0xf]
    %v28 = vld [vmem:[%s0 + $0x1c] sm:$0xf]
    %v29 = vld [vmem:[%s0 + $0x24] sm:$0xf]
    %v30 = vld [vmem:[%s0 + $0x28] sm:$0xf]
    %v31 = vld [vmem:[%s0 + $0x30] sm:$0xf]
    %v32 = vld [vmem:[%s0 + $0x34] sm:$0xf]
    %v33 = vld [vmem:[%s0 + $0x3c] sm:$0xf]
    %v34 = vld [vmem:[%s0 + $0x40] sm:$0xf]
    %v35 = vld [vmem:[%s0 + $0x48] sm:$0xf]
    %v36 = vld [vmem:[%s0 + $0x4c] sm:$0xf]
    %v37 = vld [vmem:[%s0 + $0x54] sm:$0xf]
    %v38 = vld [vmem:[%s0 + $0x58] sm:$0xf]
    %v39 = vld [vmem:[%s0 + $0x60] sm:$0xf]
    %v40 = vld [vmem:[%s0 + $0x64] sm:$0xf]
    %v41 = vld [vmem:[%s0 + $0x6c] sm:$0xf]
    %v42 = vld [vmem:[%s0 + $0x70] sm:$0xf]
    %v43 = vld [vmem:[%s0 + $0x78] sm:$0xf]
    %v44 = vld [vmem:[%s0 + $0x7c] sm:$0xf]
    %v45 = vld [vmem:[%s0 + $0x84] sm:$0xf]
    %v46 = vld [vmem:[%s0 + $0x88] sm:$0xf]
    %v47 = vld [vmem:[%s0 + $0x90] sm:$0xf]
    %v48 = vld [vmem:[%s0 + $0x94] sm:$0xf]
    %v49 = vld [vmem:[%s0 + $0x9c] sm:$0xf]
    %v50 = vld [vmem:[%s0 + $0xa0] sm:$0xf]
    %v51 = vld [vmem:[%s0 + $0xa8] sm:$0xf]
    %v52 = vld [vmem:[%s0 + $0xac] sm:$0xf]
    %v53 = vld [vmem:[%s0 + $0xb4] sm:$0xf]
    %v54 = vld [vmem:[%s0 + $0xb8] sm:$0xf]
    %v55 = vld [vmem:[%s0 + $0xc0] sm:$0xf]
    %v56 = vld [vmem:[%s0 + $0xc4] sm:$0xf]
    %v57 = vld [vmem:[%s0 + $0xcc] sm:$0xf]
    %v58 = vld [vmem:[%s0 + $0xd0] sm:$0xf]
    %v59 = vld [vmem:[%s0 + $0xd8] sm:$0xf]
    %v60 = vld [vmem:[%s0 + $0xdc] sm:$0xf]
    %v61 = vld [vmem:[%s0 + $0xe4] sm:$0xf]
    %v62 = vld [vmem:[%s0 + $0xe8] sm:$0xf]
    %v63 = vld [vmem:[%s0 + $0xf0] sm:$0xf]
    %v64 = vld [vmem:[%s0 + $0xf4] sm:$0xf]
    %v65 = vld [vmem:[%s0 + $0xfc] sm:$0xf]
    %v66 = vld [vmem:[%s0 + $0x100] sm:$0xf]
    %v67 = vld [vmem:[%s0 + $0x108] sm:$0xf]
    %v68 = vld [vmem:[%s0 + $0x10c] sm:$0xf]
    %v69 = vld [vmem:[%s0 + $0x114] sm:$0xf]
    %v70 = vld [vmem:[%s0 + $0x118] sm:$0xf]
    %v71 = vld [vmem:[%s0 + $0x120] sm:$0xf]
    %v72 = vld [vmem:[%s0 + $0x124] sm:$0xf]
    %v73 = vld [vmem:[%s0 + $0x12c] sm:$0xf]
    %v74 = vld [vmem:[%s0 + $0x130] sm:$0xf]
    %v75 = vld [vmem:[%s0 + $0x138] sm:$0xf]
    %v76 = vld [vmem:[%s0 + $0x13c] sm:$0xf]
    %v77 = vld [vmem:[%s0 + $0x144] sm:$0xf]
    %v78 = vld [vmem:[%s0 + $0x148] sm:$0xf]
    %v79 = vld [vmem:[%s0 + $0x150] sm:$0xf]
    %v80 = vld [vmem:[%s0 + $0x154] sm:$0xf]
    %v81 = vld [vmem:[%s0 + $0x15c] sm:$0xf]
    %v82 = vld [vmem:[%s0 + $0x160] sm:$0xf]
    %v83 = vld [vmem:[%s0 + $0x168] sm:$0xf]
    %v84 = vld [vmem:[%s0 + $0x16c] sm:$0xf]
    %v85 = vld [vmem:[%s0 + $0x174] sm:$0xf]
    %v86 = vld [vmem:[%s0 + $0x178] sm:$0xf]
    %v87 = vld [vmem:[%s3] sm:$0x3]
    %v88 = vld [vmem:[%s0 + $0x8] sm:$0x1]
    %v89 = vld [vmem:[%s0 + $0x14] sm:$0x1]
    %v90 = vld [vmem:[%s0 + $0x20] sm:$0x1]
    %v91 = vld [vmem:[%s0 + $0x2c] sm:$0x1]
    %v92 = vld [vmem:[%s0 + $0x38] sm:$0x1]
    %v93 = vld [vmem:[%s0 + $0x44] sm:$0x1]
    %v94 = vld [vmem:[%s0 + $0x50] sm:$0x1]
    %v95 = vld [vmem:[%s0 + $0x5c] sm:$0x1]
    %v96 = vld [vmem:[%s0 + $0x68] sm:$0x1]
    %v97 = vld [vmem:[%s0 + $0x74] sm:$0x1]
    %v98 = vld [vmem:[%s0 + $0x80] sm:$0x1]
    %v99 = vld [vmem:[%s0 + $0x8c] sm:$0x1]
    %v100 = vld [vmem:[%s0 + $0x98] sm:$0x1]
    %v101 = vld [vmem:[%s0 + $0xa4] sm:$0x1]
    %v102 = vld [vmem:[%s0 + $0xb0] sm:$0x1]
    %v103 = vld [vmem:[%s0 + $0xbc] sm:$0x1]
    %v104 = vld [vmem:[%s0 + $0xc8] sm:$0x1]
    %v105 = vld [vmem:[%s0 + $0xd4] sm:$0x1]
    %v106 = vld [vmem:[%s0 + $0xe0] sm:$0x1]
    %v107 = vld [vmem:[%s0 + $0xec] sm:$0x1]
    %v108 = vld [vmem:[%s0 + $0xf8] sm:$0x1]
    %v109 = vld [vmem:[%s0 + $0x104] sm:$0x1]
    %v110 = vld [vmem:[%s0 + $0x110] sm:$0x1]
    %v111 = vld [vmem:[%s0 + $0x11c] sm:$0x1]
    %v112 = vld [vmem:[%s0 + $0x128] sm:$0x1]
    %v113 = vld [vmem:[%s0 + $0x134] sm:$0x1]
    %v114 = vld [vmem:[%s0 + $0x140] sm:$0x1]
    %v115 = vld [vmem:[%s0 + $0x14c] sm:$0x1]
    %v116 = vld [vmem:[%s0 + $0x158] sm:$0x1]
    %v117 = vld [vmem:[%s0 + $0x164] sm:$0x1]
    %v118 = vld [vmem:[%s0 + $0x170] sm:$0x1]
    %v119 = vld [vmem:[%s0 + $0x17c] sm:$0x1]
    %vm120 = vsmask.f32 3328
    %vm121 = vsmask.f32 7440
    %vm122 = vmor %vm120, %vm121
    %v124 = vshrl.u32 %v23, 16
    %v126 = vrot.slane %v124, 4
    %v127 = vshll.u32 %v23, 16
    %v129 = vrot.slane %v127, 5
    %v130 = vor.u32 %v126, %v129
    %v131 = vrot.slane %v130, 4
    %v133 = vshll.u32 %v24, 16
    %v135 = vrot.slane %v133, 5
    %v136 = vsel %vm122, %v131, %v135
    %v137 = vshrl.u32 %v24, 16
    %v139 = vrot.slane %v137, 4
    %v140 = vor.u32 %v139, %v135
    %v141 = vrot.slane %v140, 4
    %v143 = vshll.u32 %v88, 16
    %v145 = vrot.slane %v143, 5
    %v146 = vsel %vm122, %v141, %v145
    %v148 = vshrl.u32 %v25, 16
    %v150 = vrot.slane %v148, 4
    %v151 = vshll.u32 %v25, 16
    %v153 = vrot.slane %v151, 5
    %v154 = vor.u32 %v150, %v153
    %v155 = vrot.slane %v154, 4
    %v157 = vshll.u32 %v26, 16
    %v159 = vrot.slane %v157, 5
    %v160 = vsel %vm122, %v155, %v159
    %v161 = vshrl.u32 %v26, 16
    %v163 = vrot.slane %v161, 4
    %v164 = vor.u32 %v163, %v159
    %v165 = vrot.slane %v164, 4
    %v167 = vshll.u32 %v89, 16
    %v169 = vrot.slane %v167, 5
    %v170 = vsel %vm122, %v165, %v169
    %v172 = vshrl.u32 %v27, 16
    %v174 = vrot.slane %v172, 4
    %v175 = vshll.u32 %v27, 16
    %v177 = vrot.slane %v175, 5
    %v178 = vor.u32 %v174, %v177
    %v179 = vrot.slane %v178, 4
    %v181 = vshll.u32 %v28, 16
    %v183 = vrot.slane %v181, 5
    %v184 = vsel %vm122, %v179, %v183
    %v185 = vshrl.u32 %v28, 16
    %v187 = vrot.slane %v185, 4
    %v188 = vor.u32 %v187, %v183
    %v189 = vrot.slane %v188, 4
    %v191 = vshll.u32 %v90, 16
    %v193 = vrot.slane %v191, 5
    %v194 = vsel %vm122, %v189, %v193
    %v196 = vshrl.u32 %v29, 16
    %v198 = vrot.slane %v196, 4
    %v199 = vshll.u32 %v29, 16
    %v201 = vrot.slane %v199, 5
    %v202 = vor.u32 %v198, %v201
    %v203 = vrot.slane %v202, 4
    %v205 = vshll.u32 %v30, 16
    %v207 = vrot.slane %v205, 5
    %v208 = vsel %vm122, %v203, %v207
    %v209 = vshrl.u32 %v30, 16
    %v211 = vrot.slane %v209, 4
    %v212 = vor.u32 %v211, %v207
    %v213 = vrot.slane %v212, 4
    %v215 = vshll.u32 %v91, 16
    %v217 = vrot.slane %v215, 5
    %v218 = vsel %vm122, %v213, %v217
    %v220 = vshrl.u32 %v31, 16
    %v222 = vrot.slane %v220, 4
    %v223 = vshll.u32 %v31, 16
    %v225 = vrot.slane %v223, 5
    %v226 = vor.u32 %v222, %v225
    %v227 = vrot.slane %v226, 4
    %v229 = vshll.u32 %v32, 16
    %v231 = vrot.slane %v229, 5
    %v232 = vsel %vm122, %v227, %v231
    %v233 = vshrl.u32 %v32, 16
    %v235 = vrot.slane %v233, 4
    %v236 = vor.u32 %v235, %v231
    %v237 = vrot.slane %v236, 4
    %v239 = vshll.u32 %v92, 16
    %v241 = vrot.slane %v239, 5
    %v242 = vsel %vm122, %v237, %v241
    %v244 = vshrl.u32 %v33, 16
    %v246 = vrot.slane %v244, 4
    %v247 = vshll.u32 %v33, 16
    %v249 = vrot.slane %v247, 5
    %v250 = vor.u32 %v246, %v249
    %v251 = vrot.slane %v250, 4
    %v253 = vshll.u32 %v34, 16
    %v255 = vrot.slane %v253, 5
    %v256 = vsel %vm122, %v251, %v255
    %v257 = vshrl.u32 %v34, 16
    %v259 = vrot.slane %v257, 4
    %v260 = vor.u32 %v259, %v255
    %v261 = vrot.slane %v260, 4
    %v263 = vshll.u32 %v93, 16
    %v265 = vrot.slane %v263, 5
    %v266 = vsel %vm122, %v261, %v265
    %v268 = vshrl.u32 %v35, 16
    %v270 = vrot.slane %v268, 4
    %v271 = vshll.u32 %v35, 16
    %v273 = vrot.slane %v271, 5
    %v274 = vor.u32 %v270, %v273
    %v275 = vrot.slane %v274, 4
    %v277 = vshll.u32 %v36, 16
    %v279 = vrot.slane %v277, 5
    %v280 = vsel %vm122, %v275, %v279
    %v281 = vshrl.u32 %v36, 16
    %v283 = vrot.slane %v281, 4
    %v284 = vor.u32 %v283, %v279
    %v285 = vrot.slane %v284, 4
    %v287 = vshll.u32 %v94, 16
    %v289 = vrot.slane %v287, 5
    %v290 = vsel %vm122, %v285, %v289
    %v292 = vshrl.u32 %v37, 16
    %v294 = vrot.slane %v292, 4
    %v295 = vshll.u32 %v37, 16
    %v297 = vrot.slane %v295, 5
    %v298 = vor.u32 %v294, %v297
    %v299 = vrot.slane %v298, 4
    %v301 = vshll.u32 %v38, 16
    %v303 = vrot.slane %v301, 5
    %v304 = vsel %vm122, %v299, %v303
    %v305 = vshrl.u32 %v38, 16
    %v307 = vrot.slane %v305, 4
    %v308 = vor.u32 %v307, %v303
    %v309 = vrot.slane %v308, 4
    %v311 = vshll.u32 %v95, 16
    %v313 = vrot.slane %v311, 5
    %v314 = vsel %vm122, %v309, %v313
    %v316 = vshrl.u32 %v39, 16
    %v318 = vrot.slane %v316, 4
    %v319 = vshll.u32 %v39, 16
    %v321 = vrot.slane %v319, 5
    %v322 = vor.u32 %v318, %v321
    %v323 = vrot.slane %v322, 4
    %v325 = vshll.u32 %v40, 16
    %v327 = vrot.slane %v325, 5
    %v328 = vsel %vm122, %v323, %v327
    %v329 = vshrl.u32 %v40, 16
    %v331 = vrot.slane %v329, 4
    %v332 = vor.u32 %v331, %v327
    %v333 = vrot.slane %v332, 4
    %v335 = vshll.u32 %v96, 16
    %v337 = vrot.slane %v335, 5
    %v338 = vsel %vm122, %v333, %v337
    %v340 = vshrl.u32 %v41, 16
    %v342 = vrot.slane %v340, 4
    %v343 = vshll.u32 %v41, 16
    %v345 = vrot.slane %v343, 5
    %v346 = vor.u32 %v342, %v345
    %v347 = vrot.slane %v346, 4
    %v349 = vshll.u32 %v42, 16
    %v351 = vrot.slane %v349, 5
    %v352 = vsel %vm122, %v347, %v351
    %v353 = vshrl.u32 %v42, 16
    %v355 = vrot.slane %v353, 4
    %v356 = vor.u32 %v355, %v351
    %v357 = vrot.slane %v356, 4
    %v359 = vshll.u32 %v97, 16
    %v361 = vrot.slane %v359, 5
    %v362 = vsel %vm122, %v357, %v361
    %v364 = vshrl.u32 %v43, 16
    %v366 = vrot.slane %v364, 4
    %v367 = vshll.u32 %v43, 16
    %v369 = vrot.slane %v367, 5
    %v370 = vor.u32 %v366, %v369
    %v371 = vrot.slane %v370, 4
    %v373 = vshll.u32 %v44, 16
    %v375 = vrot.slane %v373, 5
    %v376 = vsel %vm122, %v371, %v375
    %v377 = vshrl.u32 %v44, 16
    %v379 = vrot.slane %v377, 4
    %v380 = vor.u32 %v379, %v375
    %v381 = vrot.slane %v380, 4
    %v383 = vshll.u32 %v98, 16
    %v385 = vrot.slane %v383, 5
    %v386 = vsel %vm122, %v381, %v385
    %v388 = vshrl.u32 %v45, 16
    %v390 = vrot.slane %v388, 4
    %v391 = vshll.u32 %v45, 16
    %v393 = vrot.slane %v391, 5
    %v394 = vor.u32 %v390, %v393
    %v395 = vrot.slane %v394, 4
    %v397 = vshll.u32 %v46, 16
    %v399 = vrot.slane %v397, 5
    %v400 = vsel %vm122, %v395, %v399
    %v401 = vshrl.u32 %v46, 16
    %v403 = vrot.slane %v401, 4
    %v404 = vor.u32 %v403, %v399
    %v405 = vrot.slane %v404, 4
    %v407 = vshll.u32 %v99, 16
    %v409 = vrot.slane %v407, 5
    %v410 = vsel %vm122, %v405, %v409
    %v412 = vshrl.u32 %v47, 16
    %v414 = vrot.slane %v412, 4
    %v415 = vshll.u32 %v47, 16
    %v417 = vrot.slane %v415, 5
    %v418 = vor.u32 %v414, %v417
    %v419 = vrot.slane %v418, 4
    %v421 = vshll.u32 %v48, 16
    %v423 = vrot.slane %v421, 5
    %v424 = vsel %vm122, %v419, %v423
    %v425 = vshrl.u32 %v48, 16
    %v427 = vrot.slane %v425, 4
    %v428 = vor.u32 %v427, %v423
    %v429 = vrot.slane %v428, 4
    %v431 = vshll.u32 %v100, 16
    %v433 = vrot.slane %v431, 5
    %v434 = vsel %vm122, %v429, %v433
    %v436 = vshrl.u32 %v49, 16
    %v438 = vrot.slane %v436, 4
    %v439 = vshll.u32 %v49, 16
    %v441 = vrot.slane %v439, 5
    %v442 = vor.u32 %v438, %v441
    %v443 = vrot.slane %v442, 4
    %v445 = vshll.u32 %v50, 16
    %v447 = vrot.slane %v445, 5
    %v448 = vsel %vm122, %v443, %v447
    %v449 = vshrl.u32 %v50, 16
    %v451 = vrot.slane %v449, 4
    %v452 = vor.u32 %v451, %v447
    %v453 = vrot.slane %v452, 4
    %v455 = vshll.u32 %v101, 16
    %v457 = vrot.slane %v455, 5
    %v458 = vsel %vm122, %v453, %v457
    %v460 = vshrl.u32 %v51, 16
    %v462 = vrot.slane %v460, 4
    %v463 = vshll.u32 %v51, 16
    %v465 = vrot.slane %v463, 5
    %v466 = vor.u32 %v462, %v465
    %v467 = vrot.slane %v466, 4
    %v469 = vshll.u32 %v52, 16
    %v471 = vrot.slane %v469, 5
    %v472 = vsel %vm122, %v467, %v471
    %v473 = vshrl.u32 %v52, 16
    %v475 = vrot.slane %v473, 4
    %v476 = vor.u32 %v475, %v471
    %v477 = vrot.slane %v476, 4
    %v479 = vshll.u32 %v102, 16
    %v481 = vrot.slane %v479, 5
    %v482 = vsel %vm122, %v477, %v481
    %v484 = vshrl.u32 %v53, 16
    %v486 = vrot.slane %v484, 4
    %v487 = vshll.u32 %v53, 16
    %v489 = vrot.slane %v487, 5
    %v490 = vor.u32 %v486, %v489
    %v491 = vrot.slane %v490, 4
    %v493 = vshll.u32 %v54, 16
    %v495 = vrot.slane %v493, 5
    %v496 = vsel %vm122, %v491, %v495
    %v497 = vshrl.u32 %v54, 16
    %v499 = vrot.slane %v497, 4
    %v500 = vor.u32 %v499, %v495
    %v501 = vrot.slane %v500, 4
    %v503 = vshll.u32 %v103, 16
    %v505 = vrot.slane %v503, 5
    %v506 = vsel %vm122, %v501, %v505
    %v508 = vshrl.u32 %v55, 16
    %v510 = vrot.slane %v508, 4
    %v511 = vshll.u32 %v55, 16
    %v513 = vrot.slane %v511, 5
    %v514 = vor.u32 %v510, %v513
    %v515 = vrot.slane %v514, 4
    %v517 = vshll.u32 %v56, 16
    %v519 = vrot.slane %v517, 5
    %v520 = vsel %vm122, %v515, %v519
    %v521 = vshrl.u32 %v56, 16
    %v523 = vrot.slane %v521, 4
    %v524 = vor.u32 %v523, %v519
    %v525 = vrot.slane %v524, 4
    %v527 = vshll.u32 %v104, 16
    %v529 = vrot.slane %v527, 5
    %v530 = vsel %vm122, %v525, %v529
    %v532 = vshrl.u32 %v57, 16
    %v534 = vrot.slane %v532, 4
    %v535 = vshll.u32 %v57, 16
    %v537 = vrot.slane %v535, 5
    %v538 = vor.u32 %v534, %v537
    %v539 = vrot.slane %v538, 4
    %v541 = vshll.u32 %v58, 16
    %v543 = vrot.slane %v541, 5
    %v544 = vsel %vm122, %v539, %v543
    %v545 = vshrl.u32 %v58, 16
    %v547 = vrot.slane %v545, 4
    %v548 = vor.u32 %v547, %v543
    %v549 = vrot.slane %v548, 4
    %v551 = vshll.u32 %v105, 16
    %v553 = vrot.slane %v551, 5
    %v554 = vsel %vm122, %v549, %v553
    %v556 = vshrl.u32 %v59, 16
    %v558 = vrot.slane %v556, 4
    %v559 = vshll.u32 %v59, 16
    %v561 = vrot.slane %v559, 5
    %v562 = vor.u32 %v558, %v561
    %v563 = vrot.slane %v562, 4
    %v565 = vshll.u32 %v60, 16
    %v567 = vrot.slane %v565, 5
    %v568 = vsel %vm122, %v563, %v567
    %v569 = vshrl.u32 %v60, 16
    %v571 = vrot.slane %v569, 4
    %v572 = vor.u32 %v571, %v567
    %v573 = vrot.slane %v572, 4
    %v575 = vshll.u32 %v106, 16
    %v577 = vrot.slane %v575, 5
    %v578 = vsel %vm122, %v573, %v577
    %v580 = vshrl.u32 %v61, 16
    %v582 = vrot.slane %v580, 4
    %v583 = vshll.u32 %v61, 16
    %v585 = vrot.slane %v583, 5
    %v586 = vor.u32 %v582, %v585
    %v587 = vrot.slane %v586, 4
    %v589 = vshll.u32 %v62, 16
    %v591 = vrot.slane %v589, 5
    %v592 = vsel %vm122, %v587, %v591
    %v593 = vshrl.u32 %v62, 16
    %v595 = vrot.slane %v593, 4
    %v596 = vor.u32 %v595, %v591
    %v597 = vrot.slane %v596, 4
    %v599 = vshll.u32 %v107, 16
    %v601 = vrot.slane %v599, 5
    %v602 = vsel %vm122, %v597, %v601
    %v604 = vshrl.u32 %v63, 16
    %v606 = vrot.slane %v604, 4
    %v607 = vshll.u32 %v63, 16
    %v609 = vrot.slane %v607, 5
    %v610 = vor.u32 %v606, %v609
    %v611 = vrot.slane %v610, 4
    %v613 = vshll.u32 %v64, 16
    %v615 = vrot.slane %v613, 5
    %v616 = vsel %vm122, %v611, %v615
    %v617 = vshrl.u32 %v64, 16
    %v619 = vrot.slane %v617, 4
    %v620 = vor.u32 %v619, %v615
    %v621 = vrot.slane %v620, 4
    %v623 = vshll.u32 %v108, 16
    %v625 = vrot.slane %v623, 5
    %v626 = vsel %vm122, %v621, %v625
    %v628 = vshrl.u32 %v65, 16
    %v630 = vrot.slane %v628, 4
    %v631 = vshll.u32 %v65, 16
    %v633 = vrot.slane %v631, 5
    %v634 = vor.u32 %v630, %v633
    %v635 = vrot.slane %v634, 4
    %v637 = vshll.u32 %v66, 16
    %v639 = vrot.slane %v637, 5
    %v640 = vsel %vm122, %v635, %v639
    %v641 = vshrl.u32 %v66, 16
    %v643 = vrot.slane %v641, 4
    %v644 = vor.u32 %v643, %v639
    %v645 = vrot.slane %v644, 4
    %v647 = vshll.u32 %v109, 16
    %v649 = vrot.slane %v647, 5
    %v650 = vsel %vm122, %v645, %v649
    %v652 = vshrl.u32 %v67, 16
    %v654 = vrot.slane %v652, 4
    %v655 = vshll.u32 %v67, 16
    %v657 = vrot.slane %v655, 5
    %v658 = vor.u32 %v654, %v657
    %v659 = vrot.slane %v658, 4
    %v661 = vshll.u32 %v68, 16
    %v663 = vrot.slane %v661, 5
    %v664 = vsel %vm122, %v659, %v663
    %v665 = vshrl.u32 %v68, 16
    %v667 = vrot.slane %v665, 4
    %v668 = vor.u32 %v667, %v663
    %v669 = vrot.slane %v668, 4
    %v671 = vshll.u32 %v110, 16
    %v673 = vrot.slane %v671, 5
    %v674 = vsel %vm122, %v669, %v673
    %v676 = vshrl.u32 %v69, 16
    %v678 = vrot.slane %v676, 4
    %v679 = vshll.u32 %v69, 16
    %v681 = vrot.slane %v679, 5
    %v682 = vor.u32 %v678, %v681
    %v683 = vrot.slane %v682, 4
    %v685 = vshll.u32 %v70, 16
    %v687 = vrot.slane %v685, 5
    %v688 = vsel %vm122, %v683, %v687
    %v689 = vshrl.u32 %v70, 16
    %v691 = vrot.slane %v689, 4
    %v692 = vor.u32 %v691, %v687
    %v693 = vrot.slane %v692, 4
    %v695 = vshll.u32 %v111, 16
    %v697 = vrot.slane %v695, 5
    %v698 = vsel %vm122, %v693, %v697
    %v700 = vshrl.u32 %v71, 16
    %v702 = vrot.slane %v700, 4
    %v703 = vshll.u32 %v71, 16
    %v705 = vrot.slane %v703, 5
    %v706 = vor.u32 %v702, %v705
    %v707 = vrot.slane %v706, 4
    %v709 = vshll.u32 %v72, 16
    %v711 = vrot.slane %v709, 5
    %v712 = vsel %vm122, %v707, %v711
    %v713 = vshrl.u32 %v72, 16
    %v715 = vrot.slane %v713, 4
    %v716 = vor.u32 %v715, %v711
    %v717 = vrot.slane %v716, 4
    %v719 = vshll.u32 %v112, 16
    %v721 = vrot.slane %v719, 5
    %v722 = vsel %vm122, %v717, %v721
    %v724 = vshrl.u32 %v73, 16
    %v726 = vrot.slane %v724, 4
    %v727 = vshll.u32 %v73, 16
    %v729 = vrot.slane %v727, 5
    %v730 = vor.u32 %v726, %v729
    %v731 = vrot.slane %v730, 4
    %v733 = vshll.u32 %v74, 16
    %v735 = vrot.slane %v733, 5
    %v736 = vsel %vm122, %v731, %v735
    %v737 = vshrl.u32 %v74, 16
    %v739 = vrot.slane %v737, 4
    %v740 = vor.u32 %v739, %v735
    %v741 = vrot.slane %v740, 4
    %v743 = vshll.u32 %v113, 16
    %v745 = vrot.slane %v743, 5
    %v746 = vsel %vm122, %v741, %v745
    %v748 = vshrl.u32 %v75, 16
    %v750 = vrot.slane %v748, 4
    %v751 = vshll.u32 %v75, 16
    %v753 = vrot.slane %v751, 5
    %v754 = vor.u32 %v750, %v753
    %v755 = vrot.slane %v754, 4
    %v757 = vshll.u32 %v76, 16
    %v759 = vrot.slane %v757, 5
    %v760 = vsel %vm122, %v755, %v759
    %v761 = vshrl.u32 %v76, 16
    %v763 = vrot.slane %v761, 4
    %v764 = vor.u32 %v763, %v759
    %v765 = vrot.slane %v764, 4
    %v767 = vshll.u32 %v114, 16
    %v769 = vrot.slane %v767, 5
    %v770 = vsel %vm122, %v765, %v769
    %v772 = vshrl.u32 %v77, 16
    %v774 = vrot.slane %v772, 4
    %v775 = vshll.u32 %v77, 16
    %v777 = vrot.slane %v775, 5
    %v778 = vor.u32 %v774, %v777
    %v779 = vrot.slane %v778, 4
    %v781 = vshll.u32 %v78, 16
    %v783 = vrot.slane %v781, 5
    %v784 = vsel %vm122, %v779, %v783
    %v785 = vshrl.u32 %v78, 16
    %v787 = vrot.slane %v785, 4
    %v788 = vor.u32 %v787, %v783
    %v789 = vrot.slane %v788, 4
    %v791 = vshll.u32 %v115, 16
    %v793 = vrot.slane %v791, 5
    %v794 = vsel %vm122, %v789, %v793
    %v796 = vshrl.u32 %v79, 16
    %v798 = vrot.slane %v796, 4
    %v799 = vshll.u32 %v79, 16
    %v801 = vrot.slane %v799, 5
    %v802 = vor.u32 %v798, %v801
    %v803 = vrot.slane %v802, 4
    %v805 = vshll.u32 %v80, 16
    %v807 = vrot.slane %v805, 5
    %v808 = vsel %vm122, %v803, %v807
    %v809 = vshrl.u32 %v80, 16
    %v811 = vrot.slane %v809, 4
    %v812 = vor.u32 %v811, %v807
    %v813 = vrot.slane %v812, 4
    %v815 = vshll.u32 %v116, 16
    %v817 = vrot.slane %v815, 5
    %v818 = vsel %vm122, %v813, %v817
    %v820 = vshrl.u32 %v81, 16
    %v822 = vrot.slane %v820, 4
    %v823 = vshll.u32 %v81, 16
    %v825 = vrot.slane %v823, 5
    %v826 = vor.u32 %v822, %v825
    %v827 = vrot.slane %v826, 4
    %v829 = vshll.u32 %v82, 16
    %v831 = vrot.slane %v829, 5
    %v832 = vsel %vm122, %v827, %v831
    %v833 = vshrl.u32 %v82, 16
    %v835 = vrot.slane %v833, 4
    %v836 = vor.u32 %v835, %v831
    %v837 = vrot.slane %v836, 4
    %v839 = vshll.u32 %v117, 16
    %v841 = vrot.slane %v839, 5
    %v842 = vsel %vm122, %v837, %v841
    %v844 = vshrl.u32 %v83, 16
    %v846 = vrot.slane %v844, 4
    %v847 = vshll.u32 %v83, 16
    %v849 = vrot.slane %v847, 5
    %v850 = vor.u32 %v846, %v849
    %v851 = vrot.slane %v850, 4
    %v853 = vshll.u32 %v84, 16
    %v855 = vrot.slane %v853, 5
    %v856 = vsel %vm122, %v851, %v855
    %v857 = vshrl.u32 %v84, 16
    %v859 = vrot.slane %v857, 4
    %v860 = vor.u32 %v859, %v855
    %v861 = vrot.slane %v860, 4
    %v863 = vshll.u32 %v118, 16
    %v865 = vrot.slane %v863, 5
    %v866 = vsel %vm122, %v861, %v865
    %v868 = vshrl.u32 %v85, 16
    %v870 = vrot.slane %v868, 4
    %v871 = vshll.u32 %v85, 16
    %v873 = vrot.slane %v871, 5
    %v874 = vor.u32 %v870, %v873
    %v875 = vrot.slane %v874, 4
    %v877 = vshll.u32 %v86, 16
    %v879 = vrot.slane %v877, 5
    %v880 = vsel %vm122, %v875, %v879
    %v881 = vshrl.u32 %v86, 16
    %v883 = vrot.slane %v881, 4
    %v884 = vor.u32 %v883, %v879
    %v885 = vrot.slane %v884, 4
    %v887 = vshll.u32 %v119, 16
    %v889 = vrot.slane %v887, 5
    %v890 = vsel %vm122, %v885, %v889
    %s891 = scalar_lea.vmem %s3, 2
    %v892 = vld [vmem:[%s891] sm:$0x3]
    %v893 = vunpack.c.l.b16 %v136
    %v894 = vunpack.c.l.b16 %v146
    %v895 = vunpack.c.l.b16 %v160
    %v896 = vunpack.c.l.b16 %v170
    %v897 = vunpack.c.l.b16 %v184
    %v898 = vunpack.c.l.b16 %v194
    %v899 = vunpack.c.l.b16 %v208
    %v900 = vunpack.c.l.b16 %v218
    %v901 = vunpack.c.l.b16 %v232
    %v902 = vunpack.c.l.b16 %v242
    %v903 = vunpack.c.l.b16 %v256
    %v904 = vunpack.c.l.b16 %v266
    %v905 = vunpack.c.l.b16 %v280
    %v906 = vunpack.c.l.b16 %v290
    %v907 = vunpack.c.l.b16 %v304
    %v908 = vunpack.c.l.b16 %v314
    %v909 = vunpack.c.l.b16 %v328
    %v910 = vunpack.c.l.b16 %v338
    %v911 = vunpack.c.l.b16 %v352
    %v912 = vunpack.c.l.b16 %v362
    %v913 = vunpack.c.l.b16 %v376
    %v914 = vunpack.c.l.b16 %v386
    %v915 = vunpack.c.l.b16 %v400
    %v916 = vunpack.c.l.b16 %v410
    %v917 = vunpack.c.l.b16 %v424
    %v918 = vunpack.c.l.b16 %v434
    %v919 = vunpack.c.l.b16 %v448
    %v920 = vunpack.c.l.b16 %v458
    %v921 = vunpack.c.l.b16 %v472
    %v922 = vunpack.c.l.b16 %v482
    %v923 = vunpack.c.l.b16 %v496
    %v924 = vunpack.c.l.b16 %v506
    %v925 = vunpack.c.l.b16 %v520
    %v926 = vunpack.c.l.b16 %v530
    %v927 = vunpack.c.l.b16 %v544
    %v928 = vunpack.c.l.b16 %v554
    %v929 = vunpack.c.l.b16 %v568
    %v930 = vunpack.c.l.b16 %v578
    %v931 = vunpack.c.l.b16 %v592
    %v932 = vunpack.c.l.b16 %v602
    %v933 = vunpack.c.l.b16 %v616
    %v934 = vunpack.c.l.b16 %v626
    %v935 = vunpack.c.l.b16 %v640
    %v936 = vunpack.c.l.b16 %v650
    %v937 = vunpack.c.l.b16 %v664
    %v938 = vunpack.c.l.b16 %v674
    %v939 = vunpack.c.l.b16 %v688
    %v940 = vunpack.c.l.b16 %v698
    %v941 = vunpack.c.l.b16 %v712
    %v942 = vunpack.c.l.b16 %v722
    %v943 = vunpack.c.l.b16 %v736
    %v944 = vunpack.c.l.b16 %v746
    %v945 = vunpack.c.l.b16 %v760
    %v946 = vunpack.c.l.b16 %v770
    %v947 = vunpack.c.l.b16 %v784
    %v948 = vunpack.c.l.b16 %v794
    %v949 = vunpack.c.l.b16 %v808
    %v950 = vunpack.c.l.b16 %v818
    %v951 = vunpack.c.l.b16 %v832
    %v952 = vunpack.c.l.b16 %v842
    %v953 = vunpack.c.l.b16 %v856
    %v954 = vunpack.c.l.b16 %v866
    %v955 = vunpack.c.l.b16 %v880
    %v956 = vunpack.c.l.b16 %v890
    %v957 = vpack.c.b16 %v894, %v893
    %v958 = vpack.c.b16 %v896, %v895
    %v959 = vpack.c.b16 %v898, %v897
    %v960 = vpack.c.b16 %v900, %v899
    %v961 = vpack.c.b16 %v902, %v901
    %v962 = vpack.c.b16 %v904, %v903
    %v963 = vpack.c.b16 %v906, %v905
    %v964 = vpack.c.b16 %v908, %v907
    %v965 = vpack.c.b16 %v910, %v909
    %v966 = vpack.c.b16 %v912, %v911
    %v967 = vpack.c.b16 %v914, %v913
    %v968 = vpack.c.b16 %v916, %v915
    %v969 = vpack.c.b16 %v918, %v917
    %v970 = vpack.c.b16 %v920, %v919
    %v971 = vpack.c.b16 %v922, %v921
    %v972 = vpack.c.b16 %v924, %v923
    %v973 = vpack.c.b16 %v926, %v925
    %v974 = vpack.c.b16 %v928, %v927
    %v975 = vpack.c.b16 %v930, %v929
    %v976 = vpack.c.b16 %v932, %v931
    %v977 = vpack.c.b16 %v934, %v933
    %v978 = vpack.c.b16 %v936, %v935
    %v979 = vpack.c.b16 %v938, %v937
    %v980 = vpack.c.b16 %v940, %v939
    %v981 = vpack.c.b16 %v942, %v941
    %v982 = vpack.c.b16 %v944, %v943
    %v983 = vpack.c.b16 %v946, %v945
    %v984 = vpack.c.b16 %v948, %v947
    %v985 = vpack.c.b16 %v950, %v949
    %v986 = vpack.c.b16 %v952, %v951
    %v987 = vpack.c.b16 %v954, %v953
    %v988 = vpack.c.b16 %v956, %v955
    %vm989 = vcmask 31744
    %v991 = vsel %vm989, %v957, 0
    %v994 = vsel %vm989, %v958, 0
    %v997 = vsel %vm989, %v959, 0
    %v1000 = vsel %vm989, %v960, 0
    %v1003 = vsel %vm989, %v961, 0
    %v1006 = vsel %vm989, %v962, 0
    %v1009 = vsel %vm989, %v963, 0
    %v1012 = vsel %vm989, %v964, 0
    %v1015 = vsel %vm989, %v965, 0
    %v1018 = vsel %vm989, %v966, 0
    %v1021 = vsel %vm989, %v967, 0
    %v1024 = vsel %vm989, %v968, 0
    %v1027 = vsel %vm989, %v969, 0
    %v1030 = vsel %vm989, %v970, 0
    %v1033 = vsel %vm989, %v971, 0
    %v1036 = vsel %vm989, %v972, 0
    %v1039 = vsel %vm989, %v973, 0
    %v1042 = vsel %vm989, %v974, 0
    %v1045 = vsel %vm989, %v975, 0
    %v1048 = vsel %vm989, %v976, 0
    %v1051 = vsel %vm989, %v977, 0
    %v1054 = vsel %vm989, %v978, 0
    %v1057 = vsel %vm989, %v979, 0
    %v1060 = vsel %vm989, %v980, 0
    %v1063 = vsel %vm989, %v981, 0
    %v1066 = vsel %vm989, %v982, 0
    %v1069 = vsel %vm989, %v983, 0
    %v1072 = vsel %vm989, %v984, 0
    %v1075 = vsel %vm989, %v985, 0
    %v1078 = vsel %vm989, %v986, 0
    %v1081 = vsel %vm989, %v987, 0
    %v1084 = vsel %vm989, %v988, 0
    %vm1086 = vcmask 1041408
    %v1088 = vsel %vm1086, %v892, 0
    %1090 = vmatprep.subr.bf16.mxu0 0
    %1091 = vmatpush1.bf16.msra.mxu0 0
    %1092 = vmatprep.subr.bf16.mxu0 0
    %1093 = vmatpush1.bf16.msra.mxu0 0
    %1094 = vmatprep.subr.bf16.mxu0 0
    %1095 = vmatpush1.bf16.msra.mxu0 0
    %1096 = vmatprep.subr.bf16.mxu0 0
    %1097 = vmatpush1.bf16.msra.mxu0 0
    %1098 = vmatprep.subr.bf16.mxu0 0
    %1099 = vmatpush1.bf16.msra.mxu0 0
    %1100 = vmatprep.subr.bf16.mxu0 0
    %1101 = vmatpush1.bf16.msra.mxu0 0
    %1102 = vmatprep.subr.bf16.mxu0 0
    %1103 = vmatpush1.bf16.msra.mxu0 0
    %1104 = vmatprep.subr.bf16.mxu0 0
    %1105 = vmatpush1.bf16.msra.mxu0 %v1088
    %1106 = vmatprep.subr.bf16.mxu0 0
    %1107 = vmatpush2.bf16.msra.mxu0 0
    %1108 = vmatprep.subr.bf16.mxu0 0
    %1109 = vmatpush2.bf16.msra.mxu0 0
    %1110 = vmatprep.subr.bf16.mxu0 0
    %1111 = vmatpush2.bf16.msra.mxu0 0
    %1112 = vmatprep.subr.bf16.mxu0 0
    %1113 = vmatpush2.bf16.msra.mxu0 0
    %1114 = vmatprep.subr.bf16.mxu0 0
    %1115 = vmatpush2.bf16.msra.mxu0 0
    %1116 = vmatprep.subr.bf16.mxu0 0
    %1117 = vmatpush2.bf16.msra.mxu0 0
    %1118 = vmatprep.subr.bf16.mxu0 0
    %1119 = vmatpush2.bf16.msra.mxu0 0
    %1120 = vmatprep.subr.bf16.mxu0 0
    %1121 = vmatpush2.bf16.msra.mxu0 0
    %1122 = vmatprep.mubr.bf16.mxu0 0
    %1123 = vmatmul.mubr.bf16.gmra.mxu0 %v991
    %v1124 = vpop.f32.mrf.mxu0
    %v1125 = vadd.f32 0.0, %v1124
    %v1126 = vpop.f32.mrf.mxu0
    %v1127 = vpop.f32.mrf.mxu0
    %v1128 = vadd.f32 0.0, %v1127
    %v1129 = vpop.f32.mrf.mxu0
    %1130 = vmatprep.mubr.bf16.mxu0 0
    %1131 = vmatmul.mubr.bf16.gmra.mxu0 %v994
    %v1132 = vpop.f32.mrf.mxu0
    %v1133 = vadd.f32 0.0, %v1132
    %v1134 = vpop.f32.mrf.mxu0
    %v1135 = vpop.f32.mrf.mxu0
    %v1136 = vadd.f32 0.0, %v1135
    %v1137 = vpop.f32.mrf.mxu0
    %1138 = vmatprep.mubr.bf16.mxu0 0
    %1139 = vmatmul.mubr.bf16.gmra.mxu0 %v997
    %v1140 = vpop.f32.mrf.mxu0
    %v1141 = vadd.f32 0.0, %v1140
    %v1142 = vpop.f32.mrf.mxu0
    %v1143 = vpop.f32.mrf.mxu0
    %v1144 = vadd.f32 0.0, %v1143
    %v1145 = vpop.f32.mrf.mxu0
    %1146 = vmatprep.mubr.bf16.mxu0 0
    %1147 = vmatmul.mubr.bf16.gmra.mxu0 %v1000
    %v1148 = vpop.f32.mrf.mxu0
    %v1149 = vadd.f32 0.0, %v1148
    %v1150 = vpop.f32.mrf.mxu0
    %v1151 = vpop.f32.mrf.mxu0
    %v1152 = vadd.f32 0.0, %v1151
    %v1153 = vpop.f32.mrf.mxu0
    %1154 = vmatprep.mubr.bf16.mxu0 0
    %1155 = vmatmul.mubr.bf16.gmra.mxu0 %v1003
    %v1156 = vpop.f32.mrf.mxu0
    %v1157 = vadd.f32 0.0, %v1156
    %v1158 = vpop.f32.mrf.mxu0
    %v1159 = vpop.f32.mrf.mxu0
    %v1160 = vadd.f32 0.0, %v1159
    %v1161 = vpop.f32.mrf.mxu0
    %1162 = vmatprep.mubr.bf16.mxu0 0
    %1163 = vmatmul.mubr.bf16.gmra.mxu0 %v1006
    %v1164 = vpop.f32.mrf.mxu0
    %v1165 = vadd.f32 0.0, %v1164
    %v1166 = vpop.f32.mrf.mxu0
    %v1167 = vpop.f32.mrf.mxu0
    %v1168 = vadd.f32 0.0, %v1167
    %v1169 = vpop.f32.mrf.mxu0
    %1170 = vmatprep.mubr.bf16.mxu0 0
    %1171 = vmatmul.mubr.bf16.gmra.mxu0 %v1009
    %v1172 = vpop.f32.mrf.mxu0
    %v1173 = vadd.f32 0.0, %v1172
    %v1174 = vpop.f32.mrf.mxu0
    %v1175 = vpop.f32.mrf.mxu0
    %v1176 = vadd.f32 0.0, %v1175
    %v1177 = vpop.f32.mrf.mxu0
    %1178 = vmatprep.mubr.bf16.mxu0 0
    %1179 = vmatmul.mubr.bf16.gmra.mxu0 %v1012
    %v1180 = vpop.f32.mrf.mxu0
    %v1181 = vadd.f32 0.0, %v1180
    %v1182 = vpop.f32.mrf.mxu0
    %v1183 = vpop.f32.mrf.mxu0
    %v1184 = vadd.f32 0.0, %v1183
    %v1185 = vpop.f32.mrf.mxu0
    %1186 = vmatprep.mubr.bf16.mxu0 0
    %1187 = vmatmul.mubr.bf16.gmra.mxu0 %v1015
    %v1188 = vpop.f32.mrf.mxu0
    %v1189 = vadd.f32 0.0, %v1188
    %v1190 = vpop.f32.mrf.mxu0
    %v1191 = vpop.f32.mrf.mxu0
    %v1192 = vadd.f32 0.0, %v1191
    %v1193 = vpop.f32.mrf.mxu0
    %1194 = vmatprep.mubr.bf16.mxu0 0
    %1195 = vmatmul.mubr.bf16.gmra.mxu0 %v1018
    %v1196 = vpop.f32.mrf.mxu0
    %v1197 = vadd.f32 0.0, %v1196
    %v1198 = vpop.f32.mrf.mxu0
    %v1199 = vpop.f32.mrf.mxu0
    %v1200 = vadd.f32 0.0, %v1199
    %v1201 = vpop.f32.mrf.mxu0
    %1202 = vmatprep.mubr.bf16.mxu0 0
    %1203 = vmatmul.mubr.bf16.gmra.mxu0 %v1021
    %v1204 = vpop.f32.mrf.mxu0
    %v1205 = vadd.f32 0.0, %v1204
    %v1206 = vpop.f32.mrf.mxu0
    %v1207 = vpop.f32.mrf.mxu0
    %v1208 = vadd.f32 0.0, %v1207
    %v1209 = vpop.f32.mrf.mxu0
    %1210 = vmatprep.mubr.bf16.mxu0 0
    %1211 = vmatmul.mubr.bf16.gmra.mxu0 %v1024
    %v1212 = vpop.f32.mrf.mxu0
    %v1213 = vadd.f32 0.0, %v1212
    %v1214 = vpop.f32.mrf.mxu0
    %v1215 = vpop.f32.mrf.mxu0
    %v1216 = vadd.f32 0.0, %v1215
    %v1217 = vpop.f32.mrf.mxu0
    %1218 = vmatprep.mubr.bf16.mxu0 0
    %1219 = vmatmul.mubr.bf16.gmra.mxu0 %v1027
    %v1220 = vpop.f32.mrf.mxu0
    %v1221 = vadd.f32 0.0, %v1220
    %v1222 = vpop.f32.mrf.mxu0
    %v1223 = vpop.f32.mrf.mxu0
    %v1224 = vadd.f32 0.0, %v1223
    %v1225 = vpop.f32.mrf.mxu0
    %1226 = vmatprep.mubr.bf16.mxu0 0
    %1227 = vmatmul.mubr.bf16.gmra.mxu0 %v1030
    %v1228 = vpop.f32.mrf.mxu0
    %v1229 = vadd.f32 0.0, %v1228
    %v1230 = vpop.f32.mrf.mxu0
    %v1231 = vpop.f32.mrf.mxu0
    %v1232 = vadd.f32 0.0, %v1231
    %v1233 = vpop.f32.mrf.mxu0
    %1234 = vmatprep.mubr.bf16.mxu0 0
    %1235 = vmatmul.mubr.bf16.gmra.mxu0 %v1033
    %v1236 = vpop.f32.mrf.mxu0
    %v1237 = vadd.f32 0.0, %v1236
    %v1238 = vpop.f32.mrf.mxu0
    %v1239 = vpop.f32.mrf.mxu0
    %v1240 = vadd.f32 0.0, %v1239
    %v1241 = vpop.f32.mrf.mxu0
    %1242 = vmatprep.mubr.bf16.mxu0 0
    %1243 = vmatmul.mubr.bf16.gmra.mxu0 %v1036
    %v1244 = vpop.f32.mrf.mxu0
    %v1245 = vadd.f32 0.0, %v1244
    %v1246 = vpop.f32.mrf.mxu0
    %v1247 = vpop.f32.mrf.mxu0
    %v1248 = vadd.f32 0.0, %v1247
    %v1249 = vpop.f32.mrf.mxu0
    %1250 = vmatprep.mubr.bf16.mxu0 0
    %1251 = vmatmul.mubr.bf16.gmra.mxu0 %v1039
    %v1252 = vpop.f32.mrf.mxu0
    %v1253 = vadd.f32 0.0, %v1252
    %v1254 = vpop.f32.mrf.mxu0
    %v1255 = vpop.f32.mrf.mxu0
    %v1256 = vadd.f32 0.0, %v1255
    %v1257 = vpop.f32.mrf.mxu0
    %1258 = vmatprep.mubr.bf16.mxu0 0
    %1259 = vmatmul.mubr.bf16.gmra.mxu0 %v1042
    %v1260 = vpop.f32.mrf.mxu0
    %v1261 = vadd.f32 0.0, %v1260
    %v1262 = vpop.f32.mrf.mxu0
    %v1263 = vpop.f32.mrf.mxu0
    %v1264 = vadd.f32 0.0, %v1263
    %v1265 = vpop.f32.mrf.mxu0
    %1266 = vmatprep.mubr.bf16.mxu0 0
    %1267 = vmatmul.mubr.bf16.gmra.mxu0 %v1045
    %v1268 = vpop.f32.mrf.mxu0
    %v1269 = vadd.f32 0.0, %v1268
    %v1270 = vpop.f32.mrf.mxu0
    %v1271 = vpop.f32.mrf.mxu0
    %v1272 = vadd.f32 0.0, %v1271
    %v1273 = vpop.f32.mrf.mxu0
    %1274 = vmatprep.mubr.bf16.mxu0 0
    %1275 = vmatmul.mubr.bf16.gmra.mxu0 %v1048
    %v1276 = vpop.f32.mrf.mxu0
    %v1277 = vadd.f32 0.0, %v1276
    %v1278 = vpop.f32.mrf.mxu0
    %v1279 = vpop.f32.mrf.mxu0
    %v1280 = vadd.f32 0.0, %v1279
    %v1281 = vpop.f32.mrf.mxu0
    %1282 = vmatprep.mubr.bf16.mxu0 0
    %1283 = vmatmul.mubr.bf16.gmra.mxu0 %v1051
    %v1284 = vpop.f32.mrf.mxu0
    %v1285 = vadd.f32 0.0, %v1284
    %v1286 = vpop.f32.mrf.mxu0
    %v1287 = vpop.f32.mrf.mxu0
    %v1288 = vadd.f32 0.0, %v1287
    %v1289 = vpop.f32.mrf.mxu0
    %1290 = vmatprep.mubr.bf16.mxu0 0
    %1291 = vmatmul.mubr.bf16.gmra.mxu0 %v1054
    %v1292 = vpop.f32.mrf.mxu0
    %v1293 = vadd.f32 0.0, %v1292
    %v1294 = vpop.f32.mrf.mxu0
    %v1295 = vpop.f32.mrf.mxu0
    %v1296 = vadd.f32 0.0, %v1295
    %v1297 = vpop.f32.mrf.mxu0
    %1298 = vmatprep.mubr.bf16.mxu0 0
    %1299 = vmatmul.mubr.bf16.gmra.mxu0 %v1057
    %v1300 = vpop.f32.mrf.mxu0
    %v1301 = vadd.f32 0.0, %v1300
    %v1302 = vpop.f32.mrf.mxu0
    %v1303 = vpop.f32.mrf.mxu0
    %v1304 = vadd.f32 0.0, %v1303
    %v1305 = vpop.f32.mrf.mxu0
    %1306 = vmatprep.mubr.bf16.mxu0 0
    %1307 = vmatmul.mubr.bf16.gmra.mxu0 %v1060
    %v1308 = vpop.f32.mrf.mxu0
    %v1309 = vadd.f32 0.0, %v1308
    %v1310 = vpop.f32.mrf.mxu0
    %v1311 = vpop.f32.mrf.mxu0
    %v1312 = vadd.f32 0.0, %v1311
    %v1313 = vpop.f32.mrf.mxu0
    %1314 = vmatprep.mubr.bf16.mxu0 0
    %1315 = vmatmul.mubr.bf16.gmra.mxu0 %v1063
    %v1316 = vpop.f32.mrf.mxu0
    %v1317 = vadd.f32 0.0, %v1316
    %v1318 = vpop.f32.mrf.mxu0
    %v1319 = vpop.f32.mrf.mxu0
    %v1320 = vadd.f32 0.0, %v1319
    %v1321 = vpop.f32.mrf.mxu0
    %1322 = vmatprep.mubr.bf16.mxu0 0
    %1323 = vmatmul.mubr.bf16.gmra.mxu0 %v1066
    %v1324 = vpop.f32.mrf.mxu0
    %v1325 = vadd.f32 0.0, %v1324
    %v1326 = vpop.f32.mrf.mxu0
    %v1327 = vpop.f32.mrf.mxu0
    %v1328 = vadd.f32 0.0, %v1327
    %v1329 = vpop.f32.mrf.mxu0
    %1330 = vmatprep.mubr.bf16.mxu0 0
    %1331 = vmatmul.mubr.bf16.gmra.mxu0 %v1069
    %v1332 = vpop.f32.mrf.mxu0
    %v1333 = vadd.f32 0.0, %v1332
    %v1334 = vpop.f32.mrf.mxu0
    %v1335 = vpop.f32.mrf.mxu0
    %v1336 = vadd.f32 0.0, %v1335
    %v1337 = vpop.f32.mrf.mxu0
    %1338 = vmatprep.mubr.bf16.mxu0 0
    %1339 = vmatmul.mubr.bf16.gmra.mxu0 %v1072
    %v1340 = vpop.f32.mrf.mxu0
    %v1341 = vadd.f32 0.0, %v1340
    %v1342 = vpop.f32.mrf.mxu0
    %v1343 = vpop.f32.mrf.mxu0
    %v1344 = vadd.f32 0.0, %v1343
    %v1345 = vpop.f32.mrf.mxu0
    %1346 = vmatprep.mubr.bf16.mxu0 0
    %1347 = vmatmul.mubr.bf16.gmra.mxu0 %v1075
    %v1348 = vpop.f32.mrf.mxu0
    %v1349 = vadd.f32 0.0, %v1348
    %v1350 = vpop.f32.mrf.mxu0
    %v1351 = vpop.f32.mrf.mxu0
    %v1352 = vadd.f32 0.0, %v1351
    %v1353 = vpop.f32.mrf.mxu0
    %1354 = vmatprep.mubr.bf16.mxu0 0
    %1355 = vmatmul.mubr.bf16.gmra.mxu0 %v1078
    %v1356 = vpop.f32.mrf.mxu0
    %v1357 = vadd.f32 0.0, %v1356
    %v1358 = vpop.f32.mrf.mxu0
    %v1359 = vpop.f32.mrf.mxu0
    %v1360 = vadd.f32 0.0, %v1359
    %v1361 = vpop.f32.mrf.mxu0
    %1362 = vmatprep.mubr.bf16.mxu0 0
    %1363 = vmatmul.mubr.bf16.gmra.mxu0 %v1081
    %v1364 = vpop.f32.mrf.mxu0
    %v1365 = vadd.f32 0.0, %v1364
    %v1366 = vpop.f32.mrf.mxu0
    %v1367 = vpop.f32.mrf.mxu0
    %v1368 = vadd.f32 0.0, %v1367
    %v1369 = vpop.f32.mrf.mxu0
    %1370 = vmatprep.mubr.bf16.mxu0 0
    %1371 = vmatmul.mubr.bf16.gmra.mxu0 %v1084
    %v1372 = vpop.f32.mrf.mxu0
    %v1373 = vadd.f32 0.0, %v1372
    %v1374 = vpop.f32.mrf.mxu0
    %v1375 = vpop.f32.mrf.mxu0
    %v1376 = vadd.f32 0.0, %v1375
    %v1377 = vpop.f32.mrf.mxu0
    %1378 = vdwg.mxu0
    %v1443 = vunpack.c.l.b16 %v23
    %v1444 = vunpack.c.l.b16 %v24
    %v1445 = vunpack.c.l.b16 %v25
    %v1446 = vunpack.c.l.b16 %v26
    %v1447 = vunpack.c.l.b16 %v27
    %v1448 = vunpack.c.l.b16 %v28
    %v1449 = vunpack.c.l.b16 %v29
    %v1450 = vunpack.c.l.b16 %v30
    %v1451 = vunpack.c.l.b16 %v31
    %v1452 = vunpack.c.l.b16 %v32
    %v1453 = vunpack.c.l.b16 %v33
    %v1454 = vunpack.c.l.b16 %v34
    %v1455 = vunpack.c.l.b16 %v35
    %v1456 = vunpack.c.l.b16 %v36
    %v1457 = vunpack.c.l.b16 %v37
    %v1458 = vunpack.c.l.b16 %v38
    %v1459 = vunpack.c.l.b16 %v39
    %v1460 = vunpack.c.l.b16 %v40
    %v1461 = vunpack.c.l.b16 %v41
    %v1462 = vunpack.c.l.b16 %v42
    %v1463 = vunpack.c.l.b16 %v43
    %v1464 = vunpack.c.l.b16 %v44
    %v1465 = vunpack.c.l.b16 %v45
    %v1466 = vunpack.c.l.b16 %v46
    %v1467 = vunpack.c.l.b16 %v47
    %v1468 = vunpack.c.l.b16 %v48
    %v1469 = vunpack.c.l.b16 %v49
    %v1470 = vunpack.c.l.b16 %v50
    %v1471 = vunpack.c.l.b16 %v51
    %v1472 = vunpack.c.l.b16 %v52
    %v1473 = vunpack.c.l.b16 %v53
    %v1474 = vunpack.c.l.b16 %v54
    %v1475 = vunpack.c.l.b16 %v55
    %v1476 = vunpack.c.l.b16 %v56
    %v1477 = vunpack.c.l.b16 %v57
    %v1478 = vunpack.c.l.b16 %v58
    %v1479 = vunpack.c.l.b16 %v59
    %v1480 = vunpack.c.l.b16 %v60
    %v1481 = vunpack.c.l.b16 %v61
    %v1482 = vunpack.c.l.b16 %v62
    %v1483 = vunpack.c.l.b16 %v63
    %v1484 = vunpack.c.l.b16 %v64
    %v1485 = vunpack.c.l.b16 %v65
    %v1486 = vunpack.c.l.b16 %v66
    %v1487 = vunpack.c.l.b16 %v67
    %v1488 = vunpack.c.l.b16 %v68
    %v1489 = vunpack.c.l.b16 %v69
    %v1490 = vunpack.c.l.b16 %v70
    %v1491 = vunpack.c.l.b16 %v71
    %v1492 = vunpack.c.l.b16 %v72
    %v1493 = vunpack.c.l.b16 %v73
    %v1494 = vunpack.c.l.b16 %v74
    %v1495 = vunpack.c.l.b16 %v75
    %v1496 = vunpack.c.l.b16 %v76
    %v1497 = vunpack.c.l.b16 %v77
    %v1498 = vunpack.c.l.b16 %v78
    %v1499 = vunpack.c.l.b16 %v79
    %v1500 = vunpack.c.l.b16 %v80
    %v1501 = vunpack.c.l.b16 %v81
    %v1502 = vunpack.c.l.b16 %v82
    %v1503 = vunpack.c.l.b16 %v83
    %v1504 = vunpack.c.l.b16 %v84
    %v1505 = vunpack.c.l.b16 %v85
    %v1506 = vunpack.c.l.b16 %v86
    %v1507 = vpack.c.b16 %v1444, %v1443
    %v1508 = vpack.c.b16 %v1446, %v1445
    %v1509 = vpack.c.b16 %v1448, %v1447
    %v1510 = vpack.c.b16 %v1450, %v1449
    %v1511 = vpack.c.b16 %v1452, %v1451
    %v1512 = vpack.c.b16 %v1454, %v1453
    %v1513 = vpack.c.b16 %v1456, %v1455
    %v1514 = vpack.c.b16 %v1458, %v1457
    %v1515 = vpack.c.b16 %v1460, %v1459
    %v1516 = vpack.c.b16 %v1462, %v1461
    %v1517 = vpack.c.b16 %v1464, %v1463
    %v1518 = vpack.c.b16 %v1466, %v1465
    %v1519 = vpack.c.b16 %v1468, %v1467
    %v1520 = vpack.c.b16 %v1470, %v1469
    %v1521 = vpack.c.b16 %v1472, %v1471
    %v1522 = vpack.c.b16 %v1474, %v1473
    %v1523 = vpack.c.b16 %v1476, %v1475
    %v1524 = vpack.c.b16 %v1478, %v1477
    %v1525 = vpack.c.b16 %v1480, %v1479
    %v1526 = vpack.c.b16 %v1482, %v1481
    %v1527 = vpack.c.b16 %v1484, %v1483
    %v1528 = vpack.c.b16 %v1486, %v1485
    %v1529 = vpack.c.b16 %v1488, %v1487
    %v1530 = vpack.c.b16 %v1490, %v1489
    %v1531 = vpack.c.b16 %v1492, %v1491
    %v1532 = vpack.c.b16 %v1494, %v1493
    %v1533 = vpack.c.b16 %v1496, %v1495
    %v1534 = vpack.c.b16 %v1498, %v1497
    %v1535 = vpack.c.b16 %v1500, %v1499
    %v1536 = vpack.c.b16 %v1502, %v1501
    %v1537 = vpack.c.b16 %v1504, %v1503
    %v1538 = vpack.c.b16 %v1506, %v1505
    %v1540 = vsel %vm989, %v1507, 0
    %v1543 = vsel %vm989, %v1508, 0
    %v1546 = vsel %vm989, %v1509, 0
    %v1549 = vsel %vm989, %v1510, 0
    %v1552 = vsel %vm989, %v1511, 0
    %v1555 = vsel %vm989, %v1512, 0
    %v1558 = vsel %vm989, %v1513, 0
    %v1561 = vsel %vm989, %v1514, 0
    %v1564 = vsel %vm989, %v1515, 0
    %v1567 = vsel %vm989, %v1516, 0
    %v1570 = vsel %vm989, %v1517, 0
    %v1573 = vsel %vm989, %v1518, 0
    %v1576 = vsel %vm989, %v1519, 0
    %v1579 = vsel %vm989, %v1520, 0
    %v1582 = vsel %vm989, %v1521, 0
    %v1585 = vsel %vm989, %v1522, 0
    %v1588 = vsel %vm989, %v1523, 0
    %v1591 = vsel %vm989, %v1524, 0
    %v1594 = vsel %vm989, %v1525, 0
    %v1597 = vsel %vm989, %v1526, 0
    %v1600 = vsel %vm989, %v1527, 0
    %v1603 = vsel %vm989, %v1528, 0
    %v1606 = vsel %vm989, %v1529, 0
    %v1609 = vsel %vm989, %v1530, 0
    %v1612 = vsel %vm989, %v1531, 0
    %v1615 = vsel %vm989, %v1532, 0
    %v1618 = vsel %vm989, %v1533, 0
    %v1621 = vsel %vm989, %v1534, 0
    %v1624 = vsel %vm989, %v1535, 0
    %v1627 = vsel %vm989, %v1536, 0
    %v1630 = vsel %vm989, %v1537, 0
    %v1633 = vsel %vm989, %v1538, 0
    %v1636 = vsel %vm1086, %v87, 0
    %1638 = vmatprep.subr.bf16.mxu0 0
    %1639 = vmatpush1.bf16.msra.mxu0 0
    %1640 = vmatprep.subr.bf16.mxu0 0
    %1641 = vmatpush1.bf16.msra.mxu0 0
    %1642 = vmatprep.subr.bf16.mxu0 0
    %1643 = vmatpush1.bf16.msra.mxu0 0
    %1644 = vmatprep.subr.bf16.mxu0 0
    %1645 = vmatpush1.bf16.msra.mxu0 0
    %1646 = vmatprep.subr.bf16.mxu0 0
    %1647 = vmatpush1.bf16.msra.mxu0 0
    %1648 = vmatprep.subr.bf16.mxu0 0
    %1649 = vmatpush1.bf16.msra.mxu0 0
    %1650 = vmatprep.subr.bf16.mxu0 0
    %1651 = vmatpush1.bf16.msra.mxu0 0
    %1652 = vmatprep.subr.bf16.mxu0 0
    %1653 = vmatpush1.bf16.msra.mxu0 %v1636
    %1654 = vmatprep.subr.bf16.mxu0 0
    %1655 = vmatpush2.bf16.msra.mxu0 0
    %1656 = vmatprep.subr.bf16.mxu0 0
    %1657 = vmatpush2.bf16.msra.mxu0 0
    %1658 = vmatprep.subr.bf16.mxu0 0
    %1659 = vmatpush2.bf16.msra.mxu0 0
    %1660 = vmatprep.subr.bf16.mxu0 0
    %1661 = vmatpush2.bf16.msra.mxu0 0
    %1662 = vmatprep.subr.bf16.mxu0 0
    %1663 = vmatpush2.bf16.msra.mxu0 0
    %1664 = vmatprep.subr.bf16.mxu0 0
    %1665 = vmatpush2.bf16.msra.mxu0 0
    %1666 = vmatprep.subr.bf16.mxu0 0
    %1667 = vmatpush2.bf16.msra.mxu0 0
    %1668 = vmatprep.subr.bf16.mxu0 0
    %1669 = vmatpush2.bf16.msra.mxu0 0
    %1670 = vmatprep.mubr.bf16.mxu0 0
    %1671 = vmatmul.mubr.bf16.gmra.mxu0 %v1540
    %v1672 = vpop.f32.mrf.mxu0
    %v1673 = vadd.f32 %v1125, %v1672
    %v1674 = vpop.f32.mrf.mxu0
    %v1675 = vpop.f32.mrf.mxu0
    %v1676 = vadd.f32 %v1128, %v1675
    %v1677 = vpop.f32.mrf.mxu0
    %1678 = vmatprep.mubr.bf16.mxu0 0
    %1679 = vmatmul.mubr.bf16.gmra.mxu0 %v1543
    %v1680 = vpop.f32.mrf.mxu0
    %v1681 = vadd.f32 %v1133, %v1680
    %v1682 = vpop.f32.mrf.mxu0
    %v1683 = vpop.f32.mrf.mxu0
    %v1684 = vadd.f32 %v1136, %v1683
    %v1685 = vpop.f32.mrf.mxu0
    %1686 = vmatprep.mubr.bf16.mxu0 0
    %1687 = vmatmul.mubr.bf16.gmra.mxu0 %v1546
    %v1688 = vpop.f32.mrf.mxu0
    %v1689 = vadd.f32 %v1141, %v1688
    %v1690 = vpop.f32.mrf.mxu0
    %v1691 = vpop.f32.mrf.mxu0
    %v1692 = vadd.f32 %v1144, %v1691
    %v1693 = vpop.f32.mrf.mxu0
    %1694 = vmatprep.mubr.bf16.mxu0 0
    %1695 = vmatmul.mubr.bf16.gmra.mxu0 %v1549
    %v1696 = vpop.f32.mrf.mxu0
    %v1697 = vadd.f32 %v1149, %v1696
    %v1698 = vpop.f32.mrf.mxu0
    %v1699 = vpop.f32.mrf.mxu0
    %v1700 = vadd.f32 %v1152, %v1699
    %v1701 = vpop.f32.mrf.mxu0
    %1702 = vmatprep.mubr.bf16.mxu0 0
    %1703 = vmatmul.mubr.bf16.gmra.mxu0 %v1552
    %v1704 = vpop.f32.mrf.mxu0
    %v1705 = vadd.f32 %v1157, %v1704
    %v1706 = vpop.f32.mrf.mxu0
    %v1707 = vpop.f32.mrf.mxu0
    %v1708 = vadd.f32 %v1160, %v1707
    %v1709 = vpop.f32.mrf.mxu0
    %1710 = vmatprep.mubr.bf16.mxu0 0
    %1711 = vmatmul.mubr.bf16.gmra.mxu0 %v1555
    %v1712 = vpop.f32.mrf.mxu0
    %v1713 = vadd.f32 %v1165, %v1712
    %v1714 = vpop.f32.mrf.mxu0
    %v1715 = vpop.f32.mrf.mxu0
    %v1716 = vadd.f32 %v1168, %v1715
    %v1717 = vpop.f32.mrf.mxu0
    %1718 = vmatprep.mubr.bf16.mxu0 0
    %1719 = vmatmul.mubr.bf16.gmra.mxu0 %v1558
    %v1720 = vpop.f32.mrf.mxu0
    %v1721 = vadd.f32 %v1173, %v1720
    %v1722 = vpop.f32.mrf.mxu0
    %v1723 = vpop.f32.mrf.mxu0
    %v1724 = vadd.f32 %v1176, %v1723
    %v1725 = vpop.f32.mrf.mxu0
    %1726 = vmatprep.mubr.bf16.mxu0 0
    %1727 = vmatmul.mubr.bf16.gmra.mxu0 %v1561
    %v1728 = vpop.f32.mrf.mxu0
    %v1729 = vadd.f32 %v1181, %v1728
    %v1730 = vpop.f32.mrf.mxu0
    %v1731 = vpop.f32.mrf.mxu0
    %v1732 = vadd.f32 %v1184, %v1731
    %v1733 = vpop.f32.mrf.mxu0
    %1734 = vmatprep.mubr.bf16.mxu0 0
    %1735 = vmatmul.mubr.bf16.gmra.mxu0 %v1564
    %v1736 = vpop.f32.mrf.mxu0
    %v1737 = vadd.f32 %v1189, %v1736
    %v1738 = vpop.f32.mrf.mxu0
    %v1739 = vpop.f32.mrf.mxu0
    %v1740 = vadd.f32 %v1192, %v1739
    %v1741 = vpop.f32.mrf.mxu0
    %1742 = vmatprep.mubr.bf16.mxu0 0
    %1743 = vmatmul.mubr.bf16.gmra.mxu0 %v1567
    %v1744 = vpop.f32.mrf.mxu0
    %v1745 = vadd.f32 %v1197, %v1744
    %v1746 = vpop.f32.mrf.mxu0
    %v1747 = vpop.f32.mrf.mxu0
    %v1748 = vadd.f32 %v1200, %v1747
    %v1749 = vpop.f32.mrf.mxu0
    %1750 = vmatprep.mubr.bf16.mxu0 0
    %1751 = vmatmul.mubr.bf16.gmra.mxu0 %v1570
    %v1752 = vpop.f32.mrf.mxu0
    %v1753 = vadd.f32 %v1205, %v1752
    %v1754 = vpop.f32.mrf.mxu0
    %v1755 = vpop.f32.mrf.mxu0
    %v1756 = vadd.f32 %v1208, %v1755
    %v1757 = vpop.f32.mrf.mxu0
    %1758 = vmatprep.mubr.bf16.mxu0 0
    %1759 = vmatmul.mubr.bf16.gmra.mxu0 %v1573
    %v1760 = vpop.f32.mrf.mxu0
    %v1761 = vadd.f32 %v1213, %v1760
    %v1762 = vpop.f32.mrf.mxu0
    %v1763 = vpop.f32.mrf.mxu0
    %v1764 = vadd.f32 %v1216, %v1763
    %v1765 = vpop.f32.mrf.mxu0
    %1766 = vmatprep.mubr.bf16.mxu0 0
    %1767 = vmatmul.mubr.bf16.gmra.mxu0 %v1576
    %v1768 = vpop.f32.mrf.mxu0
    %v1769 = vadd.f32 %v1221, %v1768
    %v1770 = vpop.f32.mrf.mxu0
    %v1771 = vpop.f32.mrf.mxu0
    %v1772 = vadd.f32 %v1224, %v1771
    %v1773 = vpop.f32.mrf.mxu0
    %1774 = vmatprep.mubr.bf16.mxu0 0
    %1775 = vmatmul.mubr.bf16.gmra.mxu0 %v1579
    %v1776 = vpop.f32.mrf.mxu0
    %v1777 = vadd.f32 %v1229, %v1776
    %v1778 = vpop.f32.mrf.mxu0
    %v1779 = vpop.f32.mrf.mxu0
    %v1780 = vadd.f32 %v1232, %v1779
    %v1781 = vpop.f32.mrf.mxu0
    %1782 = vmatprep.mubr.bf16.mxu0 0
    %1783 = vmatmul.mubr.bf16.gmra.mxu0 %v1582
    %v1784 = vpop.f32.mrf.mxu0
    %v1785 = vadd.f32 %v1237, %v1784
    %v1786 = vpop.f32.mrf.mxu0
    %v1787 = vpop.f32.mrf.mxu0
    %v1788 = vadd.f32 %v1240, %v1787
    %v1789 = vpop.f32.mrf.mxu0
    %1790 = vmatprep.mubr.bf16.mxu0 0
    %1791 = vmatmul.mubr.bf16.gmra.mxu0 %v1585
    %v1792 = vpop.f32.mrf.mxu0
    %v1793 = vadd.f32 %v1245, %v1792
    %v1794 = vpop.f32.mrf.mxu0
    %v1795 = vpop.f32.mrf.mxu0
    %v1796 = vadd.f32 %v1248, %v1795
    %v1797 = vpop.f32.mrf.mxu0
    %1798 = vmatprep.mubr.bf16.mxu0 0
    %1799 = vmatmul.mubr.bf16.gmra.mxu0 %v1588
    %v1800 = vpop.f32.mrf.mxu0
    %v1801 = vadd.f32 %v1253, %v1800
    %v1802 = vpop.f32.mrf.mxu0
    %v1803 = vpop.f32.mrf.mxu0
    %v1804 = vadd.f32 %v1256, %v1803
    %v1805 = vpop.f32.mrf.mxu0
    %1806 = vmatprep.mubr.bf16.mxu0 0
    %1807 = vmatmul.mubr.bf16.gmra.mxu0 %v1591
    %v1808 = vpop.f32.mrf.mxu0
    %v1809 = vadd.f32 %v1261, %v1808
    %v1810 = vpop.f32.mrf.mxu0
    %v1811 = vpop.f32.mrf.mxu0
    %v1812 = vadd.f32 %v1264, %v1811
    %v1813 = vpop.f32.mrf.mxu0
    %1814 = vmatprep.mubr.bf16.mxu0 0
    %1815 = vmatmul.mubr.bf16.gmra.mxu0 %v1594
    %v1816 = vpop.f32.mrf.mxu0
    %v1817 = vadd.f32 %v1269, %v1816
    %v1818 = vpop.f32.mrf.mxu0
    %v1819 = vpop.f32.mrf.mxu0
    %v1820 = vadd.f32 %v1272, %v1819
    %v1821 = vpop.f32.mrf.mxu0
    %1822 = vmatprep.mubr.bf16.mxu0 0
    %1823 = vmatmul.mubr.bf16.gmra.mxu0 %v1597
    %v1824 = vpop.f32.mrf.mxu0
    %v1825 = vadd.f32 %v1277, %v1824
    %v1826 = vpop.f32.mrf.mxu0
    %v1827 = vpop.f32.mrf.mxu0
    %v1828 = vadd.f32 %v1280, %v1827
    %v1829 = vpop.f32.mrf.mxu0
    %1830 = vmatprep.mubr.bf16.mxu0 0
    %1831 = vmatmul.mubr.bf16.gmra.mxu0 %v1600
    %v1832 = vpop.f32.mrf.mxu0
    %v1833 = vadd.f32 %v1285, %v1832
    %v1834 = vpop.f32.mrf.mxu0
    %v1835 = vpop.f32.mrf.mxu0
    %v1836 = vadd.f32 %v1288, %v1835
    %v1837 = vpop.f32.mrf.mxu0
    %1838 = vmatprep.mubr.bf16.mxu0 0
    %1839 = vmatmul.mubr.bf16.gmra.mxu0 %v1603
    %v1840 = vpop.f32.mrf.mxu0
    %v1841 = vadd.f32 %v1293, %v1840
    %v1842 = vpop.f32.mrf.mxu0
    %v1843 = vpop.f32.mrf.mxu0
    %v1844 = vadd.f32 %v1296, %v1843
    %v1845 = vpop.f32.mrf.mxu0
    %1846 = vmatprep.mubr.bf16.mxu0 0
    %1847 = vmatmul.mubr.bf16.gmra.mxu0 %v1606
    %v1848 = vpop.f32.mrf.mxu0
    %v1849 = vadd.f32 %v1301, %v1848
    %v1850 = vpop.f32.mrf.mxu0
    %v1851 = vpop.f32.mrf.mxu0
    %v1852 = vadd.f32 %v1304, %v1851
    %v1853 = vpop.f32.mrf.mxu0
    %1854 = vmatprep.mubr.bf16.mxu0 0
    %1855 = vmatmul.mubr.bf16.gmra.mxu0 %v1609
    %v1856 = vpop.f32.mrf.mxu0
    %v1857 = vadd.f32 %v1309, %v1856
    %v1858 = vpop.f32.mrf.mxu0
    %v1859 = vpop.f32.mrf.mxu0
    %v1860 = vadd.f32 %v1312, %v1859
    %v1861 = vpop.f32.mrf.mxu0
    %1862 = vmatprep.mubr.bf16.mxu0 0
    %1863 = vmatmul.mubr.bf16.gmra.mxu0 %v1612
    %v1864 = vpop.f32.mrf.mxu0
    %v1865 = vadd.f32 %v1317, %v1864
    %v1866 = vpop.f32.mrf.mxu0
    %v1867 = vpop.f32.mrf.mxu0
    %v1868 = vadd.f32 %v1320, %v1867
    %v1869 = vpop.f32.mrf.mxu0
    %1870 = vmatprep.mubr.bf16.mxu0 0
    %1871 = vmatmul.mubr.bf16.gmra.mxu0 %v1615
    %v1872 = vpop.f32.mrf.mxu0
    %v1873 = vadd.f32 %v1325, %v1872
    %v1874 = vpop.f32.mrf.mxu0
    %v1875 = vpop.f32.mrf.mxu0
    %v1876 = vadd.f32 %v1328, %v1875
    %v1877 = vpop.f32.mrf.mxu0
    %1878 = vmatprep.mubr.bf16.mxu0 0
    %1879 = vmatmul.mubr.bf16.gmra.mxu0 %v1618
    %v1880 = vpop.f32.mrf.mxu0
    %v1881 = vadd.f32 %v1333, %v1880
    %v1882 = vpop.f32.mrf.mxu0
    %v1883 = vpop.f32.mrf.mxu0
    %v1884 = vadd.f32 %v1336, %v1883
    %v1885 = vpop.f32.mrf.mxu0
    %1886 = vmatprep.mubr.bf16.mxu0 0
    %1887 = vmatmul.mubr.bf16.gmra.mxu0 %v1621
    %v1888 = vpop.f32.mrf.mxu0
    %v1889 = vadd.f32 %v1341, %v1888
    %v1890 = vpop.f32.mrf.mxu0
    %v1891 = vpop.f32.mrf.mxu0
    %v1892 = vadd.f32 %v1344, %v1891
    %v1893 = vpop.f32.mrf.mxu0
    %1894 = vmatprep.mubr.bf16.mxu0 0
    %1895 = vmatmul.mubr.bf16.gmra.mxu0 %v1624
    %v1896 = vpop.f32.mrf.mxu0
    %v1897 = vadd.f32 %v1349, %v1896
    %v1898 = vpop.f32.mrf.mxu0
    %v1899 = vpop.f32.mrf.mxu0
    %v1900 = vadd.f32 %v1352, %v1899
    %v1901 = vpop.f32.mrf.mxu0
    %1902 = vmatprep.mubr.bf16.mxu0 0
    %1903 = vmatmul.mubr.bf16.gmra.mxu0 %v1627
    %v1904 = vpop.f32.mrf.mxu0
    %v1905 = vadd.f32 %v1357, %v1904
    %v1906 = vpop.f32.mrf.mxu0
    %v1907 = vpop.f32.mrf.mxu0
    %v1908 = vadd.f32 %v1360, %v1907
    %v1909 = vpop.f32.mrf.mxu0
    %1910 = vmatprep.mubr.bf16.mxu0 0
    %1911 = vmatmul.mubr.bf16.gmra.mxu0 %v1630
    %v1912 = vpop.f32.mrf.mxu0
    %v1913 = vadd.f32 %v1365, %v1912
    %v1914 = vpop.f32.mrf.mxu0
    %v1915 = vpop.f32.mrf.mxu0
    %v1916 = vadd.f32 %v1368, %v1915
    %v1917 = vpop.f32.mrf.mxu0
    %1918 = vmatprep.mubr.bf16.mxu0 0
    %1919 = vmatmul.mubr.bf16.gmra.mxu0 %v1633
    %v1920 = vpop.f32.mrf.mxu0
    %v1921 = vadd.f32 %v1373, %v1920
    %v1922 = vpop.f32.mrf.mxu0
    %v1923 = vpop.f32.mrf.mxu0
    %v1924 = vadd.f32 %v1376, %v1923
    %v1925 = vpop.f32.mrf.mxu0
    %1926 = vdwg.mxu0
    %v1927 = vld [vmem:[%s0] sm:$0xe]
    %v1928 = vld [vmem:[%s0 + $0xc] sm:$0xe]
    %v1929 = vld [vmem:[%s0 + $0x18] sm:$0xe]
    %v1930 = vld [vmem:[%s0 + $0x24] sm:$0xe]
    %v1931 = vld [vmem:[%s0 + $0x30] sm:$0xe]
    %v1932 = vld [vmem:[%s0 + $0x3c] sm:$0xe]
    %v1933 = vld [vmem:[%s0 + $0x48] sm:$0xe]
    %v1934 = vld [vmem:[%s0 + $0x54] sm:$0xe]
    %v1935 = vld [vmem:[%s0 + $0x60] sm:$0xe]
    %v1936 = vld [vmem:[%s0 + $0x6c] sm:$0xe]
    %v1937 = vld [vmem:[%s0 + $0x78] sm:$0xe]
    %v1938 = vld [vmem:[%s0 + $0x84] sm:$0xe]
    %v1939 = vld [vmem:[%s0 + $0x90] sm:$0xe]
    %v1940 = vld [vmem:[%s0 + $0x9c] sm:$0xe]
    %v1941 = vld [vmem:[%s0 + $0xa8] sm:$0xe]
    %v1942 = vld [vmem:[%s0 + $0xb4] sm:$0xe]
    %v1943 = vld [vmem:[%s0 + $0xc0] sm:$0xe]
    %v1944 = vld [vmem:[%s0 + $0xcc] sm:$0xe]
    %v1945 = vld [vmem:[%s0 + $0xd8] sm:$0xe]
    %v1946 = vld [vmem:[%s0 + $0xe4] sm:$0xe]
    %v1947 = vld [vmem:[%s0 + $0xf0] sm:$0xe]
    %v1948 = vld [vmem:[%s0 + $0xfc] sm:$0xe]
    %v1949 = vld [vmem:[%s0 + $0x108] sm:$0xe]
    %v1950 = vld [vmem:[%s0 + $0x114] sm:$0xe]
    %v1951 = vld [vmem:[%s0 + $0x120] sm:$0xe]
    %v1952 = vld [vmem:[%s0 + $0x12c] sm:$0xe]
    %v1953 = vld [vmem:[%s0 + $0x138] sm:$0xe]
    %v1954 = vld [vmem:[%s0 + $0x144] sm:$0xe]
    %v1955 = vld [vmem:[%s0 + $0x150] sm:$0xe]
    %v1956 = vld [vmem:[%s0 + $0x15c] sm:$0xe]
    %v1957 = vld [vmem:[%s0 + $0x168] sm:$0xe]
    %v1958 = vld [vmem:[%s0 + $0x174] sm:$0xe]
    %vm2023 = vcmask 1042432
    %vm2024 = vcmask 1046532
    %vm2025 = vmor %vm2023, %vm2024
    %v2026 = vrot.slane %v1927, 5
    %v2027 = vrot.slane %v2026, 4
    %v2028 = vrot.slane %v24, 5
    %v2029 = vsel %vm2025, %v2027, %v2028
    %v2030 = vrot.slane %v2028, 4
    %v2031 = vrot.slane %v88, 5
    %v2032 = vsel %vm2025, %v2030, %v2031
    %v2033 = vrot.slane %v1928, 5
    %v2034 = vrot.slane %v2033, 4
    %v2035 = vrot.slane %v26, 5
    %v2036 = vsel %vm2025, %v2034, %v2035
    %v2037 = vrot.slane %v2035, 4
    %v2038 = vrot.slane %v89, 5
    %v2039 = vsel %vm2025, %v2037, %v2038
    %v2040 = vrot.slane %v1929, 5
    %v2041 = vrot.slane %v2040, 4
    %v2042 = vrot.slane %v28, 5
    %v2043 = vsel %vm2025, %v2041, %v2042
    %v2044 = vrot.slane %v2042, 4
    %v2045 = vrot.slane %v90, 5
    %v2046 = vsel %vm2025, %v2044, %v2045
    %v2047 = vrot.slane %v1930, 5
    %v2048 = vrot.slane %v2047, 4
    %v2049 = vrot.slane %v30, 5
    %v2050 = vsel %vm2025, %v2048, %v2049
    %v2051 = vrot.slane %v2049, 4
    %v2052 = vrot.slane %v91, 5
    %v2053 = vsel %vm2025, %v2051, %v2052
    %v2054 = vrot.slane %v1931, 5
    %v2055 = vrot.slane %v2054, 4
    %v2056 = vrot.slane %v32, 5
    %v2057 = vsel %vm2025, %v2055, %v2056
    %v2058 = vrot.slane %v2056, 4
    %v2059 = vrot.slane %v92, 5
    %v2060 = vsel %vm2025, %v2058, %v2059
    %v2061 = vrot.slane %v1932, 5
    %v2062 = vrot.slane %v2061, 4
    %v2063 = vrot.slane %v34, 5
    %v2064 = vsel %vm2025, %v2062, %v2063
    %v2065 = vrot.slane %v2063, 4
    %v2066 = vrot.slane %v93, 5
    %v2067 = vsel %vm2025, %v2065, %v2066
    %v2068 = vrot.slane %v1933, 5
    %v2069 = vrot.slane %v2068, 4
    %v2070 = vrot.slane %v36, 5
    %v2071 = vsel %vm2025, %v2069, %v2070
    %v2072 = vrot.slane %v2070, 4
    %v2073 = vrot.slane %v94, 5
    %v2074 = vsel %vm2025, %v2072, %v2073
    %v2075 = vrot.slane %v1934, 5
    %v2076 = vrot.slane %v2075, 4
    %v2077 = vrot.slane %v38, 5
    %v2078 = vsel %vm2025, %v2076, %v2077
    %v2079 = vrot.slane %v2077, 4
    %v2080 = vrot.slane %v95, 5
    %v2081 = vsel %vm2025, %v2079, %v2080
    %v2082 = vrot.slane %v1935, 5
    %v2083 = vrot.slane %v2082, 4
    %v2084 = vrot.slane %v40, 5
    %v2085 = vsel %vm2025, %v2083, %v2084
    %v2086 = vrot.slane %v2084, 4
    %v2087 = vrot.slane %v96, 5
    %v2088 = vsel %vm2025, %v2086, %v2087
    %v2089 = vrot.slane %v1936, 5
    %v2090 = vrot.slane %v2089, 4
    %v2091 = vrot.slane %v42, 5
    %v2092 = vsel %vm2025, %v2090, %v2091
    %v2093 = vrot.slane %v2091, 4
    %v2094 = vrot.slane %v97, 5
    %v2095 = vsel %vm2025, %v2093, %v2094
    %v2096 = vrot.slane %v1937, 5
    %v2097 = vrot.slane %v2096, 4
    %v2098 = vrot.slane %v44, 5
    %v2099 = vsel %vm2025, %v2097, %v2098
    %v2100 = vrot.slane %v2098, 4
    %v2101 = vrot.slane %v98, 5
    %v2102 = vsel %vm2025, %v2100, %v2101
    %v2103 = vrot.slane %v1938, 5
    %v2104 = vrot.slane %v2103, 4
    %v2105 = vrot.slane %v46, 5
    %v2106 = vsel %vm2025, %v2104, %v2105
    %v2107 = vrot.slane %v2105, 4
    %v2108 = vrot.slane %v99, 5
    %v2109 = vsel %vm2025, %v2107, %v2108
    %v2110 = vrot.slane %v1939, 5
    %v2111 = vrot.slane %v2110, 4
    %v2112 = vrot.slane %v48, 5
    %v2113 = vsel %vm2025, %v2111, %v2112
    %v2114 = vrot.slane %v2112, 4
    %v2115 = vrot.slane %v100, 5
    %v2116 = vsel %vm2025, %v2114, %v2115
    %v2117 = vrot.slane %v1940, 5
    %v2118 = vrot.slane %v2117, 4
    %v2119 = vrot.slane %v50, 5
    %v2120 = vsel %vm2025, %v2118, %v2119
    %v2121 = vrot.slane %v2119, 4
    %v2122 = vrot.slane %v101, 5
    %v2123 = vsel %vm2025, %v2121, %v2122
    %v2124 = vrot.slane %v1941, 5
    %v2125 = vrot.slane %v2124, 4
    %v2126 = vrot.slane %v52, 5
    %v2127 = vsel %vm2025, %v2125, %v2126
    %v2128 = vrot.slane %v2126, 4
    %v2129 = vrot.slane %v102, 5
    %v2130 = vsel %vm2025, %v2128, %v2129
    %v2131 = vrot.slane %v1942, 5
    %v2132 = vrot.slane %v2131, 4
    %v2133 = vrot.slane %v54, 5
    %v2134 = vsel %vm2025, %v2132, %v2133
    %v2135 = vrot.slane %v2133, 4
    %v2136 = vrot.slane %v103, 5
    %v2137 = vsel %vm2025, %v2135, %v2136
    %v2138 = vrot.slane %v1943, 5
    %v2139 = vrot.slane %v2138, 4
    %v2140 = vrot.slane %v56, 5
    %v2141 = vsel %vm2025, %v2139, %v2140
    %v2142 = vrot.slane %v2140, 4
    %v2143 = vrot.slane %v104, 5
    %v2144 = vsel %vm2025, %v2142, %v2143
    %v2145 = vrot.slane %v1944, 5
    %v2146 = vrot.slane %v2145, 4
    %v2147 = vrot.slane %v58, 5
    %v2148 = vsel %vm2025, %v2146, %v2147
    %v2149 = vrot.slane %v2147, 4
    %v2150 = vrot.slane %v105, 5
    %v2151 = vsel %vm2025, %v2149, %v2150
    %v2152 = vrot.slane %v1945, 5
    %v2153 = vrot.slane %v2152, 4
    %v2154 = vrot.slane %v60, 5
    %v2155 = vsel %vm2025, %v2153, %v2154
    %v2156 = vrot.slane %v2154, 4
    %v2157 = vrot.slane %v106, 5
    %v2158 = vsel %vm2025, %v2156, %v2157
    %v2159 = vrot.slane %v1946, 5
    %v2160 = vrot.slane %v2159, 4
    %v2161 = vrot.slane %v62, 5
    %v2162 = vsel %vm2025, %v2160, %v2161
    %v2163 = vrot.slane %v2161, 4
    %v2164 = vrot.slane %v107, 5
    %v2165 = vsel %vm2025, %v2163, %v2164
    %v2166 = vrot.slane %v1947, 5
    %v2167 = vrot.slane %v2166, 4
    %v2168 = vrot.slane %v64, 5
    %v2169 = vsel %vm2025, %v2167, %v2168
    %v2170 = vrot.slane %v2168, 4
    %v2171 = vrot.slane %v108, 5
    %v2172 = vsel %vm2025, %v2170, %v2171
    %v2173 = vrot.slane %v1948, 5
    %v2174 = vrot.slane %v2173, 4
    %v2175 = vrot.slane %v66, 5
    %v2176 = vsel %vm2025, %v2174, %v2175
    %v2177 = vrot.slane %v2175, 4
    %v2178 = vrot.slane %v109, 5
    %v2179 = vsel %vm2025, %v2177, %v2178
    %v2180 = vrot.slane %v1949, 5
    %v2181 = vrot.slane %v2180, 4
    %v2182 = vrot.slane %v68, 5
    %v2183 = vsel %vm2025, %v2181, %v2182
    %v2184 = vrot.slane %v2182, 4
    %v2185 = vrot.slane %v110, 5
    %v2186 = vsel %vm2025, %v2184, %v2185
    %v2187 = vrot.slane %v1950, 5
    %v2188 = vrot.slane %v2187, 4
    %v2189 = vrot.slane %v70, 5
    %v2190 = vsel %vm2025, %v2188, %v2189
    %v2191 = vrot.slane %v2189, 4
    %v2192 = vrot.slane %v111, 5
    %v2193 = vsel %vm2025, %v2191, %v2192
    %v2194 = vrot.slane %v1951, 5
    %v2195 = vrot.slane %v2194, 4
    %v2196 = vrot.slane %v72, 5
    %v2197 = vsel %vm2025, %v2195, %v2196
    %v2198 = vrot.slane %v2196, 4
    %v2199 = vrot.slane %v112, 5
    %v2200 = vsel %vm2025, %v2198, %v2199
    %v2201 = vrot.slane %v1952, 5
    %v2202 = vrot.slane %v2201, 4
    %v2203 = vrot.slane %v74, 5
    %v2204 = vsel %vm2025, %v2202, %v2203
    %v2205 = vrot.slane %v2203, 4
    %v2206 = vrot.slane %v113, 5
    %v2207 = vsel %vm2025, %v2205, %v2206
    %v2208 = vrot.slane %v1953, 5
    %v2209 = vrot.slane %v2208, 4
    %v2210 = vrot.slane %v76, 5
    %v2211 = vsel %vm2025, %v2209, %v2210
    %v2212 = vrot.slane %v2210, 4
    %v2213 = vrot.slane %v114, 5
    %v2214 = vsel %vm2025, %v2212, %v2213
    %v2215 = vrot.slane %v1954, 5
    %v2216 = vrot.slane %v2215, 4
    %v2217 = vrot.slane %v78, 5
    %v2218 = vsel %vm2025, %v2216, %v2217
    %v2219 = vrot.slane %v2217, 4
    %v2220 = vrot.slane %v115, 5
    %v2221 = vsel %vm2025, %v2219, %v2220
    %v2222 = vrot.slane %v1955, 5
    %v2223 = vrot.slane %v2222, 4
    %v2224 = vrot.slane %v80, 5
    %v2225 = vsel %vm2025, %v2223, %v2224
    %v2226 = vrot.slane %v2224, 4
    %v2227 = vrot.slane %v116, 5
    %v2228 = vsel %vm2025, %v2226, %v2227
    %v2229 = vrot.slane %v1956, 5
    %v2230 = vrot.slane %v2229, 4
    %v2231 = vrot.slane %v82, 5
    %v2232 = vsel %vm2025, %v2230, %v2231
    %v2233 = vrot.slane %v2231, 4
    %v2234 = vrot.slane %v117, 5
    %v2235 = vsel %vm2025, %v2233, %v2234
    %v2236 = vrot.slane %v1957, 5
    %v2237 = vrot.slane %v2236, 4
    %v2238 = vrot.slane %v84, 5
    %v2239 = vsel %vm2025, %v2237, %v2238
    %v2240 = vrot.slane %v2238, 4
    %v2241 = vrot.slane %v118, 5
    %v2242 = vsel %vm2025, %v2240, %v2241
    %v2243 = vrot.slane %v1958, 5
    %v2244 = vrot.slane %v2243, 4
    %v2245 = vrot.slane %v86, 5
    %v2246 = vsel %vm2025, %v2244, %v2245
    %v2247 = vrot.slane %v2245, 4
    %v2248 = vrot.slane %v119, 5
    %v2249 = vsel %vm2025, %v2247, %v2248
    %s2250 = scalar_lea.vmem %s3, 4
    %v2251 = vld [vmem:[%s2250] sm:$0x3]
    %v2252 = vunpack.c.l.b16 %v2029
    %v2253 = vunpack.c.l.b16 %v2032
    %v2254 = vunpack.c.l.b16 %v2036
    %v2255 = vunpack.c.l.b16 %v2039
    %v2256 = vunpack.c.l.b16 %v2043
    %v2257 = vunpack.c.l.b16 %v2046
    %v2258 = vunpack.c.l.b16 %v2050
    %v2259 = vunpack.c.l.b16 %v2053
    %v2260 = vunpack.c.l.b16 %v2057
    %v2261 = vunpack.c.l.b16 %v2060
    %v2262 = vunpack.c.l.b16 %v2064
    %v2263 = vunpack.c.l.b16 %v2067
    %v2264 = vunpack.c.l.b16 %v2071
    %v2265 = vunpack.c.l.b16 %v2074
    %v2266 = vunpack.c.l.b16 %v2078
    %v2267 = vunpack.c.l.b16 %v2081
    %v2268 = vunpack.c.l.b16 %v2085
    %v2269 = vunpack.c.l.b16 %v2088
    %v2270 = vunpack.c.l.b16 %v2092
    %v2271 = vunpack.c.l.b16 %v2095
    %v2272 = vunpack.c.l.b16 %v2099
    %v2273 = vunpack.c.l.b16 %v2102
    %v2274 = vunpack.c.l.b16 %v2106
    %v2275 = vunpack.c.l.b16 %v2109
    %v2276 = vunpack.c.l.b16 %v2113
    %v2277 = vunpack.c.l.b16 %v2116
    %v2278 = vunpack.c.l.b16 %v2120
    %v2279 = vunpack.c.l.b16 %v2123
    %v2280 = vunpack.c.l.b16 %v2127
    %v2281 = vunpack.c.l.b16 %v2130
    %v2282 = vunpack.c.l.b16 %v2134
    %v2283 = vunpack.c.l.b16 %v2137
    %v2284 = vunpack.c.l.b16 %v2141
    %v2285 = vunpack.c.l.b16 %v2144
    %v2286 = vunpack.c.l.b16 %v2148
    %v2287 = vunpack.c.l.b16 %v2151
    %v2288 = vunpack.c.l.b16 %v2155
    %v2289 = vunpack.c.l.b16 %v2158
    %v2290 = vunpack.c.l.b16 %v2162
    %v2291 = vunpack.c.l.b16 %v2165
    %v2292 = vunpack.c.l.b16 %v2169
    %v2293 = vunpack.c.l.b16 %v2172
    %v2294 = vunpack.c.l.b16 %v2176
    %v2295 = vunpack.c.l.b16 %v2179
    %v2296 = vunpack.c.l.b16 %v2183
    %v2297 = vunpack.c.l.b16 %v2186
    %v2298 = vunpack.c.l.b16 %v2190
    %v2299 = vunpack.c.l.b16 %v2193
    %v2300 = vunpack.c.l.b16 %v2197
    %v2301 = vunpack.c.l.b16 %v2200
    %v2302 = vunpack.c.l.b16 %v2204
    %v2303 = vunpack.c.l.b16 %v2207
    %v2304 = vunpack.c.l.b16 %v2211
    %v2305 = vunpack.c.l.b16 %v2214
    %v2306 = vunpack.c.l.b16 %v2218
    %v2307 = vunpack.c.l.b16 %v2221
    %v2308 = vunpack.c.l.b16 %v2225
    %v2309 = vunpack.c.l.b16 %v2228
    %v2310 = vunpack.c.l.b16 %v2232
    %v2311 = vunpack.c.l.b16 %v2235
    %v2312 = vunpack.c.l.b16 %v2239
    %v2313 = vunpack.c.l.b16 %v2242
    %v2314 = vunpack.c.l.b16 %v2246
    %v2315 = vunpack.c.l.b16 %v2249
    %v2316 = vpack.c.b16 %v2253, %v2252
    %v2317 = vpack.c.b16 %v2255, %v2254
    %v2318 = vpack.c.b16 %v2257, %v2256
    %v2319 = vpack.c.b16 %v2259, %v2258
    %v2320 = vpack.c.b16 %v2261, %v2260
    %v2321 = vpack.c.b16 %v2263, %v2262
    %v2322 = vpack.c.b16 %v2265, %v2264
    %v2323 = vpack.c.b16 %v2267, %v2266
    %v2324 = vpack.c.b16 %v2269, %v2268
    %v2325 = vpack.c.b16 %v2271, %v2270
    %v2326 = vpack.c.b16 %v2273, %v2272
    %v2327 = vpack.c.b16 %v2275, %v2274
    %v2328 = vpack.c.b16 %v2277, %v2276
    %v2329 = vpack.c.b16 %v2279, %v2278
    %v2330 = vpack.c.b16 %v2281, %v2280
    %v2331 = vpack.c.b16 %v2283, %v2282
    %v2332 = vpack.c.b16 %v2285, %v2284
    %v2333 = vpack.c.b16 %v2287, %v2286
    %v2334 = vpack.c.b16 %v2289, %v2288
    %v2335 = vpack.c.b16 %v2291, %v2290
    %v2336 = vpack.c.b16 %v2293, %v2292
    %v2337 = vpack.c.b16 %v2295, %v2294
    %v2338 = vpack.c.b16 %v2297, %v2296
    %v2339 = vpack.c.b16 %v2299, %v2298
    %v2340 = vpack.c.b16 %v2301, %v2300
    %v2341 = vpack.c.b16 %v2303, %v2302
    %v2342 = vpack.c.b16 %v2305, %v2304
    %v2343 = vpack.c.b16 %v2307, %v2306
    %v2344 = vpack.c.b16 %v2309, %v2308
    %v2345 = vpack.c.b16 %v2311, %v2310
    %v2346 = vpack.c.b16 %v2313, %v2312
    %v2347 = vpack.c.b16 %v2315, %v2314
    %v2349 = vsel %vm989, %v2316, 0
    %v2352 = vsel %vm989, %v2317, 0
    %v2355 = vsel %vm989, %v2318, 0
    %v2358 = vsel %vm989, %v2319, 0
    %v2361 = vsel %vm989, %v2320, 0
    %v2364 = vsel %vm989, %v2321, 0
    %v2367 = vsel %vm989, %v2322, 0
    %v2370 = vsel %vm989, %v2323, 0
    %v2373 = vsel %vm989, %v2324, 0
    %v2376 = vsel %vm989, %v2325, 0
    %v2379 = vsel %vm989, %v2326, 0
    %v2382 = vsel %vm989, %v2327, 0
    %v2385 = vsel %vm989, %v2328, 0
    %v2388 = vsel %vm989, %v2329, 0
    %v2391 = vsel %vm989, %v2330, 0
    %v2394 = vsel %vm989, %v2331, 0
    %v2397 = vsel %vm989, %v2332, 0
    %v2400 = vsel %vm989, %v2333, 0
    %v2403 = vsel %vm989, %v2334, 0
    %v2406 = vsel %vm989, %v2335, 0
    %v2409 = vsel %vm989, %v2336, 0
    %v2412 = vsel %vm989, %v2337, 0
    %v2415 = vsel %vm989, %v2338, 0
    %v2418 = vsel %vm989, %v2339, 0
    %v2421 = vsel %vm989, %v2340, 0
    %v2424 = vsel %vm989, %v2341, 0
    %v2427 = vsel %vm989, %v2342, 0
    %v2430 = vsel %vm989, %v2343, 0
    %v2433 = vsel %vm989, %v2344, 0
    %v2436 = vsel %vm989, %v2345, 0
    %v2439 = vsel %vm989, %v2346, 0
    %v2442 = vsel %vm989, %v2347, 0
    %v2445 = vsel %vm1086, %v2251, 0
    %2447 = vmatprep.subr.bf16.mxu0 0
    %2448 = vmatpush1.bf16.msra.mxu0 0
    %2449 = vmatprep.subr.bf16.mxu0 0
    %2450 = vmatpush1.bf16.msra.mxu0 0
    %2451 = vmatprep.subr.bf16.mxu0 0
    %2452 = vmatpush1.bf16.msra.mxu0 0
    %2453 = vmatprep.subr.bf16.mxu0 0
    %2454 = vmatpush1.bf16.msra.mxu0 0
    %2455 = vmatprep.subr.bf16.mxu0 0
    %2456 = vmatpush1.bf16.msra.mxu0 0
    %2457 = vmatprep.subr.bf16.mxu0 0
    %2458 = vmatpush1.bf16.msra.mxu0 0
    %2459 = vmatprep.subr.bf16.mxu0 0
    %2460 = vmatpush1.bf16.msra.mxu0 0
    %2461 = vmatprep.subr.bf16.mxu0 0
    %2462 = vmatpush1.bf16.msra.mxu0 %v2445
    %2463 = vmatprep.subr.bf16.mxu0 0
    %2464 = vmatpush2.bf16.msra.mxu0 0
    %2465 = vmatprep.subr.bf16.mxu0 0
    %2466 = vmatpush2.bf16.msra.mxu0 0
    %2467 = vmatprep.subr.bf16.mxu0 0
    %2468 = vmatpush2.bf16.msra.mxu0 0
    %2469 = vmatprep.subr.bf16.mxu0 0
    %2470 = vmatpush2.bf16.msra.mxu0 0
    %2471 = vmatprep.subr.bf16.mxu0 0
    %2472 = vmatpush2.bf16.msra.mxu0 0
    %2473 = vmatprep.subr.bf16.mxu0 0
    %2474 = vmatpush2.bf16.msra.mxu0 0
    %2475 = vmatprep.subr.bf16.mxu0 0
    %2476 = vmatpush2.bf16.msra.mxu0 0
    %2477 = vmatprep.subr.bf16.mxu0 0
    %2478 = vmatpush2.bf16.msra.mxu0 0
    %2479 = vmatprep.mubr.bf16.mxu0 0
    %2480 = vmatmul.mubr.bf16.gmra.mxu0 %v2349
    %v2481 = vpop.f32.mrf.mxu0
    %v2482 = vadd.f32 0.0, %v2481
    %v2483 = vpop.f32.mrf.mxu0
    %v2484 = vpop.f32.mrf.mxu0
    %v2485 = vadd.f32 0.0, %v2484
    %v2486 = vpop.f32.mrf.mxu0
    %2487 = vmatprep.mubr.bf16.mxu0 0
    %2488 = vmatmul.mubr.bf16.gmra.mxu0 %v2352
    %v2489 = vpop.f32.mrf.mxu0
    %v2490 = vadd.f32 0.0, %v2489
    %v2491 = vpop.f32.mrf.mxu0
    %v2492 = vpop.f32.mrf.mxu0
    %v2493 = vadd.f32 0.0, %v2492
    %v2494 = vpop.f32.mrf.mxu0
    %2495 = vmatprep.mubr.bf16.mxu0 0
    %2496 = vmatmul.mubr.bf16.gmra.mxu0 %v2355
    %v2497 = vpop.f32.mrf.mxu0
    %v2498 = vadd.f32 0.0, %v2497
    %v2499 = vpop.f32.mrf.mxu0
    %v2500 = vpop.f32.mrf.mxu0
    %v2501 = vadd.f32 0.0, %v2500
    %v2502 = vpop.f32.mrf.mxu0
    %2503 = vmatprep.mubr.bf16.mxu0 0
    %2504 = vmatmul.mubr.bf16.gmra.mxu0 %v2358
    %v2505 = vpop.f32.mrf.mxu0
    %v2506 = vadd.f32 0.0, %v2505
    %v2507 = vpop.f32.mrf.mxu0
    %v2508 = vpop.f32.mrf.mxu0
    %v2509 = vadd.f32 0.0, %v2508
    %v2510 = vpop.f32.mrf.mxu0
    %2511 = vmatprep.mubr.bf16.mxu0 0
    %2512 = vmatmul.mubr.bf16.gmra.mxu0 %v2361
    %v2513 = vpop.f32.mrf.mxu0
    %v2514 = vadd.f32 0.0, %v2513
    %v2515 = vpop.f32.mrf.mxu0
    %v2516 = vpop.f32.mrf.mxu0
    %v2517 = vadd.f32 0.0, %v2516
    %v2518 = vpop.f32.mrf.mxu0
    %2519 = vmatprep.mubr.bf16.mxu0 0
    %2520 = vmatmul.mubr.bf16.gmra.mxu0 %v2364
    %v2521 = vpop.f32.mrf.mxu0
    %v2522 = vadd.f32 0.0, %v2521
    %v2523 = vpop.f32.mrf.mxu0
    %v2524 = vpop.f32.mrf.mxu0
    %v2525 = vadd.f32 0.0, %v2524
    %v2526 = vpop.f32.mrf.mxu0
    %2527 = vmatprep.mubr.bf16.mxu0 0
    %2528 = vmatmul.mubr.bf16.gmra.mxu0 %v2367
    %v2529 = vpop.f32.mrf.mxu0
    %v2530 = vadd.f32 0.0, %v2529
    %v2531 = vpop.f32.mrf.mxu0
    %v2532 = vpop.f32.mrf.mxu0
    %v2533 = vadd.f32 0.0, %v2532
    %v2534 = vpop.f32.mrf.mxu0
    %2535 = vmatprep.mubr.bf16.mxu0 0
    %2536 = vmatmul.mubr.bf16.gmra.mxu0 %v2370
    %v2537 = vpop.f32.mrf.mxu0
    %v2538 = vadd.f32 0.0, %v2537
    %v2539 = vpop.f32.mrf.mxu0
    %v2540 = vpop.f32.mrf.mxu0
    %v2541 = vadd.f32 0.0, %v2540
    %v2542 = vpop.f32.mrf.mxu0
    %2543 = vmatprep.mubr.bf16.mxu0 0
    %2544 = vmatmul.mubr.bf16.gmra.mxu0 %v2373
    %v2545 = vpop.f32.mrf.mxu0
    %v2546 = vadd.f32 0.0, %v2545
    %v2547 = vpop.f32.mrf.mxu0
    %v2548 = vpop.f32.mrf.mxu0
    %v2549 = vadd.f32 0.0, %v2548
    %v2550 = vpop.f32.mrf.mxu0
    %2551 = vmatprep.mubr.bf16.mxu0 0
    %2552 = vmatmul.mubr.bf16.gmra.mxu0 %v2376
    %v2553 = vpop.f32.mrf.mxu0
    %v2554 = vadd.f32 0.0, %v2553
    %v2555 = vpop.f32.mrf.mxu0
    %v2556 = vpop.f32.mrf.mxu0
    %v2557 = vadd.f32 0.0, %v2556
    %v2558 = vpop.f32.mrf.mxu0
    %2559 = vmatprep.mubr.bf16.mxu0 0
    %2560 = vmatmul.mubr.bf16.gmra.mxu0 %v2379
    %v2561 = vpop.f32.mrf.mxu0
    %v2562 = vadd.f32 0.0, %v2561
    %v2563 = vpop.f32.mrf.mxu0
    %v2564 = vpop.f32.mrf.mxu0
    %v2565 = vadd.f32 0.0, %v2564
    %v2566 = vpop.f32.mrf.mxu0
    %2567 = vmatprep.mubr.bf16.mxu0 0
    %2568 = vmatmul.mubr.bf16.gmra.mxu0 %v2382
    %v2569 = vpop.f32.mrf.mxu0
    %v2570 = vadd.f32 0.0, %v2569
    %v2571 = vpop.f32.mrf.mxu0
    %v2572 = vpop.f32.mrf.mxu0
    %v2573 = vadd.f32 0.0, %v2572
    %v2574 = vpop.f32.mrf.mxu0
    %2575 = vmatprep.mubr.bf16.mxu0 0
    %2576 = vmatmul.mubr.bf16.gmra.mxu0 %v2385
    %v2577 = vpop.f32.mrf.mxu0
    %v2578 = vadd.f32 0.0, %v2577
    %v2579 = vpop.f32.mrf.mxu0
    %v2580 = vpop.f32.mrf.mxu0
    %v2581 = vadd.f32 0.0, %v2580
    %v2582 = vpop.f32.mrf.mxu0
    %2583 = vmatprep.mubr.bf16.mxu0 0
    %2584 = vmatmul.mubr.bf16.gmra.mxu0 %v2388
    %v2585 = vpop.f32.mrf.mxu0
    %v2586 = vadd.f32 0.0, %v2585
    %v2587 = vpop.f32.mrf.mxu0
    %v2588 = vpop.f32.mrf.mxu0
    %v2589 = vadd.f32 0.0, %v2588
    %v2590 = vpop.f32.mrf.mxu0
    %2591 = vmatprep.mubr.bf16.mxu0 0
    %2592 = vmatmul.mubr.bf16.gmra.mxu0 %v2391
    %v2593 = vpop.f32.mrf.mxu0
    %v2594 = vadd.f32 0.0, %v2593
    %v2595 = vpop.f32.mrf.mxu0
    %v2596 = vpop.f32.mrf.mxu0
    %v2597 = vadd.f32 0.0, %v2596
    %v2598 = vpop.f32.mrf.mxu0
    %2599 = vmatprep.mubr.bf16.mxu0 0
    %2600 = vmatmul.mubr.bf16.gmra.mxu0 %v2394
    %v2601 = vpop.f32.mrf.mxu0
    %v2602 = vadd.f32 0.0, %v2601
    %v2603 = vpop.f32.mrf.mxu0
    %v2604 = vpop.f32.mrf.mxu0
    %v2605 = vadd.f32 0.0, %v2604
    %v2606 = vpop.f32.mrf.mxu0
    %2607 = vmatprep.mubr.bf16.mxu0 0
    %2608 = vmatmul.mubr.bf16.gmra.mxu0 %v2397
    %v2609 = vpop.f32.mrf.mxu0
    %v2610 = vadd.f32 0.0, %v2609
    %v2611 = vpop.f32.mrf.mxu0
    %v2612 = vpop.f32.mrf.mxu0
    %v2613 = vadd.f32 0.0, %v2612
    %v2614 = vpop.f32.mrf.mxu0
    %2615 = vmatprep.mubr.bf16.mxu0 0
    %2616 = vmatmul.mubr.bf16.gmra.mxu0 %v2400
    %v2617 = vpop.f32.mrf.mxu0
    %v2618 = vadd.f32 0.0, %v2617
    %v2619 = vpop.f32.mrf.mxu0
    %v2620 = vpop.f32.mrf.mxu0
    %v2621 = vadd.f32 0.0, %v2620
    %v2622 = vpop.f32.mrf.mxu0
    %2623 = vmatprep.mubr.bf16.mxu0 0
    %2624 = vmatmul.mubr.bf16.gmra.mxu0 %v2403
    %v2625 = vpop.f32.mrf.mxu0
    %v2626 = vadd.f32 0.0, %v2625
    %v2627 = vpop.f32.mrf.mxu0
    %v2628 = vpop.f32.mrf.mxu0
    %v2629 = vadd.f32 0.0, %v2628
    %v2630 = vpop.f32.mrf.mxu0
    %2631 = vmatprep.mubr.bf16.mxu0 0
    %2632 = vmatmul.mubr.bf16.gmra.mxu0 %v2406
    %v2633 = vpop.f32.mrf.mxu0
    %v2634 = vadd.f32 0.0, %v2633
    %v2635 = vpop.f32.mrf.mxu0
    %v2636 = vpop.f32.mrf.mxu0
    %v2637 = vadd.f32 0.0, %v2636
    %v2638 = vpop.f32.mrf.mxu0
    %2639 = vmatprep.mubr.bf16.mxu0 0
    %2640 = vmatmul.mubr.bf16.gmra.mxu0 %v2409
    %v2641 = vpop.f32.mrf.mxu0
    %v2642 = vadd.f32 0.0, %v2641
    %v2643 = vpop.f32.mrf.mxu0
    %v2644 = vpop.f32.mrf.mxu0
    %v2645 = vadd.f32 0.0, %v2644
    %v2646 = vpop.f32.mrf.mxu0
    %2647 = vmatprep.mubr.bf16.mxu0 0
    %2648 = vmatmul.mubr.bf16.gmra.mxu0 %v2412
    %v2649 = vpop.f32.mrf.mxu0
    %v2650 = vadd.f32 0.0, %v2649
    %v2651 = vpop.f32.mrf.mxu0
    %v2652 = vpop.f32.mrf.mxu0
    %v2653 = vadd.f32 0.0, %v2652
    %v2654 = vpop.f32.mrf.mxu0
    %2655 = vmatprep.mubr.bf16.mxu0 0
    %2656 = vmatmul.mubr.bf16.gmra.mxu0 %v2415
    %v2657 = vpop.f32.mrf.mxu0
    %v2658 = vadd.f32 0.0, %v2657
    %v2659 = vpop.f32.mrf.mxu0
    %v2660 = vpop.f32.mrf.mxu0
    %v2661 = vadd.f32 0.0, %v2660
    %v2662 = vpop.f32.mrf.mxu0
    %2663 = vmatprep.mubr.bf16.mxu0 0
    %2664 = vmatmul.mubr.bf16.gmra.mxu0 %v2418
    %v2665 = vpop.f32.mrf.mxu0
    %v2666 = vadd.f32 0.0, %v2665
    %v2667 = vpop.f32.mrf.mxu0
    %v2668 = vpop.f32.mrf.mxu0
    %v2669 = vadd.f32 0.0, %v2668
    %v2670 = vpop.f32.mrf.mxu0
    %2671 = vmatprep.mubr.bf16.mxu0 0
    %2672 = vmatmul.mubr.bf16.gmra.mxu0 %v2421
    %v2673 = vpop.f32.mrf.mxu0
    %v2674 = vadd.f32 0.0, %v2673
    %v2675 = vpop.f32.mrf.mxu0
    %v2676 = vpop.f32.mrf.mxu0
    %v2677 = vadd.f32 0.0, %v2676
    %v2678 = vpop.f32.mrf.mxu0
    %2679 = vmatprep.mubr.bf16.mxu0 0
    %2680 = vmatmul.mubr.bf16.gmra.mxu0 %v2424
    %v2681 = vpop.f32.mrf.mxu0
    %v2682 = vadd.f32 0.0, %v2681
    %v2683 = vpop.f32.mrf.mxu0
    %v2684 = vpop.f32.mrf.mxu0
    %v2685 = vadd.f32 0.0, %v2684
    %v2686 = vpop.f32.mrf.mxu0
    %2687 = vmatprep.mubr.bf16.mxu0 0
    %2688 = vmatmul.mubr.bf16.gmra.mxu0 %v2427
    %v2689 = vpop.f32.mrf.mxu0
    %v2690 = vadd.f32 0.0, %v2689
    %v2691 = vpop.f32.mrf.mxu0
    %v2692 = vpop.f32.mrf.mxu0
    %v2693 = vadd.f32 0.0, %v2692
    %v2694 = vpop.f32.mrf.mxu0
    %2695 = vmatprep.mubr.bf16.mxu0 0
    %2696 = vmatmul.mubr.bf16.gmra.mxu0 %v2430
    %v2697 = vpop.f32.mrf.mxu0
    %v2698 = vadd.f32 0.0, %v2697
    %v2699 = vpop.f32.mrf.mxu0
    %v2700 = vpop.f32.mrf.mxu0
    %v2701 = vadd.f32 0.0, %v2700
    %v2702 = vpop.f32.mrf.mxu0
    %2703 = vmatprep.mubr.bf16.mxu0 0
    %2704 = vmatmul.mubr.bf16.gmra.mxu0 %v2433
    %v2705 = vpop.f32.mrf.mxu0
    %v2706 = vadd.f32 0.0, %v2705
    %v2707 = vpop.f32.mrf.mxu0
    %v2708 = vpop.f32.mrf.mxu0
    %v2709 = vadd.f32 0.0, %v2708
    %v2710 = vpop.f32.mrf.mxu0
    %2711 = vmatprep.mubr.bf16.mxu0 0
    %2712 = vmatmul.mubr.bf16.gmra.mxu0 %v2436
    %v2713 = vpop.f32.mrf.mxu0
    %v2714 = vadd.f32 0.0, %v2713
    %v2715 = vpop.f32.mrf.mxu0
    %v2716 = vpop.f32.mrf.mxu0
    %v2717 = vadd.f32 0.0, %v2716
    %v2718 = vpop.f32.mrf.mxu0
    %2719 = vmatprep.mubr.bf16.mxu0 0
    %2720 = vmatmul.mubr.bf16.gmra.mxu0 %v2439
    %v2721 = vpop.f32.mrf.mxu0
    %v2722 = vadd.f32 0.0, %v2721
    %v2723 = vpop.f32.mrf.mxu0
    %v2724 = vpop.f32.mrf.mxu0
    %v2725 = vadd.f32 0.0, %v2724
    %v2726 = vpop.f32.mrf.mxu0
    %2727 = vmatprep.mubr.bf16.mxu0 0
    %2728 = vmatmul.mubr.bf16.gmra.mxu0 %v2442
    %v2729 = vpop.f32.mrf.mxu0
    %v2730 = vadd.f32 0.0, %v2729
    %v2731 = vpop.f32.mrf.mxu0
    %v2732 = vpop.f32.mrf.mxu0
    %v2733 = vadd.f32 0.0, %v2732
    %v2734 = vpop.f32.mrf.mxu0
    %2735 = vdwg.mxu0
    %v2736 = vadd.f32 %v1673, %v2482
    %v2737 = vadd.f32 %v1676, %v2485
    %v2738 = vadd.f32 %v1681, %v2490
    %v2739 = vadd.f32 %v1684, %v2493
    %v2740 = vadd.f32 %v1689, %v2498
    %v2741 = vadd.f32 %v1692, %v2501
    %v2742 = vadd.f32 %v1697, %v2506
    %v2743 = vadd.f32 %v1700, %v2509
    %v2744 = vadd.f32 %v1705, %v2514
    %v2745 = vadd.f32 %v1708, %v2517
    %v2746 = vadd.f32 %v1713, %v2522
    %v2747 = vadd.f32 %v1716, %v2525
    %v2748 = vadd.f32 %v1721, %v2530
    %v2749 = vadd.f32 %v1724, %v2533
    %v2750 = vadd.f32 %v1729, %v2538
    %v2751 = vadd.f32 %v1732, %v2541
    %v2752 = vadd.f32 %v1737, %v2546
    %v2753 = vadd.f32 %v1740, %v2549
    %v2754 = vadd.f32 %v1745, %v2554
    %v2755 = vadd.f32 %v1748, %v2557
    %v2756 = vadd.f32 %v1753, %v2562
    %v2757 = vadd.f32 %v1756, %v2565
    %v2758 = vadd.f32 %v1761, %v2570
    %v2759 = vadd.f32 %v1764, %v2573
    %v2760 = vadd.f32 %v1769, %v2578
    %v2761 = vadd.f32 %v1772, %v2581
    %v2762 = vadd.f32 %v1777, %v2586
    %v2763 = vadd.f32 %v1780, %v2589
    %v2764 = vadd.f32 %v1785, %v2594
    %v2765 = vadd.f32 %v1788, %v2597
    %v2766 = vadd.f32 %v1793, %v2602
    %v2767 = vadd.f32 %v1796, %v2605
    %v2768 = vadd.f32 %v1801, %v2610
    %v2769 = vadd.f32 %v1804, %v2613
    %v2770 = vadd.f32 %v1809, %v2618
    %v2771 = vadd.f32 %v1812, %v2621
    %v2772 = vadd.f32 %v1817, %v2626
    %v2773 = vadd.f32 %v1820, %v2629
    %v2774 = vadd.f32 %v1825, %v2634
    %v2775 = vadd.f32 %v1828, %v2637
    %v2776 = vadd.f32 %v1833, %v2642
    %v2777 = vadd.f32 %v1836, %v2645
    %v2778 = vadd.f32 %v1841, %v2650
    %v2779 = vadd.f32 %v1844, %v2653
    %v2780 = vadd.f32 %v1849, %v2658
    %v2781 = vadd.f32 %v1852, %v2661
    %v2782 = vadd.f32 %v1857, %v2666
    %v2783 = vadd.f32 %v1860, %v2669
    %v2784 = vadd.f32 %v1865, %v2674
    %v2785 = vadd.f32 %v1868, %v2677
    %v2786 = vadd.f32 %v1873, %v2682
    %v2787 = vadd.f32 %v1876, %v2685
    %v2788 = vadd.f32 %v1881, %v2690
    %v2789 = vadd.f32 %v1884, %v2693
    %v2790 = vadd.f32 %v1889, %v2698
    %v2791 = vadd.f32 %v1892, %v2701
    %v2792 = vadd.f32 %v1897, %v2706
    %v2793 = vadd.f32 %v1900, %v2709
    %v2794 = vadd.f32 %v1905, %v2714
    %v2795 = vadd.f32 %v1908, %v2717
    %v2796 = vadd.f32 %v1913, %v2722
    %v2797 = vadd.f32 %v1916, %v2725
    %v2798 = vadd.f32 %v1921, %v2730
    %v2799 = vadd.f32 %v1924, %v2733
    %v2800 = vld [vmem:[%s1] sm:$0xf]
    %v2801 = vld [vmem:[%s1 + $0x4] sm:$0xf]
    %v2802 = vld [vmem:[%s1 + $0xc] sm:$0xf]
    %v2803 = vld [vmem:[%s1 + $0x10] sm:$0xf]
    %v2804 = vld [vmem:[%s1 + $0x18] sm:$0xf]
    %v2805 = vld [vmem:[%s1 + $0x1c] sm:$0xf]
    %v2806 = vld [vmem:[%s1 + $0x24] sm:$0xf]
    %v2807 = vld [vmem:[%s1 + $0x28] sm:$0xf]
    %v2808 = vld [vmem:[%s1 + $0x30] sm:$0xf]
    %v2809 = vld [vmem:[%s1 + $0x34] sm:$0xf]
    %v2810 = vld [vmem:[%s1 + $0x3c] sm:$0xf]
    %v2811 = vld [vmem:[%s1 + $0x40] sm:$0xf]
    %v2812 = vld [vmem:[%s1 + $0x48] sm:$0xf]
    %v2813 = vld [vmem:[%s1 + $0x4c] sm:$0xf]
    %v2814 = vld [vmem:[%s1 + $0x54] sm:$0xf]
    %v2815 = vld [vmem:[%s1 + $0x58] sm:$0xf]
    %v2816 = vld [vmem:[%s1 + $0x60] sm:$0xf]
    %v2817 = vld [vmem:[%s1 + $0x64] sm:$0xf]
    %v2818 = vld [vmem:[%s1 + $0x6c] sm:$0xf]
    %v2819 = vld [vmem:[%s1 + $0x70] sm:$0xf]
    %v2820 = vld [vmem:[%s1 + $0x78] sm:$0xf]
    %v2821 = vld [vmem:[%s1 + $0x7c] sm:$0xf]
    %v2822 = vld [vmem:[%s1 + $0x84] sm:$0xf]
    %v2823 = vld [vmem:[%s1 + $0x88] sm:$0xf]
    %v2824 = vld [vmem:[%s1 + $0x90] sm:$0xf]
    %v2825 = vld [vmem:[%s1 + $0x94] sm:$0xf]
    %v2826 = vld [vmem:[%s1 + $0x9c] sm:$0xf]
    %v2827 = vld [vmem:[%s1 + $0xa0] sm:$0xf]
    %v2828 = vld [vmem:[%s1 + $0xa8] sm:$0xf]
    %v2829 = vld [vmem:[%s1 + $0xac] sm:$0xf]
    %v2830 = vld [vmem:[%s1 + $0xb4] sm:$0xf]
    %v2831 = vld [vmem:[%s1 + $0xb8] sm:$0xf]
    %v2832 = vld [vmem:[%s1 + $0xc0] sm:$0xf]
    %v2833 = vld [vmem:[%s1 + $0xc4] sm:$0xf]
    %v2834 = vld [vmem:[%s1 + $0xcc] sm:$0xf]
    %v2835 = vld [vmem:[%s1 + $0xd0] sm:$0xf]
    %v2836 = vld [vmem:[%s1 + $0xd8] sm:$0xf]
    %v2837 = vld [vmem:[%s1 + $0xdc] sm:$0xf]
    %v2838 = vld [vmem:[%s1 + $0xe4] sm:$0xf]
    %v2839 = vld [vmem:[%s1 + $0xe8] sm:$0xf]
    %v2840 = vld [vmem:[%s1 + $0xf0] sm:$0xf]
    %v2841 = vld [vmem:[%s1 + $0xf4] sm:$0xf]
    %v2842 = vld [vmem:[%s1 + $0xfc] sm:$0xf]
    %v2843 = vld [vmem:[%s1 + $0x100] sm:$0xf]
    %v2844 = vld [vmem:[%s1 + $0x108] sm:$0xf]
    %v2845 = vld [vmem:[%s1 + $0x10c] sm:$0xf]
    %v2846 = vld [vmem:[%s1 + $0x114] sm:$0xf]
    %v2847 = vld [vmem:[%s1 + $0x118] sm:$0xf]
    %v2848 = vld [vmem:[%s1 + $0x120] sm:$0xf]
    %v2849 = vld [vmem:[%s1 + $0x124] sm:$0xf]
    %v2850 = vld [vmem:[%s1 + $0x12c] sm:$0xf]
    %v2851 = vld [vmem:[%s1 + $0x130] sm:$0xf]
    %v2852 = vld [vmem:[%s1 + $0x138] sm:$0xf]
    %v2853 = vld [vmem:[%s1 + $0x13c] sm:$0xf]
    %v2854 = vld [vmem:[%s1 + $0x144] sm:$0xf]
    %v2855 = vld [vmem:[%s1 + $0x148] sm:$0xf]
    %v2856 = vld [vmem:[%s1 + $0x150] sm:$0xf]
    %v2857 = vld [vmem:[%s1 + $0x154] sm:$0xf]
    %v2858 = vld [vmem:[%s1 + $0x15c] sm:$0xf]
    %v2859 = vld [vmem:[%s1 + $0x160] sm:$0xf]
    %v2860 = vld [vmem:[%s1 + $0x168] sm:$0xf]
    %v2861 = vld [vmem:[%s1 + $0x16c] sm:$0xf]
    %v2862 = vld [vmem:[%s1 + $0x174] sm:$0xf]
    %v2863 = vld [vmem:[%s1 + $0x178] sm:$0xf]
    %s2864 = scalar_lea.vmem %s3, 6
    %v2865 = vld [vmem:[%s2864] sm:$0x3]
    %v2930 = vunpack.c.l.b16 %v2800
    %v2931 = vunpack.c.l.b16 %v2801
    %v2932 = vunpack.c.l.b16 %v2802
    %v2933 = vunpack.c.l.b16 %v2803
    %v2934 = vunpack.c.l.b16 %v2804
    %v2935 = vunpack.c.l.b16 %v2805
    %v2936 = vunpack.c.l.b16 %v2806
    %v2937 = vunpack.c.l.b16 %v2807
    %v2938 = vunpack.c.l.b16 %v2808
    %v2939 = vunpack.c.l.b16 %v2809
    %v2940 = vunpack.c.l.b16 %v2810
    %v2941 = vunpack.c.l.b16 %v2811
    %v2942 = vunpack.c.l.b16 %v2812
    %v2943 = vunpack.c.l.b16 %v2813
    %v2944 = vunpack.c.l.b16 %v2814
    %v2945 = vunpack.c.l.b16 %v2815
    %v2946 = vunpack.c.l.b16 %v2816
    %v2947 = vunpack.c.l.b16 %v2817
    %v2948 = vunpack.c.l.b16 %v2818
    %v2949 = vunpack.c.l.b16 %v2819
    %v2950 = vunpack.c.l.b16 %v2820
    %v2951 = vunpack.c.l.b16 %v2821
    %v2952 = vunpack.c.l.b16 %v2822
    %v2953 = vunpack.c.l.b16 %v2823
    %v2954 = vunpack.c.l.b16 %v2824
    %v2955 = vunpack.c.l.b16 %v2825
    %v2956 = vunpack.c.l.b16 %v2826
    %v2957 = vunpack.c.l.b16 %v2827
    %v2958 = vunpack.c.l.b16 %v2828
    %v2959 = vunpack.c.l.b16 %v2829
    %v2960 = vunpack.c.l.b16 %v2830
    %v2961 = vunpack.c.l.b16 %v2831
    %v2962 = vunpack.c.l.b16 %v2832
    %v2963 = vunpack.c.l.b16 %v2833
    %v2964 = vunpack.c.l.b16 %v2834
    %v2965 = vunpack.c.l.b16 %v2835
    %v2966 = vunpack.c.l.b16 %v2836
    %v2967 = vunpack.c.l.b16 %v2837
    %v2968 = vunpack.c.l.b16 %v2838
    %v2969 = vunpack.c.l.b16 %v2839
    %v2970 = vunpack.c.l.b16 %v2840
    %v2971 = vunpack.c.l.b16 %v2841
    %v2972 = vunpack.c.l.b16 %v2842
    %v2973 = vunpack.c.l.b16 %v2843
    %v2974 = vunpack.c.l.b16 %v2844
    %v2975 = vunpack.c.l.b16 %v2845
    %v2976 = vunpack.c.l.b16 %v2846
    %v2977 = vunpack.c.l.b16 %v2847
    %v2978 = vunpack.c.l.b16 %v2848
    %v2979 = vunpack.c.l.b16 %v2849
    %v2980 = vunpack.c.l.b16 %v2850
    %v2981 = vunpack.c.l.b16 %v2851
    %v2982 = vunpack.c.l.b16 %v2852
    %v2983 = vunpack.c.l.b16 %v2853
    %v2984 = vunpack.c.l.b16 %v2854
    %v2985 = vunpack.c.l.b16 %v2855
    %v2986 = vunpack.c.l.b16 %v2856
    %v2987 = vunpack.c.l.b16 %v2857
    %v2988 = vunpack.c.l.b16 %v2858
    %v2989 = vunpack.c.l.b16 %v2859
    %v2990 = vunpack.c.l.b16 %v2860
    %v2991 = vunpack.c.l.b16 %v2861
    %v2992 = vunpack.c.l.b16 %v2862
    %v2993 = vunpack.c.l.b16 %v2863
    %v2994 = vpack.c.b16 %v2931, %v2930
    %v2995 = vpack.c.b16 %v2933, %v2932
    %v2996 = vpack.c.b16 %v2935, %v2934
    %v2997 = vpack.c.b16 %v2937, %v2936
    %v2998 = vpack.c.b16 %v2939, %v2938
    %v2999 = vpack.c.b16 %v2941, %v2940
    %v3000 = vpack.c.b16 %v2943, %v2942
    %v3001 = vpack.c.b16 %v2945, %v2944
    %v3002 = vpack.c.b16 %v2947, %v2946
    %v3003 = vpack.c.b16 %v2949, %v2948
    %v3004 = vpack.c.b16 %v2951, %v2950
    %v3005 = vpack.c.b16 %v2953, %v2952
    %v3006 = vpack.c.b16 %v2955, %v2954
    %v3007 = vpack.c.b16 %v2957, %v2956
    %v3008 = vpack.c.b16 %v2959, %v2958
    %v3009 = vpack.c.b16 %v2961, %v2960
    %v3010 = vpack.c.b16 %v2963, %v2962
    %v3011 = vpack.c.b16 %v2965, %v2964
    %v3012 = vpack.c.b16 %v2967, %v2966
    %v3013 = vpack.c.b16 %v2969, %v2968
    %v3014 = vpack.c.b16 %v2971, %v2970
    %v3015 = vpack.c.b16 %v2973, %v2972
    %v3016 = vpack.c.b16 %v2975, %v2974
    %v3017 = vpack.c.b16 %v2977, %v2976
    %v3018 = vpack.c.b16 %v2979, %v2978
    %v3019 = vpack.c.b16 %v2981, %v2980
    %v3020 = vpack.c.b16 %v2983, %v2982
    %v3021 = vpack.c.b16 %v2985, %v2984
    %v3022 = vpack.c.b16 %v2987, %v2986
    %v3023 = vpack.c.b16 %v2989, %v2988
    %v3024 = vpack.c.b16 %v2991, %v2990
    %v3025 = vpack.c.b16 %v2993, %v2992
    %v3027 = vsel %vm989, %v2994, 0
    %v3030 = vsel %vm989, %v2995, 0
    %v3033 = vsel %vm989, %v2996, 0
    %v3036 = vsel %vm989, %v2997, 0
    %v3039 = vsel %vm989, %v2998, 0
    %v3042 = vsel %vm989, %v2999, 0
    %v3045 = vsel %vm989, %v3000, 0
    %v3048 = vsel %vm989, %v3001, 0
    %v3051 = vsel %vm989, %v3002, 0
    %v3054 = vsel %vm989, %v3003, 0
    %v3057 = vsel %vm989, %v3004, 0
    %v3060 = vsel %vm989, %v3005, 0
    %v3063 = vsel %vm989, %v3006, 0
    %v3066 = vsel %vm989, %v3007, 0
    %v3069 = vsel %vm989, %v3008, 0
    %v3072 = vsel %vm989, %v3009, 0
    %v3075 = vsel %vm989, %v3010, 0
    %v3078 = vsel %vm989, %v3011, 0
    %v3081 = vsel %vm989, %v3012, 0
    %v3084 = vsel %vm989, %v3013, 0
    %v3087 = vsel %vm989, %v3014, 0
    %v3090 = vsel %vm989, %v3015, 0
    %v3093 = vsel %vm989, %v3016, 0
    %v3096 = vsel %vm989, %v3017, 0
    %v3099 = vsel %vm989, %v3018, 0
    %v3102 = vsel %vm989, %v3019, 0
    %v3105 = vsel %vm989, %v3020, 0
    %v3108 = vsel %vm989, %v3021, 0
    %v3111 = vsel %vm989, %v3022, 0
    %v3114 = vsel %vm989, %v3023, 0
    %v3117 = vsel %vm989, %v3024, 0
    %v3120 = vsel %vm989, %v3025, 0
    %v3123 = vsel %vm1086, %v2865, 0
    %3125 = vmatprep.subr.bf16.mxu0 0
    %3126 = vmatpush1.bf16.msra.mxu0 0
    %3127 = vmatprep.subr.bf16.mxu0 0
    %3128 = vmatpush1.bf16.msra.mxu0 0
    %3129 = vmatprep.subr.bf16.mxu0 0
    %3130 = vmatpush1.bf16.msra.mxu0 0
    %3131 = vmatprep.subr.bf16.mxu0 0
    %3132 = vmatpush1.bf16.msra.mxu0 0
    %3133 = vmatprep.subr.bf16.mxu0 0
    %3134 = vmatpush1.bf16.msra.mxu0 0
    %3135 = vmatprep.subr.bf16.mxu0 0
    %3136 = vmatpush1.bf16.msra.mxu0 0
    %3137 = vmatprep.subr.bf16.mxu0 0
    %3138 = vmatpush1.bf16.msra.mxu0 0
    %3139 = vmatprep.subr.bf16.mxu0 0
    %3140 = vmatpush1.bf16.msra.mxu0 %v3123
    %3141 = vmatprep.subr.bf16.mxu0 0
    %3142 = vmatpush2.bf16.msra.mxu0 0
    %3143 = vmatprep.subr.bf16.mxu0 0
    %3144 = vmatpush2.bf16.msra.mxu0 0
    %3145 = vmatprep.subr.bf16.mxu0 0
    %3146 = vmatpush2.bf16.msra.mxu0 0
    %3147 = vmatprep.subr.bf16.mxu0 0
    %3148 = vmatpush2.bf16.msra.mxu0 0
    %3149 = vmatprep.subr.bf16.mxu0 0
    %3150 = vmatpush2.bf16.msra.mxu0 0
    %3151 = vmatprep.subr.bf16.mxu0 0
    %3152 = vmatpush2.bf16.msra.mxu0 0
    %3153 = vmatprep.subr.bf16.mxu0 0
    %3154 = vmatpush2.bf16.msra.mxu0 0
    %3155 = vmatprep.subr.bf16.mxu0 0
    %3156 = vmatpush2.bf16.msra.mxu0 0
    %3157 = vmatprep.mubr.bf16.mxu0 0
    %3158 = vmatmul.mubr.bf16.gmra.mxu0 %v3027
    %v3159 = vpop.f32.mrf.mxu0
    %v3160 = vadd.f32 0.0, %v3159
    %v3161 = vpop.f32.mrf.mxu0
    %v3162 = vpop.f32.mrf.mxu0
    %v3163 = vadd.f32 0.0, %v3162
    %v3164 = vpop.f32.mrf.mxu0
    %3165 = vmatprep.mubr.bf16.mxu0 0
    %3166 = vmatmul.mubr.bf16.gmra.mxu0 %v3030
    %v3167 = vpop.f32.mrf.mxu0
    %v3168 = vadd.f32 0.0, %v3167
    %v3169 = vpop.f32.mrf.mxu0
    %v3170 = vpop.f32.mrf.mxu0
    %v3171 = vadd.f32 0.0, %v3170
    %v3172 = vpop.f32.mrf.mxu0
    %3173 = vmatprep.mubr.bf16.mxu0 0
    %3174 = vmatmul.mubr.bf16.gmra.mxu0 %v3033
    %v3175 = vpop.f32.mrf.mxu0
    %v3176 = vadd.f32 0.0, %v3175
    %v3177 = vpop.f32.mrf.mxu0
    %v3178 = vpop.f32.mrf.mxu0
    %v3179 = vadd.f32 0.0, %v3178
    %v3180 = vpop.f32.mrf.mxu0
    %3181 = vmatprep.mubr.bf16.mxu0 0
    %3182 = vmatmul.mubr.bf16.gmra.mxu0 %v3036
    %v3183 = vpop.f32.mrf.mxu0
    %v3184 = vadd.f32 0.0, %v3183
    %v3185 = vpop.f32.mrf.mxu0
    %v3186 = vpop.f32.mrf.mxu0
    %v3187 = vadd.f32 0.0, %v3186
    %v3188 = vpop.f32.mrf.mxu0
    %3189 = vmatprep.mubr.bf16.mxu0 0
    %3190 = vmatmul.mubr.bf16.gmra.mxu0 %v3039
    %v3191 = vpop.f32.mrf.mxu0
    %v3192 = vadd.f32 0.0, %v3191
    %v3193 = vpop.f32.mrf.mxu0
    %v3194 = vpop.f32.mrf.mxu0
    %v3195 = vadd.f32 0.0, %v3194
    %v3196 = vpop.f32.mrf.mxu0
    %3197 = vmatprep.mubr.bf16.mxu0 0
    %3198 = vmatmul.mubr.bf16.gmra.mxu0 %v3042
    %v3199 = vpop.f32.mrf.mxu0
    %v3200 = vadd.f32 0.0, %v3199
    %v3201 = vpop.f32.mrf.mxu0
    %v3202 = vpop.f32.mrf.mxu0
    %v3203 = vadd.f32 0.0, %v3202
    %v3204 = vpop.f32.mrf.mxu0
    %3205 = vmatprep.mubr.bf16.mxu0 0
    %3206 = vmatmul.mubr.bf16.gmra.mxu0 %v3045
    %v3207 = vpop.f32.mrf.mxu0
    %v3208 = vadd.f32 0.0, %v3207
    %v3209 = vpop.f32.mrf.mxu0
    %v3210 = vpop.f32.mrf.mxu0
    %v3211 = vadd.f32 0.0, %v3210
    %v3212 = vpop.f32.mrf.mxu0
    %3213 = vmatprep.mubr.bf16.mxu0 0
    %3214 = vmatmul.mubr.bf16.gmra.mxu0 %v3048
    %v3215 = vpop.f32.mrf.mxu0
    %v3216 = vadd.f32 0.0, %v3215
    %v3217 = vpop.f32.mrf.mxu0
    %v3218 = vpop.f32.mrf.mxu0
    %v3219 = vadd.f32 0.0, %v3218
    %v3220 = vpop.f32.mrf.mxu0
    %3221 = vmatprep.mubr.bf16.mxu0 0
    %3222 = vmatmul.mubr.bf16.gmra.mxu0 %v3051
    %v3223 = vpop.f32.mrf.mxu0
    %v3224 = vadd.f32 0.0, %v3223
    %v3225 = vpop.f32.mrf.mxu0
    %v3226 = vpop.f32.mrf.mxu0
    %v3227 = vadd.f32 0.0, %v3226
    %v3228 = vpop.f32.mrf.mxu0
    %3229 = vmatprep.mubr.bf16.mxu0 0
    %3230 = vmatmul.mubr.bf16.gmra.mxu0 %v3054
    %v3231 = vpop.f32.mrf.mxu0
    %v3232 = vadd.f32 0.0, %v3231
    %v3233 = vpop.f32.mrf.mxu0
    %v3234 = vpop.f32.mrf.mxu0
    %v3235 = vadd.f32 0.0, %v3234
    %v3236 = vpop.f32.mrf.mxu0
    %3237 = vmatprep.mubr.bf16.mxu0 0
    %3238 = vmatmul.mubr.bf16.gmra.mxu0 %v3057
    %v3239 = vpop.f32.mrf.mxu0
    %v3240 = vadd.f32 0.0, %v3239
    %v3241 = vpop.f32.mrf.mxu0
    %v3242 = vpop.f32.mrf.mxu0
    %v3243 = vadd.f32 0.0, %v3242
    %v3244 = vpop.f32.mrf.mxu0
    %3245 = vmatprep.mubr.bf16.mxu0 0
    %3246 = vmatmul.mubr.bf16.gmra.mxu0 %v3060
    %v3247 = vpop.f32.mrf.mxu0
    %v3248 = vadd.f32 0.0, %v3247
    %v3249 = vpop.f32.mrf.mxu0
    %v3250 = vpop.f32.mrf.mxu0
    %v3251 = vadd.f32 0.0, %v3250
    %v3252 = vpop.f32.mrf.mxu0
    %3253 = vmatprep.mubr.bf16.mxu0 0
    %3254 = vmatmul.mubr.bf16.gmra.mxu0 %v3063
    %v3255 = vpop.f32.mrf.mxu0
    %v3256 = vadd.f32 0.0, %v3255
    %v3257 = vpop.f32.mrf.mxu0
    %v3258 = vpop.f32.mrf.mxu0
    %v3259 = vadd.f32 0.0, %v3258
    %v3260 = vpop.f32.mrf.mxu0
    %3261 = vmatprep.mubr.bf16.mxu0 0
    %3262 = vmatmul.mubr.bf16.gmra.mxu0 %v3066
    %v3263 = vpop.f32.mrf.mxu0
    %v3264 = vadd.f32 0.0, %v3263
    %v3265 = vpop.f32.mrf.mxu0
    %v3266 = vpop.f32.mrf.mxu0
    %v3267 = vadd.f32 0.0, %v3266
    %v3268 = vpop.f32.mrf.mxu0
    %3269 = vmatprep.mubr.bf16.mxu0 0
    %3270 = vmatmul.mubr.bf16.gmra.mxu0 %v3069
    %v3271 = vpop.f32.mrf.mxu0
    %v3272 = vadd.f32 0.0, %v3271
    %v3273 = vpop.f32.mrf.mxu0
    %v3274 = vpop.f32.mrf.mxu0
    %v3275 = vadd.f32 0.0, %v3274
    %v3276 = vpop.f32.mrf.mxu0
    %3277 = vmatprep.mubr.bf16.mxu0 0
    %3278 = vmatmul.mubr.bf16.gmra.mxu0 %v3072
    %v3279 = vpop.f32.mrf.mxu0
    %v3280 = vadd.f32 0.0, %v3279
    %v3281 = vpop.f32.mrf.mxu0
    %v3282 = vpop.f32.mrf.mxu0
    %v3283 = vadd.f32 0.0, %v3282
    %v3284 = vpop.f32.mrf.mxu0
    %3285 = vmatprep.mubr.bf16.mxu0 0
    %3286 = vmatmul.mubr.bf16.gmra.mxu0 %v3075
    %v3287 = vpop.f32.mrf.mxu0
    %v3288 = vadd.f32 0.0, %v3287
    %v3289 = vpop.f32.mrf.mxu0
    %v3290 = vpop.f32.mrf.mxu0
    %v3291 = vadd.f32 0.0, %v3290
    %v3292 = vpop.f32.mrf.mxu0
    %3293 = vmatprep.mubr.bf16.mxu0 0
    %3294 = vmatmul.mubr.bf16.gmra.mxu0 %v3078
    %v3295 = vpop.f32.mrf.mxu0
    %v3296 = vadd.f32 0.0, %v3295
    %v3297 = vpop.f32.mrf.mxu0
    %v3298 = vpop.f32.mrf.mxu0
    %v3299 = vadd.f32 0.0, %v3298
    %v3300 = vpop.f32.mrf.mxu0
    %3301 = vmatprep.mubr.bf16.mxu0 0
    %3302 = vmatmul.mubr.bf16.gmra.mxu0 %v3081
    %v3303 = vpop.f32.mrf.mxu0
    %v3304 = vadd.f32 0.0, %v3303
    %v3305 = vpop.f32.mrf.mxu0
    %v3306 = vpop.f32.mrf.mxu0
    %v3307 = vadd.f32 0.0, %v3306
    %v3308 = vpop.f32.mrf.mxu0
    %3309 = vmatprep.mubr.bf16.mxu0 0
    %3310 = vmatmul.mubr.bf16.gmra.mxu0 %v3084
    %v3311 = vpop.f32.mrf.mxu0
    %v3312 = vadd.f32 0.0, %v3311
    %v3313 = vpop.f32.mrf.mxu0
    %v3314 = vpop.f32.mrf.mxu0
    %v3315 = vadd.f32 0.0, %v3314
    %v3316 = vpop.f32.mrf.mxu0
    %3317 = vmatprep.mubr.bf16.mxu0 0
    %3318 = vmatmul.mubr.bf16.gmra.mxu0 %v3087
    %v3319 = vpop.f32.mrf.mxu0
    %v3320 = vadd.f32 0.0, %v3319
    %v3321 = vpop.f32.mrf.mxu0
    %v3322 = vpop.f32.mrf.mxu0
    %v3323 = vadd.f32 0.0, %v3322
    %v3324 = vpop.f32.mrf.mxu0
    %3325 = vmatprep.mubr.bf16.mxu0 0
    %3326 = vmatmul.mubr.bf16.gmra.mxu0 %v3090
    %v3327 = vpop.f32.mrf.mxu0
    %v3328 = vadd.f32 0.0, %v3327
    %v3329 = vpop.f32.mrf.mxu0
    %v3330 = vpop.f32.mrf.mxu0
    %v3331 = vadd.f32 0.0, %v3330
    %v3332 = vpop.f32.mrf.mxu0
    %3333 = vmatprep.mubr.bf16.mxu0 0
    %3334 = vmatmul.mubr.bf16.gmra.mxu0 %v3093
    %v3335 = vpop.f32.mrf.mxu0
    %v3336 = vadd.f32 0.0, %v3335
    %v3337 = vpop.f32.mrf.mxu0
    %v3338 = vpop.f32.mrf.mxu0
    %v3339 = vadd.f32 0.0, %v3338
    %v3340 = vpop.f32.mrf.mxu0
    %3341 = vmatprep.mubr.bf16.mxu0 0
    %3342 = vmatmul.mubr.bf16.gmra.mxu0 %v3096
    %v3343 = vpop.f32.mrf.mxu0
    %v3344 = vadd.f32 0.0, %v3343
    %v3345 = vpop.f32.mrf.mxu0
    %v3346 = vpop.f32.mrf.mxu0
    %v3347 = vadd.f32 0.0, %v3346
    %v3348 = vpop.f32.mrf.mxu0
    %3349 = vmatprep.mubr.bf16.mxu0 0
    %3350 = vmatmul.mubr.bf16.gmra.mxu0 %v3099
    %v3351 = vpop.f32.mrf.mxu0
    %v3352 = vadd.f32 0.0, %v3351
    %v3353 = vpop.f32.mrf.mxu0
    %v3354 = vpop.f32.mrf.mxu0
    %v3355 = vadd.f32 0.0, %v3354
    %v3356 = vpop.f32.mrf.mxu0
    %3357 = vmatprep.mubr.bf16.mxu0 0
    %3358 = vmatmul.mubr.bf16.gmra.mxu0 %v3102
    %v3359 = vpop.f32.mrf.mxu0
    %v3360 = vadd.f32 0.0, %v3359
    %v3361 = vpop.f32.mrf.mxu0
    %v3362 = vpop.f32.mrf.mxu0
    %v3363 = vadd.f32 0.0, %v3362
    %v3364 = vpop.f32.mrf.mxu0
    %3365 = vmatprep.mubr.bf16.mxu0 0
    %3366 = vmatmul.mubr.bf16.gmra.mxu0 %v3105
    %v3367 = vpop.f32.mrf.mxu0
    %v3368 = vadd.f32 0.0, %v3367
    %v3369 = vpop.f32.mrf.mxu0
    %v3370 = vpop.f32.mrf.mxu0
    %v3371 = vadd.f32 0.0, %v3370
    %v3372 = vpop.f32.mrf.mxu0
    %3373 = vmatprep.mubr.bf16.mxu0 0
    %3374 = vmatmul.mubr.bf16.gmra.mxu0 %v3108
    %v3375 = vpop.f32.mrf.mxu0
    %v3376 = vadd.f32 0.0, %v3375
    %v3377 = vpop.f32.mrf.mxu0
    %v3378 = vpop.f32.mrf.mxu0
    %v3379 = vadd.f32 0.0, %v3378
    %v3380 = vpop.f32.mrf.mxu0
    %3381 = vmatprep.mubr.bf16.mxu0 0
    %3382 = vmatmul.mubr.bf16.gmra.mxu0 %v3111
    %v3383 = vpop.f32.mrf.mxu0
    %v3384 = vadd.f32 0.0, %v3383
    %v3385 = vpop.f32.mrf.mxu0
    %v3386 = vpop.f32.mrf.mxu0
    %v3387 = vadd.f32 0.0, %v3386
    %v3388 = vpop.f32.mrf.mxu0
    %3389 = vmatprep.mubr.bf16.mxu0 0
    %3390 = vmatmul.mubr.bf16.gmra.mxu0 %v3114
    %v3391 = vpop.f32.mrf.mxu0
    %v3392 = vadd.f32 0.0, %v3391
    %v3393 = vpop.f32.mrf.mxu0
    %v3394 = vpop.f32.mrf.mxu0
    %v3395 = vadd.f32 0.0, %v3394
    %v3396 = vpop.f32.mrf.mxu0
    %3397 = vmatprep.mubr.bf16.mxu0 0
    %3398 = vmatmul.mubr.bf16.gmra.mxu0 %v3117
    %v3399 = vpop.f32.mrf.mxu0
    %v3400 = vadd.f32 0.0, %v3399
    %v3401 = vpop.f32.mrf.mxu0
    %v3402 = vpop.f32.mrf.mxu0
    %v3403 = vadd.f32 0.0, %v3402
    %v3404 = vpop.f32.mrf.mxu0
    %3405 = vmatprep.mubr.bf16.mxu0 0
    %3406 = vmatmul.mubr.bf16.gmra.mxu0 %v3120
    %v3407 = vpop.f32.mrf.mxu0
    %v3408 = vadd.f32 0.0, %v3407
    %v3409 = vpop.f32.mrf.mxu0
    %v3410 = vpop.f32.mrf.mxu0
    %v3411 = vadd.f32 0.0, %v3410
    %v3412 = vpop.f32.mrf.mxu0
    %3413 = vdwg.mxu0
    %v3414 = vadd.f32 %v2736, %v3160
    %v3415 = vadd.f32 %v2737, %v3163
    %v3416 = vadd.f32 %v2738, %v3168
    %v3417 = vadd.f32 %v2739, %v3171
    %v3418 = vadd.f32 %v2740, %v3176
    %v3419 = vadd.f32 %v2741, %v3179
    %v3420 = vadd.f32 %v2742, %v3184
    %v3421 = vadd.f32 %v2743, %v3187
    %v3422 = vadd.f32 %v2744, %v3192
    %v3423 = vadd.f32 %v2745, %v3195
    %v3424 = vadd.f32 %v2746, %v3200
    %v3425 = vadd.f32 %v2747, %v3203
    %v3426 = vadd.f32 %v2748, %v3208
    %v3427 = vadd.f32 %v2749, %v3211
    %v3428 = vadd.f32 %v2750, %v3216
    %v3429 = vadd.f32 %v2751, %v3219
    %v3430 = vadd.f32 %v2752, %v3224
    %v3431 = vadd.f32 %v2753, %v3227
    %v3432 = vadd.f32 %v2754, %v3232
    %v3433 = vadd.f32 %v2755, %v3235
    %v3434 = vadd.f32 %v2756, %v3240
    %v3435 = vadd.f32 %v2757, %v3243
    %v3436 = vadd.f32 %v2758, %v3248
    %v3437 = vadd.f32 %v2759, %v3251
    %v3438 = vadd.f32 %v2760, %v3256
    %v3439 = vadd.f32 %v2761, %v3259
    %v3440 = vadd.f32 %v2762, %v3264
    %v3441 = vadd.f32 %v2763, %v3267
    %v3442 = vadd.f32 %v2764, %v3272
    %v3443 = vadd.f32 %v2765, %v3275
    %v3444 = vadd.f32 %v2766, %v3280
    %v3445 = vadd.f32 %v2767, %v3283
    %v3446 = vadd.f32 %v2768, %v3288
    %v3447 = vadd.f32 %v2769, %v3291
    %v3448 = vadd.f32 %v2770, %v3296
    %v3449 = vadd.f32 %v2771, %v3299
    %v3450 = vadd.f32 %v2772, %v3304
    %v3451 = vadd.f32 %v2773, %v3307
    %v3452 = vadd.f32 %v2774, %v3312
    %v3453 = vadd.f32 %v2775, %v3315
    %v3454 = vadd.f32 %v2776, %v3320
    %v3455 = vadd.f32 %v2777, %v3323
    %v3456 = vadd.f32 %v2778, %v3328
    %v3457 = vadd.f32 %v2779, %v3331
    %v3458 = vadd.f32 %v2780, %v3336
    %v3459 = vadd.f32 %v2781, %v3339
    %v3460 = vadd.f32 %v2782, %v3344
    %v3461 = vadd.f32 %v2783, %v3347
    %v3462 = vadd.f32 %v2784, %v3352
    %v3463 = vadd.f32 %v2785, %v3355
    %v3464 = vadd.f32 %v2786, %v3360
    %v3465 = vadd.f32 %v2787, %v3363
    %v3466 = vadd.f32 %v2788, %v3368
    %v3467 = vadd.f32 %v2789, %v3371
    %v3468 = vadd.f32 %v2790, %v3376
    %v3469 = vadd.f32 %v2791, %v3379
    %v3470 = vadd.f32 %v2792, %v3384
    %v3471 = vadd.f32 %v2793, %v3387
    %v3472 = vadd.f32 %v2794, %v3392
    %v3473 = vadd.f32 %v2795, %v3395
    %v3474 = vadd.f32 %v2796, %v3400
    %v3475 = vadd.f32 %v2797, %v3403
    %v3476 = vadd.f32 %v2798, %v3408
    %v3477 = vadd.f32 %v2799, %v3411
    %v3478 = vld [vmem:[%s1] sm:$0xf]
    %v3479 = vld [vmem:[%s1 + $0x4] sm:$0xf]
    %v3480 = vld [vmem:[%s1 + $0x8] sm:$0x1]
    %v3481 = vld [vmem:[%s1 + $0xc] sm:$0xf]
    %v3482 = vld [vmem:[%s1 + $0x10] sm:$0xf]
    %v3483 = vld [vmem:[%s1 + $0x14] sm:$0x1]
    %v3484 = vld [vmem:[%s1 + $0x18] sm:$0xf]
    %v3485 = vld [vmem:[%s1 + $0x1c] sm:$0xf]
    %v3486 = vld [vmem:[%s1 + $0x20] sm:$0x1]
    %v3487 = vld [vmem:[%s1 + $0x24] sm:$0xf]
    %v3488 = vld [vmem:[%s1 + $0x28] sm:$0xf]
    %v3489 = vld [vmem:[%s1 + $0x2c] sm:$0x1]
    %v3490 = vld [vmem:[%s1 + $0x30] sm:$0xf]
    %v3491 = vld [vmem:[%s1 + $0x34] sm:$0xf]
    %v3492 = vld [vmem:[%s1 + $0x38] sm:$0x1]
    %v3493 = vld [vmem:[%s1 + $0x3c] sm:$0xf]
    %v3494 = vld [vmem:[%s1 + $0x40] sm:$0xf]
    %v3495 = vld [vmem:[%s1 + $0x44] sm:$0x1]
    %v3496 = vld [vmem:[%s1 + $0x48] sm:$0xf]
    %v3497 = vld [vmem:[%s1 + $0x4c] sm:$0xf]
    %v3498 = vld [vmem:[%s1 + $0x50] sm:$0x1]
    %v3499 = vld [vmem:[%s1 + $0x54] sm:$0xf]
    %v3500 = vld [vmem:[%s1 + $0x58] sm:$0xf]
    %v3501 = vld [vmem:[%s1 + $0x5c] sm:$0x1]
    %v3502 = vld [vmem:[%s1 + $0x60] sm:$0xf]
    %v3503 = vld [vmem:[%s1 + $0x64] sm:$0xf]
    %v3504 = vld [vmem:[%s1 + $0x68] sm:$0x1]
    %v3505 = vld [vmem:[%s1 + $0x6c] sm:$0xf]
    %v3506 = vld [vmem:[%s1 + $0x70] sm:$0xf]
    %v3507 = vld [vmem:[%s1 + $0x74] sm:$0x1]
    %v3508 = vld [vmem:[%s1 + $0x78] sm:$0xf]
    %v3509 = vld [vmem:[%s1 + $0x7c] sm:$0xf]
    %v3510 = vld [vmem:[%s1 + $0x80] sm:$0x1]
    %v3511 = vld [vmem:[%s1 + $0x84] sm:$0xf]
    %v3512 = vld [vmem:[%s1 + $0x88] sm:$0xf]
    %v3513 = vld [vmem:[%s1 + $0x8c] sm:$0x1]
    %v3514 = vld [vmem:[%s1 + $0x90] sm:$0xf]
    %v3515 = vld [vmem:[%s1 + $0x94] sm:$0xf]
    %v3516 = vld [vmem:[%s1 + $0x98] sm:$0x1]
    %v3517 = vld [vmem:[%s1 + $0x9c] sm:$0xf]
    %v3518 = vld [vmem:[%s1 + $0xa0] sm:$0xf]
    %v3519 = vld [vmem:[%s1 + $0xa4] sm:$0x1]
    %v3520 = vld [vmem:[%s1 + $0xa8] sm:$0xf]
    %v3521 = vld [vmem:[%s1 + $0xac] sm:$0xf]
    %v3522 = vld [vmem:[%s1 + $0xb0] sm:$0x1]
    %v3523 = vld [vmem:[%s1 + $0xb4] sm:$0xf]
    %v3524 = vld [vmem:[%s1 + $0xb8] sm:$0xf]
    %v3525 = vld [vmem:[%s1 + $0xbc] sm:$0x1]
    %v3526 = vld [vmem:[%s1 + $0xc0] sm:$0xf]
    %v3527 = vld [vmem:[%s1 + $0xc4] sm:$0xf]
    %v3528 = vld [vmem:[%s1 + $0xc8] sm:$0x1]
    %v3529 = vld [vmem:[%s1 + $0xcc] sm:$0xf]
    %v3530 = vld [vmem:[%s1 + $0xd0] sm:$0xf]
    %v3531 = vld [vmem:[%s1 + $0xd4] sm:$0x1]
    %v3532 = vld [vmem:[%s1 + $0xd8] sm:$0xf]
    %v3533 = vld [vmem:[%s1 + $0xdc] sm:$0xf]
    %v3534 = vld [vmem:[%s1 + $0xe0] sm:$0x1]
    %v3535 = vld [vmem:[%s1 + $0xe4] sm:$0xf]
    %v3536 = vld [vmem:[%s1 + $0xe8] sm:$0xf]
    %v3537 = vld [vmem:[%s1 + $0xec] sm:$0x1]
    %v3538 = vld [vmem:[%s1 + $0xf0] sm:$0xf]
    %v3539 = vld [vmem:[%s1 + $0xf4] sm:$0xf]
    %v3540 = vld [vmem:[%s1 + $0xf8] sm:$0x1]
    %v3541 = vld [vmem:[%s1 + $0xfc] sm:$0xf]
    %v3542 = vld [vmem:[%s1 + $0x100] sm:$0xf]
    %v3543 = vld [vmem:[%s1 + $0x104] sm:$0x1]
    %v3544 = vld [vmem:[%s1 + $0x108] sm:$0xf]
    %v3545 = vld [vmem:[%s1 + $0x10c] sm:$0xf]
    %v3546 = vld [vmem:[%s1 + $0x110] sm:$0x1]
    %v3547 = vld [vmem:[%s1 + $0x114] sm:$0xf]
    %v3548 = vld [vmem:[%s1 + $0x118] sm:$0xf]
    %v3549 = vld [vmem:[%s1 + $0x11c] sm:$0x1]
    %v3550 = vld [vmem:[%s1 + $0x120] sm:$0xf]
    %v3551 = vld [vmem:[%s1 + $0x124] sm:$0xf]
    %v3552 = vld [vmem:[%s1 + $0x128] sm:$0x1]
    %v3553 = vld [vmem:[%s1 + $0x12c] sm:$0xf]
    %v3554 = vld [vmem:[%s1 + $0x130] sm:$0xf]
    %v3555 = vld [vmem:[%s1 + $0x134] sm:$0x1]
    %v3556 = vld [vmem:[%s1 + $0x138] sm:$0xf]
    %v3557 = vld [vmem:[%s1 + $0x13c] sm:$0xf]
    %v3558 = vld [vmem:[%s1 + $0x140] sm:$0x1]
    %v3559 = vld [vmem:[%s1 + $0x144] sm:$0xf]
    %v3560 = vld [vmem:[%s1 + $0x148] sm:$0xf]
    %v3561 = vld [vmem:[%s1 + $0x14c] sm:$0x1]
    %v3562 = vld [vmem:[%s1 + $0x150] sm:$0xf]
    %v3563 = vld [vmem:[%s1 + $0x154] sm:$0xf]
    %v3564 = vld [vmem:[%s1 + $0x158] sm:$0x1]
    %v3565 = vld [vmem:[%s1 + $0x15c] sm:$0xf]
    %v3566 = vld [vmem:[%s1 + $0x160] sm:$0xf]
    %v3567 = vld [vmem:[%s1 + $0x164] sm:$0x1]
    %v3568 = vld [vmem:[%s1 + $0x168] sm:$0xf]
    %v3569 = vld [vmem:[%s1 + $0x16c] sm:$0xf]
    %v3570 = vld [vmem:[%s1 + $0x170] sm:$0x1]
    %v3571 = vld [vmem:[%s1 + $0x174] sm:$0xf]
    %v3572 = vld [vmem:[%s1 + $0x178] sm:$0xf]
    %v3573 = vld [vmem:[%s1 + $0x17c] sm:$0x1]
    %v3575 = vshrl.u32 %v3478, 16
    %v3577 = vrot.slane %v3575, 4
    %v3578 = vshll.u32 %v3478, 16
    %v3580 = vrot.slane %v3578, 5
    %v3581 = vor.u32 %v3577, %v3580
    %v3582 = vrot.slane %v3581, 4
    %v3584 = vshll.u32 %v3479, 16
    %v3586 = vrot.slane %v3584, 5
    %v3587 = vsel %vm122, %v3582, %v3586
    %v3588 = vshrl.u32 %v3479, 16
    %v3590 = vrot.slane %v3588, 4
    %v3591 = vor.u32 %v3590, %v3586
    %v3592 = vrot.slane %v3591, 4
    %v3594 = vshll.u32 %v3480, 16
    %v3596 = vrot.slane %v3594, 5
    %v3597 = vsel %vm122, %v3592, %v3596
    %v3599 = vshrl.u32 %v3481, 16
    %v3601 = vrot.slane %v3599, 4
    %v3602 = vshll.u32 %v3481, 16
    %v3604 = vrot.slane %v3602, 5
    %v3605 = vor.u32 %v3601, %v3604
    %v3606 = vrot.slane %v3605, 4
    %v3608 = vshll.u32 %v3482, 16
    %v3610 = vrot.slane %v3608, 5
    %v3611 = vsel %vm122, %v3606, %v3610
    %v3612 = vshrl.u32 %v3482, 16
    %v3614 = vrot.slane %v3612, 4
    %v3615 = vor.u32 %v3614, %v3610
    %v3616 = vrot.slane %v3615, 4
    %v3618 = vshll.u32 %v3483, 16
    %v3620 = vrot.slane %v3618, 5
    %v3621 = vsel %vm122, %v3616, %v3620
    %v3623 = vshrl.u32 %v3484, 16
    %v3625 = vrot.slane %v3623, 4
    %v3626 = vshll.u32 %v3484, 16
    %v3628 = vrot.slane %v3626, 5
    %v3629 = vor.u32 %v3625, %v3628
    %v3630 = vrot.slane %v3629, 4
    %v3632 = vshll.u32 %v3485, 16
    %v3634 = vrot.slane %v3632, 5
    %v3635 = vsel %vm122, %v3630, %v3634
    %v3636 = vshrl.u32 %v3485, 16
    %v3638 = vrot.slane %v3636, 4
    %v3639 = vor.u32 %v3638, %v3634
    %v3640 = vrot.slane %v3639, 4
    %v3642 = vshll.u32 %v3486, 16
    %v3644 = vrot.slane %v3642, 5
    %v3645 = vsel %vm122, %v3640, %v3644
    %v3647 = vshrl.u32 %v3487, 16
    %v3649 = vrot.slane %v3647, 4
    %v3650 = vshll.u32 %v3487, 16
    %v3652 = vrot.slane %v3650, 5
    %v3653 = vor.u32 %v3649, %v3652
    %v3654 = vrot.slane %v3653, 4
    %v3656 = vshll.u32 %v3488, 16
    %v3658 = vrot.slane %v3656, 5
    %v3659 = vsel %vm122, %v3654, %v3658
    %v3660 = vshrl.u32 %v3488, 16
    %v3662 = vrot.slane %v3660, 4
    %v3663 = vor.u32 %v3662, %v3658
    %v3664 = vrot.slane %v3663, 4
    %v3666 = vshll.u32 %v3489, 16
    %v3668 = vrot.slane %v3666, 5
    %v3669 = vsel %vm122, %v3664, %v3668
    %v3671 = vshrl.u32 %v3490, 16
    %v3673 = vrot.slane %v3671, 4
    %v3674 = vshll.u32 %v3490, 16
    %v3676 = vrot.slane %v3674, 5
    %v3677 = vor.u32 %v3673, %v3676
    %v3678 = vrot.slane %v3677, 4
    %v3680 = vshll.u32 %v3491, 16
    %v3682 = vrot.slane %v3680, 5
    %v3683 = vsel %vm122, %v3678, %v3682
    %v3684 = vshrl.u32 %v3491, 16
    %v3686 = vrot.slane %v3684, 4
    %v3687 = vor.u32 %v3686, %v3682
    %v3688 = vrot.slane %v3687, 4
    %v3690 = vshll.u32 %v3492, 16
    %v3692 = vrot.slane %v3690, 5
    %v3693 = vsel %vm122, %v3688, %v3692
    %v3695 = vshrl.u32 %v3493, 16
    %v3697 = vrot.slane %v3695, 4
    %v3698 = vshll.u32 %v3493, 16
    %v3700 = vrot.slane %v3698, 5
    %v3701 = vor.u32 %v3697, %v3700
    %v3702 = vrot.slane %v3701, 4
    %v3704 = vshll.u32 %v3494, 16
    %v3706 = vrot.slane %v3704, 5
    %v3707 = vsel %vm122, %v3702, %v3706
    %v3708 = vshrl.u32 %v3494, 16
    %v3710 = vrot.slane %v3708, 4
    %v3711 = vor.u32 %v3710, %v3706
    %v3712 = vrot.slane %v3711, 4
    %v3714 = vshll.u32 %v3495, 16
    %v3716 = vrot.slane %v3714, 5
    %v3717 = vsel %vm122, %v3712, %v3716
    %v3719 = vshrl.u32 %v3496, 16
    %v3721 = vrot.slane %v3719, 4
    %v3722 = vshll.u32 %v3496, 16
    %v3724 = vrot.slane %v3722, 5
    %v3725 = vor.u32 %v3721, %v3724
    %v3726 = vrot.slane %v3725, 4
    %v3728 = vshll.u32 %v3497, 16
    %v3730 = vrot.slane %v3728, 5
    %v3731 = vsel %vm122, %v3726, %v3730
    %v3732 = vshrl.u32 %v3497, 16
    %v3734 = vrot.slane %v3732, 4
    %v3735 = vor.u32 %v3734, %v3730
    %v3736 = vrot.slane %v3735, 4
    %v3738 = vshll.u32 %v3498, 16
    %v3740 = vrot.slane %v3738, 5
    %v3741 = vsel %vm122, %v3736, %v3740
    %v3743 = vshrl.u32 %v3499, 16
    %v3745 = vrot.slane %v3743, 4
    %v3746 = vshll.u32 %v3499, 16
    %v3748 = vrot.slane %v3746, 5
    %v3749 = vor.u32 %v3745, %v3748
    %v3750 = vrot.slane %v3749, 4
    %v3752 = vshll.u32 %v3500, 16
    %v3754 = vrot.slane %v3752, 5
    %v3755 = vsel %vm122, %v3750, %v3754
    %v3756 = vshrl.u32 %v3500, 16
    %v3758 = vrot.slane %v3756, 4
    %v3759 = vor.u32 %v3758, %v3754
    %v3760 = vrot.slane %v3759, 4
    %v3762 = vshll.u32 %v3501, 16
    %v3764 = vrot.slane %v3762, 5
    %v3765 = vsel %vm122, %v3760, %v3764
    %v3767 = vshrl.u32 %v3502, 16
    %v3769 = vrot.slane %v3767, 4
    %v3770 = vshll.u32 %v3502, 16
    %v3772 = vrot.slane %v3770, 5
    %v3773 = vor.u32 %v3769, %v3772
    %v3774 = vrot.slane %v3773, 4
    %v3776 = vshll.u32 %v3503, 16
    %v3778 = vrot.slane %v3776, 5
    %v3779 = vsel %vm122, %v3774, %v3778
    %v3780 = vshrl.u32 %v3503, 16
    %v3782 = vrot.slane %v3780, 4
    %v3783 = vor.u32 %v3782, %v3778
    %v3784 = vrot.slane %v3783, 4
    %v3786 = vshll.u32 %v3504, 16
    %v3788 = vrot.slane %v3786, 5
    %v3789 = vsel %vm122, %v3784, %v3788
    %v3791 = vshrl.u32 %v3505, 16
    %v3793 = vrot.slane %v3791, 4
    %v3794 = vshll.u32 %v3505, 16
    %v3796 = vrot.slane %v3794, 5
    %v3797 = vor.u32 %v3793, %v3796
    %v3798 = vrot.slane %v3797, 4
    %v3800 = vshll.u32 %v3506, 16
    %v3802 = vrot.slane %v3800, 5
    %v3803 = vsel %vm122, %v3798, %v3802
    %v3804 = vshrl.u32 %v3506, 16
    %v3806 = vrot.slane %v3804, 4
    %v3807 = vor.u32 %v3806, %v3802
    %v3808 = vrot.slane %v3807, 4
    %v3810 = vshll.u32 %v3507, 16
    %v3812 = vrot.slane %v3810, 5
    %v3813 = vsel %vm122, %v3808, %v3812
    %v3815 = vshrl.u32 %v3508, 16
    %v3817 = vrot.slane %v3815, 4
    %v3818 = vshll.u32 %v3508, 16
    %v3820 = vrot.slane %v3818, 5
    %v3821 = vor.u32 %v3817, %v3820
    %v3822 = vrot.slane %v3821, 4
    %v3824 = vshll.u32 %v3509, 16
    %v3826 = vrot.slane %v3824, 5
    %v3827 = vsel %vm122, %v3822, %v3826
    %v3828 = vshrl.u32 %v3509, 16
    %v3830 = vrot.slane %v3828, 4
    %v3831 = vor.u32 %v3830, %v3826
    %v3832 = vrot.slane %v3831, 4
    %v3834 = vshll.u32 %v3510, 16
    %v3836 = vrot.slane %v3834, 5
    %v3837 = vsel %vm122, %v3832, %v3836
    %v3839 = vshrl.u32 %v3511, 16
    %v3841 = vrot.slane %v3839, 4
    %v3842 = vshll.u32 %v3511, 16
    %v3844 = vrot.slane %v3842, 5
    %v3845 = vor.u32 %v3841, %v3844
    %v3846 = vrot.slane %v3845, 4
    %v3848 = vshll.u32 %v3512, 16
    %v3850 = vrot.slane %v3848, 5
    %v3851 = vsel %vm122, %v3846, %v3850
    %v3852 = vshrl.u32 %v3512, 16
    %v3854 = vrot.slane %v3852, 4
    %v3855 = vor.u32 %v3854, %v3850
    %v3856 = vrot.slane %v3855, 4
    %v3858 = vshll.u32 %v3513, 16
    %v3860 = vrot.slane %v3858, 5
    %v3861 = vsel %vm122, %v3856, %v3860
    %v3863 = vshrl.u32 %v3514, 16
    %v3865 = vrot.slane %v3863, 4
    %v3866 = vshll.u32 %v3514, 16
    %v3868 = vrot.slane %v3866, 5
    %v3869 = vor.u32 %v3865, %v3868
    %v3870 = vrot.slane %v3869, 4
    %v3872 = vshll.u32 %v3515, 16
    %v3874 = vrot.slane %v3872, 5
    %v3875 = vsel %vm122, %v3870, %v3874
    %v3876 = vshrl.u32 %v3515, 16
    %v3878 = vrot.slane %v3876, 4
    %v3879 = vor.u32 %v3878, %v3874
    %v3880 = vrot.slane %v3879, 4
    %v3882 = vshll.u32 %v3516, 16
    %v3884 = vrot.slane %v3882, 5
    %v3885 = vsel %vm122, %v3880, %v3884
    %v3887 = vshrl.u32 %v3517, 16
    %v3889 = vrot.slane %v3887, 4
    %v3890 = vshll.u32 %v3517, 16
    %v3892 = vrot.slane %v3890, 5
    %v3893 = vor.u32 %v3889, %v3892
    %v3894 = vrot.slane %v3893, 4
    %v3896 = vshll.u32 %v3518, 16
    %v3898 = vrot.slane %v3896, 5
    %v3899 = vsel %vm122, %v3894, %v3898
    %v3900 = vshrl.u32 %v3518, 16
    %v3902 = vrot.slane %v3900, 4
    %v3903 = vor.u32 %v3902, %v3898
    %v3904 = vrot.slane %v3903, 4
    %v3906 = vshll.u32 %v3519, 16
    %v3908 = vrot.slane %v3906, 5
    %v3909 = vsel %vm122, %v3904, %v3908
    %v3911 = vshrl.u32 %v3520, 16
    %v3913 = vrot.slane %v3911, 4
    %v3914 = vshll.u32 %v3520, 16
    %v3916 = vrot.slane %v3914, 5
    %v3917 = vor.u32 %v3913, %v3916
    %v3918 = vrot.slane %v3917, 4
    %v3920 = vshll.u32 %v3521, 16
    %v3922 = vrot.slane %v3920, 5
    %v3923 = vsel %vm122, %v3918, %v3922
    %v3924 = vshrl.u32 %v3521, 16
    %v3926 = vrot.slane %v3924, 4
    %v3927 = vor.u32 %v3926, %v3922
    %v3928 = vrot.slane %v3927, 4
    %v3930 = vshll.u32 %v3522, 16
    %v3932 = vrot.slane %v3930, 5
    %v3933 = vsel %vm122, %v3928, %v3932
    %v3935 = vshrl.u32 %v3523, 16
    %v3937 = vrot.slane %v3935, 4
    %v3938 = vshll.u32 %v3523, 16
    %v3940 = vrot.slane %v3938, 5
    %v3941 = vor.u32 %v3937, %v3940
    %v3942 = vrot.slane %v3941, 4
    %v3944 = vshll.u32 %v3524, 16
    %v3946 = vrot.slane %v3944, 5
    %v3947 = vsel %vm122, %v3942, %v3946
    %v3948 = vshrl.u32 %v3524, 16
    %v3950 = vrot.slane %v3948, 4
    %v3951 = vor.u32 %v3950, %v3946
    %v3952 = vrot.slane %v3951, 4
    %v3954 = vshll.u32 %v3525, 16
    %v3956 = vrot.slane %v3954, 5
    %v3957 = vsel %vm122, %v3952, %v3956
    %v3959 = vshrl.u32 %v3526, 16
    %v3961 = vrot.slane %v3959, 4
    %v3962 = vshll.u32 %v3526, 16
    %v3964 = vrot.slane %v3962, 5
    %v3965 = vor.u32 %v3961, %v3964
    %v3966 = vrot.slane %v3965, 4
    %v3968 = vshll.u32 %v3527, 16
    %v3970 = vrot.slane %v3968, 5
    %v3971 = vsel %vm122, %v3966, %v3970
    %v3972 = vshrl.u32 %v3527, 16
    %v3974 = vrot.slane %v3972, 4
    %v3975 = vor.u32 %v3974, %v3970
    %v3976 = vrot.slane %v3975, 4
    %v3978 = vshll.u32 %v3528, 16
    %v3980 = vrot.slane %v3978, 5
    %v3981 = vsel %vm122, %v3976, %v3980
    %v3983 = vshrl.u32 %v3529, 16
    %v3985 = vrot.slane %v3983, 4
    %v3986 = vshll.u32 %v3529, 16
    %v3988 = vrot.slane %v3986, 5
    %v3989 = vor.u32 %v3985, %v3988
    %v3990 = vrot.slane %v3989, 4
    %v3992 = vshll.u32 %v3530, 16
    %v3994 = vrot.slane %v3992, 5
    %v3995 = vsel %vm122, %v3990, %v3994
    %v3996 = vshrl.u32 %v3530, 16
    %v3998 = vrot.slane %v3996, 4
    %v3999 = vor.u32 %v3998, %v3994
    %v4000 = vrot.slane %v3999, 4
    %v4002 = vshll.u32 %v3531, 16
    %v4004 = vrot.slane %v4002, 5
    %v4005 = vsel %vm122, %v4000, %v4004
    %v4007 = vshrl.u32 %v3532, 16
    %v4009 = vrot.slane %v4007, 4
    %v4010 = vshll.u32 %v3532, 16
    %v4012 = vrot.slane %v4010, 5
    %v4013 = vor.u32 %v4009, %v4012
    %v4014 = vrot.slane %v4013, 4
    %v4016 = vshll.u32 %v3533, 16
    %v4018 = vrot.slane %v4016, 5
    %v4019 = vsel %vm122, %v4014, %v4018
    %v4020 = vshrl.u32 %v3533, 16
    %v4022 = vrot.slane %v4020, 4
    %v4023 = vor.u32 %v4022, %v4018
    %v4024 = vrot.slane %v4023, 4
    %v4026 = vshll.u32 %v3534, 16
    %v4028 = vrot.slane %v4026, 5
    %v4029 = vsel %vm122, %v4024, %v4028
    %v4031 = vshrl.u32 %v3535, 16
    %v4033 = vrot.slane %v4031, 4
    %v4034 = vshll.u32 %v3535, 16
    %v4036 = vrot.slane %v4034, 5
    %v4037 = vor.u32 %v4033, %v4036
    %v4038 = vrot.slane %v4037, 4
    %v4040 = vshll.u32 %v3536, 16
    %v4042 = vrot.slane %v4040, 5
    %v4043 = vsel %vm122, %v4038, %v4042
    %v4044 = vshrl.u32 %v3536, 16
    %v4046 = vrot.slane %v4044, 4
    %v4047 = vor.u32 %v4046, %v4042
    %v4048 = vrot.slane %v4047, 4
    %v4050 = vshll.u32 %v3537, 16
    %v4052 = vrot.slane %v4050, 5
    %v4053 = vsel %vm122, %v4048, %v4052
    %v4055 = vshrl.u32 %v3538, 16
    %v4057 = vrot.slane %v4055, 4
    %v4058 = vshll.u32 %v3538, 16
    %v4060 = vrot.slane %v4058, 5
    %v4061 = vor.u32 %v4057, %v4060
    %v4062 = vrot.slane %v4061, 4
    %v4064 = vshll.u32 %v3539, 16
    %v4066 = vrot.slane %v4064, 5
    %v4067 = vsel %vm122, %v4062, %v4066
    %v4068 = vshrl.u32 %v3539, 16
    %v4070 = vrot.slane %v4068, 4
    %v4071 = vor.u32 %v4070, %v4066
    %v4072 = vrot.slane %v4071, 4
    %v4074 = vshll.u32 %v3540, 16
    %v4076 = vrot.slane %v4074, 5
    %v4077 = vsel %vm122, %v4072, %v4076
    %v4079 = vshrl.u32 %v3541, 16
    %v4081 = vrot.slane %v4079, 4
    %v4082 = vshll.u32 %v3541, 16
    %v4084 = vrot.slane %v4082, 5
    %v4085 = vor.u32 %v4081, %v4084
    %v4086 = vrot.slane %v4085, 4
    %v4088 = vshll.u32 %v3542, 16
    %v4090 = vrot.slane %v4088, 5
    %v4091 = vsel %vm122, %v4086, %v4090
    %v4092 = vshrl.u32 %v3542, 16
    %v4094 = vrot.slane %v4092, 4
    %v4095 = vor.u32 %v4094, %v4090
    %v4096 = vrot.slane %v4095, 4
    %v4098 = vshll.u32 %v3543, 16
    %v4100 = vrot.slane %v4098, 5
    %v4101 = vsel %vm122, %v4096, %v4100
    %v4103 = vshrl.u32 %v3544, 16
    %v4105 = vrot.slane %v4103, 4
    %v4106 = vshll.u32 %v3544, 16
    %v4108 = vrot.slane %v4106, 5
    %v4109 = vor.u32 %v4105, %v4108
    %v4110 = vrot.slane %v4109, 4
    %v4112 = vshll.u32 %v3545, 16
    %v4114 = vrot.slane %v4112, 5
    %v4115 = vsel %vm122, %v4110, %v4114
    %v4116 = vshrl.u32 %v3545, 16
    %v4118 = vrot.slane %v4116, 4
    %v4119 = vor.u32 %v4118, %v4114
    %v4120 = vrot.slane %v4119, 4
    %v4122 = vshll.u32 %v3546, 16
    %v4124 = vrot.slane %v4122, 5
    %v4125 = vsel %vm122, %v4120, %v4124
    %v4127 = vshrl.u32 %v3547, 16
    %v4129 = vrot.slane %v4127, 4
    %v4130 = vshll.u32 %v3547, 16
    %v4132 = vrot.slane %v4130, 5
    %v4133 = vor.u32 %v4129, %v4132
    %v4134 = vrot.slane %v4133, 4
    %v4136 = vshll.u32 %v3548, 16
    %v4138 = vrot.slane %v4136, 5
    %v4139 = vsel %vm122, %v4134, %v4138
    %v4140 = vshrl.u32 %v3548, 16
    %v4142 = vrot.slane %v4140, 4
    %v4143 = vor.u32 %v4142, %v4138
    %v4144 = vrot.slane %v4143, 4
    %v4146 = vshll.u32 %v3549, 16
    %v4148 = vrot.slane %v4146, 5
    %v4149 = vsel %vm122, %v4144, %v4148
    %v4151 = vshrl.u32 %v3550, 16
    %v4153 = vrot.slane %v4151, 4
    %v4154 = vshll.u32 %v3550, 16
    %v4156 = vrot.slane %v4154, 5
    %v4157 = vor.u32 %v4153, %v4156
    %v4158 = vrot.slane %v4157, 4
    %v4160 = vshll.u32 %v3551, 16
    %v4162 = vrot.slane %v4160, 5
    %v4163 = vsel %vm122, %v4158, %v4162
    %v4164 = vshrl.u32 %v3551, 16
    %v4166 = vrot.slane %v4164, 4
    %v4167 = vor.u32 %v4166, %v4162
    %v4168 = vrot.slane %v4167, 4
    %v4170 = vshll.u32 %v3552, 16
    %v4172 = vrot.slane %v4170, 5
    %v4173 = vsel %vm122, %v4168, %v4172
    %v4175 = vshrl.u32 %v3553, 16
    %v4177 = vrot.slane %v4175, 4
    %v4178 = vshll.u32 %v3553, 16
    %v4180 = vrot.slane %v4178, 5
    %v4181 = vor.u32 %v4177, %v4180
    %v4182 = vrot.slane %v4181, 4
    %v4184 = vshll.u32 %v3554, 16
    %v4186 = vrot.slane %v4184, 5
    %v4187 = vsel %vm122, %v4182, %v4186
    %v4188 = vshrl.u32 %v3554, 16
    %v4190 = vrot.slane %v4188, 4
    %v4191 = vor.u32 %v4190, %v4186
    %v4192 = vrot.slane %v4191, 4
    %v4194 = vshll.u32 %v3555, 16
    %v4196 = vrot.slane %v4194, 5
    %v4197 = vsel %vm122, %v4192, %v4196
    %v4199 = vshrl.u32 %v3556, 16
    %v4201 = vrot.slane %v4199, 4
    %v4202 = vshll.u32 %v3556, 16
    %v4204 = vrot.slane %v4202, 5
    %v4205 = vor.u32 %v4201, %v4204
    %v4206 = vrot.slane %v4205, 4
    %v4208 = vshll.u32 %v3557, 16
    %v4210 = vrot.slane %v4208, 5
    %v4211 = vsel %vm122, %v4206, %v4210
    %v4212 = vshrl.u32 %v3557, 16
    %v4214 = vrot.slane %v4212, 4
    %v4215 = vor.u32 %v4214, %v4210
    %v4216 = vrot.slane %v4215, 4
    %v4218 = vshll.u32 %v3558, 16
    %v4220 = vrot.slane %v4218, 5
    %v4221 = vsel %vm122, %v4216, %v4220
    %v4223 = vshrl.u32 %v3559, 16
    %v4225 = vrot.slane %v4223, 4
    %v4226 = vshll.u32 %v3559, 16
    %v4228 = vrot.slane %v4226, 5
    %v4229 = vor.u32 %v4225, %v4228
    %v4230 = vrot.slane %v4229, 4
    %v4232 = vshll.u32 %v3560, 16
    %v4234 = vrot.slane %v4232, 5
    %v4235 = vsel %vm122, %v4230, %v4234
    %v4236 = vshrl.u32 %v3560, 16
    %v4238 = vrot.slane %v4236, 4
    %v4239 = vor.u32 %v4238, %v4234
    %v4240 = vrot.slane %v4239, 4
    %v4242 = vshll.u32 %v3561, 16
    %v4244 = vrot.slane %v4242, 5
    %v4245 = vsel %vm122, %v4240, %v4244
    %v4247 = vshrl.u32 %v3562, 16
    %v4249 = vrot.slane %v4247, 4
    %v4250 = vshll.u32 %v3562, 16
    %v4252 = vrot.slane %v4250, 5
    %v4253 = vor.u32 %v4249, %v4252
    %v4254 = vrot.slane %v4253, 4
    %v4256 = vshll.u32 %v3563, 16
    %v4258 = vrot.slane %v4256, 5
    %v4259 = vsel %vm122, %v4254, %v4258
    %v4260 = vshrl.u32 %v3563, 16
    %v4262 = vrot.slane %v4260, 4
    %v4263 = vor.u32 %v4262, %v4258
    %v4264 = vrot.slane %v4263, 4
    %v4266 = vshll.u32 %v3564, 16
    %v4268 = vrot.slane %v4266, 5
    %v4269 = vsel %vm122, %v4264, %v4268
    %v4271 = vshrl.u32 %v3565, 16
    %v4273 = vrot.slane %v4271, 4
    %v4274 = vshll.u32 %v3565, 16
    %v4276 = vrot.slane %v4274, 5
    %v4277 = vor.u32 %v4273, %v4276
    %v4278 = vrot.slane %v4277, 4
    %v4280 = vshll.u32 %v3566, 16
    %v4282 = vrot.slane %v4280, 5
    %v4283 = vsel %vm122, %v4278, %v4282
    %v4284 = vshrl.u32 %v3566, 16
    %v4286 = vrot.slane %v4284, 4
    %v4287 = vor.u32 %v4286, %v4282
    %v4288 = vrot.slane %v4287, 4
    %v4290 = vshll.u32 %v3567, 16
    %v4292 = vrot.slane %v4290, 5
    %v4293 = vsel %vm122, %v4288, %v4292
    %v4295 = vshrl.u32 %v3568, 16
    %v4297 = vrot.slane %v4295, 4
    %v4298 = vshll.u32 %v3568, 16
    %v4300 = vrot.slane %v4298, 5
    %v4301 = vor.u32 %v4297, %v4300
    %v4302 = vrot.slane %v4301, 4
    %v4304 = vshll.u32 %v3569, 16
    %v4306 = vrot.slane %v4304, 5
    %v4307 = vsel %vm122, %v4302, %v4306
    %v4308 = vshrl.u32 %v3569, 16
    %v4310 = vrot.slane %v4308, 4
    %v4311 = vor.u32 %v4310, %v4306
    %v4312 = vrot.slane %v4311, 4
    %v4314 = vshll.u32 %v3570, 16
    %v4316 = vrot.slane %v4314, 5
    %v4317 = vsel %vm122, %v4312, %v4316
    %v4319 = vshrl.u32 %v3571, 16
    %v4321 = vrot.slane %v4319, 4
    %v4322 = vshll.u32 %v3571, 16
    %v4324 = vrot.slane %v4322, 5
    %v4325 = vor.u32 %v4321, %v4324
    %v4326 = vrot.slane %v4325, 4
    %v4328 = vshll.u32 %v3572, 16
    %v4330 = vrot.slane %v4328, 5
    %v4331 = vsel %vm122, %v4326, %v4330
    %v4332 = vshrl.u32 %v3572, 16
    %v4334 = vrot.slane %v4332, 4
    %v4335 = vor.u32 %v4334, %v4330
    %v4336 = vrot.slane %v4335, 4
    %v4338 = vshll.u32 %v3573, 16
    %v4340 = vrot.slane %v4338, 5
    %v4341 = vsel %vm122, %v4336, %v4340
    %s4342 = scalar_lea.vmem %s3, 8
    %v4343 = vld [vmem:[%s4342] sm:$0x3]
    %v4344 = vunpack.c.l.b16 %v3587
    %v4345 = vunpack.c.l.b16 %v3597
    %v4346 = vunpack.c.l.b16 %v3611
    %v4347 = vunpack.c.l.b16 %v3621
    %v4348 = vunpack.c.l.b16 %v3635
    %v4349 = vunpack.c.l.b16 %v3645
    %v4350 = vunpack.c.l.b16 %v3659
    %v4351 = vunpack.c.l.b16 %v3669
    %v4352 = vunpack.c.l.b16 %v3683
    %v4353 = vunpack.c.l.b16 %v3693
    %v4354 = vunpack.c.l.b16 %v3707
    %v4355 = vunpack.c.l.b16 %v3717
    %v4356 = vunpack.c.l.b16 %v3731
    %v4357 = vunpack.c.l.b16 %v3741
    %v4358 = vunpack.c.l.b16 %v3755
    %v4359 = vunpack.c.l.b16 %v3765
    %v4360 = vunpack.c.l.b16 %v3779
    %v4361 = vunpack.c.l.b16 %v3789
    %v4362 = vunpack.c.l.b16 %v3803
    %v4363 = vunpack.c.l.b16 %v3813
    %v4364 = vunpack.c.l.b16 %v3827
    %v4365 = vunpack.c.l.b16 %v3837
    %v4366 = vunpack.c.l.b16 %v3851
    %v4367 = vunpack.c.l.b16 %v3861
    %v4368 = vunpack.c.l.b16 %v3875
    %v4369 = vunpack.c.l.b16 %v3885
    %v4370 = vunpack.c.l.b16 %v3899
    %v4371 = vunpack.c.l.b16 %v3909
    %v4372 = vunpack.c.l.b16 %v3923
    %v4373 = vunpack.c.l.b16 %v3933
    %v4374 = vunpack.c.l.b16 %v3947
    %v4375 = vunpack.c.l.b16 %v3957
    %v4376 = vunpack.c.l.b16 %v3971
    %v4377 = vunpack.c.l.b16 %v3981
    %v4378 = vunpack.c.l.b16 %v3995
    %v4379 = vunpack.c.l.b16 %v4005
    %v4380 = vunpack.c.l.b16 %v4019
    %v4381 = vunpack.c.l.b16 %v4029
    %v4382 = vunpack.c.l.b16 %v4043
    %v4383 = vunpack.c.l.b16 %v4053
    %v4384 = vunpack.c.l.b16 %v4067
    %v4385 = vunpack.c.l.b16 %v4077
    %v4386 = vunpack.c.l.b16 %v4091
    %v4387 = vunpack.c.l.b16 %v4101
    %v4388 = vunpack.c.l.b16 %v4115
    %v4389 = vunpack.c.l.b16 %v4125
    %v4390 = vunpack.c.l.b16 %v4139
    %v4391 = vunpack.c.l.b16 %v4149
    %v4392 = vunpack.c.l.b16 %v4163
    %v4393 = vunpack.c.l.b16 %v4173
    %v4394 = vunpack.c.l.b16 %v4187
    %v4395 = vunpack.c.l.b16 %v4197
    %v4396 = vunpack.c.l.b16 %v4211
    %v4397 = vunpack.c.l.b16 %v4221
    %v4398 = vunpack.c.l.b16 %v4235
    %v4399 = vunpack.c.l.b16 %v4245
    %v4400 = vunpack.c.l.b16 %v4259
    %v4401 = vunpack.c.l.b16 %v4269
    %v4402 = vunpack.c.l.b16 %v4283
    %v4403 = vunpack.c.l.b16 %v4293
    %v4404 = vunpack.c.l.b16 %v4307
    %v4405 = vunpack.c.l.b16 %v4317
    %v4406 = vunpack.c.l.b16 %v4331
    %v4407 = vunpack.c.l.b16 %v4341
    %v4408 = vpack.c.b16 %v4345, %v4344
    %v4409 = vpack.c.b16 %v4347, %v4346
    %v4410 = vpack.c.b16 %v4349, %v4348
    %v4411 = vpack.c.b16 %v4351, %v4350
    %v4412 = vpack.c.b16 %v4353, %v4352
    %v4413 = vpack.c.b16 %v4355, %v4354
    %v4414 = vpack.c.b16 %v4357, %v4356
    %v4415 = vpack.c.b16 %v4359, %v4358
    %v4416 = vpack.c.b16 %v4361, %v4360
    %v4417 = vpack.c.b16 %v4363, %v4362
    %v4418 = vpack.c.b16 %v4365, %v4364
    %v4419 = vpack.c.b16 %v4367, %v4366
    %v4420 = vpack.c.b16 %v4369, %v4368
    %v4421 = vpack.c.b16 %v4371, %v4370
    %v4422 = vpack.c.b16 %v4373, %v4372
    %v4423 = vpack.c.b16 %v4375, %v4374
    %v4424 = vpack.c.b16 %v4377, %v4376
    %v4425 = vpack.c.b16 %v4379, %v4378
    %v4426 = vpack.c.b16 %v4381, %v4380
    %v4427 = vpack.c.b16 %v4383, %v4382
    %v4428 = vpack.c.b16 %v4385, %v4384
    %v4429 = vpack.c.b16 %v4387, %v4386
    %v4430 = vpack.c.b16 %v4389, %v4388
    %v4431 = vpack.c.b16 %v4391, %v4390
    %v4432 = vpack.c.b16 %v4393, %v4392
    %v4433 = vpack.c.b16 %v4395, %v4394
    %v4434 = vpack.c.b16 %v4397, %v4396
    %v4435 = vpack.c.b16 %v4399, %v4398
    %v4436 = vpack.c.b16 %v4401, %v4400
    %v4437 = vpack.c.b16 %v4403, %v4402
    %v4438 = vpack.c.b16 %v4405, %v4404
    %v4439 = vpack.c.b16 %v4407, %v4406
    %v4441 = vsel %vm989, %v4408, 0
    %v4444 = vsel %vm989, %v4409, 0
    %v4447 = vsel %vm989, %v4410, 0
    %v4450 = vsel %vm989, %v4411, 0
    %v4453 = vsel %vm989, %v4412, 0
    %v4456 = vsel %vm989, %v4413, 0
    %v4459 = vsel %vm989, %v4414, 0
    %v4462 = vsel %vm989, %v4415, 0
    %v4465 = vsel %vm989, %v4416, 0
    %v4468 = vsel %vm989, %v4417, 0
    %v4471 = vsel %vm989, %v4418, 0
    %v4474 = vsel %vm989, %v4419, 0
    %v4477 = vsel %vm989, %v4420, 0
    %v4480 = vsel %vm989, %v4421, 0
    %v4483 = vsel %vm989, %v4422, 0
    %v4486 = vsel %vm989, %v4423, 0
    %v4489 = vsel %vm989, %v4424, 0
    %v4492 = vsel %vm989, %v4425, 0
    %v4495 = vsel %vm989, %v4426, 0
    %v4498 = vsel %vm989, %v4427, 0
    %v4501 = vsel %vm989, %v4428, 0
    %v4504 = vsel %vm989, %v4429, 0
    %v4507 = vsel %vm989, %v4430, 0
    %v4510 = vsel %vm989, %v4431, 0
    %v4513 = vsel %vm989, %v4432, 0
    %v4516 = vsel %vm989, %v4433, 0
    %v4519 = vsel %vm989, %v4434, 0
    %v4522 = vsel %vm989, %v4435, 0
    %v4525 = vsel %vm989, %v4436, 0
    %v4528 = vsel %vm989, %v4437, 0
    %v4531 = vsel %vm989, %v4438, 0
    %v4534 = vsel %vm989, %v4439, 0
    %v4537 = vsel %vm1086, %v4343, 0
    %4539 = vmatprep.subr.bf16.mxu0 0
    %4540 = vmatpush1.bf16.msra.mxu0 0
    %4541 = vmatprep.subr.bf16.mxu0 0
    %4542 = vmatpush1.bf16.msra.mxu0 0
    %4543 = vmatprep.subr.bf16.mxu0 0
    %4544 = vmatpush1.bf16.msra.mxu0 0
    %4545 = vmatprep.subr.bf16.mxu0 0
    %4546 = vmatpush1.bf16.msra.mxu0 0
    %4547 = vmatprep.subr.bf16.mxu0 0
    %4548 = vmatpush1.bf16.msra.mxu0 0
    %4549 = vmatprep.subr.bf16.mxu0 0
    %4550 = vmatpush1.bf16.msra.mxu0 0
    %4551 = vmatprep.subr.bf16.mxu0 0
    %4552 = vmatpush1.bf16.msra.mxu0 0
    %4553 = vmatprep.subr.bf16.mxu0 0
    %4554 = vmatpush1.bf16.msra.mxu0 %v4537
    %4555 = vmatprep.subr.bf16.mxu0 0
    %4556 = vmatpush2.bf16.msra.mxu0 0
    %4557 = vmatprep.subr.bf16.mxu0 0
    %4558 = vmatpush2.bf16.msra.mxu0 0
    %4559 = vmatprep.subr.bf16.mxu0 0
    %4560 = vmatpush2.bf16.msra.mxu0 0
    %4561 = vmatprep.subr.bf16.mxu0 0
    %4562 = vmatpush2.bf16.msra.mxu0 0
    %4563 = vmatprep.subr.bf16.mxu0 0
    %4564 = vmatpush2.bf16.msra.mxu0 0
    %4565 = vmatprep.subr.bf16.mxu0 0
    %4566 = vmatpush2.bf16.msra.mxu0 0
    %4567 = vmatprep.subr.bf16.mxu0 0
    %4568 = vmatpush2.bf16.msra.mxu0 0
    %4569 = vmatprep.subr.bf16.mxu0 0
    %4570 = vmatpush2.bf16.msra.mxu0 0
    %4571 = vmatprep.mubr.bf16.mxu0 0
    %4572 = vmatmul.mubr.bf16.gmra.mxu0 %v4441
    %v4573 = vpop.f32.mrf.mxu0
    %v4574 = vadd.f32 0.0, %v4573
    %v4575 = vpop.f32.mrf.mxu0
    %v4576 = vpop.f32.mrf.mxu0
    %v4577 = vadd.f32 0.0, %v4576
    %v4578 = vpop.f32.mrf.mxu0
    %4579 = vmatprep.mubr.bf16.mxu0 0
    %4580 = vmatmul.mubr.bf16.gmra.mxu0 %v4444
    %v4581 = vpop.f32.mrf.mxu0
    %v4582 = vadd.f32 0.0, %v4581
    %v4583 = vpop.f32.mrf.mxu0
    %v4584 = vpop.f32.mrf.mxu0
    %v4585 = vadd.f32 0.0, %v4584
    %v4586 = vpop.f32.mrf.mxu0
    %4587 = vmatprep.mubr.bf16.mxu0 0
    %4588 = vmatmul.mubr.bf16.gmra.mxu0 %v4447
    %v4589 = vpop.f32.mrf.mxu0
    %v4590 = vadd.f32 0.0, %v4589
    %v4591 = vpop.f32.mrf.mxu0
    %v4592 = vpop.f32.mrf.mxu0
    %v4593 = vadd.f32 0.0, %v4592
    %v4594 = vpop.f32.mrf.mxu0
    %4595 = vmatprep.mubr.bf16.mxu0 0
    %4596 = vmatmul.mubr.bf16.gmra.mxu0 %v4450
    %v4597 = vpop.f32.mrf.mxu0
    %v4598 = vadd.f32 0.0, %v4597
    %v4599 = vpop.f32.mrf.mxu0
    %v4600 = vpop.f32.mrf.mxu0
    %v4601 = vadd.f32 0.0, %v4600
    %v4602 = vpop.f32.mrf.mxu0
    %4603 = vmatprep.mubr.bf16.mxu0 0
    %4604 = vmatmul.mubr.bf16.gmra.mxu0 %v4453
    %v4605 = vpop.f32.mrf.mxu0
    %v4606 = vadd.f32 0.0, %v4605
    %v4607 = vpop.f32.mrf.mxu0
    %v4608 = vpop.f32.mrf.mxu0
    %v4609 = vadd.f32 0.0, %v4608
    %v4610 = vpop.f32.mrf.mxu0
    %4611 = vmatprep.mubr.bf16.mxu0 0
    %4612 = vmatmul.mubr.bf16.gmra.mxu0 %v4456
    %v4613 = vpop.f32.mrf.mxu0
    %v4614 = vadd.f32 0.0, %v4613
    %v4615 = vpop.f32.mrf.mxu0
    %v4616 = vpop.f32.mrf.mxu0
    %v4617 = vadd.f32 0.0, %v4616
    %v4618 = vpop.f32.mrf.mxu0
    %4619 = vmatprep.mubr.bf16.mxu0 0
    %4620 = vmatmul.mubr.bf16.gmra.mxu0 %v4459
    %v4621 = vpop.f32.mrf.mxu0
    %v4622 = vadd.f32 0.0, %v4621
    %v4623 = vpop.f32.mrf.mxu0
    %v4624 = vpop.f32.mrf.mxu0
    %v4625 = vadd.f32 0.0, %v4624
    %v4626 = vpop.f32.mrf.mxu0
    %4627 = vmatprep.mubr.bf16.mxu0 0
    %4628 = vmatmul.mubr.bf16.gmra.mxu0 %v4462
    %v4629 = vpop.f32.mrf.mxu0
    %v4630 = vadd.f32 0.0, %v4629
    %v4631 = vpop.f32.mrf.mxu0
    %v4632 = vpop.f32.mrf.mxu0
    %v4633 = vadd.f32 0.0, %v4632
    %v4634 = vpop.f32.mrf.mxu0
    %4635 = vmatprep.mubr.bf16.mxu0 0
    %4636 = vmatmul.mubr.bf16.gmra.mxu0 %v4465
    %v4637 = vpop.f32.mrf.mxu0
    %v4638 = vadd.f32 0.0, %v4637
    %v4639 = vpop.f32.mrf.mxu0
    %v4640 = vpop.f32.mrf.mxu0
    %v4641 = vadd.f32 0.0, %v4640
    %v4642 = vpop.f32.mrf.mxu0
    %4643 = vmatprep.mubr.bf16.mxu0 0
    %4644 = vmatmul.mubr.bf16.gmra.mxu0 %v4468
    %v4645 = vpop.f32.mrf.mxu0
    %v4646 = vadd.f32 0.0, %v4645
    %v4647 = vpop.f32.mrf.mxu0
    %v4648 = vpop.f32.mrf.mxu0
    %v4649 = vadd.f32 0.0, %v4648
    %v4650 = vpop.f32.mrf.mxu0
    %4651 = vmatprep.mubr.bf16.mxu0 0
    %4652 = vmatmul.mubr.bf16.gmra.mxu0 %v4471
    %v4653 = vpop.f32.mrf.mxu0
    %v4654 = vadd.f32 0.0, %v4653
    %v4655 = vpop.f32.mrf.mxu0
    %v4656 = vpop.f32.mrf.mxu0
    %v4657 = vadd.f32 0.0, %v4656
    %v4658 = vpop.f32.mrf.mxu0
    %4659 = vmatprep.mubr.bf16.mxu0 0
    %4660 = vmatmul.mubr.bf16.gmra.mxu0 %v4474
    %v4661 = vpop.f32.mrf.mxu0
    %v4662 = vadd.f32 0.0, %v4661
    %v4663 = vpop.f32.mrf.mxu0
    %v4664 = vpop.f32.mrf.mxu0
    %v4665 = vadd.f32 0.0, %v4664
    %v4666 = vpop.f32.mrf.mxu0
    %4667 = vmatprep.mubr.bf16.mxu0 0
    %4668 = vmatmul.mubr.bf16.gmra.mxu0 %v4477
    %v4669 = vpop.f32.mrf.mxu0
    %v4670 = vadd.f32 0.0, %v4669
    %v4671 = vpop.f32.mrf.mxu0
    %v4672 = vpop.f32.mrf.mxu0
    %v4673 = vadd.f32 0.0, %v4672
    %v4674 = vpop.f32.mrf.mxu0
    %4675 = vmatprep.mubr.bf16.mxu0 0
    %4676 = vmatmul.mubr.bf16.gmra.mxu0 %v4480
    %v4677 = vpop.f32.mrf.mxu0
    %v4678 = vadd.f32 0.0, %v4677
    %v4679 = vpop.f32.mrf.mxu0
    %v4680 = vpop.f32.mrf.mxu0
    %v4681 = vadd.f32 0.0, %v4680
    %v4682 = vpop.f32.mrf.mxu0
    %4683 = vmatprep.mubr.bf16.mxu0 0
    %4684 = vmatmul.mubr.bf16.gmra.mxu0 %v4483
    %v4685 = vpop.f32.mrf.mxu0
    %v4686 = vadd.f32 0.0, %v4685
    %v4687 = vpop.f32.mrf.mxu0
    %v4688 = vpop.f32.mrf.mxu0
    %v4689 = vadd.f32 0.0, %v4688
    %v4690 = vpop.f32.mrf.mxu0
    %4691 = vmatprep.mubr.bf16.mxu0 0
    %4692 = vmatmul.mubr.bf16.gmra.mxu0 %v4486
    %v4693 = vpop.f32.mrf.mxu0
    %v4694 = vadd.f32 0.0, %v4693
    %v4695 = vpop.f32.mrf.mxu0
    %v4696 = vpop.f32.mrf.mxu0
    %v4697 = vadd.f32 0.0, %v4696
    %v4698 = vpop.f32.mrf.mxu0
    %4699 = vmatprep.mubr.bf16.mxu0 0
    %4700 = vmatmul.mubr.bf16.gmra.mxu0 %v4489
    %v4701 = vpop.f32.mrf.mxu0
    %v4702 = vadd.f32 0.0, %v4701
    %v4703 = vpop.f32.mrf.mxu0
    %v4704 = vpop.f32.mrf.mxu0
    %v4705 = vadd.f32 0.0, %v4704
    %v4706 = vpop.f32.mrf.mxu0
    %4707 = vmatprep.mubr.bf16.mxu0 0
    %4708 = vmatmul.mubr.bf16.gmra.mxu0 %v4492
    %v4709 = vpop.f32.mrf.mxu0
    %v4710 = vadd.f32 0.0, %v4709
    %v4711 = vpop.f32.mrf.mxu0
    %v4712 = vpop.f32.mrf.mxu0
    %v4713 = vadd.f32 0.0, %v4712
    %v4714 = vpop.f32.mrf.mxu0
    %4715 = vmatprep.mubr.bf16.mxu0 0
    %4716 = vmatmul.mubr.bf16.gmra.mxu0 %v4495
    %v4717 = vpop.f32.mrf.mxu0
    %v4718 = vadd.f32 0.0, %v4717
    %v4719 = vpop.f32.mrf.mxu0
    %v4720 = vpop.f32.mrf.mxu0
    %v4721 = vadd.f32 0.0, %v4720
    %v4722 = vpop.f32.mrf.mxu0
    %4723 = vmatprep.mubr.bf16.mxu0 0
    %4724 = vmatmul.mubr.bf16.gmra.mxu0 %v4498
    %v4725 = vpop.f32.mrf.mxu0
    %v4726 = vadd.f32 0.0, %v4725
    %v4727 = vpop.f32.mrf.mxu0
    %v4728 = vpop.f32.mrf.mxu0
    %v4729 = vadd.f32 0.0, %v4728
    %v4730 = vpop.f32.mrf.mxu0
    %4731 = vmatprep.mubr.bf16.mxu0 0
    %4732 = vmatmul.mubr.bf16.gmra.mxu0 %v4501
    %v4733 = vpop.f32.mrf.mxu0
    %v4734 = vadd.f32 0.0, %v4733
    %v4735 = vpop.f32.mrf.mxu0
    %v4736 = vpop.f32.mrf.mxu0
    %v4737 = vadd.f32 0.0, %v4736
    %v4738 = vpop.f32.mrf.mxu0
    %4739 = vmatprep.mubr.bf16.mxu0 0
    %4740 = vmatmul.mubr.bf16.gmra.mxu0 %v4504
    %v4741 = vpop.f32.mrf.mxu0
    %v4742 = vadd.f32 0.0, %v4741
    %v4743 = vpop.f32.mrf.mxu0
    %v4744 = vpop.f32.mrf.mxu0
    %v4745 = vadd.f32 0.0, %v4744
    %v4746 = vpop.f32.mrf.mxu0
    %4747 = vmatprep.mubr.bf16.mxu0 0
    %4748 = vmatmul.mubr.bf16.gmra.mxu0 %v4507
    %v4749 = vpop.f32.mrf.mxu0
    %v4750 = vadd.f32 0.0, %v4749
    %v4751 = vpop.f32.mrf.mxu0
    %v4752 = vpop.f32.mrf.mxu0
    %v4753 = vadd.f32 0.0, %v4752
    %v4754 = vpop.f32.mrf.mxu0
    %4755 = vmatprep.mubr.bf16.mxu0 0
    %4756 = vmatmul.mubr.bf16.gmra.mxu0 %v4510
    %v4757 = vpop.f32.mrf.mxu0
    %v4758 = vadd.f32 0.0, %v4757
    %v4759 = vpop.f32.mrf.mxu0
    %v4760 = vpop.f32.mrf.mxu0
    %v4761 = vadd.f32 0.0, %v4760
    %v4762 = vpop.f32.mrf.mxu0
    %4763 = vmatprep.mubr.bf16.mxu0 0
    %4764 = vmatmul.mubr.bf16.gmra.mxu0 %v4513
    %v4765 = vpop.f32.mrf.mxu0
    %v4766 = vadd.f32 0.0, %v4765
    %v4767 = vpop.f32.mrf.mxu0
    %v4768 = vpop.f32.mrf.mxu0
    %v4769 = vadd.f32 0.0, %v4768
    %v4770 = vpop.f32.mrf.mxu0
    %4771 = vmatprep.mubr.bf16.mxu0 0
    %4772 = vmatmul.mubr.bf16.gmra.mxu0 %v4516
    %v4773 = vpop.f32.mrf.mxu0
    %v4774 = vadd.f32 0.0, %v4773
    %v4775 = vpop.f32.mrf.mxu0
    %v4776 = vpop.f32.mrf.mxu0
    %v4777 = vadd.f32 0.0, %v4776
    %v4778 = vpop.f32.mrf.mxu0
    %4779 = vmatprep.mubr.bf16.mxu0 0
    %4780 = vmatmul.mubr.bf16.gmra.mxu0 %v4519
    %v4781 = vpop.f32.mrf.mxu0
    %v4782 = vadd.f32 0.0, %v4781
    %v4783 = vpop.f32.mrf.mxu0
    %v4784 = vpop.f32.mrf.mxu0
    %v4785 = vadd.f32 0.0, %v4784
    %v4786 = vpop.f32.mrf.mxu0
    %4787 = vmatprep.mubr.bf16.mxu0 0
    %4788 = vmatmul.mubr.bf16.gmra.mxu0 %v4522
    %v4789 = vpop.f32.mrf.mxu0
    %v4790 = vadd.f32 0.0, %v4789
    %v4791 = vpop.f32.mrf.mxu0
    %v4792 = vpop.f32.mrf.mxu0
    %v4793 = vadd.f32 0.0, %v4792
    %v4794 = vpop.f32.mrf.mxu0
    %4795 = vmatprep.mubr.bf16.mxu0 0
    %4796 = vmatmul.mubr.bf16.gmra.mxu0 %v4525
    %v4797 = vpop.f32.mrf.mxu0
    %v4798 = vadd.f32 0.0, %v4797
    %v4799 = vpop.f32.mrf.mxu0
    %v4800 = vpop.f32.mrf.mxu0
    %v4801 = vadd.f32 0.0, %v4800
    %v4802 = vpop.f32.mrf.mxu0
    %4803 = vmatprep.mubr.bf16.mxu0 0
    %4804 = vmatmul.mubr.bf16.gmra.mxu0 %v4528
    %v4805 = vpop.f32.mrf.mxu0
    %v4806 = vadd.f32 0.0, %v4805
    %v4807 = vpop.f32.mrf.mxu0
    %v4808 = vpop.f32.mrf.mxu0
    %v4809 = vadd.f32 0.0, %v4808
    %v4810 = vpop.f32.mrf.mxu0
    %4811 = vmatprep.mubr.bf16.mxu0 0
    %4812 = vmatmul.mubr.bf16.gmra.mxu0 %v4531
    %v4813 = vpop.f32.mrf.mxu0
    %v4814 = vadd.f32 0.0, %v4813
    %v4815 = vpop.f32.mrf.mxu0
    %v4816 = vpop.f32.mrf.mxu0
    %v4817 = vadd.f32 0.0, %v4816
    %v4818 = vpop.f32.mrf.mxu0
    %4819 = vmatprep.mubr.bf16.mxu0 0
    %4820 = vmatmul.mubr.bf16.gmra.mxu0 %v4534
    %v4821 = vpop.f32.mrf.mxu0
    %v4822 = vadd.f32 0.0, %v4821
    %v4823 = vpop.f32.mrf.mxu0
    %v4824 = vpop.f32.mrf.mxu0
    %v4825 = vadd.f32 0.0, %v4824
    %v4826 = vpop.f32.mrf.mxu0
    %4827 = vdwg.mxu0
    %v4828 = vadd.f32 %v3414, %v4574
    %v4829 = vadd.f32 %v3415, %v4577
    %v4830 = vadd.f32 %v3416, %v4582
    %v4831 = vadd.f32 %v3417, %v4585
    %v4832 = vadd.f32 %v3418, %v4590
    %v4833 = vadd.f32 %v3419, %v4593
    %v4834 = vadd.f32 %v3420, %v4598
    %v4835 = vadd.f32 %v3421, %v4601
    %v4836 = vadd.f32 %v3422, %v4606
    %v4837 = vadd.f32 %v3423, %v4609
    %v4838 = vadd.f32 %v3424, %v4614
    %v4839 = vadd.f32 %v3425, %v4617
    %v4840 = vadd.f32 %v3426, %v4622
    %v4841 = vadd.f32 %v3427, %v4625
    %v4842 = vadd.f32 %v3428, %v4630
    %v4843 = vadd.f32 %v3429, %v4633
    %v4844 = vadd.f32 %v3430, %v4638
    %v4845 = vadd.f32 %v3431, %v4641
    %v4846 = vadd.f32 %v3432, %v4646
    %v4847 = vadd.f32 %v3433, %v4649
    %v4848 = vadd.f32 %v3434, %v4654
    %v4849 = vadd.f32 %v3435, %v4657
    %v4850 = vadd.f32 %v3436, %v4662
    %v4851 = vadd.f32 %v3437, %v4665
    %v4852 = vadd.f32 %v3438, %v4670
    %v4853 = vadd.f32 %v3439, %v4673
    %v4854 = vadd.f32 %v3440, %v4678
    %v4855 = vadd.f32 %v3441, %v4681
    %v4856 = vadd.f32 %v3442, %v4686
    %v4857 = vadd.f32 %v3443, %v4689
    %v4858 = vadd.f32 %v3444, %v4694
    %v4859 = vadd.f32 %v3445, %v4697
    %v4860 = vadd.f32 %v3446, %v4702
    %v4861 = vadd.f32 %v3447, %v4705
    %v4862 = vadd.f32 %v3448, %v4710
    %v4863 = vadd.f32 %v3449, %v4713
    %v4864 = vadd.f32 %v3450, %v4718
    %v4865 = vadd.f32 %v3451, %v4721
    %v4866 = vadd.f32 %v3452, %v4726
    %v4867 = vadd.f32 %v3453, %v4729
    %v4868 = vadd.f32 %v3454, %v4734
    %v4869 = vadd.f32 %v3455, %v4737
    %v4870 = vadd.f32 %v3456, %v4742
    %v4871 = vadd.f32 %v3457, %v4745
    %v4872 = vadd.f32 %v3458, %v4750
    %v4873 = vadd.f32 %v3459, %v4753
    %v4874 = vadd.f32 %v3460, %v4758
    %v4875 = vadd.f32 %v3461, %v4761
    %v4876 = vadd.f32 %v3462, %v4766
    %v4877 = vadd.f32 %v3463, %v4769
    %v4878 = vadd.f32 %v3464, %v4774
    %v4879 = vadd.f32 %v3465, %v4777
    %v4880 = vadd.f32 %v3466, %v4782
    %v4881 = vadd.f32 %v3467, %v4785
    %v4882 = vadd.f32 %v3468, %v4790
    %v4883 = vadd.f32 %v3469, %v4793
    %v4884 = vadd.f32 %v3470, %v4798
    %v4885 = vadd.f32 %v3471, %v4801
    %v4886 = vadd.f32 %v3472, %v4806
    %v4887 = vadd.f32 %v3473, %v4809
    %v4888 = vadd.f32 %v3474, %v4814
    %v4889 = vadd.f32 %v3475, %v4817
    %v4890 = vadd.f32 %v3476, %v4822
    %v4891 = vadd.f32 %v3477, %v4825
    %v4892 = vld [vmem:[%s1] sm:$0xe]
    %v4893 = vld [vmem:[%s1 + $0xc] sm:$0xe]
    %v4894 = vld [vmem:[%s1 + $0x18] sm:$0xe]
    %v4895 = vld [vmem:[%s1 + $0x24] sm:$0xe]
    %v4896 = vld [vmem:[%s1 + $0x30] sm:$0xe]
    %v4897 = vld [vmem:[%s1 + $0x3c] sm:$0xe]
    %v4898 = vld [vmem:[%s1 + $0x48] sm:$0xe]
    %v4899 = vld [vmem:[%s1 + $0x54] sm:$0xe]
    %v4900 = vld [vmem:[%s1 + $0x60] sm:$0xe]
    %v4901 = vld [vmem:[%s1 + $0x6c] sm:$0xe]
    %v4902 = vld [vmem:[%s1 + $0x78] sm:$0xe]
    %v4903 = vld [vmem:[%s1 + $0x84] sm:$0xe]
    %v4904 = vld [vmem:[%s1 + $0x90] sm:$0xe]
    %v4905 = vld [vmem:[%s1 + $0x9c] sm:$0xe]
    %v4906 = vld [vmem:[%s1 + $0xa8] sm:$0xe]
    %v4907 = vld [vmem:[%s1 + $0xb4] sm:$0xe]
    %v4908 = vld [vmem:[%s1 + $0xc0] sm:$0xe]
    %v4909 = vld [vmem:[%s1 + $0xcc] sm:$0xe]
    %v4910 = vld [vmem:[%s1 + $0xd8] sm:$0xe]
    %v4911 = vld [vmem:[%s1 + $0xe4] sm:$0xe]
    %v4912 = vld [vmem:[%s1 + $0xf0] sm:$0xe]
    %v4913 = vld [vmem:[%s1 + $0xfc] sm:$0xe]
    %v4914 = vld [vmem:[%s1 + $0x108] sm:$0xe]
    %v4915 = vld [vmem:[%s1 + $0x114] sm:$0xe]
    %v4916 = vld [vmem:[%s1 + $0x120] sm:$0xe]
    %v4917 = vld [vmem:[%s1 + $0x12c] sm:$0xe]
    %v4918 = vld [vmem:[%s1 + $0x138] sm:$0xe]
    %v4919 = vld [vmem:[%s1 + $0x144] sm:$0xe]
    %v4920 = vld [vmem:[%s1 + $0x150] sm:$0xe]
    %v4921 = vld [vmem:[%s1 + $0x15c] sm:$0xe]
    %v4922 = vld [vmem:[%s1 + $0x168] sm:$0xe]
    %v4923 = vld [vmem:[%s1 + $0x174] sm:$0xe]
    %v5020 = vrot.slane %v4892, 5
    %v5021 = vrot.slane %v5020, 4
    %v5022 = vrot.slane %v3479, 5
    %v5023 = vsel %vm2025, %v5021, %v5022
    %v5024 = vrot.slane %v5022, 4
    %v5025 = vrot.slane %v3480, 5
    %v5026 = vsel %vm2025, %v5024, %v5025
    %v5027 = vrot.slane %v4893, 5
    %v5028 = vrot.slane %v5027, 4
    %v5029 = vrot.slane %v3482, 5
    %v5030 = vsel %vm2025, %v5028, %v5029
    %v5031 = vrot.slane %v5029, 4
    %v5032 = vrot.slane %v3483, 5
    %v5033 = vsel %vm2025, %v5031, %v5032
    %v5034 = vrot.slane %v4894, 5
    %v5035 = vrot.slane %v5034, 4
    %v5036 = vrot.slane %v3485, 5
    %v5037 = vsel %vm2025, %v5035, %v5036
    %v5038 = vrot.slane %v5036, 4
    %v5039 = vrot.slane %v3486, 5
    %v5040 = vsel %vm2025, %v5038, %v5039
    %v5041 = vrot.slane %v4895, 5
    %v5042 = vrot.slane %v5041, 4
    %v5043 = vrot.slane %v3488, 5
    %v5044 = vsel %vm2025, %v5042, %v5043
    %v5045 = vrot.slane %v5043, 4
    %v5046 = vrot.slane %v3489, 5
    %v5047 = vsel %vm2025, %v5045, %v5046
    %v5048 = vrot.slane %v4896, 5
    %v5049 = vrot.slane %v5048, 4
    %v5050 = vrot.slane %v3491, 5
    %v5051 = vsel %vm2025, %v5049, %v5050
    %v5052 = vrot.slane %v5050, 4
    %v5053 = vrot.slane %v3492, 5
    %v5054 = vsel %vm2025, %v5052, %v5053
    %v5055 = vrot.slane %v4897, 5
    %v5056 = vrot.slane %v5055, 4
    %v5057 = vrot.slane %v3494, 5
    %v5058 = vsel %vm2025, %v5056, %v5057
    %v5059 = vrot.slane %v5057, 4
    %v5060 = vrot.slane %v3495, 5
    %v5061 = vsel %vm2025, %v5059, %v5060
    %v5062 = vrot.slane %v4898, 5
    %v5063 = vrot.slane %v5062, 4
    %v5064 = vrot.slane %v3497, 5
    %v5065 = vsel %vm2025, %v5063, %v5064
    %v5066 = vrot.slane %v5064, 4
    %v5067 = vrot.slane %v3498, 5
    %v5068 = vsel %vm2025, %v5066, %v5067
    %v5069 = vrot.slane %v4899, 5
    %v5070 = vrot.slane %v5069, 4
    %v5071 = vrot.slane %v3500, 5
    %v5072 = vsel %vm2025, %v5070, %v5071
    %v5073 = vrot.slane %v5071, 4
    %v5074 = vrot.slane %v3501, 5
    %v5075 = vsel %vm2025, %v5073, %v5074
    %v5076 = vrot.slane %v4900, 5
    %v5077 = vrot.slane %v5076, 4
    %v5078 = vrot.slane %v3503, 5
    %v5079 = vsel %vm2025, %v5077, %v5078
    %v5080 = vrot.slane %v5078, 4
    %v5081 = vrot.slane %v3504, 5
    %v5082 = vsel %vm2025, %v5080, %v5081
    %v5083 = vrot.slane %v4901, 5
    %v5084 = vrot.slane %v5083, 4
    %v5085 = vrot.slane %v3506, 5
    %v5086 = vsel %vm2025, %v5084, %v5085
    %v5087 = vrot.slane %v5085, 4
    %v5088 = vrot.slane %v3507, 5
    %v5089 = vsel %vm2025, %v5087, %v5088
    %v5090 = vrot.slane %v4902, 5
    %v5091 = vrot.slane %v5090, 4
    %v5092 = vrot.slane %v3509, 5
    %v5093 = vsel %vm2025, %v5091, %v5092
    %v5094 = vrot.slane %v5092, 4
    %v5095 = vrot.slane %v3510, 5
    %v5096 = vsel %vm2025, %v5094, %v5095
    %v5097 = vrot.slane %v4903, 5
    %v5098 = vrot.slane %v5097, 4
    %v5099 = vrot.slane %v3512, 5
    %v5100 = vsel %vm2025, %v5098, %v5099
    %v5101 = vrot.slane %v5099, 4
    %v5102 = vrot.slane %v3513, 5
    %v5103 = vsel %vm2025, %v5101, %v5102
    %v5104 = vrot.slane %v4904, 5
    %v5105 = vrot.slane %v5104, 4
    %v5106 = vrot.slane %v3515, 5
    %v5107 = vsel %vm2025, %v5105, %v5106
    %v5108 = vrot.slane %v5106, 4
    %v5109 = vrot.slane %v3516, 5
    %v5110 = vsel %vm2025, %v5108, %v5109
    %v5111 = vrot.slane %v4905, 5
    %v5112 = vrot.slane %v5111, 4
    %v5113 = vrot.slane %v3518, 5
    %v5114 = vsel %vm2025, %v5112, %v5113
    %v5115 = vrot.slane %v5113, 4
    %v5116 = vrot.slane %v3519, 5
    %v5117 = vsel %vm2025, %v5115, %v5116
    %v5118 = vrot.slane %v4906, 5
    %v5119 = vrot.slane %v5118, 4
    %v5120 = vrot.slane %v3521, 5
    %v5121 = vsel %vm2025, %v5119, %v5120
    %v5122 = vrot.slane %v5120, 4
    %v5123 = vrot.slane %v3522, 5
    %v5124 = vsel %vm2025, %v5122, %v5123
    %v5125 = vrot.slane %v4907, 5
    %v5126 = vrot.slane %v5125, 4
    %v5127 = vrot.slane %v3524, 5
    %v5128 = vsel %vm2025, %v5126, %v5127
    %v5129 = vrot.slane %v5127, 4
    %v5130 = vrot.slane %v3525, 5
    %v5131 = vsel %vm2025, %v5129, %v5130
    %v5132 = vrot.slane %v4908, 5
    %v5133 = vrot.slane %v5132, 4
    %v5134 = vrot.slane %v3527, 5
    %v5135 = vsel %vm2025, %v5133, %v5134
    %v5136 = vrot.slane %v5134, 4
    %v5137 = vrot.slane %v3528, 5
    %v5138 = vsel %vm2025, %v5136, %v5137
    %v5139 = vrot.slane %v4909, 5
    %v5140 = vrot.slane %v5139, 4
    %v5141 = vrot.slane %v3530, 5
    %v5142 = vsel %vm2025, %v5140, %v5141
    %v5143 = vrot.slane %v5141, 4
    %v5144 = vrot.slane %v3531, 5
    %v5145 = vsel %vm2025, %v5143, %v5144
    %v5146 = vrot.slane %v4910, 5
    %v5147 = vrot.slane %v5146, 4
    %v5148 = vrot.slane %v3533, 5
    %v5149 = vsel %vm2025, %v5147, %v5148
    %v5150 = vrot.slane %v5148, 4
    %v5151 = vrot.slane %v3534, 5
    %v5152 = vsel %vm2025, %v5150, %v5151
    %v5153 = vrot.slane %v4911, 5
    %v5154 = vrot.slane %v5153, 4
    %v5155 = vrot.slane %v3536, 5
    %v5156 = vsel %vm2025, %v5154, %v5155
    %v5157 = vrot.slane %v5155, 4
    %v5158 = vrot.slane %v3537, 5
    %v5159 = vsel %vm2025, %v5157, %v5158
    %v5160 = vrot.slane %v4912, 5
    %v5161 = vrot.slane %v5160, 4
    %v5162 = vrot.slane %v3539, 5
    %v5163 = vsel %vm2025, %v5161, %v5162
    %v5164 = vrot.slane %v5162, 4
    %v5165 = vrot.slane %v3540, 5
    %v5166 = vsel %vm2025, %v5164, %v5165
    %v5167 = vrot.slane %v4913, 5
    %v5168 = vrot.slane %v5167, 4
    %v5169 = vrot.slane %v3542, 5
    %v5170 = vsel %vm2025, %v5168, %v5169
    %v5171 = vrot.slane %v5169, 4
    %v5172 = vrot.slane %v3543, 5
    %v5173 = vsel %vm2025, %v5171, %v5172
    %v5174 = vrot.slane %v4914, 5
    %v5175 = vrot.slane %v5174, 4
    %v5176 = vrot.slane %v3545, 5
    %v5177 = vsel %vm2025, %v5175, %v5176
    %v5178 = vrot.slane %v5176, 4
    %v5179 = vrot.slane %v3546, 5
    %v5180 = vsel %vm2025, %v5178, %v5179
    %v5181 = vrot.slane %v4915, 5
    %v5182 = vrot.slane %v5181, 4
    %v5183 = vrot.slane %v3548, 5
    %v5184 = vsel %vm2025, %v5182, %v5183
    %v5185 = vrot.slane %v5183, 4
    %v5186 = vrot.slane %v3549, 5
    %v5187 = vsel %vm2025, %v5185, %v5186
    %v5188 = vrot.slane %v4916, 5
    %v5189 = vrot.slane %v5188, 4
    %v5190 = vrot.slane %v3551, 5
    %v5191 = vsel %vm2025, %v5189, %v5190
    %v5192 = vrot.slane %v5190, 4
    %v5193 = vrot.slane %v3552, 5
    %v5194 = vsel %vm2025, %v5192, %v5193
    %v5195 = vrot.slane %v4917, 5
    %v5196 = vrot.slane %v5195, 4
    %v5197 = vrot.slane %v3554, 5
    %v5198 = vsel %vm2025, %v5196, %v5197
    %v5199 = vrot.slane %v5197, 4
    %v5200 = vrot.slane %v3555, 5
    %v5201 = vsel %vm2025, %v5199, %v5200
    %v5202 = vrot.slane %v4918, 5
    %v5203 = vrot.slane %v5202, 4
    %v5204 = vrot.slane %v3557, 5
    %v5205 = vsel %vm2025, %v5203, %v5204
    %v5206 = vrot.slane %v5204, 4
    %v5207 = vrot.slane %v3558, 5
    %v5208 = vsel %vm2025, %v5206, %v5207
    %v5209 = vrot.slane %v4919, 5
    %v5210 = vrot.slane %v5209, 4
    %v5211 = vrot.slane %v3560, 5
    %v5212 = vsel %vm2025, %v5210, %v5211
    %v5213 = vrot.slane %v5211, 4
    %v5214 = vrot.slane %v3561, 5
    %v5215 = vsel %vm2025, %v5213, %v5214
    %v5216 = vrot.slane %v4920, 5
    %v5217 = vrot.slane %v5216, 4
    %v5218 = vrot.slane %v3563, 5
    %v5219 = vsel %vm2025, %v5217, %v5218
    %v5220 = vrot.slane %v5218, 4
    %v5221 = vrot.slane %v3564, 5
    %v5222 = vsel %vm2025, %v5220, %v5221
    %v5223 = vrot.slane %v4921, 5
    %v5224 = vrot.slane %v5223, 4
    %v5225 = vrot.slane %v3566, 5
    %v5226 = vsel %vm2025, %v5224, %v5225
    %v5227 = vrot.slane %v5225, 4
    %v5228 = vrot.slane %v3567, 5
    %v5229 = vsel %vm2025, %v5227, %v5228
    %v5230 = vrot.slane %v4922, 5
    %v5231 = vrot.slane %v5230, 4
    %v5232 = vrot.slane %v3569, 5
    %v5233 = vsel %vm2025, %v5231, %v5232
    %v5234 = vrot.slane %v5232, 4
    %v5235 = vrot.slane %v3570, 5
    %v5236 = vsel %vm2025, %v5234, %v5235
    %v5237 = vrot.slane %v4923, 5
    %v5238 = vrot.slane %v5237, 4
    %v5239 = vrot.slane %v3572, 5
    %v5240 = vsel %vm2025, %v5238, %v5239
    %v5241 = vrot.slane %v5239, 4
    %v5242 = vrot.slane %v3573, 5
    %v5243 = vsel %vm2025, %v5241, %v5242
    %s5244 = scalar_lea.vmem %s3, 10
    %v5245 = vld [vmem:[%s5244] sm:$0x3]
    %v5246 = vunpack.c.l.b16 %v5023
    %v5247 = vunpack.c.l.b16 %v5026
    %v5248 = vunpack.c.l.b16 %v5030
    %v5249 = vunpack.c.l.b16 %v5033
    %v5250 = vunpack.c.l.b16 %v5037
    %v5251 = vunpack.c.l.b16 %v5040
    %v5252 = vunpack.c.l.b16 %v5044
    %v5253 = vunpack.c.l.b16 %v5047
    %v5254 = vunpack.c.l.b16 %v5051
    %v5255 = vunpack.c.l.b16 %v5054
    %v5256 = vunpack.c.l.b16 %v5058
    %v5257 = vunpack.c.l.b16 %v5061
    %v5258 = vunpack.c.l.b16 %v5065
    %v5259 = vunpack.c.l.b16 %v5068
    %v5260 = vunpack.c.l.b16 %v5072
    %v5261 = vunpack.c.l.b16 %v5075
    %v5262 = vunpack.c.l.b16 %v5079
    %v5263 = vunpack.c.l.b16 %v5082
    %v5264 = vunpack.c.l.b16 %v5086
    %v5265 = vunpack.c.l.b16 %v5089
    %v5266 = vunpack.c.l.b16 %v5093
    %v5267 = vunpack.c.l.b16 %v5096
    %v5268 = vunpack.c.l.b16 %v5100
    %v5269 = vunpack.c.l.b16 %v5103
    %v5270 = vunpack.c.l.b16 %v5107
    %v5271 = vunpack.c.l.b16 %v5110
    %v5272 = vunpack.c.l.b16 %v5114
    %v5273 = vunpack.c.l.b16 %v5117
    %v5274 = vunpack.c.l.b16 %v5121
    %v5275 = vunpack.c.l.b16 %v5124
    %v5276 = vunpack.c.l.b16 %v5128
    %v5277 = vunpack.c.l.b16 %v5131
    %v5278 = vunpack.c.l.b16 %v5135
    %v5279 = vunpack.c.l.b16 %v5138
    %v5280 = vunpack.c.l.b16 %v5142
    %v5281 = vunpack.c.l.b16 %v5145
    %v5282 = vunpack.c.l.b16 %v5149
    %v5283 = vunpack.c.l.b16 %v5152
    %v5284 = vunpack.c.l.b16 %v5156
    %v5285 = vunpack.c.l.b16 %v5159
    %v5286 = vunpack.c.l.b16 %v5163
    %v5287 = vunpack.c.l.b16 %v5166
    %v5288 = vunpack.c.l.b16 %v5170
    %v5289 = vunpack.c.l.b16 %v5173
    %v5290 = vunpack.c.l.b16 %v5177
    %v5291 = vunpack.c.l.b16 %v5180
    %v5292 = vunpack.c.l.b16 %v5184
    %v5293 = vunpack.c.l.b16 %v5187
    %v5294 = vunpack.c.l.b16 %v5191
    %v5295 = vunpack.c.l.b16 %v5194
    %v5296 = vunpack.c.l.b16 %v5198
    %v5297 = vunpack.c.l.b16 %v5201
    %v5298 = vunpack.c.l.b16 %v5205
    %v5299 = vunpack.c.l.b16 %v5208
    %v5300 = vunpack.c.l.b16 %v5212
    %v5301 = vunpack.c.l.b16 %v5215
    %v5302 = vunpack.c.l.b16 %v5219
    %v5303 = vunpack.c.l.b16 %v5222
    %v5304 = vunpack.c.l.b16 %v5226
    %v5305 = vunpack.c.l.b16 %v5229
    %v5306 = vunpack.c.l.b16 %v5233
    %v5307 = vunpack.c.l.b16 %v5236
    %v5308 = vunpack.c.l.b16 %v5240
    %v5309 = vunpack.c.l.b16 %v5243
    %v5310 = vpack.c.b16 %v5247, %v5246
    %v5311 = vpack.c.b16 %v5249, %v5248
    %v5312 = vpack.c.b16 %v5251, %v5250
    %v5313 = vpack.c.b16 %v5253, %v5252
    %v5314 = vpack.c.b16 %v5255, %v5254
    %v5315 = vpack.c.b16 %v5257, %v5256
    %v5316 = vpack.c.b16 %v5259, %v5258
    %v5317 = vpack.c.b16 %v5261, %v5260
    %v5318 = vpack.c.b16 %v5263, %v5262
    %v5319 = vpack.c.b16 %v5265, %v5264
    %v5320 = vpack.c.b16 %v5267, %v5266
    %v5321 = vpack.c.b16 %v5269, %v5268
    %v5322 = vpack.c.b16 %v5271, %v5270
    %v5323 = vpack.c.b16 %v5273, %v5272
    %v5324 = vpack.c.b16 %v5275, %v5274
    %v5325 = vpack.c.b16 %v5277, %v5276
    %v5326 = vpack.c.b16 %v5279, %v5278
    %v5327 = vpack.c.b16 %v5281, %v5280
    %v5328 = vpack.c.b16 %v5283, %v5282
    %v5329 = vpack.c.b16 %v5285, %v5284
    %v5330 = vpack.c.b16 %v5287, %v5286
    %v5331 = vpack.c.b16 %v5289, %v5288
    %v5332 = vpack.c.b16 %v5291, %v5290
    %v5333 = vpack.c.b16 %v5293, %v5292
    %v5334 = vpack.c.b16 %v5295, %v5294
    %v5335 = vpack.c.b16 %v5297, %v5296
    %v5336 = vpack.c.b16 %v5299, %v5298
    %v5337 = vpack.c.b16 %v5301, %v5300
    %v5338 = vpack.c.b16 %v5303, %v5302
    %v5339 = vpack.c.b16 %v5305, %v5304
    %v5340 = vpack.c.b16 %v5307, %v5306
    %v5341 = vpack.c.b16 %v5309, %v5308
    %v5343 = vsel %vm989, %v5310, 0
    %v5346 = vsel %vm989, %v5311, 0
    %v5349 = vsel %vm989, %v5312, 0
    %v5352 = vsel %vm989, %v5313, 0
    %v5355 = vsel %vm989, %v5314, 0
    %v5358 = vsel %vm989, %v5315, 0
    %v5361 = vsel %vm989, %v5316, 0
    %v5364 = vsel %vm989, %v5317, 0
    %v5367 = vsel %vm989, %v5318, 0
    %v5370 = vsel %vm989, %v5319, 0
    %v5373 = vsel %vm989, %v5320, 0
    %v5376 = vsel %vm989, %v5321, 0
    %v5379 = vsel %vm989, %v5322, 0
    %v5382 = vsel %vm989, %v5323, 0
    %v5385 = vsel %vm989, %v5324, 0
    %v5388 = vsel %vm989, %v5325, 0
    %v5391 = vsel %vm989, %v5326, 0
    %v5394 = vsel %vm989, %v5327, 0
    %v5397 = vsel %vm989, %v5328, 0
    %v5400 = vsel %vm989, %v5329, 0
    %v5403 = vsel %vm989, %v5330, 0
    %v5406 = vsel %vm989, %v5331, 0
    %v5409 = vsel %vm989, %v5332, 0
    %v5412 = vsel %vm989, %v5333, 0
    %v5415 = vsel %vm989, %v5334, 0
    %v5418 = vsel %vm989, %v5335, 0
    %v5421 = vsel %vm989, %v5336, 0
    %v5424 = vsel %vm989, %v5337, 0
    %v5427 = vsel %vm989, %v5338, 0
    %v5430 = vsel %vm989, %v5339, 0
    %v5433 = vsel %vm989, %v5340, 0
    %v5436 = vsel %vm989, %v5341, 0
    %v5439 = vsel %vm1086, %v5245, 0
    %5441 = vmatprep.subr.bf16.mxu0 0
    %5442 = vmatpush1.bf16.msra.mxu0 0
    %5443 = vmatprep.subr.bf16.mxu0 0
    %5444 = vmatpush1.bf16.msra.mxu0 0
    %5445 = vmatprep.subr.bf16.mxu0 0
    %5446 = vmatpush1.bf16.msra.mxu0 0
    %5447 = vmatprep.subr.bf16.mxu0 0
    %5448 = vmatpush1.bf16.msra.mxu0 0
    %5449 = vmatprep.subr.bf16.mxu0 0
    %5450 = vmatpush1.bf16.msra.mxu0 0
    %5451 = vmatprep.subr.bf16.mxu0 0
    %5452 = vmatpush1.bf16.msra.mxu0 0
    %5453 = vmatprep.subr.bf16.mxu0 0
    %5454 = vmatpush1.bf16.msra.mxu0 0
    %5455 = vmatprep.subr.bf16.mxu0 0
    %5456 = vmatpush1.bf16.msra.mxu0 %v5439
    %5457 = vmatprep.subr.bf16.mxu0 0
    %5458 = vmatpush2.bf16.msra.mxu0 0
    %5459 = vmatprep.subr.bf16.mxu0 0
    %5460 = vmatpush2.bf16.msra.mxu0 0
    %5461 = vmatprep.subr.bf16.mxu0 0
    %5462 = vmatpush2.bf16.msra.mxu0 0
    %5463 = vmatprep.subr.bf16.mxu0 0
    %5464 = vmatpush2.bf16.msra.mxu0 0
    %5465 = vmatprep.subr.bf16.mxu0 0
    %5466 = vmatpush2.bf16.msra.mxu0 0
    %5467 = vmatprep.subr.bf16.mxu0 0
    %5468 = vmatpush2.bf16.msra.mxu0 0
    %5469 = vmatprep.subr.bf16.mxu0 0
    %5470 = vmatpush2.bf16.msra.mxu0 0
    %5471 = vmatprep.subr.bf16.mxu0 0
    %5472 = vmatpush2.bf16.msra.mxu0 0
    %5473 = vmatprep.mubr.bf16.mxu0 0
    %5474 = vmatmul.mubr.bf16.gmra.mxu0 %v5343
    %v5475 = vpop.f32.mrf.mxu0
    %v5476 = vadd.f32 0.0, %v5475
    %v5477 = vpop.f32.mrf.mxu0
    %v5478 = vpop.f32.mrf.mxu0
    %v5479 = vadd.f32 0.0, %v5478
    %v5480 = vpop.f32.mrf.mxu0
    %5481 = vmatprep.mubr.bf16.mxu0 0
    %5482 = vmatmul.mubr.bf16.gmra.mxu0 %v5346
    %v5483 = vpop.f32.mrf.mxu0
    %v5484 = vadd.f32 0.0, %v5483
    %v5485 = vpop.f32.mrf.mxu0
    %v5486 = vpop.f32.mrf.mxu0
    %v5487 = vadd.f32 0.0, %v5486
    %v5488 = vpop.f32.mrf.mxu0
    %5489 = vmatprep.mubr.bf16.mxu0 0
    %5490 = vmatmul.mubr.bf16.gmra.mxu0 %v5349
    %v5491 = vpop.f32.mrf.mxu0
    %v5492 = vadd.f32 0.0, %v5491
    %v5493 = vpop.f32.mrf.mxu0
    %v5494 = vpop.f32.mrf.mxu0
    %v5495 = vadd.f32 0.0, %v5494
    %v5496 = vpop.f32.mrf.mxu0
    %5497 = vmatprep.mubr.bf16.mxu0 0
    %5498 = vmatmul.mubr.bf16.gmra.mxu0 %v5352
    %v5499 = vpop.f32.mrf.mxu0
    %v5500 = vadd.f32 0.0, %v5499
    %v5501 = vpop.f32.mrf.mxu0
    %v5502 = vpop.f32.mrf.mxu0
    %v5503 = vadd.f32 0.0, %v5502
    %v5504 = vpop.f32.mrf.mxu0
    %5505 = vmatprep.mubr.bf16.mxu0 0
    %5506 = vmatmul.mubr.bf16.gmra.mxu0 %v5355
    %v5507 = vpop.f32.mrf.mxu0
    %v5508 = vadd.f32 0.0, %v5507
    %v5509 = vpop.f32.mrf.mxu0
    %v5510 = vpop.f32.mrf.mxu0
    %v5511 = vadd.f32 0.0, %v5510
    %v5512 = vpop.f32.mrf.mxu0
    %5513 = vmatprep.mubr.bf16.mxu0 0
    %5514 = vmatmul.mubr.bf16.gmra.mxu0 %v5358
    %v5515 = vpop.f32.mrf.mxu0
    %v5516 = vadd.f32 0.0, %v5515
    %v5517 = vpop.f32.mrf.mxu0
    %v5518 = vpop.f32.mrf.mxu0
    %v5519 = vadd.f32 0.0, %v5518
    %v5520 = vpop.f32.mrf.mxu0
    %5521 = vmatprep.mubr.bf16.mxu0 0
    %5522 = vmatmul.mubr.bf16.gmra.mxu0 %v5361
    %v5523 = vpop.f32.mrf.mxu0
    %v5524 = vadd.f32 0.0, %v5523
    %v5525 = vpop.f32.mrf.mxu0
    %v5526 = vpop.f32.mrf.mxu0
    %v5527 = vadd.f32 0.0, %v5526
    %v5528 = vpop.f32.mrf.mxu0
    %5529 = vmatprep.mubr.bf16.mxu0 0
    %5530 = vmatmul.mubr.bf16.gmra.mxu0 %v5364
    %v5531 = vpop.f32.mrf.mxu0
    %v5532 = vadd.f32 0.0, %v5531
    %v5533 = vpop.f32.mrf.mxu0
    %v5534 = vpop.f32.mrf.mxu0
    %v5535 = vadd.f32 0.0, %v5534
    %v5536 = vpop.f32.mrf.mxu0
    %5537 = vmatprep.mubr.bf16.mxu0 0
    %5538 = vmatmul.mubr.bf16.gmra.mxu0 %v5367
    %v5539 = vpop.f32.mrf.mxu0
    %v5540 = vadd.f32 0.0, %v5539
    %v5541 = vpop.f32.mrf.mxu0
    %v5542 = vpop.f32.mrf.mxu0
    %v5543 = vadd.f32 0.0, %v5542
    %v5544 = vpop.f32.mrf.mxu0
    %5545 = vmatprep.mubr.bf16.mxu0 0
    %5546 = vmatmul.mubr.bf16.gmra.mxu0 %v5370
    %v5547 = vpop.f32.mrf.mxu0
    %v5548 = vadd.f32 0.0, %v5547
    %v5549 = vpop.f32.mrf.mxu0
    %v5550 = vpop.f32.mrf.mxu0
    %v5551 = vadd.f32 0.0, %v5550
    %v5552 = vpop.f32.mrf.mxu0
    %5553 = vmatprep.mubr.bf16.mxu0 0
    %5554 = vmatmul.mubr.bf16.gmra.mxu0 %v5373
    %v5555 = vpop.f32.mrf.mxu0
    %v5556 = vadd.f32 0.0, %v5555
    %v5557 = vpop.f32.mrf.mxu0
    %v5558 = vpop.f32.mrf.mxu0
    %v5559 = vadd.f32 0.0, %v5558
    %v5560 = vpop.f32.mrf.mxu0
    %5561 = vmatprep.mubr.bf16.mxu0 0
    %5562 = vmatmul.mubr.bf16.gmra.mxu0 %v5376
    %v5563 = vpop.f32.mrf.mxu0
    %v5564 = vadd.f32 0.0, %v5563
    %v5565 = vpop.f32.mrf.mxu0
    %v5566 = vpop.f32.mrf.mxu0
    %v5567 = vadd.f32 0.0, %v5566
    %v5568 = vpop.f32.mrf.mxu0
    %5569 = vmatprep.mubr.bf16.mxu0 0
    %5570 = vmatmul.mubr.bf16.gmra.mxu0 %v5379
    %v5571 = vpop.f32.mrf.mxu0
    %v5572 = vadd.f32 0.0, %v5571
    %v5573 = vpop.f32.mrf.mxu0
    %v5574 = vpop.f32.mrf.mxu0
    %v5575 = vadd.f32 0.0, %v5574
    %v5576 = vpop.f32.mrf.mxu0
    %5577 = vmatprep.mubr.bf16.mxu0 0
    %5578 = vmatmul.mubr.bf16.gmra.mxu0 %v5382
    %v5579 = vpop.f32.mrf.mxu0
    %v5580 = vadd.f32 0.0, %v5579
    %v5581 = vpop.f32.mrf.mxu0
    %v5582 = vpop.f32.mrf.mxu0
    %v5583 = vadd.f32 0.0, %v5582
    %v5584 = vpop.f32.mrf.mxu0
    %5585 = vmatprep.mubr.bf16.mxu0 0
    %5586 = vmatmul.mubr.bf16.gmra.mxu0 %v5385
    %v5587 = vpop.f32.mrf.mxu0
    %v5588 = vadd.f32 0.0, %v5587
    %v5589 = vpop.f32.mrf.mxu0
    %v5590 = vpop.f32.mrf.mxu0
    %v5591 = vadd.f32 0.0, %v5590
    %v5592 = vpop.f32.mrf.mxu0
    %5593 = vmatprep.mubr.bf16.mxu0 0
    %5594 = vmatmul.mubr.bf16.gmra.mxu0 %v5388
    %v5595 = vpop.f32.mrf.mxu0
    %v5596 = vadd.f32 0.0, %v5595
    %v5597 = vpop.f32.mrf.mxu0
    %v5598 = vpop.f32.mrf.mxu0
    %v5599 = vadd.f32 0.0, %v5598
    %v5600 = vpop.f32.mrf.mxu0
    %5601 = vmatprep.mubr.bf16.mxu0 0
    %5602 = vmatmul.mubr.bf16.gmra.mxu0 %v5391
    %v5603 = vpop.f32.mrf.mxu0
    %v5604 = vadd.f32 0.0, %v5603
    %v5605 = vpop.f32.mrf.mxu0
    %v5606 = vpop.f32.mrf.mxu0
    %v5607 = vadd.f32 0.0, %v5606
    %v5608 = vpop.f32.mrf.mxu0
    %5609 = vmatprep.mubr.bf16.mxu0 0
    %5610 = vmatmul.mubr.bf16.gmra.mxu0 %v5394
    %v5611 = vpop.f32.mrf.mxu0
    %v5612 = vadd.f32 0.0, %v5611
    %v5613 = vpop.f32.mrf.mxu0
    %v5614 = vpop.f32.mrf.mxu0
    %v5615 = vadd.f32 0.0, %v5614
    %v5616 = vpop.f32.mrf.mxu0
    %5617 = vmatprep.mubr.bf16.mxu0 0
    %5618 = vmatmul.mubr.bf16.gmra.mxu0 %v5397
    %v5619 = vpop.f32.mrf.mxu0
    %v5620 = vadd.f32 0.0, %v5619
    %v5621 = vpop.f32.mrf.mxu0
    %v5622 = vpop.f32.mrf.mxu0
    %v5623 = vadd.f32 0.0, %v5622
    %v5624 = vpop.f32.mrf.mxu0
    %5625 = vmatprep.mubr.bf16.mxu0 0
    %5626 = vmatmul.mubr.bf16.gmra.mxu0 %v5400
    %v5627 = vpop.f32.mrf.mxu0
    %v5628 = vadd.f32 0.0, %v5627
    %v5629 = vpop.f32.mrf.mxu0
    %v5630 = vpop.f32.mrf.mxu0
    %v5631 = vadd.f32 0.0, %v5630
    %v5632 = vpop.f32.mrf.mxu0
    %5633 = vmatprep.mubr.bf16.mxu0 0
    %5634 = vmatmul.mubr.bf16.gmra.mxu0 %v5403
    %v5635 = vpop.f32.mrf.mxu0
    %v5636 = vadd.f32 0.0, %v5635
    %v5637 = vpop.f32.mrf.mxu0
    %v5638 = vpop.f32.mrf.mxu0
    %v5639 = vadd.f32 0.0, %v5638
    %v5640 = vpop.f32.mrf.mxu0
    %5641 = vmatprep.mubr.bf16.mxu0 0
    %5642 = vmatmul.mubr.bf16.gmra.mxu0 %v5406
    %v5643 = vpop.f32.mrf.mxu0
    %v5644 = vadd.f32 0.0, %v5643
    %v5645 = vpop.f32.mrf.mxu0
    %v5646 = vpop.f32.mrf.mxu0
    %v5647 = vadd.f32 0.0, %v5646
    %v5648 = vpop.f32.mrf.mxu0
    %5649 = vmatprep.mubr.bf16.mxu0 0
    %5650 = vmatmul.mubr.bf16.gmra.mxu0 %v5409
    %v5651 = vpop.f32.mrf.mxu0
    %v5652 = vadd.f32 0.0, %v5651
    %v5653 = vpop.f32.mrf.mxu0
    %v5654 = vpop.f32.mrf.mxu0
    %v5655 = vadd.f32 0.0, %v5654
    %v5656 = vpop.f32.mrf.mxu0
    %5657 = vmatprep.mubr.bf16.mxu0 0
    %5658 = vmatmul.mubr.bf16.gmra.mxu0 %v5412
    %v5659 = vpop.f32.mrf.mxu0
    %v5660 = vadd.f32 0.0, %v5659
    %v5661 = vpop.f32.mrf.mxu0
    %v5662 = vpop.f32.mrf.mxu0
    %v5663 = vadd.f32 0.0, %v5662
    %v5664 = vpop.f32.mrf.mxu0
    %5665 = vmatprep.mubr.bf16.mxu0 0
    %5666 = vmatmul.mubr.bf16.gmra.mxu0 %v5415
    %v5667 = vpop.f32.mrf.mxu0
    %v5668 = vadd.f32 0.0, %v5667
    %v5669 = vpop.f32.mrf.mxu0
    %v5670 = vpop.f32.mrf.mxu0
    %v5671 = vadd.f32 0.0, %v5670
    %v5672 = vpop.f32.mrf.mxu0
    %5673 = vmatprep.mubr.bf16.mxu0 0
    %5674 = vmatmul.mubr.bf16.gmra.mxu0 %v5418
    %v5675 = vpop.f32.mrf.mxu0
    %v5676 = vadd.f32 0.0, %v5675
    %v5677 = vpop.f32.mrf.mxu0
    %v5678 = vpop.f32.mrf.mxu0
    %v5679 = vadd.f32 0.0, %v5678
    %v5680 = vpop.f32.mrf.mxu0
    %5681 = vmatprep.mubr.bf16.mxu0 0
    %5682 = vmatmul.mubr.bf16.gmra.mxu0 %v5421
    %v5683 = vpop.f32.mrf.mxu0
    %v5684 = vadd.f32 0.0, %v5683
    %v5685 = vpop.f32.mrf.mxu0
    %v5686 = vpop.f32.mrf.mxu0
    %v5687 = vadd.f32 0.0, %v5686
    %v5688 = vpop.f32.mrf.mxu0
    %5689 = vmatprep.mubr.bf16.mxu0 0
    %5690 = vmatmul.mubr.bf16.gmra.mxu0 %v5424
    %v5691 = vpop.f32.mrf.mxu0
    %v5692 = vadd.f32 0.0, %v5691
    %v5693 = vpop.f32.mrf.mxu0
    %v5694 = vpop.f32.mrf.mxu0
    %v5695 = vadd.f32 0.0, %v5694
    %v5696 = vpop.f32.mrf.mxu0
    %5697 = vmatprep.mubr.bf16.mxu0 0
    %5698 = vmatmul.mubr.bf16.gmra.mxu0 %v5427
    %v5699 = vpop.f32.mrf.mxu0
    %v5700 = vadd.f32 0.0, %v5699
    %v5701 = vpop.f32.mrf.mxu0
    %v5702 = vpop.f32.mrf.mxu0
    %v5703 = vadd.f32 0.0, %v5702
    %v5704 = vpop.f32.mrf.mxu0
    %5705 = vmatprep.mubr.bf16.mxu0 0
    %5706 = vmatmul.mubr.bf16.gmra.mxu0 %v5430
    %v5707 = vpop.f32.mrf.mxu0
    %v5708 = vadd.f32 0.0, %v5707
    %v5709 = vpop.f32.mrf.mxu0
    %v5710 = vpop.f32.mrf.mxu0
    %v5711 = vadd.f32 0.0, %v5710
    %v5712 = vpop.f32.mrf.mxu0
    %5713 = vmatprep.mubr.bf16.mxu0 0
    %5714 = vmatmul.mubr.bf16.gmra.mxu0 %v5433
    %v5715 = vpop.f32.mrf.mxu0
    %v5716 = vadd.f32 0.0, %v5715
    %v5717 = vpop.f32.mrf.mxu0
    %v5718 = vpop.f32.mrf.mxu0
    %v5719 = vadd.f32 0.0, %v5718
    %v5720 = vpop.f32.mrf.mxu0
    %5721 = vmatprep.mubr.bf16.mxu0 0
    %5722 = vmatmul.mubr.bf16.gmra.mxu0 %v5436
    %v5723 = vpop.f32.mrf.mxu0
    %v5724 = vadd.f32 0.0, %v5723
    %v5725 = vpop.f32.mrf.mxu0
    %v5726 = vpop.f32.mrf.mxu0
    %v5727 = vadd.f32 0.0, %v5726
    %v5728 = vpop.f32.mrf.mxu0
    %5729 = vdwg.mxu0
    %v5730 = vadd.f32 %v4828, %v5476
    %v5731 = vadd.f32 %v4829, %v5479
    %v5732 = vadd.f32 %v4830, %v5484
    %v5733 = vadd.f32 %v4831, %v5487
    %v5734 = vadd.f32 %v4832, %v5492
    %v5735 = vadd.f32 %v4833, %v5495
    %v5736 = vadd.f32 %v4834, %v5500
    %v5737 = vadd.f32 %v4835, %v5503
    %v5738 = vadd.f32 %v4836, %v5508
    %v5739 = vadd.f32 %v4837, %v5511
    %v5740 = vadd.f32 %v4838, %v5516
    %v5741 = vadd.f32 %v4839, %v5519
    %v5742 = vadd.f32 %v4840, %v5524
    %v5743 = vadd.f32 %v4841, %v5527
    %v5744 = vadd.f32 %v4842, %v5532
    %v5745 = vadd.f32 %v4843, %v5535
    %v5746 = vadd.f32 %v4844, %v5540
    %v5747 = vadd.f32 %v4845, %v5543
    %v5748 = vadd.f32 %v4846, %v5548
    %v5749 = vadd.f32 %v4847, %v5551
    %v5750 = vadd.f32 %v4848, %v5556
    %v5751 = vadd.f32 %v4849, %v5559
    %v5752 = vadd.f32 %v4850, %v5564
    %v5753 = vadd.f32 %v4851, %v5567
    %v5754 = vadd.f32 %v4852, %v5572
    %v5755 = vadd.f32 %v4853, %v5575
    %v5756 = vadd.f32 %v4854, %v5580
    %v5757 = vadd.f32 %v4855, %v5583
    %v5758 = vadd.f32 %v4856, %v5588
    %v5759 = vadd.f32 %v4857, %v5591
    %v5760 = vadd.f32 %v4858, %v5596
    %v5761 = vadd.f32 %v4859, %v5599
    %v5762 = vadd.f32 %v4860, %v5604
    %v5763 = vadd.f32 %v4861, %v5607
    %v5764 = vadd.f32 %v4862, %v5612
    %v5765 = vadd.f32 %v4863, %v5615
    %v5766 = vadd.f32 %v4864, %v5620
    %v5767 = vadd.f32 %v4865, %v5623
    %v5768 = vadd.f32 %v4866, %v5628
    %v5769 = vadd.f32 %v4867, %v5631
    %v5770 = vadd.f32 %v4868, %v5636
    %v5771 = vadd.f32 %v4869, %v5639
    %v5772 = vadd.f32 %v4870, %v5644
    %v5773 = vadd.f32 %v4871, %v5647
    %v5774 = vadd.f32 %v4872, %v5652
    %v5775 = vadd.f32 %v4873, %v5655
    %v5776 = vadd.f32 %v4874, %v5660
    %v5777 = vadd.f32 %v4875, %v5663
    %v5778 = vadd.f32 %v4876, %v5668
    %v5779 = vadd.f32 %v4877, %v5671
    %v5780 = vadd.f32 %v4878, %v5676
    %v5781 = vadd.f32 %v4879, %v5679
    %v5782 = vadd.f32 %v4880, %v5684
    %v5783 = vadd.f32 %v4881, %v5687
    %v5784 = vadd.f32 %v4882, %v5692
    %v5785 = vadd.f32 %v4883, %v5695
    %v5786 = vadd.f32 %v4884, %v5700
    %v5787 = vadd.f32 %v4885, %v5703
    %v5788 = vadd.f32 %v4886, %v5708
    %v5789 = vadd.f32 %v4887, %v5711
    %v5790 = vadd.f32 %v4888, %v5716
    %v5791 = vadd.f32 %v4889, %v5719
    %v5792 = vadd.f32 %v4890, %v5724
    %v5793 = vadd.f32 %v4891, %v5727
    %v5794 = vld [vmem:[%s2] sm:$0xf]
    %v5795 = vld [vmem:[%s2 + $0x4] sm:$0xf]
    %v5796 = vld [vmem:[%s2 + $0xc] sm:$0xf]
    %v5797 = vld [vmem:[%s2 + $0x10] sm:$0xf]
    %v5798 = vld [vmem:[%s2 + $0x18] sm:$0xf]
    %v5799 = vld [vmem:[%s2 + $0x1c] sm:$0xf]
    %v5800 = vld [vmem:[%s2 + $0x24] sm:$0xf]
    %v5801 = vld [vmem:[%s2 + $0x28] sm:$0xf]
    %v5802 = vld [vmem:[%s2 + $0x30] sm:$0xf]
    %v5803 = vld [vmem:[%s2 + $0x34] sm:$0xf]
    %v5804 = vld [vmem:[%s2 + $0x3c] sm:$0xf]
    %v5805 = vld [vmem:[%s2 + $0x40] sm:$0xf]
    %v5806 = vld [vmem:[%s2 + $0x48] sm:$0xf]
    %v5807 = vld [vmem:[%s2 + $0x4c] sm:$0xf]
    %v5808 = vld [vmem:[%s2 + $0x54] sm:$0xf]
    %v5809 = vld [vmem:[%s2 + $0x58] sm:$0xf]
    %v5810 = vld [vmem:[%s2 + $0x60] sm:$0xf]
    %v5811 = vld [vmem:[%s2 + $0x64] sm:$0xf]
    %v5812 = vld [vmem:[%s2 + $0x6c] sm:$0xf]
    %v5813 = vld [vmem:[%s2 + $0x70] sm:$0xf]
    %v5814 = vld [vmem:[%s2 + $0x78] sm:$0xf]
    %v5815 = vld [vmem:[%s2 + $0x7c] sm:$0xf]
    %v5816 = vld [vmem:[%s2 + $0x84] sm:$0xf]
    %v5817 = vld [vmem:[%s2 + $0x88] sm:$0xf]
    %v5818 = vld [vmem:[%s2 + $0x90] sm:$0xf]
    %v5819 = vld [vmem:[%s2 + $0x94] sm:$0xf]
    %v5820 = vld [vmem:[%s2 + $0x9c] sm:$0xf]
    %v5821 = vld [vmem:[%s2 + $0xa0] sm:$0xf]
    %v5822 = vld [vmem:[%s2 + $0xa8] sm:$0xf]
    %v5823 = vld [vmem:[%s2 + $0xac] sm:$0xf]
    %v5824 = vld [vmem:[%s2 + $0xb4] sm:$0xf]
    %v5825 = vld [vmem:[%s2 + $0xb8] sm:$0xf]
    %v5826 = vld [vmem:[%s2 + $0xc0] sm:$0xf]
    %v5827 = vld [vmem:[%s2 + $0xc4] sm:$0xf]
    %v5828 = vld [vmem:[%s2 + $0xcc] sm:$0xf]
    %v5829 = vld [vmem:[%s2 + $0xd0] sm:$0xf]
    %v5830 = vld [vmem:[%s2 + $0xd8] sm:$0xf]
    %v5831 = vld [vmem:[%s2 + $0xdc] sm:$0xf]
    %v5832 = vld [vmem:[%s2 + $0xe4] sm:$0xf]
    %v5833 = vld [vmem:[%s2 + $0xe8] sm:$0xf]
    %v5834 = vld [vmem:[%s2 + $0xf0] sm:$0xf]
    %v5835 = vld [vmem:[%s2 + $0xf4] sm:$0xf]
    %v5836 = vld [vmem:[%s2 + $0xfc] sm:$0xf]
    %v5837 = vld [vmem:[%s2 + $0x100] sm:$0xf]
    %v5838 = vld [vmem:[%s2 + $0x108] sm:$0xf]
    %v5839 = vld [vmem:[%s2 + $0x10c] sm:$0xf]
    %v5840 = vld [vmem:[%s2 + $0x114] sm:$0xf]
    %v5841 = vld [vmem:[%s2 + $0x118] sm:$0xf]
    %v5842 = vld [vmem:[%s2 + $0x120] sm:$0xf]
    %v5843 = vld [vmem:[%s2 + $0x124] sm:$0xf]
    %v5844 = vld [vmem:[%s2 + $0x12c] sm:$0xf]
    %v5845 = vld [vmem:[%s2 + $0x130] sm:$0xf]
    %v5846 = vld [vmem:[%s2 + $0x138] sm:$0xf]
    %v5847 = vld [vmem:[%s2 + $0x13c] sm:$0xf]
    %v5848 = vld [vmem:[%s2 + $0x144] sm:$0xf]
    %v5849 = vld [vmem:[%s2 + $0x148] sm:$0xf]
    %v5850 = vld [vmem:[%s2 + $0x150] sm:$0xf]
    %v5851 = vld [vmem:[%s2 + $0x154] sm:$0xf]
    %v5852 = vld [vmem:[%s2 + $0x15c] sm:$0xf]
    %v5853 = vld [vmem:[%s2 + $0x160] sm:$0xf]
    %v5854 = vld [vmem:[%s2 + $0x168] sm:$0xf]
    %v5855 = vld [vmem:[%s2 + $0x16c] sm:$0xf]
    %v5856 = vld [vmem:[%s2 + $0x174] sm:$0xf]
    %v5857 = vld [vmem:[%s2 + $0x178] sm:$0xf]
    %s5858 = scalar_lea.vmem %s3, 12
    %v5859 = vld [vmem:[%s5858] sm:$0x3]
    %v5924 = vunpack.c.l.b16 %v5794
    %v5925 = vunpack.c.l.b16 %v5795
    %v5926 = vunpack.c.l.b16 %v5796
    %v5927 = vunpack.c.l.b16 %v5797
    %v5928 = vunpack.c.l.b16 %v5798
    %v5929 = vunpack.c.l.b16 %v5799
    %v5930 = vunpack.c.l.b16 %v5800
    %v5931 = vunpack.c.l.b16 %v5801
    %v5932 = vunpack.c.l.b16 %v5802
    %v5933 = vunpack.c.l.b16 %v5803
    %v5934 = vunpack.c.l.b16 %v5804
    %v5935 = vunpack.c.l.b16 %v5805
    %v5936 = vunpack.c.l.b16 %v5806
    %v5937 = vunpack.c.l.b16 %v5807
    %v5938 = vunpack.c.l.b16 %v5808
    %v5939 = vunpack.c.l.b16 %v5809
    %v5940 = vunpack.c.l.b16 %v5810
    %v5941 = vunpack.c.l.b16 %v5811
    %v5942 = vunpack.c.l.b16 %v5812
    %v5943 = vunpack.c.l.b16 %v5813
    %v5944 = vunpack.c.l.b16 %v5814
    %v5945 = vunpack.c.l.b16 %v5815
    %v5946 = vunpack.c.l.b16 %v5816
    %v5947 = vunpack.c.l.b16 %v5817
    %v5948 = vunpack.c.l.b16 %v5818
    %v5949 = vunpack.c.l.b16 %v5819
    %v5950 = vunpack.c.l.b16 %v5820
    %v5951 = vunpack.c.l.b16 %v5821
    %v5952 = vunpack.c.l.b16 %v5822
    %v5953 = vunpack.c.l.b16 %v5823
    %v5954 = vunpack.c.l.b16 %v5824
    %v5955 = vunpack.c.l.b16 %v5825
    %v5956 = vunpack.c.l.b16 %v5826
    %v5957 = vunpack.c.l.b16 %v5827
    %v5958 = vunpack.c.l.b16 %v5828
    %v5959 = vunpack.c.l.b16 %v5829
    %v5960 = vunpack.c.l.b16 %v5830
    %v5961 = vunpack.c.l.b16 %v5831
    %v5962 = vunpack.c.l.b16 %v5832
    %v5963 = vunpack.c.l.b16 %v5833
    %v5964 = vunpack.c.l.b16 %v5834
    %v5965 = vunpack.c.l.b16 %v5835
    %v5966 = vunpack.c.l.b16 %v5836
    %v5967 = vunpack.c.l.b16 %v5837
    %v5968 = vunpack.c.l.b16 %v5838
    %v5969 = vunpack.c.l.b16 %v5839
    %v5970 = vunpack.c.l.b16 %v5840
    %v5971 = vunpack.c.l.b16 %v5841
    %v5972 = vunpack.c.l.b16 %v5842
    %v5973 = vunpack.c.l.b16 %v5843
    %v5974 = vunpack.c.l.b16 %v5844
    %v5975 = vunpack.c.l.b16 %v5845
    %v5976 = vunpack.c.l.b16 %v5846
    %v5977 = vunpack.c.l.b16 %v5847
    %v5978 = vunpack.c.l.b16 %v5848
    %v5979 = vunpack.c.l.b16 %v5849
    %v5980 = vunpack.c.l.b16 %v5850
    %v5981 = vunpack.c.l.b16 %v5851
    %v5982 = vunpack.c.l.b16 %v5852
    %v5983 = vunpack.c.l.b16 %v5853
    %v5984 = vunpack.c.l.b16 %v5854
    %v5985 = vunpack.c.l.b16 %v5855
    %v5986 = vunpack.c.l.b16 %v5856
    %v5987 = vunpack.c.l.b16 %v5857
    %v5988 = vpack.c.b16 %v5925, %v5924
    %v5989 = vpack.c.b16 %v5927, %v5926
    %v5990 = vpack.c.b16 %v5929, %v5928
    %v5991 = vpack.c.b16 %v5931, %v5930
    %v5992 = vpack.c.b16 %v5933, %v5932
    %v5993 = vpack.c.b16 %v5935, %v5934
    %v5994 = vpack.c.b16 %v5937, %v5936
    %v5995 = vpack.c.b16 %v5939, %v5938
    %v5996 = vpack.c.b16 %v5941, %v5940
    %v5997 = vpack.c.b16 %v5943, %v5942
    %v5998 = vpack.c.b16 %v5945, %v5944
    %v5999 = vpack.c.b16 %v5947, %v5946
    %v6000 = vpack.c.b16 %v5949, %v5948
    %v6001 = vpack.c.b16 %v5951, %v5950
    %v6002 = vpack.c.b16 %v5953, %v5952
    %v6003 = vpack.c.b16 %v5955, %v5954
    %v6004 = vpack.c.b16 %v5957, %v5956
    %v6005 = vpack.c.b16 %v5959, %v5958
    %v6006 = vpack.c.b16 %v5961, %v5960
    %v6007 = vpack.c.b16 %v5963, %v5962
    %v6008 = vpack.c.b16 %v5965, %v5964
    %v6009 = vpack.c.b16 %v5967, %v5966
    %v6010 = vpack.c.b16 %v5969, %v5968
    %v6011 = vpack.c.b16 %v5971, %v5970
    %v6012 = vpack.c.b16 %v5973, %v5972
    %v6013 = vpack.c.b16 %v5975, %v5974
    %v6014 = vpack.c.b16 %v5977, %v5976
    %v6015 = vpack.c.b16 %v5979, %v5978
    %v6016 = vpack.c.b16 %v5981, %v5980
    %v6017 = vpack.c.b16 %v5983, %v5982
    %v6018 = vpack.c.b16 %v5985, %v5984
    %v6019 = vpack.c.b16 %v5987, %v5986
    %v6021 = vsel %vm989, %v5988, 0
    %v6024 = vsel %vm989, %v5989, 0
    %v6027 = vsel %vm989, %v5990, 0
    %v6030 = vsel %vm989, %v5991, 0
    %v6033 = vsel %vm989, %v5992, 0
    %v6036 = vsel %vm989, %v5993, 0
    %v6039 = vsel %vm989, %v5994, 0
    %v6042 = vsel %vm989, %v5995, 0
    %v6045 = vsel %vm989, %v5996, 0
    %v6048 = vsel %vm989, %v5997, 0
    %v6051 = vsel %vm989, %v5998, 0
    %v6054 = vsel %vm989, %v5999, 0
    %v6057 = vsel %vm989, %v6000, 0
    %v6060 = vsel %vm989, %v6001, 0
    %v6063 = vsel %vm989, %v6002, 0
    %v6066 = vsel %vm989, %v6003, 0
    %v6069 = vsel %vm989, %v6004, 0
    %v6072 = vsel %vm989, %v6005, 0
    %v6075 = vsel %vm989, %v6006, 0
    %v6078 = vsel %vm989, %v6007, 0
    %v6081 = vsel %vm989, %v6008, 0
    %v6084 = vsel %vm989, %v6009, 0
    %v6087 = vsel %vm989, %v6010, 0
    %v6090 = vsel %vm989, %v6011, 0
    %v6093 = vsel %vm989, %v6012, 0
    %v6096 = vsel %vm989, %v6013, 0
    %v6099 = vsel %vm989, %v6014, 0
    %v6102 = vsel %vm989, %v6015, 0
    %v6105 = vsel %vm989, %v6016, 0
    %v6108 = vsel %vm989, %v6017, 0
    %v6111 = vsel %vm989, %v6018, 0
    %v6114 = vsel %vm989, %v6019, 0
    %v6117 = vsel %vm1086, %v5859, 0
    %6119 = vmatprep.subr.bf16.mxu0 0
    %6120 = vmatpush1.bf16.msra.mxu0 0
    %6121 = vmatprep.subr.bf16.mxu0 0
    %6122 = vmatpush1.bf16.msra.mxu0 0
    %6123 = vmatprep.subr.bf16.mxu0 0
    %6124 = vmatpush1.bf16.msra.mxu0 0
    %6125 = vmatprep.subr.bf16.mxu0 0
    %6126 = vmatpush1.bf16.msra.mxu0 0
    %6127 = vmatprep.subr.bf16.mxu0 0
    %6128 = vmatpush1.bf16.msra.mxu0 0
    %6129 = vmatprep.subr.bf16.mxu0 0
    %6130 = vmatpush1.bf16.msra.mxu0 0
    %6131 = vmatprep.subr.bf16.mxu0 0
    %6132 = vmatpush1.bf16.msra.mxu0 0
    %6133 = vmatprep.subr.bf16.mxu0 0
    %6134 = vmatpush1.bf16.msra.mxu0 %v6117
    %6135 = vmatprep.subr.bf16.mxu0 0
    %6136 = vmatpush2.bf16.msra.mxu0 0
    %6137 = vmatprep.subr.bf16.mxu0 0
    %6138 = vmatpush2.bf16.msra.mxu0 0
    %6139 = vmatprep.subr.bf16.mxu0 0
    %6140 = vmatpush2.bf16.msra.mxu0 0
    %6141 = vmatprep.subr.bf16.mxu0 0
    %6142 = vmatpush2.bf16.msra.mxu0 0
    %6143 = vmatprep.subr.bf16.mxu0 0
    %6144 = vmatpush2.bf16.msra.mxu0 0
    %6145 = vmatprep.subr.bf16.mxu0 0
    %6146 = vmatpush2.bf16.msra.mxu0 0
    %6147 = vmatprep.subr.bf16.mxu0 0
    %6148 = vmatpush2.bf16.msra.mxu0 0
    %6149 = vmatprep.subr.bf16.mxu0 0
    %6150 = vmatpush2.bf16.msra.mxu0 0
    %6151 = vmatprep.mubr.bf16.mxu0 0
    %6152 = vmatmul.mubr.bf16.gmra.mxu0 %v6021
    %v6153 = vpop.f32.mrf.mxu0
    %v6154 = vadd.f32 0.0, %v6153
    %v6155 = vpop.f32.mrf.mxu0
    %v6156 = vpop.f32.mrf.mxu0
    %v6157 = vadd.f32 0.0, %v6156
    %v6158 = vpop.f32.mrf.mxu0
    %6159 = vmatprep.mubr.bf16.mxu0 0
    %6160 = vmatmul.mubr.bf16.gmra.mxu0 %v6024
    %v6161 = vpop.f32.mrf.mxu0
    %v6162 = vadd.f32 0.0, %v6161
    %v6163 = vpop.f32.mrf.mxu0
    %v6164 = vpop.f32.mrf.mxu0
    %v6165 = vadd.f32 0.0, %v6164
    %v6166 = vpop.f32.mrf.mxu0
    %6167 = vmatprep.mubr.bf16.mxu0 0
    %6168 = vmatmul.mubr.bf16.gmra.mxu0 %v6027
    %v6169 = vpop.f32.mrf.mxu0
    %v6170 = vadd.f32 0.0, %v6169
    %v6171 = vpop.f32.mrf.mxu0
    %v6172 = vpop.f32.mrf.mxu0
    %v6173 = vadd.f32 0.0, %v6172
    %v6174 = vpop.f32.mrf.mxu0
    %6175 = vmatprep.mubr.bf16.mxu0 0
    %6176 = vmatmul.mubr.bf16.gmra.mxu0 %v6030
    %v6177 = vpop.f32.mrf.mxu0
    %v6178 = vadd.f32 0.0, %v6177
    %v6179 = vpop.f32.mrf.mxu0
    %v6180 = vpop.f32.mrf.mxu0
    %v6181 = vadd.f32 0.0, %v6180
    %v6182 = vpop.f32.mrf.mxu0
    %6183 = vmatprep.mubr.bf16.mxu0 0
    %6184 = vmatmul.mubr.bf16.gmra.mxu0 %v6033
    %v6185 = vpop.f32.mrf.mxu0
    %v6186 = vadd.f32 0.0, %v6185
    %v6187 = vpop.f32.mrf.mxu0
    %v6188 = vpop.f32.mrf.mxu0
    %v6189 = vadd.f32 0.0, %v6188
    %v6190 = vpop.f32.mrf.mxu0
    %6191 = vmatprep.mubr.bf16.mxu0 0
    %6192 = vmatmul.mubr.bf16.gmra.mxu0 %v6036
    %v6193 = vpop.f32.mrf.mxu0
    %v6194 = vadd.f32 0.0, %v6193
    %v6195 = vpop.f32.mrf.mxu0
    %v6196 = vpop.f32.mrf.mxu0
    %v6197 = vadd.f32 0.0, %v6196
    %v6198 = vpop.f32.mrf.mxu0
    %6199 = vmatprep.mubr.bf16.mxu0 0
    %6200 = vmatmul.mubr.bf16.gmra.mxu0 %v6039
    %v6201 = vpop.f32.mrf.mxu0
    %v6202 = vadd.f32 0.0, %v6201
    %v6203 = vpop.f32.mrf.mxu0
    %v6204 = vpop.f32.mrf.mxu0
    %v6205 = vadd.f32 0.0, %v6204
    %v6206 = vpop.f32.mrf.mxu0
    %6207 = vmatprep.mubr.bf16.mxu0 0
    %6208 = vmatmul.mubr.bf16.gmra.mxu0 %v6042
    %v6209 = vpop.f32.mrf.mxu0
    %v6210 = vadd.f32 0.0, %v6209
    %v6211 = vpop.f32.mrf.mxu0
    %v6212 = vpop.f32.mrf.mxu0
    %v6213 = vadd.f32 0.0, %v6212
    %v6214 = vpop.f32.mrf.mxu0
    %6215 = vmatprep.mubr.bf16.mxu0 0
    %6216 = vmatmul.mubr.bf16.gmra.mxu0 %v6045
    %v6217 = vpop.f32.mrf.mxu0
    %v6218 = vadd.f32 0.0, %v6217
    %v6219 = vpop.f32.mrf.mxu0
    %v6220 = vpop.f32.mrf.mxu0
    %v6221 = vadd.f32 0.0, %v6220
    %v6222 = vpop.f32.mrf.mxu0
    %6223 = vmatprep.mubr.bf16.mxu0 0
    %6224 = vmatmul.mubr.bf16.gmra.mxu0 %v6048
    %v6225 = vpop.f32.mrf.mxu0
    %v6226 = vadd.f32 0.0, %v6225
    %v6227 = vpop.f32.mrf.mxu0
    %v6228 = vpop.f32.mrf.mxu0
    %v6229 = vadd.f32 0.0, %v6228
    %v6230 = vpop.f32.mrf.mxu0
    %6231 = vmatprep.mubr.bf16.mxu0 0
    %6232 = vmatmul.mubr.bf16.gmra.mxu0 %v6051
    %v6233 = vpop.f32.mrf.mxu0
    %v6234 = vadd.f32 0.0, %v6233
    %v6235 = vpop.f32.mrf.mxu0
    %v6236 = vpop.f32.mrf.mxu0
    %v6237 = vadd.f32 0.0, %v6236
    %v6238 = vpop.f32.mrf.mxu0
    %6239 = vmatprep.mubr.bf16.mxu0 0
    %6240 = vmatmul.mubr.bf16.gmra.mxu0 %v6054
    %v6241 = vpop.f32.mrf.mxu0
    %v6242 = vadd.f32 0.0, %v6241
    %v6243 = vpop.f32.mrf.mxu0
    %v6244 = vpop.f32.mrf.mxu0
    %v6245 = vadd.f32 0.0, %v6244
    %v6246 = vpop.f32.mrf.mxu0
    %6247 = vmatprep.mubr.bf16.mxu0 0
    %6248 = vmatmul.mubr.bf16.gmra.mxu0 %v6057
    %v6249 = vpop.f32.mrf.mxu0
    %v6250 = vadd.f32 0.0, %v6249
    %v6251 = vpop.f32.mrf.mxu0
    %v6252 = vpop.f32.mrf.mxu0
    %v6253 = vadd.f32 0.0, %v6252
    %v6254 = vpop.f32.mrf.mxu0
    %6255 = vmatprep.mubr.bf16.mxu0 0
    %6256 = vmatmul.mubr.bf16.gmra.mxu0 %v6060
    %v6257 = vpop.f32.mrf.mxu0
    %v6258 = vadd.f32 0.0, %v6257
    %v6259 = vpop.f32.mrf.mxu0
    %v6260 = vpop.f32.mrf.mxu0
    %v6261 = vadd.f32 0.0, %v6260
    %v6262 = vpop.f32.mrf.mxu0
    %6263 = vmatprep.mubr.bf16.mxu0 0
    %6264 = vmatmul.mubr.bf16.gmra.mxu0 %v6063
    %v6265 = vpop.f32.mrf.mxu0
    %v6266 = vadd.f32 0.0, %v6265
    %v6267 = vpop.f32.mrf.mxu0
    %v6268 = vpop.f32.mrf.mxu0
    %v6269 = vadd.f32 0.0, %v6268
    %v6270 = vpop.f32.mrf.mxu0
    %6271 = vmatprep.mubr.bf16.mxu0 0
    %6272 = vmatmul.mubr.bf16.gmra.mxu0 %v6066
    %v6273 = vpop.f32.mrf.mxu0
    %v6274 = vadd.f32 0.0, %v6273
    %v6275 = vpop.f32.mrf.mxu0
    %v6276 = vpop.f32.mrf.mxu0
    %v6277 = vadd.f32 0.0, %v6276
    %v6278 = vpop.f32.mrf.mxu0
    %6279 = vmatprep.mubr.bf16.mxu0 0
    %6280 = vmatmul.mubr.bf16.gmra.mxu0 %v6069
    %v6281 = vpop.f32.mrf.mxu0
    %v6282 = vadd.f32 0.0, %v6281
    %v6283 = vpop.f32.mrf.mxu0
    %v6284 = vpop.f32.mrf.mxu0
    %v6285 = vadd.f32 0.0, %v6284
    %v6286 = vpop.f32.mrf.mxu0
    %6287 = vmatprep.mubr.bf16.mxu0 0
    %6288 = vmatmul.mubr.bf16.gmra.mxu0 %v6072
    %v6289 = vpop.f32.mrf.mxu0
    %v6290 = vadd.f32 0.0, %v6289
    %v6291 = vpop.f32.mrf.mxu0
    %v6292 = vpop.f32.mrf.mxu0
    %v6293 = vadd.f32 0.0, %v6292
    %v6294 = vpop.f32.mrf.mxu0
    %6295 = vmatprep.mubr.bf16.mxu0 0
    %6296 = vmatmul.mubr.bf16.gmra.mxu0 %v6075
    %v6297 = vpop.f32.mrf.mxu0
    %v6298 = vadd.f32 0.0, %v6297
    %v6299 = vpop.f32.mrf.mxu0
    %v6300 = vpop.f32.mrf.mxu0
    %v6301 = vadd.f32 0.0, %v6300
    %v6302 = vpop.f32.mrf.mxu0
    %6303 = vmatprep.mubr.bf16.mxu0 0
    %6304 = vmatmul.mubr.bf16.gmra.mxu0 %v6078
    %v6305 = vpop.f32.mrf.mxu0
    %v6306 = vadd.f32 0.0, %v6305
    %v6307 = vpop.f32.mrf.mxu0
    %v6308 = vpop.f32.mrf.mxu0
    %v6309 = vadd.f32 0.0, %v6308
    %v6310 = vpop.f32.mrf.mxu0
    %6311 = vmatprep.mubr.bf16.mxu0 0
    %6312 = vmatmul.mubr.bf16.gmra.mxu0 %v6081
    %v6313 = vpop.f32.mrf.mxu0
    %v6314 = vadd.f32 0.0, %v6313
    %v6315 = vpop.f32.mrf.mxu0
    %v6316 = vpop.f32.mrf.mxu0
    %v6317 = vadd.f32 0.0, %v6316
    %v6318 = vpop.f32.mrf.mxu0
    %6319 = vmatprep.mubr.bf16.mxu0 0
    %6320 = vmatmul.mubr.bf16.gmra.mxu0 %v6084
    %v6321 = vpop.f32.mrf.mxu0
    %v6322 = vadd.f32 0.0, %v6321
    %v6323 = vpop.f32.mrf.mxu0
    %v6324 = vpop.f32.mrf.mxu0
    %v6325 = vadd.f32 0.0, %v6324
    %v6326 = vpop.f32.mrf.mxu0
    %6327 = vmatprep.mubr.bf16.mxu0 0
    %6328 = vmatmul.mubr.bf16.gmra.mxu0 %v6087
    %v6329 = vpop.f32.mrf.mxu0
    %v6330 = vadd.f32 0.0, %v6329
    %v6331 = vpop.f32.mrf.mxu0
    %v6332 = vpop.f32.mrf.mxu0
    %v6333 = vadd.f32 0.0, %v6332
    %v6334 = vpop.f32.mrf.mxu0
    %6335 = vmatprep.mubr.bf16.mxu0 0
    %6336 = vmatmul.mubr.bf16.gmra.mxu0 %v6090
    %v6337 = vpop.f32.mrf.mxu0
    %v6338 = vadd.f32 0.0, %v6337
    %v6339 = vpop.f32.mrf.mxu0
    %v6340 = vpop.f32.mrf.mxu0
    %v6341 = vadd.f32 0.0, %v6340
    %v6342 = vpop.f32.mrf.mxu0
    %6343 = vmatprep.mubr.bf16.mxu0 0
    %6344 = vmatmul.mubr.bf16.gmra.mxu0 %v6093
    %v6345 = vpop.f32.mrf.mxu0
    %v6346 = vadd.f32 0.0, %v6345
    %v6347 = vpop.f32.mrf.mxu0
    %v6348 = vpop.f32.mrf.mxu0
    %v6349 = vadd.f32 0.0, %v6348
    %v6350 = vpop.f32.mrf.mxu0
    %6351 = vmatprep.mubr.bf16.mxu0 0
    %6352 = vmatmul.mubr.bf16.gmra.mxu0 %v6096
    %v6353 = vpop.f32.mrf.mxu0
    %v6354 = vadd.f32 0.0, %v6353
    %v6355 = vpop.f32.mrf.mxu0
    %v6356 = vpop.f32.mrf.mxu0
    %v6357 = vadd.f32 0.0, %v6356
    %v6358 = vpop.f32.mrf.mxu0
    %6359 = vmatprep.mubr.bf16.mxu0 0
    %6360 = vmatmul.mubr.bf16.gmra.mxu0 %v6099
    %v6361 = vpop.f32.mrf.mxu0
    %v6362 = vadd.f32 0.0, %v6361
    %v6363 = vpop.f32.mrf.mxu0
    %v6364 = vpop.f32.mrf.mxu0
    %v6365 = vadd.f32 0.0, %v6364
    %v6366 = vpop.f32.mrf.mxu0
    %6367 = vmatprep.mubr.bf16.mxu0 0
    %6368 = vmatmul.mubr.bf16.gmra.mxu0 %v6102
    %v6369 = vpop.f32.mrf.mxu0
    %v6370 = vadd.f32 0.0, %v6369
    %v6371 = vpop.f32.mrf.mxu0
    %v6372 = vpop.f32.mrf.mxu0
    %v6373 = vadd.f32 0.0, %v6372
    %v6374 = vpop.f32.mrf.mxu0
    %6375 = vmatprep.mubr.bf16.mxu0 0
    %6376 = vmatmul.mubr.bf16.gmra.mxu0 %v6105
    %v6377 = vpop.f32.mrf.mxu0
    %v6378 = vadd.f32 0.0, %v6377
    %v6379 = vpop.f32.mrf.mxu0
    %v6380 = vpop.f32.mrf.mxu0
    %v6381 = vadd.f32 0.0, %v6380
    %v6382 = vpop.f32.mrf.mxu0
    %6383 = vmatprep.mubr.bf16.mxu0 0
    %6384 = vmatmul.mubr.bf16.gmra.mxu0 %v6108
    %v6385 = vpop.f32.mrf.mxu0
    %v6386 = vadd.f32 0.0, %v6385
    %v6387 = vpop.f32.mrf.mxu0
    %v6388 = vpop.f32.mrf.mxu0
    %v6389 = vadd.f32 0.0, %v6388
    %v6390 = vpop.f32.mrf.mxu0
    %6391 = vmatprep.mubr.bf16.mxu0 0
    %6392 = vmatmul.mubr.bf16.gmra.mxu0 %v6111
    %v6393 = vpop.f32.mrf.mxu0
    %v6394 = vadd.f32 0.0, %v6393
    %v6395 = vpop.f32.mrf.mxu0
    %v6396 = vpop.f32.mrf.mxu0
    %v6397 = vadd.f32 0.0, %v6396
    %v6398 = vpop.f32.mrf.mxu0
    %6399 = vmatprep.mubr.bf16.mxu0 0
    %6400 = vmatmul.mubr.bf16.gmra.mxu0 %v6114
    %v6401 = vpop.f32.mrf.mxu0
    %v6402 = vadd.f32 0.0, %v6401
    %v6403 = vpop.f32.mrf.mxu0
    %v6404 = vpop.f32.mrf.mxu0
    %v6405 = vadd.f32 0.0, %v6404
    %v6406 = vpop.f32.mrf.mxu0
    %6407 = vdwg.mxu0
    %v6408 = vadd.f32 %v5730, %v6154
    %v6409 = vadd.f32 %v5731, %v6157
    %v6410 = vadd.f32 %v5732, %v6162
    %v6411 = vadd.f32 %v5733, %v6165
    %v6412 = vadd.f32 %v5734, %v6170
    %v6413 = vadd.f32 %v5735, %v6173
    %v6414 = vadd.f32 %v5736, %v6178
    %v6415 = vadd.f32 %v5737, %v6181
    %v6416 = vadd.f32 %v5738, %v6186
    %v6417 = vadd.f32 %v5739, %v6189
    %v6418 = vadd.f32 %v5740, %v6194
    %v6419 = vadd.f32 %v5741, %v6197
    %v6420 = vadd.f32 %v5742, %v6202
    %v6421 = vadd.f32 %v5743, %v6205
    %v6422 = vadd.f32 %v5744, %v6210
    %v6423 = vadd.f32 %v5745, %v6213
    %v6424 = vadd.f32 %v5746, %v6218
    %v6425 = vadd.f32 %v5747, %v6221
    %v6426 = vadd.f32 %v5748, %v6226
    %v6427 = vadd.f32 %v5749, %v6229
    %v6428 = vadd.f32 %v5750, %v6234
    %v6429 = vadd.f32 %v5751, %v6237
    %v6430 = vadd.f32 %v5752, %v6242
    %v6431 = vadd.f32 %v5753, %v6245
    %v6432 = vadd.f32 %v5754, %v6250
    %v6433 = vadd.f32 %v5755, %v6253
    %v6434 = vadd.f32 %v5756, %v6258
    %v6435 = vadd.f32 %v5757, %v6261
    %v6436 = vadd.f32 %v5758, %v6266
    %v6437 = vadd.f32 %v5759, %v6269
    %v6438 = vadd.f32 %v5760, %v6274
    %v6439 = vadd.f32 %v5761, %v6277
    %v6440 = vadd.f32 %v5762, %v6282
    %v6441 = vadd.f32 %v5763, %v6285
    %v6442 = vadd.f32 %v5764, %v6290
    %v6443 = vadd.f32 %v5765, %v6293
    %v6444 = vadd.f32 %v5766, %v6298
    %v6445 = vadd.f32 %v5767, %v6301
    %v6446 = vadd.f32 %v5768, %v6306
    %v6447 = vadd.f32 %v5769, %v6309
    %v6448 = vadd.f32 %v5770, %v6314
    %v6449 = vadd.f32 %v5771, %v6317
    %v6450 = vadd.f32 %v5772, %v6322
    %v6451 = vadd.f32 %v5773, %v6325
    %v6452 = vadd.f32 %v5774, %v6330
    %v6453 = vadd.f32 %v5775, %v6333
    %v6454 = vadd.f32 %v5776, %v6338
    %v6455 = vadd.f32 %v5777, %v6341
    %v6456 = vadd.f32 %v5778, %v6346
    %v6457 = vadd.f32 %v5779, %v6349
    %v6458 = vadd.f32 %v5780, %v6354
    %v6459 = vadd.f32 %v5781, %v6357
    %v6460 = vadd.f32 %v5782, %v6362
    %v6461 = vadd.f32 %v5783, %v6365
    %v6462 = vadd.f32 %v5784, %v6370
    %v6463 = vadd.f32 %v5785, %v6373
    %v6464 = vadd.f32 %v5786, %v6378
    %v6465 = vadd.f32 %v5787, %v6381
    %v6466 = vadd.f32 %v5788, %v6386
    %v6467 = vadd.f32 %v5789, %v6389
    %v6468 = vadd.f32 %v5790, %v6394
    %v6469 = vadd.f32 %v5791, %v6397
    %v6470 = vadd.f32 %v5792, %v6402
    %v6471 = vadd.f32 %v5793, %v6405
    %v6472 = vld [vmem:[%s2] sm:$0xf]
    %v6473 = vld [vmem:[%s2 + $0x4] sm:$0xf]
    %v6474 = vld [vmem:[%s2 + $0x8] sm:$0x1]
    %v6475 = vld [vmem:[%s2 + $0xc] sm:$0xf]
    %v6476 = vld [vmem:[%s2 + $0x10] sm:$0xf]
    %v6477 = vld [vmem:[%s2 + $0x14] sm:$0x1]
    %v6478 = vld [vmem:[%s2 + $0x18] sm:$0xf]
    %v6479 = vld [vmem:[%s2 + $0x1c] sm:$0xf]
    %v6480 = vld [vmem:[%s2 + $0x20] sm:$0x1]
    %v6481 = vld [vmem:[%s2 + $0x24] sm:$0xf]
    %v6482 = vld [vmem:[%s2 + $0x28] sm:$0xf]
    %v6483 = vld [vmem:[%s2 + $0x2c] sm:$0x1]
    %v6484 = vld [vmem:[%s2 + $0x30] sm:$0xf]
    %v6485 = vld [vmem:[%s2 + $0x34] sm:$0xf]
    %v6486 = vld [vmem:[%s2 + $0x38] sm:$0x1]
    %v6487 = vld [vmem:[%s2 + $0x3c] sm:$0xf]
    %v6488 = vld [vmem:[%s2 + $0x40] sm:$0xf]
    %v6489 = vld [vmem:[%s2 + $0x44] sm:$0x1]
    %v6490 = vld [vmem:[%s2 + $0x48] sm:$0xf]
    %v6491 = vld [vmem:[%s2 + $0x4c] sm:$0xf]
    %v6492 = vld [vmem:[%s2 + $0x50] sm:$0x1]
    %v6493 = vld [vmem:[%s2 + $0x54] sm:$0xf]
    %v6494 = vld [vmem:[%s2 + $0x58] sm:$0xf]
    %v6495 = vld [vmem:[%s2 + $0x5c] sm:$0x1]
    %v6496 = vld [vmem:[%s2 + $0x60] sm:$0xf]
    %v6497 = vld [vmem:[%s2 + $0x64] sm:$0xf]
    %v6498 = vld [vmem:[%s2 + $0x68] sm:$0x1]
    %v6499 = vld [vmem:[%s2 + $0x6c] sm:$0xf]
    %v6500 = vld [vmem:[%s2 + $0x70] sm:$0xf]
    %v6501 = vld [vmem:[%s2 + $0x74] sm:$0x1]
    %v6502 = vld [vmem:[%s2 + $0x78] sm:$0xf]
    %v6503 = vld [vmem:[%s2 + $0x7c] sm:$0xf]
    %v6504 = vld [vmem:[%s2 + $0x80] sm:$0x1]
    %v6505 = vld [vmem:[%s2 + $0x84] sm:$0xf]
    %v6506 = vld [vmem:[%s2 + $0x88] sm:$0xf]
    %v6507 = vld [vmem:[%s2 + $0x8c] sm:$0x1]
    %v6508 = vld [vmem:[%s2 + $0x90] sm:$0xf]
    %v6509 = vld [vmem:[%s2 + $0x94] sm:$0xf]
    %v6510 = vld [vmem:[%s2 + $0x98] sm:$0x1]
    %v6511 = vld [vmem:[%s2 + $0x9c] sm:$0xf]
    %v6512 = vld [vmem:[%s2 + $0xa0] sm:$0xf]
    %v6513 = vld [vmem:[%s2 + $0xa4] sm:$0x1]
    %v6514 = vld [vmem:[%s2 + $0xa8] sm:$0xf]
    %v6515 = vld [vmem:[%s2 + $0xac] sm:$0xf]
    %v6516 = vld [vmem:[%s2 + $0xb0] sm:$0x1]
    %v6517 = vld [vmem:[%s2 + $0xb4] sm:$0xf]
    %v6518 = vld [vmem:[%s2 + $0xb8] sm:$0xf]
    %v6519 = vld [vmem:[%s2 + $0xbc] sm:$0x1]
    %v6520 = vld [vmem:[%s2 + $0xc0] sm:$0xf]
    %v6521 = vld [vmem:[%s2 + $0xc4] sm:$0xf]
    %v6522 = vld [vmem:[%s2 + $0xc8] sm:$0x1]
    %v6523 = vld [vmem:[%s2 + $0xcc] sm:$0xf]
    %v6524 = vld [vmem:[%s2 + $0xd0] sm:$0xf]
    %v6525 = vld [vmem:[%s2 + $0xd4] sm:$0x1]
    %v6526 = vld [vmem:[%s2 + $0xd8] sm:$0xf]
    %v6527 = vld [vmem:[%s2 + $0xdc] sm:$0xf]
    %v6528 = vld [vmem:[%s2 + $0xe0] sm:$0x1]
    %v6529 = vld [vmem:[%s2 + $0xe4] sm:$0xf]
    %v6530 = vld [vmem:[%s2 + $0xe8] sm:$0xf]
    %v6531 = vld [vmem:[%s2 + $0xec] sm:$0x1]
    %v6532 = vld [vmem:[%s2 + $0xf0] sm:$0xf]
    %v6533 = vld [vmem:[%s2 + $0xf4] sm:$0xf]
    %v6534 = vld [vmem:[%s2 + $0xf8] sm:$0x1]
    %v6535 = vld [vmem:[%s2 + $0xfc] sm:$0xf]
    %v6536 = vld [vmem:[%s2 + $0x100] sm:$0xf]
    %v6537 = vld [vmem:[%s2 + $0x104] sm:$0x1]
    %v6538 = vld [vmem:[%s2 + $0x108] sm:$0xf]
    %v6539 = vld [vmem:[%s2 + $0x10c] sm:$0xf]
    %v6540 = vld [vmem:[%s2 + $0x110] sm:$0x1]
    %v6541 = vld [vmem:[%s2 + $0x114] sm:$0xf]
    %v6542 = vld [vmem:[%s2 + $0x118] sm:$0xf]
    %v6543 = vld [vmem:[%s2 + $0x11c] sm:$0x1]
    %v6544 = vld [vmem:[%s2 + $0x120] sm:$0xf]
    %v6545 = vld [vmem:[%s2 + $0x124] sm:$0xf]
    %v6546 = vld [vmem:[%s2 + $0x128] sm:$0x1]
    %v6547 = vld [vmem:[%s2 + $0x12c] sm:$0xf]
    %v6548 = vld [vmem:[%s2 + $0x130] sm:$0xf]
    %v6549 = vld [vmem:[%s2 + $0x134] sm:$0x1]
    %v6550 = vld [vmem:[%s2 + $0x138] sm:$0xf]
    %v6551 = vld [vmem:[%s2 + $0x13c] sm:$0xf]
    %v6552 = vld [vmem:[%s2 + $0x140] sm:$0x1]
    %v6553 = vld [vmem:[%s2 + $0x144] sm:$0xf]
    %v6554 = vld [vmem:[%s2 + $0x148] sm:$0xf]
    %v6555 = vld [vmem:[%s2 + $0x14c] sm:$0x1]
    %v6556 = vld [vmem:[%s2 + $0x150] sm:$0xf]
    %v6557 = vld [vmem:[%s2 + $0x154] sm:$0xf]
    %v6558 = vld [vmem:[%s2 + $0x158] sm:$0x1]
    %v6559 = vld [vmem:[%s2 + $0x15c] sm:$0xf]
    %v6560 = vld [vmem:[%s2 + $0x160] sm:$0xf]
    %v6561 = vld [vmem:[%s2 + $0x164] sm:$0x1]
    %v6562 = vld [vmem:[%s2 + $0x168] sm:$0xf]
    %v6563 = vld [vmem:[%s2 + $0x16c] sm:$0xf]
    %v6564 = vld [vmem:[%s2 + $0x170] sm:$0x1]
    %v6565 = vld [vmem:[%s2 + $0x174] sm:$0xf]
    %v6566 = vld [vmem:[%s2 + $0x178] sm:$0xf]
    %v6567 = vld [vmem:[%s2 + $0x17c] sm:$0x1]
    %v6569 = vshrl.u32 %v6472, 16
    %v6571 = vrot.slane %v6569, 4
    %v6572 = vshll.u32 %v6472, 16
    %v6574 = vrot.slane %v6572, 5
    %v6575 = vor.u32 %v6571, %v6574
    %v6576 = vrot.slane %v6575, 4
    %v6578 = vshll.u32 %v6473, 16
    %v6580 = vrot.slane %v6578, 5
    %v6581 = vsel %vm122, %v6576, %v6580
    %v6582 = vshrl.u32 %v6473, 16
    %v6584 = vrot.slane %v6582, 4
    %v6585 = vor.u32 %v6584, %v6580
    %v6586 = vrot.slane %v6585, 4
    %v6588 = vshll.u32 %v6474, 16
    %v6590 = vrot.slane %v6588, 5
    %v6591 = vsel %vm122, %v6586, %v6590
    %v6593 = vshrl.u32 %v6475, 16
    %v6595 = vrot.slane %v6593, 4
    %v6596 = vshll.u32 %v6475, 16
    %v6598 = vrot.slane %v6596, 5
    %v6599 = vor.u32 %v6595, %v6598
    %v6600 = vrot.slane %v6599, 4
    %v6602 = vshll.u32 %v6476, 16
    %v6604 = vrot.slane %v6602, 5
    %v6605 = vsel %vm122, %v6600, %v6604
    %v6606 = vshrl.u32 %v6476, 16
    %v6608 = vrot.slane %v6606, 4
    %v6609 = vor.u32 %v6608, %v6604
    %v6610 = vrot.slane %v6609, 4
    %v6612 = vshll.u32 %v6477, 16
    %v6614 = vrot.slane %v6612, 5
    %v6615 = vsel %vm122, %v6610, %v6614
    %v6617 = vshrl.u32 %v6478, 16
    %v6619 = vrot.slane %v6617, 4
    %v6620 = vshll.u32 %v6478, 16
    %v6622 = vrot.slane %v6620, 5
    %v6623 = vor.u32 %v6619, %v6622
    %v6624 = vrot.slane %v6623, 4
    %v6626 = vshll.u32 %v6479, 16
    %v6628 = vrot.slane %v6626, 5
    %v6629 = vsel %vm122, %v6624, %v6628
    %v6630 = vshrl.u32 %v6479, 16
    %v6632 = vrot.slane %v6630, 4
    %v6633 = vor.u32 %v6632, %v6628
    %v6634 = vrot.slane %v6633, 4
    %v6636 = vshll.u32 %v6480, 16
    %v6638 = vrot.slane %v6636, 5
    %v6639 = vsel %vm122, %v6634, %v6638
    %v6641 = vshrl.u32 %v6481, 16
    %v6643 = vrot.slane %v6641, 4
    %v6644 = vshll.u32 %v6481, 16
    %v6646 = vrot.slane %v6644, 5
    %v6647 = vor.u32 %v6643, %v6646
    %v6648 = vrot.slane %v6647, 4
    %v6650 = vshll.u32 %v6482, 16
    %v6652 = vrot.slane %v6650, 5
    %v6653 = vsel %vm122, %v6648, %v6652
    %v6654 = vshrl.u32 %v6482, 16
    %v6656 = vrot.slane %v6654, 4
    %v6657 = vor.u32 %v6656, %v6652
    %v6658 = vrot.slane %v6657, 4
    %v6660 = vshll.u32 %v6483, 16
    %v6662 = vrot.slane %v6660, 5
    %v6663 = vsel %vm122, %v6658, %v6662
    %v6665 = vshrl.u32 %v6484, 16
    %v6667 = vrot.slane %v6665, 4
    %v6668 = vshll.u32 %v6484, 16
    %v6670 = vrot.slane %v6668, 5
    %v6671 = vor.u32 %v6667, %v6670
    %v6672 = vrot.slane %v6671, 4
    %v6674 = vshll.u32 %v6485, 16
    %v6676 = vrot.slane %v6674, 5
    %v6677 = vsel %vm122, %v6672, %v6676
    %v6678 = vshrl.u32 %v6485, 16
    %v6680 = vrot.slane %v6678, 4
    %v6681 = vor.u32 %v6680, %v6676
    %v6682 = vrot.slane %v6681, 4
    %v6684 = vshll.u32 %v6486, 16
    %v6686 = vrot.slane %v6684, 5
    %v6687 = vsel %vm122, %v6682, %v6686
    %v6689 = vshrl.u32 %v6487, 16
    %v6691 = vrot.slane %v6689, 4
    %v6692 = vshll.u32 %v6487, 16
    %v6694 = vrot.slane %v6692, 5
    %v6695 = vor.u32 %v6691, %v6694
    %v6696 = vrot.slane %v6695, 4
    %v6698 = vshll.u32 %v6488, 16
    %v6700 = vrot.slane %v6698, 5
    %v6701 = vsel %vm122, %v6696, %v6700
    %v6702 = vshrl.u32 %v6488, 16
    %v6704 = vrot.slane %v6702, 4
    %v6705 = vor.u32 %v6704, %v6700
    %v6706 = vrot.slane %v6705, 4
    %v6708 = vshll.u32 %v6489, 16
    %v6710 = vrot.slane %v6708, 5
    %v6711 = vsel %vm122, %v6706, %v6710
    %v6713 = vshrl.u32 %v6490, 16
    %v6715 = vrot.slane %v6713, 4
    %v6716 = vshll.u32 %v6490, 16
    %v6718 = vrot.slane %v6716, 5
    %v6719 = vor.u32 %v6715, %v6718
    %v6720 = vrot.slane %v6719, 4
    %v6722 = vshll.u32 %v6491, 16
    %v6724 = vrot.slane %v6722, 5
    %v6725 = vsel %vm122, %v6720, %v6724
    %v6726 = vshrl.u32 %v6491, 16
    %v6728 = vrot.slane %v6726, 4
    %v6729 = vor.u32 %v6728, %v6724
    %v6730 = vrot.slane %v6729, 4
    %v6732 = vshll.u32 %v6492, 16
    %v6734 = vrot.slane %v6732, 5
    %v6735 = vsel %vm122, %v6730, %v6734
    %v6737 = vshrl.u32 %v6493, 16
    %v6739 = vrot.slane %v6737, 4
    %v6740 = vshll.u32 %v6493, 16
    %v6742 = vrot.slane %v6740, 5
    %v6743 = vor.u32 %v6739, %v6742
    %v6744 = vrot.slane %v6743, 4
    %v6746 = vshll.u32 %v6494, 16
    %v6748 = vrot.slane %v6746, 5
    %v6749 = vsel %vm122, %v6744, %v6748
    %v6750 = vshrl.u32 %v6494, 16
    %v6752 = vrot.slane %v6750, 4
    %v6753 = vor.u32 %v6752, %v6748
    %v6754 = vrot.slane %v6753, 4
    %v6756 = vshll.u32 %v6495, 16
    %v6758 = vrot.slane %v6756, 5
    %v6759 = vsel %vm122, %v6754, %v6758
    %v6761 = vshrl.u32 %v6496, 16
    %v6763 = vrot.slane %v6761, 4
    %v6764 = vshll.u32 %v6496, 16
    %v6766 = vrot.slane %v6764, 5
    %v6767 = vor.u32 %v6763, %v6766
    %v6768 = vrot.slane %v6767, 4
    %v6770 = vshll.u32 %v6497, 16
    %v6772 = vrot.slane %v6770, 5
    %v6773 = vsel %vm122, %v6768, %v6772
    %v6774 = vshrl.u32 %v6497, 16
    %v6776 = vrot.slane %v6774, 4
    %v6777 = vor.u32 %v6776, %v6772
    %v6778 = vrot.slane %v6777, 4
    %v6780 = vshll.u32 %v6498, 16
    %v6782 = vrot.slane %v6780, 5
    %v6783 = vsel %vm122, %v6778, %v6782
    %v6785 = vshrl.u32 %v6499, 16
    %v6787 = vrot.slane %v6785, 4
    %v6788 = vshll.u32 %v6499, 16
    %v6790 = vrot.slane %v6788, 5
    %v6791 = vor.u32 %v6787, %v6790
    %v6792 = vrot.slane %v6791, 4
    %v6794 = vshll.u32 %v6500, 16
    %v6796 = vrot.slane %v6794, 5
    %v6797 = vsel %vm122, %v6792, %v6796
    %v6798 = vshrl.u32 %v6500, 16
    %v6800 = vrot.slane %v6798, 4
    %v6801 = vor.u32 %v6800, %v6796
    %v6802 = vrot.slane %v6801, 4
    %v6804 = vshll.u32 %v6501, 16
    %v6806 = vrot.slane %v6804, 5
    %v6807 = vsel %vm122, %v6802, %v6806
    %v6809 = vshrl.u32 %v6502, 16
    %v6811 = vrot.slane %v6809, 4
    %v6812 = vshll.u32 %v6502, 16
    %v6814 = vrot.slane %v6812, 5
    %v6815 = vor.u32 %v6811, %v6814
    %v6816 = vrot.slane %v6815, 4
    %v6818 = vshll.u32 %v6503, 16
    %v6820 = vrot.slane %v6818, 5
    %v6821 = vsel %vm122, %v6816, %v6820
    %v6822 = vshrl.u32 %v6503, 16
    %v6824 = vrot.slane %v6822, 4
    %v6825 = vor.u32 %v6824, %v6820
    %v6826 = vrot.slane %v6825, 4
    %v6828 = vshll.u32 %v6504, 16
    %v6830 = vrot.slane %v6828, 5
    %v6831 = vsel %vm122, %v6826, %v6830
    %v6833 = vshrl.u32 %v6505, 16
    %v6835 = vrot.slane %v6833, 4
    %v6836 = vshll.u32 %v6505, 16
    %v6838 = vrot.slane %v6836, 5
    %v6839 = vor.u32 %v6835, %v6838
    %v6840 = vrot.slane %v6839, 4
    %v6842 = vshll.u32 %v6506, 16
    %v6844 = vrot.slane %v6842, 5
    %v6845 = vsel %vm122, %v6840, %v6844
    %v6846 = vshrl.u32 %v6506, 16
    %v6848 = vrot.slane %v6846, 4
    %v6849 = vor.u32 %v6848, %v6844
    %v6850 = vrot.slane %v6849, 4
    %v6852 = vshll.u32 %v6507, 16
    %v6854 = vrot.slane %v6852, 5
    %v6855 = vsel %vm122, %v6850, %v6854
    %v6857 = vshrl.u32 %v6508, 16
    %v6859 = vrot.slane %v6857, 4
    %v6860 = vshll.u32 %v6508, 16
    %v6862 = vrot.slane %v6860, 5
    %v6863 = vor.u32 %v6859, %v6862
    %v6864 = vrot.slane %v6863, 4
    %v6866 = vshll.u32 %v6509, 16
    %v6868 = vrot.slane %v6866, 5
    %v6869 = vsel %vm122, %v6864, %v6868
    %v6870 = vshrl.u32 %v6509, 16
    %v6872 = vrot.slane %v6870, 4
    %v6873 = vor.u32 %v6872, %v6868
    %v6874 = vrot.slane %v6873, 4
    %v6876 = vshll.u32 %v6510, 16
    %v6878 = vrot.slane %v6876, 5
    %v6879 = vsel %vm122, %v6874, %v6878
    %v6881 = vshrl.u32 %v6511, 16
    %v6883 = vrot.slane %v6881, 4
    %v6884 = vshll.u32 %v6511, 16
    %v6886 = vrot.slane %v6884, 5
    %v6887 = vor.u32 %v6883, %v6886
    %v6888 = vrot.slane %v6887, 4
    %v6890 = vshll.u32 %v6512, 16
    %v6892 = vrot.slane %v6890, 5
    %v6893 = vsel %vm122, %v6888, %v6892
    %v6894 = vshrl.u32 %v6512, 16
    %v6896 = vrot.slane %v6894, 4
    %v6897 = vor.u32 %v6896, %v6892
    %v6898 = vrot.slane %v6897, 4
    %v6900 = vshll.u32 %v6513, 16
    %v6902 = vrot.slane %v6900, 5
    %v6903 = vsel %vm122, %v6898, %v6902
    %v6905 = vshrl.u32 %v6514, 16
    %v6907 = vrot.slane %v6905, 4
    %v6908 = vshll.u32 %v6514, 16
    %v6910 = vrot.slane %v6908, 5
    %v6911 = vor.u32 %v6907, %v6910
    %v6912 = vrot.slane %v6911, 4
    %v6914 = vshll.u32 %v6515, 16
    %v6916 = vrot.slane %v6914, 5
    %v6917 = vsel %vm122, %v6912, %v6916
    %v6918 = vshrl.u32 %v6515, 16
    %v6920 = vrot.slane %v6918, 4
    %v6921 = vor.u32 %v6920, %v6916
    %v6922 = vrot.slane %v6921, 4
    %v6924 = vshll.u32 %v6516, 16
    %v6926 = vrot.slane %v6924, 5
    %v6927 = vsel %vm122, %v6922, %v6926
    %v6929 = vshrl.u32 %v6517, 16
    %v6931 = vrot.slane %v6929, 4
    %v6932 = vshll.u32 %v6517, 16
    %v6934 = vrot.slane %v6932, 5
    %v6935 = vor.u32 %v6931, %v6934
    %v6936 = vrot.slane %v6935, 4
    %v6938 = vshll.u32 %v6518, 16
    %v6940 = vrot.slane %v6938, 5
    %v6941 = vsel %vm122, %v6936, %v6940
    %v6942 = vshrl.u32 %v6518, 16
    %v6944 = vrot.slane %v6942, 4
    %v6945 = vor.u32 %v6944, %v6940
    %v6946 = vrot.slane %v6945, 4
    %v6948 = vshll.u32 %v6519, 16
    %v6950 = vrot.slane %v6948, 5
    %v6951 = vsel %vm122, %v6946, %v6950
    %v6953 = vshrl.u32 %v6520, 16
    %v6955 = vrot.slane %v6953, 4
    %v6956 = vshll.u32 %v6520, 16
    %v6958 = vrot.slane %v6956, 5
    %v6959 = vor.u32 %v6955, %v6958
    %v6960 = vrot.slane %v6959, 4
    %v6962 = vshll.u32 %v6521, 16
    %v6964 = vrot.slane %v6962, 5
    %v6965 = vsel %vm122, %v6960, %v6964
    %v6966 = vshrl.u32 %v6521, 16
    %v6968 = vrot.slane %v6966, 4
    %v6969 = vor.u32 %v6968, %v6964
    %v6970 = vrot.slane %v6969, 4
    %v6972 = vshll.u32 %v6522, 16
    %v6974 = vrot.slane %v6972, 5
    %v6975 = vsel %vm122, %v6970, %v6974
    %v6977 = vshrl.u32 %v6523, 16
    %v6979 = vrot.slane %v6977, 4
    %v6980 = vshll.u32 %v6523, 16
    %v6982 = vrot.slane %v6980, 5
    %v6983 = vor.u32 %v6979, %v6982
    %v6984 = vrot.slane %v6983, 4
    %v6986 = vshll.u32 %v6524, 16
    %v6988 = vrot.slane %v6986, 5
    %v6989 = vsel %vm122, %v6984, %v6988
    %v6990 = vshrl.u32 %v6524, 16
    %v6992 = vrot.slane %v6990, 4
    %v6993 = vor.u32 %v6992, %v6988
    %v6994 = vrot.slane %v6993, 4
    %v6996 = vshll.u32 %v6525, 16
    %v6998 = vrot.slane %v6996, 5
    %v6999 = vsel %vm122, %v6994, %v6998
    %v7001 = vshrl.u32 %v6526, 16
    %v7003 = vrot.slane %v7001, 4
    %v7004 = vshll.u32 %v6526, 16
    %v7006 = vrot.slane %v7004, 5
    %v7007 = vor.u32 %v7003, %v7006
    %v7008 = vrot.slane %v7007, 4
    %v7010 = vshll.u32 %v6527, 16
    %v7012 = vrot.slane %v7010, 5
    %v7013 = vsel %vm122, %v7008, %v7012
    %v7014 = vshrl.u32 %v6527, 16
    %v7016 = vrot.slane %v7014, 4
    %v7017 = vor.u32 %v7016, %v7012
    %v7018 = vrot.slane %v7017, 4
    %v7020 = vshll.u32 %v6528, 16
    %v7022 = vrot.slane %v7020, 5
    %v7023 = vsel %vm122, %v7018, %v7022
    %v7025 = vshrl.u32 %v6529, 16
    %v7027 = vrot.slane %v7025, 4
    %v7028 = vshll.u32 %v6529, 16
    %v7030 = vrot.slane %v7028, 5
    %v7031 = vor.u32 %v7027, %v7030
    %v7032 = vrot.slane %v7031, 4
    %v7034 = vshll.u32 %v6530, 16
    %v7036 = vrot.slane %v7034, 5
    %v7037 = vsel %vm122, %v7032, %v7036
    %v7038 = vshrl.u32 %v6530, 16
    %v7040 = vrot.slane %v7038, 4
    %v7041 = vor.u32 %v7040, %v7036
    %v7042 = vrot.slane %v7041, 4
    %v7044 = vshll.u32 %v6531, 16
    %v7046 = vrot.slane %v7044, 5
    %v7047 = vsel %vm122, %v7042, %v7046
    %v7049 = vshrl.u32 %v6532, 16
    %v7051 = vrot.slane %v7049, 4
    %v7052 = vshll.u32 %v6532, 16
    %v7054 = vrot.slane %v7052, 5
    %v7055 = vor.u32 %v7051, %v7054
    %v7056 = vrot.slane %v7055, 4
    %v7058 = vshll.u32 %v6533, 16
    %v7060 = vrot.slane %v7058, 5
    %v7061 = vsel %vm122, %v7056, %v7060
    %v7062 = vshrl.u32 %v6533, 16
    %v7064 = vrot.slane %v7062, 4
    %v7065 = vor.u32 %v7064, %v7060
    %v7066 = vrot.slane %v7065, 4
    %v7068 = vshll.u32 %v6534, 16
    %v7070 = vrot.slane %v7068, 5
    %v7071 = vsel %vm122, %v7066, %v7070
    %v7073 = vshrl.u32 %v6535, 16
    %v7075 = vrot.slane %v7073, 4
    %v7076 = vshll.u32 %v6535, 16
    %v7078 = vrot.slane %v7076, 5
    %v7079 = vor.u32 %v7075, %v7078
    %v7080 = vrot.slane %v7079, 4
    %v7082 = vshll.u32 %v6536, 16
    %v7084 = vrot.slane %v7082, 5
    %v7085 = vsel %vm122, %v7080, %v7084
    %v7086 = vshrl.u32 %v6536, 16
    %v7088 = vrot.slane %v7086, 4
    %v7089 = vor.u32 %v7088, %v7084
    %v7090 = vrot.slane %v7089, 4
    %v7092 = vshll.u32 %v6537, 16
    %v7094 = vrot.slane %v7092, 5
    %v7095 = vsel %vm122, %v7090, %v7094
    %v7097 = vshrl.u32 %v6538, 16
    %v7099 = vrot.slane %v7097, 4
    %v7100 = vshll.u32 %v6538, 16
    %v7102 = vrot.slane %v7100, 5
    %v7103 = vor.u32 %v7099, %v7102
    %v7104 = vrot.slane %v7103, 4
    %v7106 = vshll.u32 %v6539, 16
    %v7108 = vrot.slane %v7106, 5
    %v7109 = vsel %vm122, %v7104, %v7108
    %v7110 = vshrl.u32 %v6539, 16
    %v7112 = vrot.slane %v7110, 4
    %v7113 = vor.u32 %v7112, %v7108
    %v7114 = vrot.slane %v7113, 4
    %v7116 = vshll.u32 %v6540, 16
    %v7118 = vrot.slane %v7116, 5
    %v7119 = vsel %vm122, %v7114, %v7118
    %v7121 = vshrl.u32 %v6541, 16
    %v7123 = vrot.slane %v7121, 4
    %v7124 = vshll.u32 %v6541, 16
    %v7126 = vrot.slane %v7124, 5
    %v7127 = vor.u32 %v7123, %v7126
    %v7128 = vrot.slane %v7127, 4
    %v7130 = vshll.u32 %v6542, 16
    %v7132 = vrot.slane %v7130, 5
    %v7133 = vsel %vm122, %v7128, %v7132
    %v7134 = vshrl.u32 %v6542, 16
    %v7136 = vrot.slane %v7134, 4
    %v7137 = vor.u32 %v7136, %v7132
    %v7138 = vrot.slane %v7137, 4
    %v7140 = vshll.u32 %v6543, 16
    %v7142 = vrot.slane %v7140, 5
    %v7143 = vsel %vm122, %v7138, %v7142
    %v7145 = vshrl.u32 %v6544, 16
    %v7147 = vrot.slane %v7145, 4
    %v7148 = vshll.u32 %v6544, 16
    %v7150 = vrot.slane %v7148, 5
    %v7151 = vor.u32 %v7147, %v7150
    %v7152 = vrot.slane %v7151, 4
    %v7154 = vshll.u32 %v6545, 16
    %v7156 = vrot.slane %v7154, 5
    %v7157 = vsel %vm122, %v7152, %v7156
    %v7158 = vshrl.u32 %v6545, 16
    %v7160 = vrot.slane %v7158, 4
    %v7161 = vor.u32 %v7160, %v7156
    %v7162 = vrot.slane %v7161, 4
    %v7164 = vshll.u32 %v6546, 16
    %v7166 = vrot.slane %v7164, 5
    %v7167 = vsel %vm122, %v7162, %v7166
    %v7169 = vshrl.u32 %v6547, 16
    %v7171 = vrot.slane %v7169, 4
    %v7172 = vshll.u32 %v6547, 16
    %v7174 = vrot.slane %v7172, 5
    %v7175 = vor.u32 %v7171, %v7174
    %v7176 = vrot.slane %v7175, 4
    %v7178 = vshll.u32 %v6548, 16
    %v7180 = vrot.slane %v7178, 5
    %v7181 = vsel %vm122, %v7176, %v7180
    %v7182 = vshrl.u32 %v6548, 16
    %v7184 = vrot.slane %v7182, 4
    %v7185 = vor.u32 %v7184, %v7180
    %v7186 = vrot.slane %v7185, 4
    %v7188 = vshll.u32 %v6549, 16
    %v7190 = vrot.slane %v7188, 5
    %v7191 = vsel %vm122, %v7186, %v7190
    %v7193 = vshrl.u32 %v6550, 16
    %v7195 = vrot.slane %v7193, 4
    %v7196 = vshll.u32 %v6550, 16
    %v7198 = vrot.slane %v7196, 5
    %v7199 = vor.u32 %v7195, %v7198
    %v7200 = vrot.slane %v7199, 4
    %v7202 = vshll.u32 %v6551, 16
    %v7204 = vrot.slane %v7202, 5
    %v7205 = vsel %vm122, %v7200, %v7204
    %v7206 = vshrl.u32 %v6551, 16
    %v7208 = vrot.slane %v7206, 4
    %v7209 = vor.u32 %v7208, %v7204
    %v7210 = vrot.slane %v7209, 4
    %v7212 = vshll.u32 %v6552, 16
    %v7214 = vrot.slane %v7212, 5
    %v7215 = vsel %vm122, %v7210, %v7214
    %v7217 = vshrl.u32 %v6553, 16
    %v7219 = vrot.slane %v7217, 4
    %v7220 = vshll.u32 %v6553, 16
    %v7222 = vrot.slane %v7220, 5
    %v7223 = vor.u32 %v7219, %v7222
    %v7224 = vrot.slane %v7223, 4
    %v7226 = vshll.u32 %v6554, 16
    %v7228 = vrot.slane %v7226, 5
    %v7229 = vsel %vm122, %v7224, %v7228
    %v7230 = vshrl.u32 %v6554, 16
    %v7232 = vrot.slane %v7230, 4
    %v7233 = vor.u32 %v7232, %v7228
    %v7234 = vrot.slane %v7233, 4
    %v7236 = vshll.u32 %v6555, 16
    %v7238 = vrot.slane %v7236, 5
    %v7239 = vsel %vm122, %v7234, %v7238
    %v7241 = vshrl.u32 %v6556, 16
    %v7243 = vrot.slane %v7241, 4
    %v7244 = vshll.u32 %v6556, 16
    %v7246 = vrot.slane %v7244, 5
    %v7247 = vor.u32 %v7243, %v7246
    %v7248 = vrot.slane %v7247, 4
    %v7250 = vshll.u32 %v6557, 16
    %v7252 = vrot.slane %v7250, 5
    %v7253 = vsel %vm122, %v7248, %v7252
    %v7254 = vshrl.u32 %v6557, 16
    %v7256 = vrot.slane %v7254, 4
    %v7257 = vor.u32 %v7256, %v7252
    %v7258 = vrot.slane %v7257, 4
    %v7260 = vshll.u32 %v6558, 16
    %v7262 = vrot.slane %v7260, 5
    %v7263 = vsel %vm122, %v7258, %v7262
    %v7265 = vshrl.u32 %v6559, 16
    %v7267 = vrot.slane %v7265, 4
    %v7268 = vshll.u32 %v6559, 16
    %v7270 = vrot.slane %v7268, 5
    %v7271 = vor.u32 %v7267, %v7270
    %v7272 = vrot.slane %v7271, 4
    %v7274 = vshll.u32 %v6560, 16
    %v7276 = vrot.slane %v7274, 5
    %v7277 = vsel %vm122, %v7272, %v7276
    %v7278 = vshrl.u32 %v6560, 16
    %v7280 = vrot.slane %v7278, 4
    %v7281 = vor.u32 %v7280, %v7276
    %v7282 = vrot.slane %v7281, 4
    %v7284 = vshll.u32 %v6561, 16
    %v7286 = vrot.slane %v7284, 5
    %v7287 = vsel %vm122, %v7282, %v7286
    %v7289 = vshrl.u32 %v6562, 16
    %v7291 = vrot.slane %v7289, 4
    %v7292 = vshll.u32 %v6562, 16
    %v7294 = vrot.slane %v7292, 5
    %v7295 = vor.u32 %v7291, %v7294
    %v7296 = vrot.slane %v7295, 4
    %v7298 = vshll.u32 %v6563, 16
    %v7300 = vrot.slane %v7298, 5
    %v7301 = vsel %vm122, %v7296, %v7300
    %v7302 = vshrl.u32 %v6563, 16
    %v7304 = vrot.slane %v7302, 4
    %v7305 = vor.u32 %v7304, %v7300
    %v7306 = vrot.slane %v7305, 4
    %v7308 = vshll.u32 %v6564, 16
    %v7310 = vrot.slane %v7308, 5
    %v7311 = vsel %vm122, %v7306, %v7310
    %v7313 = vshrl.u32 %v6565, 16
    %v7315 = vrot.slane %v7313, 4
    %v7316 = vshll.u32 %v6565, 16
    %v7318 = vrot.slane %v7316, 5
    %v7319 = vor.u32 %v7315, %v7318
    %v7320 = vrot.slane %v7319, 4
    %v7322 = vshll.u32 %v6566, 16
    %v7324 = vrot.slane %v7322, 5
    %v7325 = vsel %vm122, %v7320, %v7324
    %v7326 = vshrl.u32 %v6566, 16
    %v7328 = vrot.slane %v7326, 4
    %v7329 = vor.u32 %v7328, %v7324
    %v7330 = vrot.slane %v7329, 4
    %v7332 = vshll.u32 %v6567, 16
    %v7334 = vrot.slane %v7332, 5
    %v7335 = vsel %vm122, %v7330, %v7334
    %s7336 = scalar_lea.vmem %s3, 14
    %v7337 = vld [vmem:[%s7336] sm:$0x3]
    %v7338 = vunpack.c.l.b16 %v6581
    %v7339 = vunpack.c.l.b16 %v6591
    %v7340 = vunpack.c.l.b16 %v6605
    %v7341 = vunpack.c.l.b16 %v6615
    %v7342 = vunpack.c.l.b16 %v6629
    %v7343 = vunpack.c.l.b16 %v6639
    %v7344 = vunpack.c.l.b16 %v6653
    %v7345 = vunpack.c.l.b16 %v6663
    %v7346 = vunpack.c.l.b16 %v6677
    %v7347 = vunpack.c.l.b16 %v6687
    %v7348 = vunpack.c.l.b16 %v6701
    %v7349 = vunpack.c.l.b16 %v6711
    %v7350 = vunpack.c.l.b16 %v6725
    %v7351 = vunpack.c.l.b16 %v6735
    %v7352 = vunpack.c.l.b16 %v6749
    %v7353 = vunpack.c.l.b16 %v6759
    %v7354 = vunpack.c.l.b16 %v6773
    %v7355 = vunpack.c.l.b16 %v6783
    %v7356 = vunpack.c.l.b16 %v6797
    %v7357 = vunpack.c.l.b16 %v6807
    %v7358 = vunpack.c.l.b16 %v6821
    %v7359 = vunpack.c.l.b16 %v6831
    %v7360 = vunpack.c.l.b16 %v6845
    %v7361 = vunpack.c.l.b16 %v6855
    %v7362 = vunpack.c.l.b16 %v6869
    %v7363 = vunpack.c.l.b16 %v6879
    %v7364 = vunpack.c.l.b16 %v6893
    %v7365 = vunpack.c.l.b16 %v6903
    %v7366 = vunpack.c.l.b16 %v6917
    %v7367 = vunpack.c.l.b16 %v6927
    %v7368 = vunpack.c.l.b16 %v6941
    %v7369 = vunpack.c.l.b16 %v6951
    %v7370 = vunpack.c.l.b16 %v6965
    %v7371 = vunpack.c.l.b16 %v6975
    %v7372 = vunpack.c.l.b16 %v6989
    %v7373 = vunpack.c.l.b16 %v6999
    %v7374 = vunpack.c.l.b16 %v7013
    %v7375 = vunpack.c.l.b16 %v7023
    %v7376 = vunpack.c.l.b16 %v7037
    %v7377 = vunpack.c.l.b16 %v7047
    %v7378 = vunpack.c.l.b16 %v7061
    %v7379 = vunpack.c.l.b16 %v7071
    %v7380 = vunpack.c.l.b16 %v7085
    %v7381 = vunpack.c.l.b16 %v7095
    %v7382 = vunpack.c.l.b16 %v7109
    %v7383 = vunpack.c.l.b16 %v7119
    %v7384 = vunpack.c.l.b16 %v7133
    %v7385 = vunpack.c.l.b16 %v7143
    %v7386 = vunpack.c.l.b16 %v7157
    %v7387 = vunpack.c.l.b16 %v7167
    %v7388 = vunpack.c.l.b16 %v7181
    %v7389 = vunpack.c.l.b16 %v7191
    %v7390 = vunpack.c.l.b16 %v7205
    %v7391 = vunpack.c.l.b16 %v7215
    %v7392 = vunpack.c.l.b16 %v7229
    %v7393 = vunpack.c.l.b16 %v7239
    %v7394 = vunpack.c.l.b16 %v7253
    %v7395 = vunpack.c.l.b16 %v7263
    %v7396 = vunpack.c.l.b16 %v7277
    %v7397 = vunpack.c.l.b16 %v7287
    %v7398 = vunpack.c.l.b16 %v7301
    %v7399 = vunpack.c.l.b16 %v7311
    %v7400 = vunpack.c.l.b16 %v7325
    %v7401 = vunpack.c.l.b16 %v7335
    %v7402 = vpack.c.b16 %v7339, %v7338
    %v7403 = vpack.c.b16 %v7341, %v7340
    %v7404 = vpack.c.b16 %v7343, %v7342
    %v7405 = vpack.c.b16 %v7345, %v7344
    %v7406 = vpack.c.b16 %v7347, %v7346
    %v7407 = vpack.c.b16 %v7349, %v7348
    %v7408 = vpack.c.b16 %v7351, %v7350
    %v7409 = vpack.c.b16 %v7353, %v7352
    %v7410 = vpack.c.b16 %v7355, %v7354
    %v7411 = vpack.c.b16 %v7357, %v7356
    %v7412 = vpack.c.b16 %v7359, %v7358
    %v7413 = vpack.c.b16 %v7361, %v7360
    %v7414 = vpack.c.b16 %v7363, %v7362
    %v7415 = vpack.c.b16 %v7365, %v7364
    %v7416 = vpack.c.b16 %v7367, %v7366
    %v7417 = vpack.c.b16 %v7369, %v7368
    %v7418 = vpack.c.b16 %v7371, %v7370
    %v7419 = vpack.c.b16 %v7373, %v7372
    %v7420 = vpack.c.b16 %v7375, %v7374
    %v7421 = vpack.c.b16 %v7377, %v7376
    %v7422 = vpack.c.b16 %v7379, %v7378
    %v7423 = vpack.c.b16 %v7381, %v7380
    %v7424 = vpack.c.b16 %v7383, %v7382
    %v7425 = vpack.c.b16 %v7385, %v7384
    %v7426 = vpack.c.b16 %v7387, %v7386
    %v7427 = vpack.c.b16 %v7389, %v7388
    %v7428 = vpack.c.b16 %v7391, %v7390
    %v7429 = vpack.c.b16 %v7393, %v7392
    %v7430 = vpack.c.b16 %v7395, %v7394
    %v7431 = vpack.c.b16 %v7397, %v7396
    %v7432 = vpack.c.b16 %v7399, %v7398
    %v7433 = vpack.c.b16 %v7401, %v7400
    %v7435 = vsel %vm989, %v7402, 0
    %v7438 = vsel %vm989, %v7403, 0
    %v7441 = vsel %vm989, %v7404, 0
    %v7444 = vsel %vm989, %v7405, 0
    %v7447 = vsel %vm989, %v7406, 0
    %v7450 = vsel %vm989, %v7407, 0
    %v7453 = vsel %vm989, %v7408, 0
    %v7456 = vsel %vm989, %v7409, 0
    %v7459 = vsel %vm989, %v7410, 0
    %v7462 = vsel %vm989, %v7411, 0
    %v7465 = vsel %vm989, %v7412, 0
    %v7468 = vsel %vm989, %v7413, 0
    %v7471 = vsel %vm989, %v7414, 0
    %v7474 = vsel %vm989, %v7415, 0
    %v7477 = vsel %vm989, %v7416, 0
    %v7480 = vsel %vm989, %v7417, 0
    %v7483 = vsel %vm989, %v7418, 0
    %v7486 = vsel %vm989, %v7419, 0
    %v7489 = vsel %vm989, %v7420, 0
    %v7492 = vsel %vm989, %v7421, 0
    %v7495 = vsel %vm989, %v7422, 0
    %v7498 = vsel %vm989, %v7423, 0
    %v7501 = vsel %vm989, %v7424, 0
    %v7504 = vsel %vm989, %v7425, 0
    %v7507 = vsel %vm989, %v7426, 0
    %v7510 = vsel %vm989, %v7427, 0
    %v7513 = vsel %vm989, %v7428, 0
    %v7516 = vsel %vm989, %v7429, 0
    %v7519 = vsel %vm989, %v7430, 0
    %v7522 = vsel %vm989, %v7431, 0
    %v7525 = vsel %vm989, %v7432, 0
    %v7528 = vsel %vm989, %v7433, 0
    %v7531 = vsel %vm1086, %v7337, 0
    %7533 = vmatprep.subr.bf16.mxu0 0
    %7534 = vmatpush1.bf16.msra.mxu0 0
    %7535 = vmatprep.subr.bf16.mxu0 0
    %7536 = vmatpush1.bf16.msra.mxu0 0
    %7537 = vmatprep.subr.bf16.mxu0 0
    %7538 = vmatpush1.bf16.msra.mxu0 0
    %7539 = vmatprep.subr.bf16.mxu0 0
    %7540 = vmatpush1.bf16.msra.mxu0 0
    %7541 = vmatprep.subr.bf16.mxu0 0
    %7542 = vmatpush1.bf16.msra.mxu0 0
    %7543 = vmatprep.subr.bf16.mxu0 0
    %7544 = vmatpush1.bf16.msra.mxu0 0
    %7545 = vmatprep.subr.bf16.mxu0 0
    %7546 = vmatpush1.bf16.msra.mxu0 0
    %7547 = vmatprep.subr.bf16.mxu0 0
    %7548 = vmatpush1.bf16.msra.mxu0 %v7531
    %7549 = vmatprep.subr.bf16.mxu0 0
    %7550 = vmatpush2.bf16.msra.mxu0 0
    %7551 = vmatprep.subr.bf16.mxu0 0
    %7552 = vmatpush2.bf16.msra.mxu0 0
    %7553 = vmatprep.subr.bf16.mxu0 0
    %7554 = vmatpush2.bf16.msra.mxu0 0
    %7555 = vmatprep.subr.bf16.mxu0 0
    %7556 = vmatpush2.bf16.msra.mxu0 0
    %7557 = vmatprep.subr.bf16.mxu0 0
    %7558 = vmatpush2.bf16.msra.mxu0 0
    %7559 = vmatprep.subr.bf16.mxu0 0
    %7560 = vmatpush2.bf16.msra.mxu0 0
    %7561 = vmatprep.subr.bf16.mxu0 0
    %7562 = vmatpush2.bf16.msra.mxu0 0
    %7563 = vmatprep.subr.bf16.mxu0 0
    %7564 = vmatpush2.bf16.msra.mxu0 0
    %7565 = vmatprep.mubr.bf16.mxu0 0
    %7566 = vmatmul.mubr.bf16.gmra.mxu0 %v7435
    %v7567 = vpop.f32.mrf.mxu0
    %v7568 = vadd.f32 0.0, %v7567
    %v7569 = vpop.f32.mrf.mxu0
    %v7570 = vpop.f32.mrf.mxu0
    %v7571 = vadd.f32 0.0, %v7570
    %v7572 = vpop.f32.mrf.mxu0
    %7573 = vmatprep.mubr.bf16.mxu0 0
    %7574 = vmatmul.mubr.bf16.gmra.mxu0 %v7438
    %v7575 = vpop.f32.mrf.mxu0
    %v7576 = vadd.f32 0.0, %v7575
    %v7577 = vpop.f32.mrf.mxu0
    %v7578 = vpop.f32.mrf.mxu0
    %v7579 = vadd.f32 0.0, %v7578
    %v7580 = vpop.f32.mrf.mxu0
    %7581 = vmatprep.mubr.bf16.mxu0 0
    %7582 = vmatmul.mubr.bf16.gmra.mxu0 %v7441
    %v7583 = vpop.f32.mrf.mxu0
    %v7584 = vadd.f32 0.0, %v7583
    %v7585 = vpop.f32.mrf.mxu0
    %v7586 = vpop.f32.mrf.mxu0
    %v7587 = vadd.f32 0.0, %v7586
    %v7588 = vpop.f32.mrf.mxu0
    %7589 = vmatprep.mubr.bf16.mxu0 0
    %7590 = vmatmul.mubr.bf16.gmra.mxu0 %v7444
    %v7591 = vpop.f32.mrf.mxu0
    %v7592 = vadd.f32 0.0, %v7591
    %v7593 = vpop.f32.mrf.mxu0
    %v7594 = vpop.f32.mrf.mxu0
    %v7595 = vadd.f32 0.0, %v7594
    %v7596 = vpop.f32.mrf.mxu0
    %7597 = vmatprep.mubr.bf16.mxu0 0
    %7598 = vmatmul.mubr.bf16.gmra.mxu0 %v7447
    %v7599 = vpop.f32.mrf.mxu0
    %v7600 = vadd.f32 0.0, %v7599
    %v7601 = vpop.f32.mrf.mxu0
    %v7602 = vpop.f32.mrf.mxu0
    %v7603 = vadd.f32 0.0, %v7602
    %v7604 = vpop.f32.mrf.mxu0
    %7605 = vmatprep.mubr.bf16.mxu0 0
    %7606 = vmatmul.mubr.bf16.gmra.mxu0 %v7450
    %v7607 = vpop.f32.mrf.mxu0
    %v7608 = vadd.f32 0.0, %v7607
    %v7609 = vpop.f32.mrf.mxu0
    %v7610 = vpop.f32.mrf.mxu0
    %v7611 = vadd.f32 0.0, %v7610
    %v7612 = vpop.f32.mrf.mxu0
    %7613 = vmatprep.mubr.bf16.mxu0 0
    %7614 = vmatmul.mubr.bf16.gmra.mxu0 %v7453
    %v7615 = vpop.f32.mrf.mxu0
    %v7616 = vadd.f32 0.0, %v7615
    %v7617 = vpop.f32.mrf.mxu0
    %v7618 = vpop.f32.mrf.mxu0
    %v7619 = vadd.f32 0.0, %v7618
    %v7620 = vpop.f32.mrf.mxu0
    %7621 = vmatprep.mubr.bf16.mxu0 0
    %7622 = vmatmul.mubr.bf16.gmra.mxu0 %v7456
    %v7623 = vpop.f32.mrf.mxu0
    %v7624 = vadd.f32 0.0, %v7623
    %v7625 = vpop.f32.mrf.mxu0
    %v7626 = vpop.f32.mrf.mxu0
    %v7627 = vadd.f32 0.0, %v7626
    %v7628 = vpop.f32.mrf.mxu0
    %7629 = vmatprep.mubr.bf16.mxu0 0
    %7630 = vmatmul.mubr.bf16.gmra.mxu0 %v7459
    %v7631 = vpop.f32.mrf.mxu0
    %v7632 = vadd.f32 0.0, %v7631
    %v7633 = vpop.f32.mrf.mxu0
    %v7634 = vpop.f32.mrf.mxu0
    %v7635 = vadd.f32 0.0, %v7634
    %v7636 = vpop.f32.mrf.mxu0
    %7637 = vmatprep.mubr.bf16.mxu0 0
    %7638 = vmatmul.mubr.bf16.gmra.mxu0 %v7462
    %v7639 = vpop.f32.mrf.mxu0
    %v7640 = vadd.f32 0.0, %v7639
    %v7641 = vpop.f32.mrf.mxu0
    %v7642 = vpop.f32.mrf.mxu0
    %v7643 = vadd.f32 0.0, %v7642
    %v7644 = vpop.f32.mrf.mxu0
    %7645 = vmatprep.mubr.bf16.mxu0 0
    %7646 = vmatmul.mubr.bf16.gmra.mxu0 %v7465
    %v7647 = vpop.f32.mrf.mxu0
    %v7648 = vadd.f32 0.0, %v7647
    %v7649 = vpop.f32.mrf.mxu0
    %v7650 = vpop.f32.mrf.mxu0
    %v7651 = vadd.f32 0.0, %v7650
    %v7652 = vpop.f32.mrf.mxu0
    %7653 = vmatprep.mubr.bf16.mxu0 0
    %7654 = vmatmul.mubr.bf16.gmra.mxu0 %v7468
    %v7655 = vpop.f32.mrf.mxu0
    %v7656 = vadd.f32 0.0, %v7655
    %v7657 = vpop.f32.mrf.mxu0
    %v7658 = vpop.f32.mrf.mxu0
    %v7659 = vadd.f32 0.0, %v7658
    %v7660 = vpop.f32.mrf.mxu0
    %7661 = vmatprep.mubr.bf16.mxu0 0
    %7662 = vmatmul.mubr.bf16.gmra.mxu0 %v7471
    %v7663 = vpop.f32.mrf.mxu0
    %v7664 = vadd.f32 0.0, %v7663
    %v7665 = vpop.f32.mrf.mxu0
    %v7666 = vpop.f32.mrf.mxu0
    %v7667 = vadd.f32 0.0, %v7666
    %v7668 = vpop.f32.mrf.mxu0
    %7669 = vmatprep.mubr.bf16.mxu0 0
    %7670 = vmatmul.mubr.bf16.gmra.mxu0 %v7474
    %v7671 = vpop.f32.mrf.mxu0
    %v7672 = vadd.f32 0.0, %v7671
    %v7673 = vpop.f32.mrf.mxu0
    %v7674 = vpop.f32.mrf.mxu0
    %v7675 = vadd.f32 0.0, %v7674
    %v7676 = vpop.f32.mrf.mxu0
    %7677 = vmatprep.mubr.bf16.mxu0 0
    %7678 = vmatmul.mubr.bf16.gmra.mxu0 %v7477
    %v7679 = vpop.f32.mrf.mxu0
    %v7680 = vadd.f32 0.0, %v7679
    %v7681 = vpop.f32.mrf.mxu0
    %v7682 = vpop.f32.mrf.mxu0
    %v7683 = vadd.f32 0.0, %v7682
    %v7684 = vpop.f32.mrf.mxu0
    %7685 = vmatprep.mubr.bf16.mxu0 0
    %7686 = vmatmul.mubr.bf16.gmra.mxu0 %v7480
    %v7687 = vpop.f32.mrf.mxu0
    %v7688 = vadd.f32 0.0, %v7687
    %v7689 = vpop.f32.mrf.mxu0
    %v7690 = vpop.f32.mrf.mxu0
    %v7691 = vadd.f32 0.0, %v7690
    %v7692 = vpop.f32.mrf.mxu0
    %7693 = vmatprep.mubr.bf16.mxu0 0
    %7694 = vmatmul.mubr.bf16.gmra.mxu0 %v7483
    %v7695 = vpop.f32.mrf.mxu0
    %v7696 = vadd.f32 0.0, %v7695
    %v7697 = vpop.f32.mrf.mxu0
    %v7698 = vpop.f32.mrf.mxu0
    %v7699 = vadd.f32 0.0, %v7698
    %v7700 = vpop.f32.mrf.mxu0
    %7701 = vmatprep.mubr.bf16.mxu0 0
    %7702 = vmatmul.mubr.bf16.gmra.mxu0 %v7486
    %v7703 = vpop.f32.mrf.mxu0
    %v7704 = vadd.f32 0.0, %v7703
    %v7705 = vpop.f32.mrf.mxu0
    %v7706 = vpop.f32.mrf.mxu0
    %v7707 = vadd.f32 0.0, %v7706
    %v7708 = vpop.f32.mrf.mxu0
    %7709 = vmatprep.mubr.bf16.mxu0 0
    %7710 = vmatmul.mubr.bf16.gmra.mxu0 %v7489
    %v7711 = vpop.f32.mrf.mxu0
    %v7712 = vadd.f32 0.0, %v7711
    %v7713 = vpop.f32.mrf.mxu0
    %v7714 = vpop.f32.mrf.mxu0
    %v7715 = vadd.f32 0.0, %v7714
    %v7716 = vpop.f32.mrf.mxu0
    %7717 = vmatprep.mubr.bf16.mxu0 0
    %7718 = vmatmul.mubr.bf16.gmra.mxu0 %v7492
    %v7719 = vpop.f32.mrf.mxu0
    %v7720 = vadd.f32 0.0, %v7719
    %v7721 = vpop.f32.mrf.mxu0
    %v7722 = vpop.f32.mrf.mxu0
    %v7723 = vadd.f32 0.0, %v7722
    %v7724 = vpop.f32.mrf.mxu0
    %7725 = vmatprep.mubr.bf16.mxu0 0
    %7726 = vmatmul.mubr.bf16.gmra.mxu0 %v7495
    %v7727 = vpop.f32.mrf.mxu0
    %v7728 = vadd.f32 0.0, %v7727
    %v7729 = vpop.f32.mrf.mxu0
    %v7730 = vpop.f32.mrf.mxu0
    %v7731 = vadd.f32 0.0, %v7730
    %v7732 = vpop.f32.mrf.mxu0
    %7733 = vmatprep.mubr.bf16.mxu0 0
    %7734 = vmatmul.mubr.bf16.gmra.mxu0 %v7498
    %v7735 = vpop.f32.mrf.mxu0
    %v7736 = vadd.f32 0.0, %v7735
    %v7737 = vpop.f32.mrf.mxu0
    %v7738 = vpop.f32.mrf.mxu0
    %v7739 = vadd.f32 0.0, %v7738
    %v7740 = vpop.f32.mrf.mxu0
    %7741 = vmatprep.mubr.bf16.mxu0 0
    %7742 = vmatmul.mubr.bf16.gmra.mxu0 %v7501
    %v7743 = vpop.f32.mrf.mxu0
    %v7744 = vadd.f32 0.0, %v7743
    %v7745 = vpop.f32.mrf.mxu0
    %v7746 = vpop.f32.mrf.mxu0
    %v7747 = vadd.f32 0.0, %v7746
    %v7748 = vpop.f32.mrf.mxu0
    %7749 = vmatprep.mubr.bf16.mxu0 0
    %7750 = vmatmul.mubr.bf16.gmra.mxu0 %v7504
    %v7751 = vpop.f32.mrf.mxu0
    %v7752 = vadd.f32 0.0, %v7751
    %v7753 = vpop.f32.mrf.mxu0
    %v7754 = vpop.f32.mrf.mxu0
    %v7755 = vadd.f32 0.0, %v7754
    %v7756 = vpop.f32.mrf.mxu0
    %7757 = vmatprep.mubr.bf16.mxu0 0
    %7758 = vmatmul.mubr.bf16.gmra.mxu0 %v7507
    %v7759 = vpop.f32.mrf.mxu0
    %v7760 = vadd.f32 0.0, %v7759
    %v7761 = vpop.f32.mrf.mxu0
    %v7762 = vpop.f32.mrf.mxu0
    %v7763 = vadd.f32 0.0, %v7762
    %v7764 = vpop.f32.mrf.mxu0
    %7765 = vmatprep.mubr.bf16.mxu0 0
    %7766 = vmatmul.mubr.bf16.gmra.mxu0 %v7510
    %v7767 = vpop.f32.mrf.mxu0
    %v7768 = vadd.f32 0.0, %v7767
    %v7769 = vpop.f32.mrf.mxu0
    %v7770 = vpop.f32.mrf.mxu0
    %v7771 = vadd.f32 0.0, %v7770
    %v7772 = vpop.f32.mrf.mxu0
    %7773 = vmatprep.mubr.bf16.mxu0 0
    %7774 = vmatmul.mubr.bf16.gmra.mxu0 %v7513
    %v7775 = vpop.f32.mrf.mxu0
    %v7776 = vadd.f32 0.0, %v7775
    %v7777 = vpop.f32.mrf.mxu0
    %v7778 = vpop.f32.mrf.mxu0
    %v7779 = vadd.f32 0.0, %v7778
    %v7780 = vpop.f32.mrf.mxu0
    %7781 = vmatprep.mubr.bf16.mxu0 0
    %7782 = vmatmul.mubr.bf16.gmra.mxu0 %v7516
    %v7783 = vpop.f32.mrf.mxu0
    %v7784 = vadd.f32 0.0, %v7783
    %v7785 = vpop.f32.mrf.mxu0
    %v7786 = vpop.f32.mrf.mxu0
    %v7787 = vadd.f32 0.0, %v7786
    %v7788 = vpop.f32.mrf.mxu0
    %7789 = vmatprep.mubr.bf16.mxu0 0
    %7790 = vmatmul.mubr.bf16.gmra.mxu0 %v7519
    %v7791 = vpop.f32.mrf.mxu0
    %v7792 = vadd.f32 0.0, %v7791
    %v7793 = vpop.f32.mrf.mxu0
    %v7794 = vpop.f32.mrf.mxu0
    %v7795 = vadd.f32 0.0, %v7794
    %v7796 = vpop.f32.mrf.mxu0
    %7797 = vmatprep.mubr.bf16.mxu0 0
    %7798 = vmatmul.mubr.bf16.gmra.mxu0 %v7522
    %v7799 = vpop.f32.mrf.mxu0
    %v7800 = vadd.f32 0.0, %v7799
    %v7801 = vpop.f32.mrf.mxu0
    %v7802 = vpop.f32.mrf.mxu0
    %v7803 = vadd.f32 0.0, %v7802
    %v7804 = vpop.f32.mrf.mxu0
    %7805 = vmatprep.mubr.bf16.mxu0 0
    %7806 = vmatmul.mubr.bf16.gmra.mxu0 %v7525
    %v7807 = vpop.f32.mrf.mxu0
    %v7808 = vadd.f32 0.0, %v7807
    %v7809 = vpop.f32.mrf.mxu0
    %v7810 = vpop.f32.mrf.mxu0
    %v7811 = vadd.f32 0.0, %v7810
    %v7812 = vpop.f32.mrf.mxu0
    %7813 = vmatprep.mubr.bf16.mxu0 0
    %7814 = vmatmul.mubr.bf16.gmra.mxu0 %v7528
    %v7815 = vpop.f32.mrf.mxu0
    %v7816 = vadd.f32 0.0, %v7815
    %v7817 = vpop.f32.mrf.mxu0
    %v7818 = vpop.f32.mrf.mxu0
    %v7819 = vadd.f32 0.0, %v7818
    %v7820 = vpop.f32.mrf.mxu0
    %7821 = vdwg.mxu0
    %v7822 = vadd.f32 %v6408, %v7568
    %v7823 = vadd.f32 %v6409, %v7571
    %v7824 = vadd.f32 %v6410, %v7576
    %v7825 = vadd.f32 %v6411, %v7579
    %v7826 = vadd.f32 %v6412, %v7584
    %v7827 = vadd.f32 %v6413, %v7587
    %v7828 = vadd.f32 %v6414, %v7592
    %v7829 = vadd.f32 %v6415, %v7595
    %v7830 = vadd.f32 %v6416, %v7600
    %v7831 = vadd.f32 %v6417, %v7603
    %v7832 = vadd.f32 %v6418, %v7608
    %v7833 = vadd.f32 %v6419, %v7611
    %v7834 = vadd.f32 %v6420, %v7616
    %v7835 = vadd.f32 %v6421, %v7619
    %v7836 = vadd.f32 %v6422, %v7624
    %v7837 = vadd.f32 %v6423, %v7627
    %v7838 = vadd.f32 %v6424, %v7632
    %v7839 = vadd.f32 %v6425, %v7635
    %v7840 = vadd.f32 %v6426, %v7640
    %v7841 = vadd.f32 %v6427, %v7643
    %v7842 = vadd.f32 %v6428, %v7648
    %v7843 = vadd.f32 %v6429, %v7651
    %v7844 = vadd.f32 %v6430, %v7656
    %v7845 = vadd.f32 %v6431, %v7659
    %v7846 = vadd.f32 %v6432, %v7664
    %v7847 = vadd.f32 %v6433, %v7667
    %v7848 = vadd.f32 %v6434, %v7672
    %v7849 = vadd.f32 %v6435, %v7675
    %v7850 = vadd.f32 %v6436, %v7680
    %v7851 = vadd.f32 %v6437, %v7683
    %v7852 = vadd.f32 %v6438, %v7688
    %v7853 = vadd.f32 %v6439, %v7691
    %v7854 = vadd.f32 %v6440, %v7696
    %v7855 = vadd.f32 %v6441, %v7699
    %v7856 = vadd.f32 %v6442, %v7704
    %v7857 = vadd.f32 %v6443, %v7707
    %v7858 = vadd.f32 %v6444, %v7712
    %v7859 = vadd.f32 %v6445, %v7715
    %v7860 = vadd.f32 %v6446, %v7720
    %v7861 = vadd.f32 %v6447, %v7723
    %v7862 = vadd.f32 %v6448, %v7728
    %v7863 = vadd.f32 %v6449, %v7731
    %v7864 = vadd.f32 %v6450, %v7736
    %v7865 = vadd.f32 %v6451, %v7739
    %v7866 = vadd.f32 %v6452, %v7744
    %v7867 = vadd.f32 %v6453, %v7747
    %v7868 = vadd.f32 %v6454, %v7752
    %v7869 = vadd.f32 %v6455, %v7755
    %v7870 = vadd.f32 %v6456, %v7760
    %v7871 = vadd.f32 %v6457, %v7763
    %v7872 = vadd.f32 %v6458, %v7768
    %v7873 = vadd.f32 %v6459, %v7771
    %v7874 = vadd.f32 %v6460, %v7776
    %v7875 = vadd.f32 %v6461, %v7779
    %v7876 = vadd.f32 %v6462, %v7784
    %v7877 = vadd.f32 %v6463, %v7787
    %v7878 = vadd.f32 %v6464, %v7792
    %v7879 = vadd.f32 %v6465, %v7795
    %v7880 = vadd.f32 %v6466, %v7800
    %v7881 = vadd.f32 %v6467, %v7803
    %v7882 = vadd.f32 %v6468, %v7808
    %v7883 = vadd.f32 %v6469, %v7811
    %v7884 = vadd.f32 %v6470, %v7816
    %v7885 = vadd.f32 %v6471, %v7819
    %v7886 = vld [vmem:[%s2] sm:$0xe]
    %v7887 = vld [vmem:[%s2 + $0xc] sm:$0xe]
    %v7888 = vld [vmem:[%s2 + $0x18] sm:$0xe]
    %v7889 = vld [vmem:[%s2 + $0x24] sm:$0xe]
    %v7890 = vld [vmem:[%s2 + $0x30] sm:$0xe]
    %v7891 = vld [vmem:[%s2 + $0x3c] sm:$0xe]
    %v7892 = vld [vmem:[%s2 + $0x48] sm:$0xe]
    %v7893 = vld [vmem:[%s2 + $0x54] sm:$0xe]
    %v7894 = vld [vmem:[%s2 + $0x60] sm:$0xe]
    %v7895 = vld [vmem:[%s2 + $0x6c] sm:$0xe]
    %v7896 = vld [vmem:[%s2 + $0x78] sm:$0xe]
    %v7897 = vld [vmem:[%s2 + $0x84] sm:$0xe]
    %v7898 = vld [vmem:[%s2 + $0x90] sm:$0xe]
    %v7899 = vld [vmem:[%s2 + $0x9c] sm:$0xe]
    %v7900 = vld [vmem:[%s2 + $0xa8] sm:$0xe]
    %v7901 = vld [vmem:[%s2 + $0xb4] sm:$0xe]
    %v7902 = vld [vmem:[%s2 + $0xc0] sm:$0xe]
    %v7903 = vld [vmem:[%s2 + $0xcc] sm:$0xe]
    %v7904 = vld [vmem:[%s2 + $0xd8] sm:$0xe]
    %v7905 = vld [vmem:[%s2 + $0xe4] sm:$0xe]
    %v7906 = vld [vmem:[%s2 + $0xf0] sm:$0xe]
    %v7907 = vld [vmem:[%s2 + $0xfc] sm:$0xe]
    %v7908 = vld [vmem:[%s2 + $0x108] sm:$0xe]
    %v7909 = vld [vmem:[%s2 + $0x114] sm:$0xe]
    %v7910 = vld [vmem:[%s2 + $0x120] sm:$0xe]
    %v7911 = vld [vmem:[%s2 + $0x12c] sm:$0xe]
    %v7912 = vld [vmem:[%s2 + $0x138] sm:$0xe]
    %v7913 = vld [vmem:[%s2 + $0x144] sm:$0xe]
    %v7914 = vld [vmem:[%s2 + $0x150] sm:$0xe]
    %v7915 = vld [vmem:[%s2 + $0x15c] sm:$0xe]
    %v7916 = vld [vmem:[%s2 + $0x168] sm:$0xe]
    %v7917 = vld [vmem:[%s2 + $0x174] sm:$0xe]
    %v8014 = vrot.slane %v7886, 5
    %v8015 = vrot.slane %v8014, 4
    %v8016 = vrot.slane %v6473, 5
    %v8017 = vsel %vm2025, %v8015, %v8016
    %v8018 = vrot.slane %v8016, 4
    %v8019 = vrot.slane %v6474, 5
    %v8020 = vsel %vm2025, %v8018, %v8019
    %v8021 = vrot.slane %v7887, 5
    %v8022 = vrot.slane %v8021, 4
    %v8023 = vrot.slane %v6476, 5
    %v8024 = vsel %vm2025, %v8022, %v8023
    %v8025 = vrot.slane %v8023, 4
    %v8026 = vrot.slane %v6477, 5
    %v8027 = vsel %vm2025, %v8025, %v8026
    %v8028 = vrot.slane %v7888, 5
    %v8029 = vrot.slane %v8028, 4
    %v8030 = vrot.slane %v6479, 5
    %v8031 = vsel %vm2025, %v8029, %v8030
    %v8032 = vrot.slane %v8030, 4
    %v8033 = vrot.slane %v6480, 5
    %v8034 = vsel %vm2025, %v8032, %v8033
    %v8035 = vrot.slane %v7889, 5
    %v8036 = vrot.slane %v8035, 4
    %v8037 = vrot.slane %v6482, 5
    %v8038 = vsel %vm2025, %v8036, %v8037
    %v8039 = vrot.slane %v8037, 4
    %v8040 = vrot.slane %v6483, 5
    %v8041 = vsel %vm2025, %v8039, %v8040
    %v8042 = vrot.slane %v7890, 5
    %v8043 = vrot.slane %v8042, 4
    %v8044 = vrot.slane %v6485, 5
    %v8045 = vsel %vm2025, %v8043, %v8044
    %v8046 = vrot.slane %v8044, 4
    %v8047 = vrot.slane %v6486, 5
    %v8048 = vsel %vm2025, %v8046, %v8047
    %v8049 = vrot.slane %v7891, 5
    %v8050 = vrot.slane %v8049, 4
    %v8051 = vrot.slane %v6488, 5
    %v8052 = vsel %vm2025, %v8050, %v8051
    %v8053 = vrot.slane %v8051, 4
    %v8054 = vrot.slane %v6489, 5
    %v8055 = vsel %vm2025, %v8053, %v8054
    %v8056 = vrot.slane %v7892, 5
    %v8057 = vrot.slane %v8056, 4
    %v8058 = vrot.slane %v6491, 5
    %v8059 = vsel %vm2025, %v8057, %v8058
    %v8060 = vrot.slane %v8058, 4
    %v8061 = vrot.slane %v6492, 5
    %v8062 = vsel %vm2025, %v8060, %v8061
    %v8063 = vrot.slane %v7893, 5
    %v8064 = vrot.slane %v8063, 4
    %v8065 = vrot.slane %v6494, 5
    %v8066 = vsel %vm2025, %v8064, %v8065
    %v8067 = vrot.slane %v8065, 4
    %v8068 = vrot.slane %v6495, 5
    %v8069 = vsel %vm2025, %v8067, %v8068
    %v8070 = vrot.slane %v7894, 5
    %v8071 = vrot.slane %v8070, 4
    %v8072 = vrot.slane %v6497, 5
    %v8073 = vsel %vm2025, %v8071, %v8072
    %v8074 = vrot.slane %v8072, 4
    %v8075 = vrot.slane %v6498, 5
    %v8076 = vsel %vm2025, %v8074, %v8075
    %v8077 = vrot.slane %v7895, 5
    %v8078 = vrot.slane %v8077, 4
    %v8079 = vrot.slane %v6500, 5
    %v8080 = vsel %vm2025, %v8078, %v8079
    %v8081 = vrot.slane %v8079, 4
    %v8082 = vrot.slane %v6501, 5
    %v8083 = vsel %vm2025, %v8081, %v8082
    %v8084 = vrot.slane %v7896, 5
    %v8085 = vrot.slane %v8084, 4
    %v8086 = vrot.slane %v6503, 5
    %v8087 = vsel %vm2025, %v8085, %v8086
    %v8088 = vrot.slane %v8086, 4
    %v8089 = vrot.slane %v6504, 5
    %v8090 = vsel %vm2025, %v8088, %v8089
    %v8091 = vrot.slane %v7897, 5
    %v8092 = vrot.slane %v8091, 4
    %v8093 = vrot.slane %v6506, 5
    %v8094 = vsel %vm2025, %v8092, %v8093
    %v8095 = vrot.slane %v8093, 4
    %v8096 = vrot.slane %v6507, 5
    %v8097 = vsel %vm2025, %v8095, %v8096
    %v8098 = vrot.slane %v7898, 5
    %v8099 = vrot.slane %v8098, 4
    %v8100 = vrot.slane %v6509, 5
    %v8101 = vsel %vm2025, %v8099, %v8100
    %v8102 = vrot.slane %v8100, 4
    %v8103 = vrot.slane %v6510, 5
    %v8104 = vsel %vm2025, %v8102, %v8103
    %v8105 = vrot.slane %v7899, 5
    %v8106 = vrot.slane %v8105, 4
    %v8107 = vrot.slane %v6512, 5
    %v8108 = vsel %vm2025, %v8106, %v8107
    %v8109 = vrot.slane %v8107, 4
    %v8110 = vrot.slane %v6513, 5
    %v8111 = vsel %vm2025, %v8109, %v8110
    %v8112 = vrot.slane %v7900, 5
    %v8113 = vrot.slane %v8112, 4
    %v8114 = vrot.slane %v6515, 5
    %v8115 = vsel %vm2025, %v8113, %v8114
    %v8116 = vrot.slane %v8114, 4
    %v8117 = vrot.slane %v6516, 5
    %v8118 = vsel %vm2025, %v8116, %v8117
    %v8119 = vrot.slane %v7901, 5
    %v8120 = vrot.slane %v8119, 4
    %v8121 = vrot.slane %v6518, 5
    %v8122 = vsel %vm2025, %v8120, %v8121
    %v8123 = vrot.slane %v8121, 4
    %v8124 = vrot.slane %v6519, 5
    %v8125 = vsel %vm2025, %v8123, %v8124
    %v8126 = vrot.slane %v7902, 5
    %v8127 = vrot.slane %v8126, 4
    %v8128 = vrot.slane %v6521, 5
    %v8129 = vsel %vm2025, %v8127, %v8128
    %v8130 = vrot.slane %v8128, 4
    %v8131 = vrot.slane %v6522, 5
    %v8132 = vsel %vm2025, %v8130, %v8131
    %v8133 = vrot.slane %v7903, 5
    %v8134 = vrot.slane %v8133, 4
    %v8135 = vrot.slane %v6524, 5
    %v8136 = vsel %vm2025, %v8134, %v8135
    %v8137 = vrot.slane %v8135, 4
    %v8138 = vrot.slane %v6525, 5
    %v8139 = vsel %vm2025, %v8137, %v8138
    %v8140 = vrot.slane %v7904, 5
    %v8141 = vrot.slane %v8140, 4
    %v8142 = vrot.slane %v6527, 5
    %v8143 = vsel %vm2025, %v8141, %v8142
    %v8144 = vrot.slane %v8142, 4
    %v8145 = vrot.slane %v6528, 5
    %v8146 = vsel %vm2025, %v8144, %v8145
    %v8147 = vrot.slane %v7905, 5
    %v8148 = vrot.slane %v8147, 4
    %v8149 = vrot.slane %v6530, 5
    %v8150 = vsel %vm2025, %v8148, %v8149
    %v8151 = vrot.slane %v8149, 4
    %v8152 = vrot.slane %v6531, 5
    %v8153 = vsel %vm2025, %v8151, %v8152
    %v8154 = vrot.slane %v7906, 5
    %v8155 = vrot.slane %v8154, 4
    %v8156 = vrot.slane %v6533, 5
    %v8157 = vsel %vm2025, %v8155, %v8156
    %v8158 = vrot.slane %v8156, 4
    %v8159 = vrot.slane %v6534, 5
    %v8160 = vsel %vm2025, %v8158, %v8159
    %v8161 = vrot.slane %v7907, 5
    %v8162 = vrot.slane %v8161, 4
    %v8163 = vrot.slane %v6536, 5
    %v8164 = vsel %vm2025, %v8162, %v8163
    %v8165 = vrot.slane %v8163, 4
    %v8166 = vrot.slane %v6537, 5
    %v8167 = vsel %vm2025, %v8165, %v8166
    %v8168 = vrot.slane %v7908, 5
    %v8169 = vrot.slane %v8168, 4
    %v8170 = vrot.slane %v6539, 5
    %v8171 = vsel %vm2025, %v8169, %v8170
    %v8172 = vrot.slane %v8170, 4
    %v8173 = vrot.slane %v6540, 5
    %v8174 = vsel %vm2025, %v8172, %v8173
    %v8175 = vrot.slane %v7909, 5
    %v8176 = vrot.slane %v8175, 4
    %v8177 = vrot.slane %v6542, 5
    %v8178 = vsel %vm2025, %v8176, %v8177
    %v8179 = vrot.slane %v8177, 4
    %v8180 = vrot.slane %v6543, 5
    %v8181 = vsel %vm2025, %v8179, %v8180
    %v8182 = vrot.slane %v7910, 5
    %v8183 = vrot.slane %v8182, 4
    %v8184 = vrot.slane %v6545, 5
    %v8185 = vsel %vm2025, %v8183, %v8184
    %v8186 = vrot.slane %v8184, 4
    %v8187 = vrot.slane %v6546, 5
    %v8188 = vsel %vm2025, %v8186, %v8187
    %v8189 = vrot.slane %v7911, 5
    %v8190 = vrot.slane %v8189, 4
    %v8191 = vrot.slane %v6548, 5
    %v8192 = vsel %vm2025, %v8190, %v8191
    %v8193 = vrot.slane %v8191, 4
    %v8194 = vrot.slane %v6549, 5
    %v8195 = vsel %vm2025, %v8193, %v8194
    %v8196 = vrot.slane %v7912, 5
    %v8197 = vrot.slane %v8196, 4
    %v8198 = vrot.slane %v6551, 5
    %v8199 = vsel %vm2025, %v8197, %v8198
    %v8200 = vrot.slane %v8198, 4
    %v8201 = vrot.slane %v6552, 5
    %v8202 = vsel %vm2025, %v8200, %v8201
    %v8203 = vrot.slane %v7913, 5
    %v8204 = vrot.slane %v8203, 4
    %v8205 = vrot.slane %v6554, 5
    %v8206 = vsel %vm2025, %v8204, %v8205
    %v8207 = vrot.slane %v8205, 4
    %v8208 = vrot.slane %v6555, 5
    %v8209 = vsel %vm2025, %v8207, %v8208
    %v8210 = vrot.slane %v7914, 5
    %v8211 = vrot.slane %v8210, 4
    %v8212 = vrot.slane %v6557, 5
    %v8213 = vsel %vm2025, %v8211, %v8212
    %v8214 = vrot.slane %v8212, 4
    %v8215 = vrot.slane %v6558, 5
    %v8216 = vsel %vm2025, %v8214, %v8215
    %v8217 = vrot.slane %v7915, 5
    %v8218 = vrot.slane %v8217, 4
    %v8219 = vrot.slane %v6560, 5
    %v8220 = vsel %vm2025, %v8218, %v8219
    %v8221 = vrot.slane %v8219, 4
    %v8222 = vrot.slane %v6561, 5
    %v8223 = vsel %vm2025, %v8221, %v8222
    %v8224 = vrot.slane %v7916, 5
    %v8225 = vrot.slane %v8224, 4
    %v8226 = vrot.slane %v6563, 5
    %v8227 = vsel %vm2025, %v8225, %v8226
    %v8228 = vrot.slane %v8226, 4
    %v8229 = vrot.slane %v6564, 5
    %v8230 = vsel %vm2025, %v8228, %v8229
    %v8231 = vrot.slane %v7917, 5
    %v8232 = vrot.slane %v8231, 4
    %v8233 = vrot.slane %v6566, 5
    %v8234 = vsel %vm2025, %v8232, %v8233
    %v8235 = vrot.slane %v8233, 4
    %v8236 = vrot.slane %v6567, 5
    %v8237 = vsel %vm2025, %v8235, %v8236
    %s8238 = scalar_lea.vmem %s3, 16
    %v8239 = vld [vmem:[%s8238] sm:$0x3]
    %v8240 = vunpack.c.l.b16 %v8017
    %v8241 = vunpack.c.l.b16 %v8020
    %v8242 = vunpack.c.l.b16 %v8024
    %v8243 = vunpack.c.l.b16 %v8027
    %v8244 = vunpack.c.l.b16 %v8031
    %v8245 = vunpack.c.l.b16 %v8034
    %v8246 = vunpack.c.l.b16 %v8038
    %v8247 = vunpack.c.l.b16 %v8041
    %v8248 = vunpack.c.l.b16 %v8045
    %v8249 = vunpack.c.l.b16 %v8048
    %v8250 = vunpack.c.l.b16 %v8052
    %v8251 = vunpack.c.l.b16 %v8055
    %v8252 = vunpack.c.l.b16 %v8059
    %v8253 = vunpack.c.l.b16 %v8062
    %v8254 = vunpack.c.l.b16 %v8066
    %v8255 = vunpack.c.l.b16 %v8069
    %v8256 = vunpack.c.l.b16 %v8073
    %v8257 = vunpack.c.l.b16 %v8076
    %v8258 = vunpack.c.l.b16 %v8080
    %v8259 = vunpack.c.l.b16 %v8083
    %v8260 = vunpack.c.l.b16 %v8087
    %v8261 = vunpack.c.l.b16 %v8090
    %v8262 = vunpack.c.l.b16 %v8094
    %v8263 = vunpack.c.l.b16 %v8097
    %v8264 = vunpack.c.l.b16 %v8101
    %v8265 = vunpack.c.l.b16 %v8104
    %v8266 = vunpack.c.l.b16 %v8108
    %v8267 = vunpack.c.l.b16 %v8111
    %v8268 = vunpack.c.l.b16 %v8115
    %v8269 = vunpack.c.l.b16 %v8118
    %v8270 = vunpack.c.l.b16 %v8122
    %v8271 = vunpack.c.l.b16 %v8125
    %v8272 = vunpack.c.l.b16 %v8129
    %v8273 = vunpack.c.l.b16 %v8132
    %v8274 = vunpack.c.l.b16 %v8136
    %v8275 = vunpack.c.l.b16 %v8139
    %v8276 = vunpack.c.l.b16 %v8143
    %v8277 = vunpack.c.l.b16 %v8146
    %v8278 = vunpack.c.l.b16 %v8150
    %v8279 = vunpack.c.l.b16 %v8153
    %v8280 = vunpack.c.l.b16 %v8157
    %v8281 = vunpack.c.l.b16 %v8160
    %v8282 = vunpack.c.l.b16 %v8164
    %v8283 = vunpack.c.l.b16 %v8167
    %v8284 = vunpack.c.l.b16 %v8171
    %v8285 = vunpack.c.l.b16 %v8174
    %v8286 = vunpack.c.l.b16 %v8178
    %v8287 = vunpack.c.l.b16 %v8181
    %v8288 = vunpack.c.l.b16 %v8185
    %v8289 = vunpack.c.l.b16 %v8188
    %v8290 = vunpack.c.l.b16 %v8192
    %v8291 = vunpack.c.l.b16 %v8195
    %v8292 = vunpack.c.l.b16 %v8199
    %v8293 = vunpack.c.l.b16 %v8202
    %v8294 = vunpack.c.l.b16 %v8206
    %v8295 = vunpack.c.l.b16 %v8209
    %v8296 = vunpack.c.l.b16 %v8213
    %v8297 = vunpack.c.l.b16 %v8216
    %v8298 = vunpack.c.l.b16 %v8220
    %v8299 = vunpack.c.l.b16 %v8223
    %v8300 = vunpack.c.l.b16 %v8227
    %v8301 = vunpack.c.l.b16 %v8230
    %v8302 = vunpack.c.l.b16 %v8234
    %v8303 = vunpack.c.l.b16 %v8237
    %v8304 = vpack.c.b16 %v8241, %v8240
    %v8305 = vpack.c.b16 %v8243, %v8242
    %v8306 = vpack.c.b16 %v8245, %v8244
    %v8307 = vpack.c.b16 %v8247, %v8246
    %v8308 = vpack.c.b16 %v8249, %v8248
    %v8309 = vpack.c.b16 %v8251, %v8250
    %v8310 = vpack.c.b16 %v8253, %v8252
    %v8311 = vpack.c.b16 %v8255, %v8254
    %v8312 = vpack.c.b16 %v8257, %v8256
    %v8313 = vpack.c.b16 %v8259, %v8258
    %v8314 = vpack.c.b16 %v8261, %v8260
    %v8315 = vpack.c.b16 %v8263, %v8262
    %v8316 = vpack.c.b16 %v8265, %v8264
    %v8317 = vpack.c.b16 %v8267, %v8266
    %v8318 = vpack.c.b16 %v8269, %v8268
    %v8319 = vpack.c.b16 %v8271, %v8270
    %v8320 = vpack.c.b16 %v8273, %v8272
    %v8321 = vpack.c.b16 %v8275, %v8274
    %v8322 = vpack.c.b16 %v8277, %v8276
    %v8323 = vpack.c.b16 %v8279, %v8278
    %v8324 = vpack.c.b16 %v8281, %v8280
    %v8325 = vpack.c.b16 %v8283, %v8282
    %v8326 = vpack.c.b16 %v8285, %v8284
    %v8327 = vpack.c.b16 %v8287, %v8286
    %v8328 = vpack.c.b16 %v8289, %v8288
    %v8329 = vpack.c.b16 %v8291, %v8290
    %v8330 = vpack.c.b16 %v8293, %v8292
    %v8331 = vpack.c.b16 %v8295, %v8294
    %v8332 = vpack.c.b16 %v8297, %v8296
    %v8333 = vpack.c.b16 %v8299, %v8298
    %v8334 = vpack.c.b16 %v8301, %v8300
    %v8335 = vpack.c.b16 %v8303, %v8302
    %v8337 = vsel %vm989, %v8304, 0
    %v8340 = vsel %vm989, %v8305, 0
    %v8343 = vsel %vm989, %v8306, 0
    %v8346 = vsel %vm989, %v8307, 0
    %v8349 = vsel %vm989, %v8308, 0
    %v8352 = vsel %vm989, %v8309, 0
    %v8355 = vsel %vm989, %v8310, 0
    %v8358 = vsel %vm989, %v8311, 0
    %v8361 = vsel %vm989, %v8312, 0
    %v8364 = vsel %vm989, %v8313, 0
    %v8367 = vsel %vm989, %v8314, 0
    %v8370 = vsel %vm989, %v8315, 0
    %v8373 = vsel %vm989, %v8316, 0
    %v8376 = vsel %vm989, %v8317, 0
    %v8379 = vsel %vm989, %v8318, 0
    %v8382 = vsel %vm989, %v8319, 0
    %v8385 = vsel %vm989, %v8320, 0
    %v8388 = vsel %vm989, %v8321, 0
    %v8391 = vsel %vm989, %v8322, 0
    %v8394 = vsel %vm989, %v8323, 0
    %v8397 = vsel %vm989, %v8324, 0
    %v8400 = vsel %vm989, %v8325, 0
    %v8403 = vsel %vm989, %v8326, 0
    %v8406 = vsel %vm989, %v8327, 0
    %v8409 = vsel %vm989, %v8328, 0
    %v8412 = vsel %vm989, %v8329, 0
    %v8415 = vsel %vm989, %v8330, 0
    %v8418 = vsel %vm989, %v8331, 0
    %v8421 = vsel %vm989, %v8332, 0
    %v8424 = vsel %vm989, %v8333, 0
    %v8427 = vsel %vm989, %v8334, 0
    %v8430 = vsel %vm989, %v8335, 0
    %v8433 = vsel %vm1086, %v8239, 0
    %8435 = vmatprep.subr.bf16.mxu0 0
    %8436 = vmatpush1.bf16.msra.mxu0 0
    %8437 = vmatprep.subr.bf16.mxu0 0
    %8438 = vmatpush1.bf16.msra.mxu0 0
    %8439 = vmatprep.subr.bf16.mxu0 0
    %8440 = vmatpush1.bf16.msra.mxu0 0
    %8441 = vmatprep.subr.bf16.mxu0 0
    %8442 = vmatpush1.bf16.msra.mxu0 0
    %8443 = vmatprep.subr.bf16.mxu0 0
    %8444 = vmatpush1.bf16.msra.mxu0 0
    %8445 = vmatprep.subr.bf16.mxu0 0
    %8446 = vmatpush1.bf16.msra.mxu0 0
    %8447 = vmatprep.subr.bf16.mxu0 0
    %8448 = vmatpush1.bf16.msra.mxu0 0
    %8449 = vmatprep.subr.bf16.mxu0 0
    %8450 = vmatpush1.bf16.msra.mxu0 %v8433
    %8451 = vmatprep.subr.bf16.mxu0 0
    %8452 = vmatpush2.bf16.msra.mxu0 0
    %8453 = vmatprep.subr.bf16.mxu0 0
    %8454 = vmatpush2.bf16.msra.mxu0 0
    %8455 = vmatprep.subr.bf16.mxu0 0
    %8456 = vmatpush2.bf16.msra.mxu0 0
    %8457 = vmatprep.subr.bf16.mxu0 0
    %8458 = vmatpush2.bf16.msra.mxu0 0
    %8459 = vmatprep.subr.bf16.mxu0 0
    %8460 = vmatpush2.bf16.msra.mxu0 0
    %8461 = vmatprep.subr.bf16.mxu0 0
    %8462 = vmatpush2.bf16.msra.mxu0 0
    %8463 = vmatprep.subr.bf16.mxu0 0
    %8464 = vmatpush2.bf16.msra.mxu0 0
    %8465 = vmatprep.subr.bf16.mxu0 0
    %8466 = vmatpush2.bf16.msra.mxu0 0
    %8467 = vmatprep.mubr.bf16.mxu0 0
    %8468 = vmatmul.mubr.bf16.gmra.mxu0 %v8337
    %v8469 = vpop.f32.mrf.mxu0
    %v8470 = vadd.f32 0.0, %v8469
    %v8471 = vpop.f32.mrf.mxu0
    %v8472 = vpop.f32.mrf.mxu0
    %v8473 = vadd.f32 0.0, %v8472
    %v8474 = vpop.f32.mrf.mxu0
    %8475 = vmatprep.mubr.bf16.mxu0 0
    %8476 = vmatmul.mubr.bf16.gmra.mxu0 %v8340
    %v8477 = vpop.f32.mrf.mxu0
    %v8478 = vadd.f32 0.0, %v8477
    %v8479 = vpop.f32.mrf.mxu0
    %v8480 = vpop.f32.mrf.mxu0
    %v8481 = vadd.f32 0.0, %v8480
    %v8482 = vpop.f32.mrf.mxu0
    %8483 = vmatprep.mubr.bf16.mxu0 0
    %8484 = vmatmul.mubr.bf16.gmra.mxu0 %v8343
    %v8485 = vpop.f32.mrf.mxu0
    %v8486 = vadd.f32 0.0, %v8485
    %v8487 = vpop.f32.mrf.mxu0
    %v8488 = vpop.f32.mrf.mxu0
    %v8489 = vadd.f32 0.0, %v8488
    %v8490 = vpop.f32.mrf.mxu0
    %8491 = vmatprep.mubr.bf16.mxu0 0
    %8492 = vmatmul.mubr.bf16.gmra.mxu0 %v8346
    %v8493 = vpop.f32.mrf.mxu0
    %v8494 = vadd.f32 0.0, %v8493
    %v8495 = vpop.f32.mrf.mxu0
    %v8496 = vpop.f32.mrf.mxu0
    %v8497 = vadd.f32 0.0, %v8496
    %v8498 = vpop.f32.mrf.mxu0
    %8499 = vmatprep.mubr.bf16.mxu0 0
    %8500 = vmatmul.mubr.bf16.gmra.mxu0 %v8349
    %v8501 = vpop.f32.mrf.mxu0
    %v8502 = vadd.f32 0.0, %v8501
    %v8503 = vpop.f32.mrf.mxu0
    %v8504 = vpop.f32.mrf.mxu0
    %v8505 = vadd.f32 0.0, %v8504
    %v8506 = vpop.f32.mrf.mxu0
    %8507 = vmatprep.mubr.bf16.mxu0 0
    %8508 = vmatmul.mubr.bf16.gmra.mxu0 %v8352
    %v8509 = vpop.f32.mrf.mxu0
    %v8510 = vadd.f32 0.0, %v8509
    %v8511 = vpop.f32.mrf.mxu0
    %v8512 = vpop.f32.mrf.mxu0
    %v8513 = vadd.f32 0.0, %v8512
    %v8514 = vpop.f32.mrf.mxu0
    %8515 = vmatprep.mubr.bf16.mxu0 0
    %8516 = vmatmul.mubr.bf16.gmra.mxu0 %v8355
    %v8517 = vpop.f32.mrf.mxu0
    %v8518 = vadd.f32 0.0, %v8517
    %v8519 = vpop.f32.mrf.mxu0
    %v8520 = vpop.f32.mrf.mxu0
    %v8521 = vadd.f32 0.0, %v8520
    %v8522 = vpop.f32.mrf.mxu0
    %8523 = vmatprep.mubr.bf16.mxu0 0
    %8524 = vmatmul.mubr.bf16.gmra.mxu0 %v8358
    %v8525 = vpop.f32.mrf.mxu0
    %v8526 = vadd.f32 0.0, %v8525
    %v8527 = vpop.f32.mrf.mxu0
    %v8528 = vpop.f32.mrf.mxu0
    %v8529 = vadd.f32 0.0, %v8528
    %v8530 = vpop.f32.mrf.mxu0
    %8531 = vmatprep.mubr.bf16.mxu0 0
    %8532 = vmatmul.mubr.bf16.gmra.mxu0 %v8361
    %v8533 = vpop.f32.mrf.mxu0
    %v8534 = vadd.f32 0.0, %v8533
    %v8535 = vpop.f32.mrf.mxu0
    %v8536 = vpop.f32.mrf.mxu0
    %v8537 = vadd.f32 0.0, %v8536
    %v8538 = vpop.f32.mrf.mxu0
    %8539 = vmatprep.mubr.bf16.mxu0 0
    %8540 = vmatmul.mubr.bf16.gmra.mxu0 %v8364
    %v8541 = vpop.f32.mrf.mxu0
    %v8542 = vadd.f32 0.0, %v8541
    %v8543 = vpop.f32.mrf.mxu0
    %v8544 = vpop.f32.mrf.mxu0
    %v8545 = vadd.f32 0.0, %v8544
    %v8546 = vpop.f32.mrf.mxu0
    %8547 = vmatprep.mubr.bf16.mxu0 0
    %8548 = vmatmul.mubr.bf16.gmra.mxu0 %v8367
    %v8549 = vpop.f32.mrf.mxu0
    %v8550 = vadd.f32 0.0, %v8549
    %v8551 = vpop.f32.mrf.mxu0
    %v8552 = vpop.f32.mrf.mxu0
    %v8553 = vadd.f32 0.0, %v8552
    %v8554 = vpop.f32.mrf.mxu0
    %8555 = vmatprep.mubr.bf16.mxu0 0
    %8556 = vmatmul.mubr.bf16.gmra.mxu0 %v8370
    %v8557 = vpop.f32.mrf.mxu0
    %v8558 = vadd.f32 0.0, %v8557
    %v8559 = vpop.f32.mrf.mxu0
    %v8560 = vpop.f32.mrf.mxu0
    %v8561 = vadd.f32 0.0, %v8560
    %v8562 = vpop.f32.mrf.mxu0
    %8563 = vmatprep.mubr.bf16.mxu0 0
    %8564 = vmatmul.mubr.bf16.gmra.mxu0 %v8373
    %v8565 = vpop.f32.mrf.mxu0
    %v8566 = vadd.f32 0.0, %v8565
    %v8567 = vpop.f32.mrf.mxu0
    %v8568 = vpop.f32.mrf.mxu0
    %v8569 = vadd.f32 0.0, %v8568
    %v8570 = vpop.f32.mrf.mxu0
    %8571 = vmatprep.mubr.bf16.mxu0 0
    %8572 = vmatmul.mubr.bf16.gmra.mxu0 %v8376
    %v8573 = vpop.f32.mrf.mxu0
    %v8574 = vadd.f32 0.0, %v8573
    %v8575 = vpop.f32.mrf.mxu0
    %v8576 = vpop.f32.mrf.mxu0
    %v8577 = vadd.f32 0.0, %v8576
    %v8578 = vpop.f32.mrf.mxu0
    %8579 = vmatprep.mubr.bf16.mxu0 0
    %8580 = vmatmul.mubr.bf16.gmra.mxu0 %v8379
    %v8581 = vpop.f32.mrf.mxu0
    %v8582 = vadd.f32 0.0, %v8581
    %v8583 = vpop.f32.mrf.mxu0
    %v8584 = vpop.f32.mrf.mxu0
    %v8585 = vadd.f32 0.0, %v8584
    %v8586 = vpop.f32.mrf.mxu0
    %8587 = vmatprep.mubr.bf16.mxu0 0
    %8588 = vmatmul.mubr.bf16.gmra.mxu0 %v8382
    %v8589 = vpop.f32.mrf.mxu0
    %v8590 = vadd.f32 0.0, %v8589
    %v8591 = vpop.f32.mrf.mxu0
    %v8592 = vpop.f32.mrf.mxu0
    %v8593 = vadd.f32 0.0, %v8592
    %v8594 = vpop.f32.mrf.mxu0
    %8595 = vmatprep.mubr.bf16.mxu0 0
    %8596 = vmatmul.mubr.bf16.gmra.mxu0 %v8385
    %v8597 = vpop.f32.mrf.mxu0
    %v8598 = vadd.f32 0.0, %v8597
    %v8599 = vpop.f32.mrf.mxu0
    %v8600 = vpop.f32.mrf.mxu0
    %v8601 = vadd.f32 0.0, %v8600
    %v8602 = vpop.f32.mrf.mxu0
    %8603 = vmatprep.mubr.bf16.mxu0 0
    %8604 = vmatmul.mubr.bf16.gmra.mxu0 %v8388
    %v8605 = vpop.f32.mrf.mxu0
    %v8606 = vadd.f32 0.0, %v8605
    %v8607 = vpop.f32.mrf.mxu0
    %v8608 = vpop.f32.mrf.mxu0
    %v8609 = vadd.f32 0.0, %v8608
    %v8610 = vpop.f32.mrf.mxu0
    %8611 = vmatprep.mubr.bf16.mxu0 0
    %8612 = vmatmul.mubr.bf16.gmra.mxu0 %v8391
    %v8613 = vpop.f32.mrf.mxu0
    %v8614 = vadd.f32 0.0, %v8613
    %v8615 = vpop.f32.mrf.mxu0
    %v8616 = vpop.f32.mrf.mxu0
    %v8617 = vadd.f32 0.0, %v8616
    %v8618 = vpop.f32.mrf.mxu0
    %8619 = vmatprep.mubr.bf16.mxu0 0
    %8620 = vmatmul.mubr.bf16.gmra.mxu0 %v8394
    %v8621 = vpop.f32.mrf.mxu0
    %v8622 = vadd.f32 0.0, %v8621
    %v8623 = vpop.f32.mrf.mxu0
    %v8624 = vpop.f32.mrf.mxu0
    %v8625 = vadd.f32 0.0, %v8624
    %v8626 = vpop.f32.mrf.mxu0
    %8627 = vmatprep.mubr.bf16.mxu0 0
    %8628 = vmatmul.mubr.bf16.gmra.mxu0 %v8397
    %v8629 = vpop.f32.mrf.mxu0
    %v8630 = vadd.f32 0.0, %v8629
    %v8631 = vpop.f32.mrf.mxu0
    %v8632 = vpop.f32.mrf.mxu0
    %v8633 = vadd.f32 0.0, %v8632
    %v8634 = vpop.f32.mrf.mxu0
    %8635 = vmatprep.mubr.bf16.mxu0 0
    %8636 = vmatmul.mubr.bf16.gmra.mxu0 %v8400
    %v8637 = vpop.f32.mrf.mxu0
    %v8638 = vadd.f32 0.0, %v8637
    %v8639 = vpop.f32.mrf.mxu0
    %v8640 = vpop.f32.mrf.mxu0
    %v8641 = vadd.f32 0.0, %v8640
    %v8642 = vpop.f32.mrf.mxu0
    %8643 = vmatprep.mubr.bf16.mxu0 0
    %8644 = vmatmul.mubr.bf16.gmra.mxu0 %v8403
    %v8645 = vpop.f32.mrf.mxu0
    %v8646 = vadd.f32 0.0, %v8645
    %v8647 = vpop.f32.mrf.mxu0
    %v8648 = vpop.f32.mrf.mxu0
    %v8649 = vadd.f32 0.0, %v8648
    %v8650 = vpop.f32.mrf.mxu0
    %8651 = vmatprep.mubr.bf16.mxu0 0
    %8652 = vmatmul.mubr.bf16.gmra.mxu0 %v8406
    %v8653 = vpop.f32.mrf.mxu0
    %v8654 = vadd.f32 0.0, %v8653
    %v8655 = vpop.f32.mrf.mxu0
    %v8656 = vpop.f32.mrf.mxu0
    %v8657 = vadd.f32 0.0, %v8656
    %v8658 = vpop.f32.mrf.mxu0
    %8659 = vmatprep.mubr.bf16.mxu0 0
    %8660 = vmatmul.mubr.bf16.gmra.mxu0 %v8409
    %v8661 = vpop.f32.mrf.mxu0
    %v8662 = vadd.f32 0.0, %v8661
    %v8663 = vpop.f32.mrf.mxu0
    %v8664 = vpop.f32.mrf.mxu0
    %v8665 = vadd.f32 0.0, %v8664
    %v8666 = vpop.f32.mrf.mxu0
    %8667 = vmatprep.mubr.bf16.mxu0 0
    %8668 = vmatmul.mubr.bf16.gmra.mxu0 %v8412
    %v8669 = vpop.f32.mrf.mxu0
    %v8670 = vadd.f32 0.0, %v8669
    %v8671 = vpop.f32.mrf.mxu0
    %v8672 = vpop.f32.mrf.mxu0
    %v8673 = vadd.f32 0.0, %v8672
    %v8674 = vpop.f32.mrf.mxu0
    %8675 = vmatprep.mubr.bf16.mxu0 0
    %8676 = vmatmul.mubr.bf16.gmra.mxu0 %v8415
    %v8677 = vpop.f32.mrf.mxu0
    %v8678 = vadd.f32 0.0, %v8677
    %v8679 = vpop.f32.mrf.mxu0
    %v8680 = vpop.f32.mrf.mxu0
    %v8681 = vadd.f32 0.0, %v8680
    %v8682 = vpop.f32.mrf.mxu0
    %8683 = vmatprep.mubr.bf16.mxu0 0
    %8684 = vmatmul.mubr.bf16.gmra.mxu0 %v8418
    %v8685 = vpop.f32.mrf.mxu0
    %v8686 = vadd.f32 0.0, %v8685
    %v8687 = vpop.f32.mrf.mxu0
    %v8688 = vpop.f32.mrf.mxu0
    %v8689 = vadd.f32 0.0, %v8688
    %v8690 = vpop.f32.mrf.mxu0
    %8691 = vmatprep.mubr.bf16.mxu0 0
    %8692 = vmatmul.mubr.bf16.gmra.mxu0 %v8421
    %v8693 = vpop.f32.mrf.mxu0
    %v8694 = vadd.f32 0.0, %v8693
    %v8695 = vpop.f32.mrf.mxu0
    %v8696 = vpop.f32.mrf.mxu0
    %v8697 = vadd.f32 0.0, %v8696
    %v8698 = vpop.f32.mrf.mxu0
    %8699 = vmatprep.mubr.bf16.mxu0 0
    %8700 = vmatmul.mubr.bf16.gmra.mxu0 %v8424
    %v8701 = vpop.f32.mrf.mxu0
    %v8702 = vadd.f32 0.0, %v8701
    %v8703 = vpop.f32.mrf.mxu0
    %v8704 = vpop.f32.mrf.mxu0
    %v8705 = vadd.f32 0.0, %v8704
    %v8706 = vpop.f32.mrf.mxu0
    %8707 = vmatprep.mubr.bf16.mxu0 0
    %8708 = vmatmul.mubr.bf16.gmra.mxu0 %v8427
    %v8709 = vpop.f32.mrf.mxu0
    %v8710 = vadd.f32 0.0, %v8709
    %v8711 = vpop.f32.mrf.mxu0
    %v8712 = vpop.f32.mrf.mxu0
    %v8713 = vadd.f32 0.0, %v8712
    %v8714 = vpop.f32.mrf.mxu0
    %8715 = vmatprep.mubr.bf16.mxu0 0
    %8716 = vmatmul.mubr.bf16.gmra.mxu0 %v8430
    %v8717 = vpop.f32.mrf.mxu0
    %v8718 = vadd.f32 0.0, %v8717
    %v8719 = vpop.f32.mrf.mxu0
    %v8720 = vpop.f32.mrf.mxu0
    %v8721 = vadd.f32 0.0, %v8720
    %v8722 = vpop.f32.mrf.mxu0
    %8723 = vdwg.mxu0
    %v8724 = vadd.f32 %v7822, %v8470
    %v8725 = vadd.f32 %v7823, %v8473
    %v8726 = vadd.f32 %v7824, %v8478
    %v8727 = vadd.f32 %v7825, %v8481
    %v8728 = vadd.f32 %v7826, %v8486
    %v8729 = vadd.f32 %v7827, %v8489
    %v8730 = vadd.f32 %v7828, %v8494
    %v8731 = vadd.f32 %v7829, %v8497
    %v8732 = vadd.f32 %v7830, %v8502
    %v8733 = vadd.f32 %v7831, %v8505
    %v8734 = vadd.f32 %v7832, %v8510
    %v8735 = vadd.f32 %v7833, %v8513
    %v8736 = vadd.f32 %v7834, %v8518
    %v8737 = vadd.f32 %v7835, %v8521
    %v8738 = vadd.f32 %v7836, %v8526
    %v8739 = vadd.f32 %v7837, %v8529
    %v8740 = vadd.f32 %v7838, %v8534
    %v8741 = vadd.f32 %v7839, %v8537
    %v8742 = vadd.f32 %v7840, %v8542
    %v8743 = vadd.f32 %v7841, %v8545
    %v8744 = vadd.f32 %v7842, %v8550
    %v8745 = vadd.f32 %v7843, %v8553
    %v8746 = vadd.f32 %v7844, %v8558
    %v8747 = vadd.f32 %v7845, %v8561
    %v8748 = vadd.f32 %v7846, %v8566
    %v8749 = vadd.f32 %v7847, %v8569
    %v8750 = vadd.f32 %v7848, %v8574
    %v8751 = vadd.f32 %v7849, %v8577
    %v8752 = vadd.f32 %v7850, %v8582
    %v8753 = vadd.f32 %v7851, %v8585
    %v8754 = vadd.f32 %v7852, %v8590
    %v8755 = vadd.f32 %v7853, %v8593
    %v8756 = vadd.f32 %v7854, %v8598
    %v8757 = vadd.f32 %v7855, %v8601
    %v8758 = vadd.f32 %v7856, %v8606
    %v8759 = vadd.f32 %v7857, %v8609
    %v8760 = vadd.f32 %v7858, %v8614
    %v8761 = vadd.f32 %v7859, %v8617
    %v8762 = vadd.f32 %v7860, %v8622
    %v8763 = vadd.f32 %v7861, %v8625
    %v8764 = vadd.f32 %v7862, %v8630
    %v8765 = vadd.f32 %v7863, %v8633
    %v8766 = vadd.f32 %v7864, %v8638
    %v8767 = vadd.f32 %v7865, %v8641
    %v8768 = vadd.f32 %v7866, %v8646
    %v8769 = vadd.f32 %v7867, %v8649
    %v8770 = vadd.f32 %v7868, %v8654
    %v8771 = vadd.f32 %v7869, %v8657
    %v8772 = vadd.f32 %v7870, %v8662
    %v8773 = vadd.f32 %v7871, %v8665
    %v8774 = vadd.f32 %v7872, %v8670
    %v8775 = vadd.f32 %v7873, %v8673
    %v8776 = vadd.f32 %v7874, %v8678
    %v8777 = vadd.f32 %v7875, %v8681
    %v8778 = vadd.f32 %v7876, %v8686
    %v8779 = vadd.f32 %v7877, %v8689
    %v8780 = vadd.f32 %v7878, %v8694
    %v8781 = vadd.f32 %v7879, %v8697
    %v8782 = vadd.f32 %v7880, %v8702
    %v8783 = vadd.f32 %v7881, %v8705
    %v8784 = vadd.f32 %v7882, %v8710
    %v8785 = vadd.f32 %v7883, %v8713
    %v8786 = vadd.f32 %v7884, %v8718
    %v8787 = vadd.f32 %v7885, %v8721
    %8788 = vst [vmem:[#allocation2] sm:$0xff] %v8724
    %8789 = vst [vmem:[#allocation2 + $0x8] sm:$0xff] %v8725
    %8790 = vst [vmem:[#allocation2 + $0x10] sm:$0xff] %v8726
    %8791 = vst [vmem:[#allocation2 + $0x18] sm:$0xff] %v8727
    %8792 = vst [vmem:[#allocation2 + $0x20] sm:$0xff] %v8728
    %8793 = vst [vmem:[#allocation2 + $0x28] sm:$0xff] %v8729
    %8794 = vst [vmem:[#allocation2 + $0x30] sm:$0xff] %v8730
    %8795 = vst [vmem:[#allocation2 + $0x38] sm:$0xff] %v8731
    %8796 = vst [vmem:[#allocation2 + $0x40] sm:$0xff] %v8732
    %8797 = vst [vmem:[#allocation2 + $0x48] sm:$0xff] %v8733
    %8798 = vst [vmem:[#allocation2 + $0x50] sm:$0xff] %v8734
    %8799 = vst [vmem:[#allocation2 + $0x58] sm:$0xff] %v8735
    %8800 = vst [vmem:[#allocation2 + $0x60] sm:$0xff] %v8736
    %8801 = vst [vmem:[#allocation2 + $0x68] sm:$0xff] %v8737
    %8802 = vst [vmem:[#allocation2 + $0x70] sm:$0xff] %v8738
    %8803 = vst [vmem:[#allocation2 + $0x78] sm:$0xff] %v8739
    %8804 = vst [vmem:[#allocation2 + $0x80] sm:$0xff] %v8740
    %8805 = vst [vmem:[#allocation2 + $0x88] sm:$0xff] %v8741
    %8806 = vst [vmem:[#allocation2 + $0x90] sm:$0xff] %v8742
    %8807 = vst [vmem:[#allocation2 + $0x98] sm:$0xff] %v8743
    %8808 = vst [vmem:[#allocation2 + $0xa0] sm:$0xff] %v8744
    %8809 = vst [vmem:[#allocation2 + $0xa8] sm:$0xff] %v8745
    %8810 = vst [vmem:[#allocation2 + $0xb0] sm:$0xff] %v8746
    %8811 = vst [vmem:[#allocation2 + $0xb8] sm:$0xff] %v8747
    %8812 = vst [vmem:[#allocation2 + $0xc0] sm:$0xff] %v8748
    %8813 = vst [vmem:[#allocation2 + $0xc8] sm:$0xff] %v8749
    %8814 = vst [vmem:[#allocation2 + $0xd0] sm:$0xff] %v8750
    %8815 = vst [vmem:[#allocation2 + $0xd8] sm:$0xff] %v8751
    %8816 = vst [vmem:[#allocation2 + $0xe0] sm:$0xff] %v8752
    %8817 = vst [vmem:[#allocation2 + $0xe8] sm:$0xff] %v8753
    %8818 = vst [vmem:[#allocation2 + $0xf0] sm:$0xff] %v8754
    %8819 = vst [vmem:[#allocation2 + $0xf8] sm:$0xff] %v8755
    %8820 = vst [vmem:[#allocation2 + $0x100] sm:$0xff] %v8756
    %8821 = vst [vmem:[#allocation2 + $0x108] sm:$0xff] %v8757
    %8822 = vst [vmem:[#allocation2 + $0x110] sm:$0xff] %v8758
    %8823 = vst [vmem:[#allocation2 + $0x118] sm:$0xff] %v8759
    %8824 = vst [vmem:[#allocation2 + $0x120] sm:$0xff] %v8760
    %8825 = vst [vmem:[#allocation2 + $0x128] sm:$0xff] %v8761
    %8826 = vst [vmem:[#allocation2 + $0x130] sm:$0xff] %v8762
    %8827 = vst [vmem:[#allocation2 + $0x138] sm:$0xff] %v8763
    %8828 = vst [vmem:[#allocation2 + $0x140] sm:$0xff] %v8764
    %8829 = vst [vmem:[#allocation2 + $0x148] sm:$0xff] %v8765
    %8830 = vst [vmem:[#allocation2 + $0x150] sm:$0xff] %v8766
    %8831 = vst [vmem:[#allocation2 + $0x158] sm:$0xff] %v8767
    %8832 = vst [vmem:[#allocation2 + $0x160] sm:$0xff] %v8768
    %8833 = vst [vmem:[#allocation2 + $0x168] sm:$0xff] %v8769
    %8834 = vst [vmem:[#allocation2 + $0x170] sm:$0xff] %v8770
    %8835 = vst [vmem:[#allocation2 + $0x178] sm:$0xff] %v8771
    %8836 = vst [vmem:[#allocation2 + $0x180] sm:$0xff] %v8772
    %8837 = vst [vmem:[#allocation2 + $0x188] sm:$0xff] %v8773
    %8838 = vst [vmem:[#allocation2 + $0x190] sm:$0xff] %v8774
    %8839 = vst [vmem:[#allocation2 + $0x198] sm:$0xff] %v8775
    %8840 = vst [vmem:[#allocation2 + $0x1a0] sm:$0xff] %v8776
    %8841 = vst [vmem:[#allocation2 + $0x1a8] sm:$0xff] %v8777
    %8842 = vst [vmem:[#allocation2 + $0x1b0] sm:$0xff] %v8778
    %8843 = vst [vmem:[#allocation2 + $0x1b8] sm:$0xff] %v8779
    %8844 = vst [vmem:[#allocation2 + $0x1c0] sm:$0xff] %v8780
    %8845 = vst [vmem:[#allocation2 + $0x1c8] sm:$0xff] %v8781
    %8846 = vst [vmem:[#allocation2 + $0x1d0] sm:$0xff] %v8782
    %8847 = vst [vmem:[#allocation2 + $0x1d8] sm:$0xff] %v8783
    %8848 = vst [vmem:[#allocation2 + $0x1e0] sm:$0xff] %v8784
    %8849 = vst [vmem:[#allocation2 + $0x1e8] sm:$0xff] %v8785
    %8850 = vst [vmem:[#allocation2 + $0x1f0] sm:$0xff] %v8786
    %8851 = vst [vmem:[#allocation2 + $0x1f8] sm:$0xff] %v8787
    %v8852 = vadd.f32 %v8724, %v8725
    %v8853 = vadd.f32 %v8852, %v8726
    %v8854 = vadd.f32 %v8853, %v8727
    %v8855 = vadd.f32 %v8854, %v8728
    %v8856 = vadd.f32 %v8855, %v8729
    %v8857 = vadd.f32 %v8856, %v8730
    %v8858 = vadd.f32 %v8857, %v8731
    %v8859 = vadd.f32 %v8858, %v8732
    %v8860 = vadd.f32 %v8859, %v8733
    %v8861 = vadd.f32 %v8860, %v8734
    %v8862 = vadd.f32 %v8861, %v8735
    %v8863 = vadd.f32 %v8862, %v8736
    %v8864 = vadd.f32 %v8863, %v8737
    %v8865 = vadd.f32 %v8864, %v8738
    %v8866 = vadd.f32 %v8865, %v8739
    %v8867 = vadd.f32 %v8866, %v8740
    %v8868 = vadd.f32 %v8867, %v8741
    %v8869 = vadd.f32 %v8868, %v8742
    %v8870 = vadd.f32 %v8869, %v8743
    %v8871 = vadd.f32 %v8870, %v8744
    %v8872 = vadd.f32 %v8871, %v8745
    %v8873 = vadd.f32 %v8872, %v8746
    %v8874 = vadd.f32 %v8873, %v8747
    %v8875 = vadd.f32 %v8874, %v8748
    %v8876 = vadd.f32 %v8875, %v8749
    %v8877 = vadd.f32 %v8876, %v8750
    %v8878 = vadd.f32 %v8877, %v8751
    %v8879 = vadd.f32 %v8878, %v8752
    %v8880 = vadd.f32 %v8879, %v8753
    %v8881 = vadd.f32 %v8880, %v8754
    %v8882 = vadd.f32 %v8881, %v8755
    %v8883 = vadd.f32 %v8882, %v8756
    %v8884 = vadd.f32 %v8883, %v8757
    %v8885 = vadd.f32 %v8884, %v8758
    %v8886 = vadd.f32 %v8885, %v8759
    %v8887 = vadd.f32 %v8886, %v8760
    %v8888 = vadd.f32 %v8887, %v8761
    %v8889 = vadd.f32 %v8888, %v8762
    %v8890 = vadd.f32 %v8889, %v8763
    %v8891 = vadd.f32 %v8890, %v8764
    %v8892 = vadd.f32 %v8891, %v8765
    %v8893 = vadd.f32 %v8892, %v8766
    %v8894 = vadd.f32 %v8893, %v8767
    %v8895 = vadd.f32 %v8894, %v8768
    %v8896 = vadd.f32 %v8895, %v8769
    %v8897 = vadd.f32 %v8896, %v8770
    %v8898 = vadd.f32 %v8897, %v8771
    %v8899 = vadd.f32 %v8898, %v8772
    %v8900 = vadd.f32 %v8899, %v8773
    %v8901 = vadd.f32 %v8900, %v8774
    %v8902 = vadd.f32 %v8901, %v8775
    %v8903 = vadd.f32 %v8902, %v8776
    %v8904 = vadd.f32 %v8903, %v8777
    %v8905 = vadd.f32 %v8904, %v8778
    %v8906 = vadd.f32 %v8905, %v8779
    %v8907 = vadd.f32 %v8906, %v8780
    %v8908 = vadd.f32 %v8907, %v8781
    %v8909 = vadd.f32 %v8908, %v8782
    %v8910 = vadd.f32 %v8909, %v8783
    %v8911 = vadd.f32 %v8910, %v8784
    %v8912 = vadd.f32 %v8911, %v8785
    %v8913 = vadd.f32 %v8912, %v8786
    %v8914 = vadd.f32 %v8913, %v8787
    %v8915 = vrot.slane %v8914, 4
    %v8916 = vadd.f32 %v8914, %v8915
    %v8917 = vrot.slane %v8916, 2
    %v8918 = vadd.f32 %v8916, %v8917
    %v8919 = vrot.slane %v8918, 1
    %v8920 = vadd.f32 %v8918, %v8919
    %v8921 = vmul.f32 %v8920, 0.001953125
    %v8922 = vsub.f32 %v8724, %v8921
    %v8923 = vsub.f32 %v8725, %v8921
    %v8924 = vsub.f32 %v8726, %v8921
    %v8925 = vsub.f32 %v8727, %v8921
    %v8926 = vsub.f32 %v8728, %v8921
    %v8927 = vsub.f32 %v8729, %v8921
    %v8928 = vsub.f32 %v8730, %v8921
    %v8929 = vsub.f32 %v8731, %v8921
    %v8930 = vsub.f32 %v8732, %v8921
    %v8931 = vsub.f32 %v8733, %v8921
    %v8932 = vsub.f32 %v8734, %v8921
    %v8933 = vsub.f32 %v8735, %v8921
    %v8934 = vsub.f32 %v8736, %v8921
    %v8935 = vsub.f32 %v8737, %v8921
    %v8936 = vsub.f32 %v8738, %v8921
    %v8937 = vsub.f32 %v8739, %v8921
    %v8938 = vsub.f32 %v8740, %v8921
    %v8939 = vsub.f32 %v8741, %v8921
    %v8940 = vsub.f32 %v8742, %v8921
    %v8941 = vsub.f32 %v8743, %v8921
    %v8942 = vsub.f32 %v8744, %v8921
    %v8943 = vsub.f32 %v8745, %v8921
    %v8944 = vsub.f32 %v8746, %v8921
    %v8945 = vsub.f32 %v8747, %v8921
    %v8946 = vsub.f32 %v8748, %v8921
    %v8947 = vsub.f32 %v8749, %v8921
    %v8948 = vsub.f32 %v8750, %v8921
    %v8949 = vsub.f32 %v8751, %v8921
    %v8950 = vsub.f32 %v8752, %v8921
    %v8951 = vsub.f32 %v8753, %v8921
    %v8952 = vsub.f32 %v8754, %v8921
    %v8953 = vsub.f32 %v8755, %v8921
    %v8954 = vsub.f32 %v8756, %v8921
    %v8955 = vsub.f32 %v8757, %v8921
    %v8956 = vsub.f32 %v8758, %v8921
    %v8957 = vsub.f32 %v8759, %v8921
    %v8958 = vsub.f32 %v8760, %v8921
    %v8959 = vsub.f32 %v8761, %v8921
    %v8960 = vsub.f32 %v8762, %v8921
    %v8961 = vsub.f32 %v8763, %v8921
    %v8962 = vsub.f32 %v8764, %v8921
    %v8963 = vsub.f32 %v8765, %v8921
    %v8964 = vsub.f32 %v8766, %v8921
    %v8965 = vsub.f32 %v8767, %v8921
    %v8966 = vsub.f32 %v8768, %v8921
    %v8967 = vsub.f32 %v8769, %v8921
    %v8968 = vsub.f32 %v8770, %v8921
    %v8969 = vsub.f32 %v8771, %v8921
    %v8970 = vsub.f32 %v8772, %v8921
    %v8971 = vsub.f32 %v8773, %v8921
    %v8972 = vsub.f32 %v8774, %v8921
    %v8973 = vsub.f32 %v8775, %v8921
    %v8974 = vsub.f32 %v8776, %v8921
    %v8975 = vsub.f32 %v8777, %v8921
    %v8976 = vsub.f32 %v8778, %v8921
    %v8977 = vsub.f32 %v8779, %v8921
    %v8978 = vsub.f32 %v8780, %v8921
    %v8979 = vsub.f32 %v8781, %v8921
    %v8980 = vsub.f32 %v8782, %v8921
    %v8981 = vsub.f32 %v8783, %v8921
    %v8982 = vsub.f32 %v8784, %v8921
    %v8983 = vsub.f32 %v8785, %v8921
    %v8984 = vsub.f32 %v8786, %v8921
    %v8985 = vsub.f32 %v8787, %v8921
    %v8986 = vmul.f32 %v8922, %v8922
    %v8987 = vmul.f32 %v8923, %v8923
    %v8988 = vmul.f32 %v8924, %v8924
    %v8989 = vmul.f32 %v8925, %v8925
    %v8990 = vmul.f32 %v8926, %v8926
    %v8991 = vmul.f32 %v8927, %v8927
    %v8992 = vmul.f32 %v8928, %v8928
    %v8993 = vmul.f32 %v8929, %v8929
    %v8994 = vmul.f32 %v8930, %v8930
    %v8995 = vmul.f32 %v8931, %v8931
    %v8996 = vmul.f32 %v8932, %v8932
    %v8997 = vmul.f32 %v8933, %v8933
    %v8998 = vmul.f32 %v8934, %v8934
    %v8999 = vmul.f32 %v8935, %v8935
    %v9000 = vmul.f32 %v8936, %v8936
    %v9001 = vmul.f32 %v8937, %v8937
    %v9002 = vmul.f32 %v8938, %v8938
    %v9003 = vmul.f32 %v8939, %v8939
    %v9004 = vmul.f32 %v8940, %v8940
    %v9005 = vmul.f32 %v8941, %v8941
    %v9006 = vmul.f32 %v8942, %v8942
    %v9007 = vmul.f32 %v8943, %v8943
    %v9008 = vmul.f32 %v8944, %v8944
    %v9009 = vmul.f32 %v8945, %v8945
    %v9010 = vmul.f32 %v8946, %v8946
    %v9011 = vmul.f32 %v8947, %v8947
    %v9012 = vmul.f32 %v8948, %v8948
    %v9013 = vmul.f32 %v8949, %v8949
    %v9014 = vmul.f32 %v8950, %v8950
    %v9015 = vmul.f32 %v8951, %v8951
    %v9016 = vmul.f32 %v8952, %v8952
    %v9017 = vmul.f32 %v8953, %v8953
    %v9018 = vmul.f32 %v8954, %v8954
    %v9019 = vmul.f32 %v8955, %v8955
    %v9020 = vmul.f32 %v8956, %v8956
    %v9021 = vmul.f32 %v8957, %v8957
    %v9022 = vmul.f32 %v8958, %v8958
    %v9023 = vmul.f32 %v8959, %v8959
    %v9024 = vmul.f32 %v8960, %v8960
    %v9025 = vmul.f32 %v8961, %v8961
    %v9026 = vmul.f32 %v8962, %v8962
    %v9027 = vmul.f32 %v8963, %v8963
    %v9028 = vmul.f32 %v8964, %v8964
    %v9029 = vmul.f32 %v8965, %v8965
    %v9030 = vmul.f32 %v8966, %v8966
    %v9031 = vmul.f32 %v8967, %v8967
    %v9032 = vmul.f32 %v8968, %v8968
    %v9033 = vmul.f32 %v8969, %v8969
    %v9034 = vmul.f32 %v8970, %v8970
    %v9035 = vmul.f32 %v8971, %v8971
    %v9036 = vmul.f32 %v8972, %v8972
    %v9037 = vmul.f32 %v8973, %v8973
    %v9038 = vmul.f32 %v8974, %v8974
    %v9039 = vmul.f32 %v8975, %v8975
    %v9040 = vmul.f32 %v8976, %v8976
    %v9041 = vmul.f32 %v8977, %v8977
    %v9042 = vmul.f32 %v8978, %v8978
    %v9043 = vmul.f32 %v8979, %v8979
    %v9044 = vmul.f32 %v8980, %v8980
    %v9045 = vmul.f32 %v8981, %v8981
    %v9046 = vmul.f32 %v8982, %v8982
    %v9047 = vmul.f32 %v8983, %v8983
    %v9048 = vmul.f32 %v8984, %v8984
    %v9049 = vmul.f32 %v8985, %v8985
    %v9050 = vadd.f32 %v8986, %v8987
    %v9051 = vadd.f32 %v9050, %v8988
    %v9052 = vadd.f32 %v9051, %v8989
    %v9053 = vadd.f32 %v9052, %v8990
    %v9054 = vadd.f32 %v9053, %v8991
    %v9055 = vadd.f32 %v9054, %v8992
    %v9056 = vadd.f32 %v9055, %v8993
    %v9057 = vadd.f32 %v9056, %v8994
    %v9058 = vadd.f32 %v9057, %v8995
    %v9059 = vadd.f32 %v9058, %v8996
    %v9060 = vadd.f32 %v9059, %v8997
    %v9061 = vadd.f32 %v9060, %v8998
    %v9062 = vadd.f32 %v9061, %v8999
    %v9063 = vadd.f32 %v9062, %v9000
    %v9064 = vadd.f32 %v9063, %v9001
    %v9065 = vadd.f32 %v9064, %v9002
    %v9066 = vadd.f32 %v9065, %v9003
    %v9067 = vadd.f32 %v9066, %v9004
    %v9068 = vadd.f32 %v9067, %v9005
    %v9069 = vadd.f32 %v9068, %v9006
    %v9070 = vadd.f32 %v9069, %v9007
    %v9071 = vadd.f32 %v9070, %v9008
    %v9072 = vadd.f32 %v9071, %v9009
    %v9073 = vadd.f32 %v9072, %v9010
    %v9074 = vadd.f32 %v9073, %v9011
    %v9075 = vadd.f32 %v9074, %v9012
    %v9076 = vadd.f32 %v9075, %v9013
    %v9077 = vadd.f32 %v9076, %v9014
    %v9078 = vadd.f32 %v9077, %v9015
    %v9079 = vadd.f32 %v9078, %v9016
    %v9080 = vadd.f32 %v9079, %v9017
    %v9081 = vadd.f32 %v9080, %v9018
    %v9082 = vadd.f32 %v9081, %v9019
    %v9083 = vadd.f32 %v9082, %v9020
    %v9084 = vadd.f32 %v9083, %v9021
    %v9085 = vadd.f32 %v9084, %v9022
    %v9086 = vadd.f32 %v9085, %v9023
    %v9087 = vadd.f32 %v9086, %v9024
    %v9088 = vadd.f32 %v9087, %v9025
    %v9089 = vadd.f32 %v9088, %v9026
    %v9090 = vadd.f32 %v9089, %v9027
    %v9091 = vadd.f32 %v9090, %v9028
    %v9092 = vadd.f32 %v9091, %v9029
    %v9093 = vadd.f32 %v9092, %v9030
    %v9094 = vadd.f32 %v9093, %v9031
    %v9095 = vadd.f32 %v9094, %v9032
    %v9096 = vadd.f32 %v9095, %v9033
    %v9097 = vadd.f32 %v9096, %v9034
    %v9098 = vadd.f32 %v9097, %v9035
    %v9099 = vadd.f32 %v9098, %v9036
    %v9100 = vadd.f32 %v9099, %v9037
    %v9101 = vadd.f32 %v9100, %v9038
    %v9102 = vadd.f32 %v9101, %v9039
    %v9103 = vadd.f32 %v9102, %v9040
    %v9104 = vadd.f32 %v9103, %v9041
    %v9105 = vadd.f32 %v9104, %v9042
    %v9106 = vadd.f32 %v9105, %v9043
    %v9107 = vadd.f32 %v9106, %v9044
    %v9108 = vadd.f32 %v9107, %v9045
    %v9109 = vadd.f32 %v9108, %v9046
    %v9110 = vadd.f32 %v9109, %v9047
    %v9111 = vadd.f32 %v9110, %v9048
    %v9112 = vadd.f32 %v9111, %v9049
    %v9113 = vrot.slane %v9112, 4
    %v9114 = vadd.f32 %v9112, %v9113
    %v9115 = vrot.slane %v9114, 2
    %v9116 = vadd.f32 %v9114, %v9115
    %v9117 = vrot.slane %v9116, 1
    %v9118 = vadd.f32 %v9116, %v9117
    %9119 = vst [vmem:[#allocation4] sm:$0xff] %v8921
    %9120 = vst [vmem:[#allocation6] sm:$0xff] %v9118
    // Predicated region
    $region18: #{tpu_custom_call.1} parent=1 // pred_check
      _
    $region19: #{tpu_custom_call.1} parent=1 // pred_check_branch
      %9122 = sbr.rel (0) target = $region21
    $region20: #{tpu_custom_call.1} parent=1 // pred_region
      %s9124 = ssub.s32 8192, 8192
      %9125 = vsyncadd [#allocation3], %s9124
      %s9126 = sshll.u32 [#allocation2], 4
      %s9127 = int_to_ptr.vmem [resolvable:$true] %s9126
      %9132 = dma.vmem_to_hbm [thread:$0]  %s9127, 8192, %s4, [#allocation3], 128, 128, 8
    $region21: #{tpu_custom_call.1} parent=1 // pred_fallthru
      _
    // Predicated region
    $region22: #{tpu_custom_call.1} parent=1 // pred_check
      _
    $region23: #{tpu_custom_call.1} parent=1 // pred_check_branch
      %9134 = sbr.rel (0) target = $region25
    $region24: #{tpu_custom_call.1} parent=1 // pred_region
      %s9136 = ssub.s32 128, 128
      %9137 = vsyncadd [#allocation5], %s9136
      %s9139 = sshll.u32 [#allocation4], 4
      %s9140 = int_to_ptr.vmem [resolvable:$true] %s9139
      %9142 = dma.vmem_to_hbm [thread:$0]  %s9140, 128, %s5, [#allocation5]
    $region25: #{tpu_custom_call.1} parent=1 // pred_fallthru
      _
    // Predicated region
    $region26: #{tpu_custom_call.1} parent=1 // pred_check
      _
    $region27: #{tpu_custom_call.1} parent=1 // pred_check_branch
      %9144 = sbr.rel (0) target = $region29
    $region28: #{tpu_custom_call.1} parent=1 // pred_region
      %s9146 = ssub.s32 128, 128
      %9147 = vsyncadd [#allocation5], %s9146
      %s9149 = sshll.u32 [#allocation6], 4
      %s9150 = int_to_ptr.vmem [resolvable:$true] %s9149
      %9152 = dma.vmem_to_hbm [thread:$0]  %s9150, 128, %s6, [#allocation5]
    $region29: #{tpu_custom_call.1} parent=1 // pred_fallthru
      _
    // Predicated region
    $region30: #{tpu_custom_call.1} parent=1 // pred_check
      _
    $region31: #{tpu_custom_call.1} parent=1 // pred_check_branch
      %9154 = sbr.rel (0) target = $region33
    $region32: #{tpu_custom_call.1} parent=1 // pred_region
      %9155 = dma.done [#allocation3], 8192
    $region33: #{tpu_custom_call.1} parent=1 // pred_fallthru
      _
    // Predicated region
    $region34: #{tpu_custom_call.1} parent=1 // pred_check
      _
    $region35: #{tpu_custom_call.1} parent=1 // pred_check_branch
      %9157 = sbr.rel (0) target = $region37
    $region36: #{tpu_custom_call.1} parent=1 // pred_region
      %9158 = dma.done [#allocation5], 128
    $region37: #{tpu_custom_call.1} parent=1 // pred_fallthru
      _
    // Predicated region
    $region38: #{tpu_custom_call.1} parent=1 // pred_check
      _
    $region39: #{tpu_custom_call.1} parent=1 // pred_check_branch
      %9160 = sbr.rel (0) target = $region41
    $region40: #{tpu_custom_call.1} parent=1 // pred_region
      %9161 = dma.done [#allocation5], 128
    $region41: #{tpu_custom_call.1} parent=1 // pred_fallthru
      _
    %9162 = vsyncpa [#allocation3], 1
    %9163 = vsyncpa [#allocation5], 1

</llo_original>
